<compile_context>
chip_gen: v5e
topology: v5e:2x2
jax: 0.10.0
libtpu: 0.0.40
codegen_flags: <defaults>
</compile_context>

<pallas_src>
import jax
import jax.numpy as jnp
from jax.experimental import pallas as pl
from jax.experimental.pallas import tpu as pltpu


# ---------------------------------------------------------------------------
# Pallas kernels
# ---------------------------------------------------------------------------
def _mm_bias_relu_kernel(x_ref, w_ref, b_ref, o_ref):
    """o = relu(x @ w + b); x cast to bf16, w already bf16, f32 accumulation."""
    acc = jnp.dot(x_ref[...].astype(jnp.bfloat16), w_ref[...],
                  preferred_element_type=jnp.float32)
    o_ref[...] = jnp.maximum(acc + b_ref[...], 0.0).astype(o_ref.dtype)


def matmul_bias_relu(x, w_bf16, b):
    """x: (M, K) f32, w: (K, N) bf16, b: (1, N) f32 -> (M, N) f32."""
    M, K = x.shape
    K2, N = w_bf16.shape
    assert K == K2, (K, K2)
    return pl.pallas_call(
        _mm_bias_relu_kernel,
        grid=(1,),
        in_specs=[
            pl.BlockSpec((M, K), lambda i: (0, 0)),
            pl.BlockSpec((K, N), lambda i: (0, 0)),
            pl.BlockSpec((1, N), lambda i: (0, 0)),
        ],
        out_specs=pl.BlockSpec((M, N), lambda i: (0, 0)),
        out_shape=jax.ShapeDtypeStruct((M, N), jnp.float32),
    )(x, w_bf16, b)


def _head_kernel(flat_ref, act_ref, w4a_ref, w4b_ref, b4_ref,
                 sw_ref, sb_ref, w5_ref, b5_ref, q_ref):
    """Fused skip + fc4 (concat-free, N-tiled) + relu + fc5 (accumulated)."""
    j = pl.program_id(0)
    # skip = relu(action_val @ skip_w + skip_b) -> (B, 10). Recomputed per tile
    # (a handful of VPU flops, irrelevant next to the fc4 weight stream).
    skip = jnp.maximum(act_ref[...] * sw_ref[...] + sb_ref[...], 0.0)
    # fc4 column tile j: h_j = relu(flat @ W4a[:, tile] + skip @ W4b[:, tile] + b4[tile])
    h = jnp.dot(flat_ref[...].astype(jnp.bfloat16), w4a_ref[...],
                preferred_element_type=jnp.float32)
    h = h + jnp.dot(skip.astype(jnp.bfloat16), w4b_ref[...],
                    preferred_element_type=jnp.float32)
    h = jnp.maximum(h + b4_ref[...], 0.0)                       # (B, TN) f32
    # fc5 contribution of this tile, accumulated into the VMEM-resident output.
    contrib = jnp.dot(h.astype(jnp.bfloat16), w5_ref[...],
                      preferred_element_type=jnp.float32)       # (B, n_out)

    @pl.when(j == 0)
    def _():
        q_ref[...] = b5_ref[...] + contrib

    @pl.when(j > 0)
    def _():
        q_ref[...] = q_ref[...] + contrib


def head_forward(flat, action_val, p, *, tn=128):
    """flat: (B, 3136) f32, action_val: (B, 1) f32 -> q: (B, num_skip_actions) f32."""
    B, K4 = flat.shape
    N4 = p["fc4_wmain"].shape[1]          # 512
    ns = p["skip_w"].shape[1]             # 10
    n_out = p["fc5_w"].shape[1]           # num_skip_actions
    assert N4 % tn == 0
    return pl.pallas_call(
        _head_kernel,
        grid=(N4 // tn,),
        in_specs=[
            pl.BlockSpec((B, K4), lambda j: (0, 0)),      # flat (resident)
            pl.BlockSpec((B, 1), lambda j: (0, 0)),       # action_val
            pl.BlockSpec((K4, tn), lambda j: (0, j)),     # fc4 weights (main rows)
            pl.BlockSpec((ns, tn), lambda j: (0, j)),     # fc4 weights (skip rows)
            pl.BlockSpec((1, tn), lambda j: (0, j)),      # fc4 bias tile
            pl.BlockSpec((1, ns), lambda j: (0, 0)),      # skip weight
            pl.BlockSpec((1, ns), lambda j: (0, 0)),      # skip bias
            pl.BlockSpec((tn, n_out), lambda j: (j, 0)),  # fc5 weight tile
            pl.BlockSpec((1, n_out), lambda j: (0, 0)),   # fc5 bias
        ],
        out_specs=pl.BlockSpec((B, n_out), lambda j: (0, 0)),
        out_shape=jax.ShapeDtypeStruct((B, n_out), jnp.float32),
        compiler_params=pltpu.CompilerParams(
            dimension_semantics=("arbitrary",)),   # output accumulates across the axis
    )(flat, action_val, p["fc4_wmain"], p["fc4_wskip"], p["fc4_b"],
      p["skip_w"], p["skip_b"], p["fc5_w"], p["fc5_b"])


# ---------------------------------------------------------------------------
# Conv = lean NHWC im2col (XLA glue) + Pallas matmul
# ---------------------------------------------------------------------------
def _im2col_nhwc(x, k, s):
    """x: (B, H, W, C) -> (B*oh*ow, k*k*C), patch feature order (kh, kw, C)."""
    B, H, W, C = x.shape
    oh = (H - k) // s + 1
    ow = (W - k) // s + 1
    cols = [x[:, i:i + s * oh:s, j:j + s * ow:s, :]
            for i in range(k) for j in range(k)]            # each (B, oh, ow, C)
    patches = jnp.concatenate(cols, axis=-1)                # (B, oh, ow, k*k*C)
    return patches.reshape(B * oh * ow, k * k * C), oh, ow


def conv2d_relu(x, wmat, b, *, k, stride):
    """x: (B, H, W, C) NHWC, wmat: (k*k*C, OC) bf16, b: (1, OC) -> (B, oh, ow, OC)."""
    B = x.shape[0]
    patches, oh, ow = _im2col_nhwc(x, k, stride)
    out = matmul_bias_relu(patches, wmat, b)                # (B*oh*ow, OC)
    return out.reshape(B, oh, ow, wmat.shape[1])


# ---------------------------------------------------------------------------
# Forward (skip-Q branch: action_val is provided)
# ---------------------------------------------------------------------------
def nature_tqn_forward(params, x_nchw, action_val):
    x = jnp.transpose(x_nchw, (0, 2, 3, 1))                 # single small NCHW->NHWC
    x = conv2d_relu(x, params["conv1_w"], params["conv1_b"], k=4, stride=2)  # 42 -> 20
    x = conv2d_relu(x, params["conv2_w"], params["conv2_b"], k=4, stride=2)  # 20 -> 9
    x = conv2d_relu(x, params["conv3_w"], params["conv3_b"], k=3, stride=1)  # 9  -> 7
    B = x.shape[0]
    flat = x.reshape(B, -1)   # NHWC flatten; fc4 rows pre-permuted to match torch flatten
    return head_forward(flat, action_val, params)           # (B, num_skip_actions)


# ---------------------------------------------------------------------------
# Parameter preparation (PyTorch layout -> kernel layout, one-time)
# ---------------------------------------------------------------------------
def _conv_wmat(w_torch):
    """torch (OC, C, kh, kw) -> (kh*kw*C, OC) bf16, matching (kh, kw, C) patches."""
    OC, C, kh, kw = w_torch.shape
    return jnp.transpose(w_torch, (2, 3, 1, 0)).reshape(kh * kw * C, OC).astype(jnp.bfloat16)


def prepare_params(tp):
    p = {}
    p["conv1_w"] = _conv_wmat(tp["conv1.weight"])
    p["conv1_b"] = tp["conv1.bias"].reshape(1, -1).astype(jnp.float32)
    p["conv2_w"] = _conv_wmat(tp["conv2.weight"])
    p["conv2_b"] = tp["conv2.bias"].reshape(1, -1).astype(jnp.float32)
    p["conv3_w"] = _conv_wmat(tp["conv3.weight"])
    p["conv3_b"] = tp["conv3.bias"].reshape(1, -1).astype(jnp.float32)

    p["skip_w"] = tp["skip.weight"].T.astype(jnp.float32)            # (1, 10)
    p["skip_b"] = tp["skip.bias"].reshape(1, -1).astype(jnp.float32)

    # torch skip_fc4.weight: (512, 3146), inputs = cat([NCHW-flatten(3136), skip(10)]).
    w4 = tp["skip_fc4.weight"].T                                     # (3146, 512)
    # Row permutation: our NHWC-flatten index r = (h*7 + w)*64 + c picks
    # torch NCHW-flatten row c*49 + (h*7 + w).  Zero runtime cost (init only).
    r = jnp.arange(7 * 7 * 64)
    perm = (r % 64) * 49 + (r // 64)
    p["fc4_wmain"] = w4[:3136][perm].astype(jnp.bfloat16)            # (3136, 512)
    p["fc4_wskip"] = w4[3136:].astype(jnp.bfloat16)                  # (10, 512)
    p["fc4_b"] = tp["skip_fc4.bias"].reshape(1, -1).astype(jnp.float32)

    p["fc5_w"] = tp["skip_fc5.weight"].T.astype(jnp.bfloat16)        # (512, num_skip_actions)
    p["fc5_b"] = tp["skip_fc5.bias"].reshape(1, -1).astype(jnp.float32)
    return p


def init_params(key, in_channels=4, num_skip_actions=10):
    ks = jax.random.split(key, 12)
    scale = 0.05

    def w(k, shape):
        return scale * jax.random.normal(k, shape, jnp.float32)

    torch_params = {
        "conv1.weight": w(ks[0], (32, in_channels, 4, 4)),   # 42x42 branch: k=4, s=2
        "conv1.bias":   w(ks[1], (32,)),
        "conv2.weight": w(ks[2], (64, 32, 4, 4)),
        "conv2.bias":   w(ks[3], (64,)),
        "conv3.weight": w(ks[4], (64, 64, 3, 3)),
        "conv3.bias":   w(ks[5], (64,)),
        "skip.weight":  w(ks[6], (10, 1)),
        "skip.bias":    w(ks[7], (10,)),
        "skip_fc4.weight": w(ks[8], (512, 7 * 7 * 64 + 10)),
        "skip_fc4.bias":   w(ks[9], (512,)),
        "skip_fc5.weight": w(ks[10], (num_skip_actions, 512)),
        "skip_fc5.bias":   w(ks[11], (num_skip_actions,)),
    }
    return prepare_params(torch_params)


if __name__ == "__main__":
    key = jax.random.PRNGKey(0)
    pkey, xkey, akey = jax.random.split(key, 3)

    B, C, H, W = 2, 4, 42, 42          # 42x42 observation branch of the module
    num_actions = 18                   # behaviour-action count (conditions the skip-Q)
    num_skip_actions = 10

    params = init_params(pkey, in_channels=C, num_skip_actions=num_skip_actions)
    x = jax.random.normal(xkey, (B, C, H, W), jnp.float32)
    # action_val conditions the skip-Q (chosen behaviour action id).
    action_val = jax.random.uniform(akey, (B, 1), jnp.float32, 0.0, float(num_actions))

    fwd = jax.jit(nature_tqn_forward)
    out = fwd(params, x, action_val)
    jax.block_until_ready(out)

    assert out.shape == (B, num_skip_actions), out.shape
    assert out.dtype == jnp.float32
    assert bool(jnp.all(jnp.isfinite(out)))
    print("KERNEL_OK")
</pallas_src>

<mosaic_0001>
module attributes {stable_mosaic.version = 11 : i64} {
  func.func @_mm_bias_relu_kernel(%arg0: i32, %arg1: memref<800x64xf32, #tpu.memory_space<vmem>>, %arg2: memref<64x32xbf16, #tpu.memory_space<vmem>>, %arg3: memref<1x32xf32, #tpu.memory_space<vmem>>, %arg4: memref<800x32xf32, #tpu.memory_space<vmem>>) attributes {dimension_semantics = [#tpu.dimension_semantics<arbitrary>], iteration_bounds = array<i64: 1>, scalar_prefetch = 0 : i64, scratch_operands = 0 : i64, tpu.core_type = #tpu.core_type<tc>, window_params = [{pipeline_mode = #tpu.pipeline_mode<synchronous>, transform_indices = @transform_0, window_bounds = array<i64: 800, 64>}, {pipeline_mode = #tpu.pipeline_mode<synchronous>, transform_indices = @transform_1, window_bounds = array<i64: 64, 32>}, {pipeline_mode = #tpu.pipeline_mode<synchronous>, transform_indices = @transform_2, window_bounds = array<i64: 1, 32>}, {pipeline_mode = #tpu.pipeline_mode<synchronous>, transform_indices = @transform_3, window_bounds = array<i64: 800, 32>}]} {
    %c0 = arith.constant 0 : index
    %c0_0 = arith.constant 0 : index
    %0 = vector.load %arg1[%c0, %c0_0] : memref<800x64xf32, #tpu.memory_space<vmem>>, vector<800x64xf32>
    %1 = arith.truncf %0 : vector<800x64xf32> to vector<800x64xbf16>
    %c0_1 = arith.constant 0 : index
    %c0_2 = arith.constant 0 : index
    %2 = vector.load %arg2[%c0_1, %c0_2] : memref<64x32xbf16, #tpu.memory_space<vmem>>, vector<64x32xbf16>
    %cst = arith.constant dense<0.000000e+00> : vector<800x32xf32>
    %3 = tpu.matmul %1, %2, %cst {dimension_numbers = #tpu.dot_dimension_numbers<[1], [0], [0], [1], [0, 0, 1, 1], [], []>} : vector<800x64xbf16>, vector<64x32xbf16>, vector<800x32xf32> -> vector<800x32xf32>
    %c0_3 = arith.constant 0 : index
    %c0_4 = arith.constant 0 : index
    %4 = vector.load %arg3[%c0_3, %c0_4] : memref<1x32xf32, #tpu.memory_space<vmem>>, vector<1x32xf32>
    %5 = vector.broadcast %4 : vector<1x32xf32> to vector<800x32xf32>
    %6 = arith.addf %3, %5 : vector<800x32xf32>
    %cst_5 = arith.constant 0.000000e+00 : f32
    %7 = vector.broadcast %cst_5 : f32 to vector<800x32xf32>
    %8 = arith.maximumf %6, %7 : vector<800x32xf32>
    %c0_6 = arith.constant 0 : index
    %c0_7 = arith.constant 0 : index
    %9 = vector.load %arg4[%c0_6, %c0_7] : memref<800x32xf32, #tpu.memory_space<vmem>>, vector<800x32xf32>
    tpu.vector_store %arg4[%c0_6, %c0_7], %8 {strides = array<i32>} : memref<800x32xf32, #tpu.memory_space<vmem>>, vector<800x32xf32>,
    return
  }
  func.func @transform_0(%arg0: i32) -> (i32, i32) {
    %c0_i32 = arith.constant 0 : i32
    %c0_i32_0 = arith.constant 0 : i32
    %c0_i32_1 = arith.constant 0 : i32
    return %c0_i32, %c0_i32_0 : i32, i32
  }
  func.func @transform_1(%arg0: i32) -> (i32, i32) {
    %c0_i32 = arith.constant 0 : i32
    %c0_i32_0 = arith.constant 0 : i32
    %c0_i32_1 = arith.constant 0 : i32
    return %c0_i32, %c0_i32_0 : i32, i32
  }
  func.func @transform_2(%arg0: i32) -> (i32, i32) {
    %c0_i32 = arith.constant 0 : i32
    %c0_i32_0 = arith.constant 0 : i32
    %c0_i32_1 = arith.constant 0 : i32
    return %c0_i32, %c0_i32_0 : i32, i32
  }
  func.func @transform_3(%arg0: i32) -> (i32, i32) {
    %c0_i32 = arith.constant 0 : i32
    %c0_i32_0 = arith.constant 0 : i32
    %c0_i32_1 = arith.constant 0 : i32
    return %c0_i32, %c0_i32_0 : i32, i32
  }
}

module attributes {stable_mosaic.version = 11 : i64} {
  func.func @_mm_bias_relu_kernel(%arg0: i32, %arg1: memref<162x512xf32, #tpu.memory_space<vmem>>, %arg2: memref<512x64xbf16, #tpu.memory_space<vmem>>, %arg3: memref<1x64xf32, #tpu.memory_space<vmem>>, %arg4: memref<162x64xf32, #tpu.memory_space<vmem>>) attributes {dimension_semantics = [#tpu.dimension_semantics<arbitrary>], iteration_bounds = array<i64: 1>, scalar_prefetch = 0 : i64, scratch_operands = 0 : i64, tpu.core_type = #tpu.core_type<tc>, window_params = [{pipeline_mode = #tpu.pipeline_mode<synchronous>, transform_indices = @transform_0, window_bounds = array<i64: 162, 512>}, {pipeline_mode = #tpu.pipeline_mode<synchronous>, transform_indices = @transform_1, window_bounds = array<i64: 512, 64>}, {pipeline_mode = #tpu.pipeline_mode<synchronous>, transform_indices = @transform_2, window_bounds = array<i64: 1, 64>}, {pipeline_mode = #tpu.pipeline_mode<synchronous>, transform_indices = @transform_3, window_bounds = array<i64: 162, 64>}]} {
    %c0 = arith.constant 0 : index
    %c0_0 = arith.constant 0 : index
    %0 = vector.load %arg1[%c0, %c0_0] : memref<162x512xf32, #tpu.memory_space<vmem>>, vector<162x512xf32>
    %1 = arith.truncf %0 : vector<162x512xf32> to vector<162x512xbf16>
    %c0_1 = arith.constant 0 : index
    %c0_2 = arith.constant 0 : index
    %2 = vector.load %arg2[%c0_1, %c0_2] : memref<512x64xbf16, #tpu.memory_space<vmem>>, vector<512x64xbf16>
    %cst = arith.constant dense<0.000000e+00> : vector<162x64xf32>
    %3 = tpu.matmul %1, %2, %cst {dimension_numbers = #tpu.dot_dimension_numbers<[1], [0], [0], [1], [0, 0, 1, 1], [], []>} : vector<162x512xbf16>, vector<512x64xbf16>, vector<162x64xf32> -> vector<162x64xf32>
    %c0_3 = arith.constant 0 : index
    %c0_4 = arith.constant 0 : index
    %4 = vector.load %arg3[%c0_3, %c0_4] : memref<1x64xf32, #tpu.memory_space<vmem>>, vector<1x64xf32>
    %5 = vector.broadcast %4 : vector<1x64xf32> to vector<162x64xf32>
    %6 = arith.addf %3, %5 : vector<162x64xf32>
    %cst_5 = arith.constant 0.000000e+00 : f32
    %7 = vector.broadcast %cst_5 : f32 to vector<162x64xf32>
    %8 = arith.maximumf %6, %7 : vector<162x64xf32>
    %c0_6 = arith.constant 0 : index
    %c0_7 = arith.constant 0 : index
    %9 = vector.load %arg4[%c0_6, %c0_7] : memref<162x64xf32, #tpu.memory_space<vmem>>, vector<162x64xf32>
    tpu.vector_store %arg4[%c0_6, %c0_7], %8 {strides = array<i32>} : memref<162x64xf32, #tpu.memory_space<vmem>>, vector<162x64xf32>,
    return
  }
  func.func @transform_0(%arg0: i32) -> (i32, i32) {
    %c0_i32 = arith.constant 0 : i32
    %c0_i32_0 = arith.constant 0 : i32
    %c0_i32_1 = arith.constant 0 : i32
    return %c0_i32, %c0_i32_0 : i32, i32
  }
  func.func @transform_1(%arg0: i32) -> (i32, i32) {
    %c0_i32 = arith.constant 0 : i32
    %c0_i32_0 = arith.constant 0 : i32
    %c0_i32_1 = arith.constant 0 : i32
    return %c0_i32, %c0_i32_0 : i32, i32
  }
  func.func @transform_2(%arg0: i32) -> (i32, i32) {
    %c0_i32 = arith.constant 0 : i32
    %c0_i32_0 = arith.constant 0 : i32
    %c0_i32_1 = arith.constant 0 : i32
    return %c0_i32, %c0_i32_0 : i32, i32
  }
  func.func @transform_3(%arg0: i32) -> (i32, i32) {
    %c0_i32 = arith.constant 0 : i32
    %c0_i32_0 = arith.constant 0 : i32
    %c0_i32_1 = arith.constant 0 : i32
    return %c0_i32, %c0_i32_0 : i32, i32
  }
}

module attributes {stable_mosaic.version = 11 : i64} {
  func.func @_mm_bias_relu_kernel(%arg0: i32, %arg1: memref<98x576xf32, #tpu.memory_space<vmem>>, %arg2: memref<576x64xbf16, #tpu.memory_space<vmem>>, %arg3: memref<1x64xf32, #tpu.memory_space<vmem>>, %arg4: memref<98x64xf32, #tpu.memory_space<vmem>>) attributes {dimension_semantics = [#tpu.dimension_semantics<arbitrary>], iteration_bounds = array<i64: 1>, scalar_prefetch = 0 : i64, scratch_operands = 0 : i64, tpu.core_type = #tpu.core_type<tc>, window_params = [{pipeline_mode = #tpu.pipeline_mode<synchronous>, transform_indices = @transform_0, window_bounds = array<i64: 98, 576>}, {pipeline_mode = #tpu.pipeline_mode<synchronous>, transform_indices = @transform_1, window_bounds = array<i64: 576, 64>}, {pipeline_mode = #tpu.pipeline_mode<synchronous>, transform_indices = @transform_2, window_bounds = array<i64: 1, 64>}, {pipeline_mode = #tpu.pipeline_mode<synchronous>, transform_indices = @transform_3, window_bounds = array<i64: 98, 64>}]} {
    %c0 = arith.constant 0 : index
    %c0_0 = arith.constant 0 : index
    %0 = vector.load %arg1[%c0, %c0_0] : memref<98x576xf32, #tpu.memory_space<vmem>>, vector<98x576xf32>
    %1 = arith.truncf %0 : vector<98x576xf32> to vector<98x576xbf16>
    %c0_1 = arith.constant 0 : index
    %c0_2 = arith.constant 0 : index
    %2 = vector.load %arg2[%c0_1, %c0_2] : memref<576x64xbf16, #tpu.memory_space<vmem>>, vector<576x64xbf16>
    %cst = arith.constant dense<0.000000e+00> : vector<98x64xf32>
    %3 = tpu.matmul %1, %2, %cst {dimension_numbers = #tpu.dot_dimension_numbers<[1], [0], [0], [1], [0, 0, 1, 1], [], []>} : vector<98x576xbf16>, vector<576x64xbf16>, vector<98x64xf32> -> vector<98x64xf32>
    %c0_3 = arith.constant 0 : index
    %c0_4 = arith.constant 0 : index
    %4 = vector.load %arg3[%c0_3, %c0_4] : memref<1x64xf32, #tpu.memory_space<vmem>>, vector<1x64xf32>
    %5 = vector.broadcast %4 : vector<1x64xf32> to vector<98x64xf32>
    %6 = arith.addf %3, %5 : vector<98x64xf32>
    %cst_5 = arith.constant 0.000000e+00 : f32
    %7 = vector.broadcast %cst_5 : f32 to vector<98x64xf32>
    %8 = arith.maximumf %6, %7 : vector<98x64xf32>
    %c0_6 = arith.constant 0 : index
    %c0_7 = arith.constant 0 : index
    %9 = vector.load %arg4[%c0_6, %c0_7] : memref<98x64xf32, #tpu.memory_space<vmem>>, vector<98x64xf32>
    tpu.vector_store %arg4[%c0_6, %c0_7], %8 {strides = array<i32>} : memref<98x64xf32, #tpu.memory_space<vmem>>, vector<98x64xf32>,
    return
  }
  func.func @transform_0(%arg0: i32) -> (i32, i32) {
    %c0_i32 = arith.constant 0 : i32
    %c0_i32_0 = arith.constant 0 : i32
    %c0_i32_1 = arith.constant 0 : i32
    return %c0_i32, %c0_i32_0 : i32, i32
  }
  func.func @transform_1(%arg0: i32) -> (i32, i32) {
    %c0_i32 = arith.constant 0 : i32
    %c0_i32_0 = arith.constant 0 : i32
    %c0_i32_1 = arith.constant 0 : i32
    return %c0_i32, %c0_i32_0 : i32, i32
  }
  func.func @transform_2(%arg0: i32) -> (i32, i32) {
    %c0_i32 = arith.constant 0 : i32
    %c0_i32_0 = arith.constant 0 : i32
    %c0_i32_1 = arith.constant 0 : i32
    return %c0_i32, %c0_i32_0 : i32, i32
  }
  func.func @transform_3(%arg0: i32) -> (i32, i32) {
    %c0_i32 = arith.constant 0 : i32
    %c0_i32_0 = arith.constant 0 : i32
    %c0_i32_1 = arith.constant 0 : i32
    return %c0_i32, %c0_i32_0 : i32, i32
  }
}

module attributes {stable_mosaic.version = 11 : i64} {
  func.func @_head_kernel(%arg0: i32, %arg1: memref<2x3136xf32, #tpu.memory_space<vmem>>, %arg2: memref<2x1xf32, #tpu.memory_space<vmem>>, %arg3: memref<3136x128xbf16, #tpu.memory_space<vmem>>, %arg4: memref<10x128xbf16, #tpu.memory_space<vmem>>, %arg5: memref<1x128xf32, #tpu.memory_space<vmem>>, %arg6: memref<1x10xf32, #tpu.memory_space<vmem>>, %arg7: memref<1x10xf32, #tpu.memory_space<vmem>>, %arg8: memref<128x10xbf16, #tpu.memory_space<vmem>>, %arg9: memref<1x10xf32, #tpu.memory_space<vmem>>, %arg10: memref<2x10xf32, #tpu.memory_space<vmem>>) attributes {dimension_semantics = [#tpu.dimension_semantics<arbitrary>], iteration_bounds = array<i64: 4>, scalar_prefetch = 0 : i64, scratch_operands = 0 : i64, tpu.core_type = #tpu.core_type<tc>, window_params = [{pipeline_mode = #tpu.pipeline_mode<synchronous>, transform_indices = @transform_0, window_bounds = array<i64: 2, 3136>}, {pipeline_mode = #tpu.pipeline_mode<synchronous>, transform_indices = @transform_1, window_bounds = array<i64: 2, 1>}, {transform_indices = @transform_2, window_bounds = array<i64: 3136, 128>}, {transform_indices = @transform_3, window_bounds = array<i64: 10, 128>}, {transform_indices = @transform_4, window_bounds = array<i64: 1, 128>}, {pipeline_mode = #tpu.pipeline_mode<synchronous>, transform_indices = @transform_5, window_bounds = array<i64: 1, 10>}, {pipeline_mode = #tpu.pipeline_mode<synchronous>, transform_indices = @transform_6, window_bounds = array<i64: 1, 10>}, {transform_indices = @transform_7, window_bounds = array<i64: 128, 10>}, {pipeline_mode = #tpu.pipeline_mode<synchronous>, transform_indices = @transform_8, window_bounds = array<i64: 1, 10>}, {pipeline_mode = #tpu.pipeline_mode<synchronous>, transform_indices = @transform_9, window_bounds = array<i64: 2, 10>}]} {
    %c0 = arith.constant 0 : index
    %c0_0 = arith.constant 0 : index
    %0 = vector.load %arg2[%c0, %c0_0] : memref<2x1xf32, #tpu.memory_space<vmem>>, vector<2x1xf32>
    %c0_1 = arith.constant 0 : index
    %c0_2 = arith.constant 0 : index
    %1 = vector.load %arg6[%c0_1, %c0_2] : memref<1x10xf32, #tpu.memory_space<vmem>>, vector<1x10xf32>
    %2 = vector.broadcast %0 : vector<2x1xf32> to vector<2x10xf32>
    %3 = vector.broadcast %1 : vector<1x10xf32> to vector<2x10xf32>
    %4 = arith.mulf %2, %3 : vector<2x10xf32>
    %c0_3 = arith.constant 0 : index
    %c0_4 = arith.constant 0 : index
    %5 = vector.load %arg7[%c0_3, %c0_4] : memref<1x10xf32, #tpu.memory_space<vmem>>, vector<1x10xf32>
    %6 = vector.broadcast %5 : vector<1x10xf32> to vector<2x10xf32>
    %7 = arith.addf %4, %6 : vector<2x10xf32>
    %cst = arith.constant 0.000000e+00 : f32
    %8 = vector.broadcast %cst : f32 to vector<2x10xf32>
    %9 = arith.maximumf %7, %8 : vector<2x10xf32>
    %c0_5 = arith.constant 0 : index
    %c0_6 = arith.constant 0 : index
    %10 = vector.load %arg1[%c0_5, %c0_6] : memref<2x3136xf32, #tpu.memory_space<vmem>>, vector<2x3136xf32>
    %11 = arith.truncf %10 : vector<2x3136xf32> to vector<2x3136xbf16>
    %c0_7 = arith.constant 0 : index
    %c0_8 = arith.constant 0 : index
    %12 = vector.load %arg3[%c0_7, %c0_8] : memref<3136x128xbf16, #tpu.memory_space<vmem>>, vector<3136x128xbf16>
    %cst_9 = arith.constant dense<0.000000e+00> : vector<2x128xf32>
    %13 = tpu.matmul %11, %12, %cst_9 {dimension_numbers = #tpu.dot_dimension_numbers<[1], [0], [0], [1], [0, 0, 1, 1], [], []>} : vector<2x3136xbf16>, vector<3136x128xbf16>, vector<2x128xf32> -> vector<2x128xf32>
    %14 = arith.truncf %9 : vector<2x10xf32> to vector<2x10xbf16>
    %c0_10 = arith.constant 0 : index
    %c0_11 = arith.constant 0 : index
    %15 = vector.load %arg4[%c0_10, %c0_11] : memref<10x128xbf16, #tpu.memory_space<vmem>>, vector<10x128xbf16>
    %cst_12 = arith.constant dense<0.000000e+00> : vector<2x128xf32>
    %16 = tpu.matmul %14, %15, %cst_12 {dimension_numbers = #tpu.dot_dimension_numbers<[1], [0], [0], [1], [0, 0, 1, 1], [], []>} : vector<2x10xbf16>, vector<10x128xbf16>, vector<2x128xf32> -> vector<2x128xf32>
    %17 = arith.addf %13, %16 : vector<2x128xf32>
    %c0_13 = arith.constant 0 : index
    %c0_14 = arith.constant 0 : index
    %18 = vector.load %arg5[%c0_13, %c0_14] : memref<1x128xf32, #tpu.memory_space<vmem>>, vector<1x128xf32>
    %19 = vector.broadcast %18 : vector<1x128xf32> to vector<2x128xf32>
    %20 = arith.addf %17, %19 : vector<2x128xf32>
    %cst_15 = arith.constant 0.000000e+00 : f32
    %21 = vector.broadcast %cst_15 : f32 to vector<2x128xf32>
    %22 = arith.maximumf %20, %21 : vector<2x128xf32>
    %23 = arith.truncf %22 : vector<2x128xf32> to vector<2x128xbf16>
    %c0_16 = arith.constant 0 : index
    %c0_17 = arith.constant 0 : index
    %24 = vector.load %arg8[%c0_16, %c0_17] : memref<128x10xbf16, #tpu.memory_space<vmem>>, vector<128x10xbf16>
    %cst_18 = arith.constant dense<0.000000e+00> : vector<2x10xf32>
    %25 = tpu.matmul %23, %24, %cst_18 {dimension_numbers = #tpu.dot_dimension_numbers<[1], [0], [0], [1], [0, 0, 1, 1], [], []>} : vector<2x128xbf16>, vector<128x10xbf16>, vector<2x10xf32> -> vector<2x10xf32>
    %c0_i32 = arith.constant 0 : i32
    %26 = arith.cmpi eq, %arg0, %c0_i32 : i32
    %27 = arith.extui %26 : i1 to i32
    %c0_i32_19 = arith.constant 0 : i32
    %28 = arith.cmpi ne, %27, %c0_i32_19 : i32
    scf.if %28 {
      %c0_22 = arith.constant 0 : index
      %c0_23 = arith.constant 0 : index
      %32 = vector.load %arg9[%c0_22, %c0_23] : memref<1x10xf32, #tpu.memory_space<vmem>>, vector<1x10xf32>
      %33 = vector.broadcast %32 : vector<1x10xf32> to vector<2x10xf32>
      %34 = arith.addf %33, %25 : vector<2x10xf32>
      %c0_24 = arith.constant 0 : index
      %c0_25 = arith.constant 0 : index
      %35 = vector.load %arg10[%c0_24, %c0_25] : memref<2x10xf32, #tpu.memory_space<vmem>>, vector<2x10xf32>
      tpu.vector_store %arg10[%c0_24, %c0_25], %34 {strides = array<i32>} : memref<2x10xf32, #tpu.memory_space<vmem>>, vector<2x10xf32>,
    } else {
    }
    %c0_i32_20 = arith.constant 0 : i32
    %29 = arith.cmpi sgt, %arg0, %c0_i32_20 : i32
    %30 = arith.extui %29 : i1 to i32
    %c0_i32_21 = arith.constant 0 : i32
    %31 = arith.cmpi ne, %30, %c0_i32_21 : i32
    scf.if %31 {
      %c0_22 = arith.constant 0 : index
      %c0_23 = arith.constant 0 : index
      %32 = vector.load %arg10[%c0_22, %c0_23] : memref<2x10xf32, #tpu.memory_space<vmem>>, vector<2x10xf32>
      %33 = arith.addf %32, %25 : vector<2x10xf32>
      %c0_24 = arith.constant 0 : index
      %c0_25 = arith.constant 0 : index
      %34 = vector.load %arg10[%c0_24, %c0_25] : memref<2x10xf32, #tpu.memory_space<vmem>>, vector<2x10xf32>
      tpu.vector_store %arg10[%c0_24, %c0_25], %33 {strides = array<i32>} : memref<2x10xf32, #tpu.memory_space<vmem>>, vector<2x10xf32>,
    } else {
    }
    return
  }
  func.func @transform_0(%arg0: i32) -> (i32, i32) {
    %c0_i32 = arith.constant 0 : i32
    %c0_i32_0 = arith.constant 0 : i32
    %c0_i32_1 = arith.constant 0 : i32
    return %c0_i32, %c0_i32_0 : i32, i32
  }
  func.func @transform_1(%arg0: i32) -> (i32, i32) {
    %c0_i32 = arith.constant 0 : i32
    %c0_i32_0 = arith.constant 0 : i32
    %c0_i32_1 = arith.constant 0 : i32
    return %c0_i32, %c0_i32_0 : i32, i32
  }
  func.func @transform_2(%arg0: i32) -> (i32, i32) {
    %c0_i32 = arith.constant 0 : i32
    %c0_i32_0 = arith.constant 0 : i32
    return %c0_i32, %arg0 : i32, i32
  }
  func.func @transform_3(%arg0: i32) -> (i32, i32) {
    %c0_i32 = arith.constant 0 : i32
    %c0_i32_0 = arith.constant 0 : i32
    return %c0_i32, %arg0 : i32, i32
  }
  func.func @transform_4(%arg0: i32) -> (i32, i32) {
    %c0_i32 = arith.constant 0 : i32
    %c0_i32_0 = arith.constant 0 : i32
    return %c0_i32, %arg0 : i32, i32
  }
  func.func @transform_5(%arg0: i32) -> (i32, i32) {
    %c0_i32 = arith.constant 0 : i32
    %c0_i32_0 = arith.constant 0 : i32
    %c0_i32_1 = arith.constant 0 : i32
    return %c0_i32, %c0_i32_0 : i32, i32
  }
  func.func @transform_6(%arg0: i32) -> (i32, i32) {
    %c0_i32 = arith.constant 0 : i32
    %c0_i32_0 = arith.constant 0 : i32
    %c0_i32_1 = arith.constant 0 : i32
    return %c0_i32, %c0_i32_0 : i32, i32
  }
  func.func @transform_7(%arg0: i32) -> (i32, i32) {
    %c0_i32 = arith.constant 0 : i32
    %c0_i32_0 = arith.constant 0 : i32
    return %arg0, %c0_i32 : i32, i32
  }
  func.func @transform_8(%arg0: i32) -> (i32, i32) {
    %c0_i32 = arith.constant 0 : i32
    %c0_i32_0 = arith.constant 0 : i32
    %c0_i32_1 = arith.constant 0 : i32
    return %c0_i32, %c0_i32_0 : i32, i32
  }
  func.func @transform_9(%arg0: i32) -> (i32, i32) {
    %c0_i32 = arith.constant 0 : i32
    %c0_i32_0 = arith.constant 0 : i32
    %c0_i32_1 = arith.constant 0 : i32
    return %c0_i32, %c0_i32_0 : i32, i32
  }
}

</mosaic_0001>

<llo_original>
// kernel: nature_tqn_forward.4
$region0: #{nature_tqn_forward.4}
  #allocation0 [shape = 'u32[]', space=smem, size = 0x4, offset = 0x4, fixed_abs, tag = 'smem constant byte address 0x4 - core index']
  #allocation1 [shape = 'u32[72,128]{1,0:T(1,128)}', space=vmem, size = 0x9000, scoped, tag = 'internal scratch']
  %s0 = inlined_call_operand.vmem [shape: f32[800,64], index: 0, kind: input, shape index: {}]
  %s1 = inlined_call_operand.vmem [shape: bf16[64,32], index: 1, kind: input, shape index: {}]
  %s2 = inlined_call_operand.vmem [shape: f32[1,32], index: 2, kind: input, shape index: {}]
  %s3 = inlined_call_operand.vmem [shape: f32[800,32], index: 3, kind: output, shape index: {}]
  %s4 = sld [smem:[#allocation0]]
  $region22: #{nature_tqn_forward.4} parent=0
    _
  %s6 = ssub.s32 1, %s4
  %s7 = scalar_select 0, %s6, %s4
  // Predicated region
  $region2: #{nature_tqn_forward.4} parent=0 // pred_check
    _
  $region3: #{nature_tqn_forward.4} parent=0 // pred_check_branch
    %9 = sbr.rel (0) target = $region5
  $region4: #{nature_tqn_forward.4} parent=0 // pred_region
    _
  $region5: #{nature_tqn_forward.4} parent=0 // pred_fallthru
    _
  // Predicated region
  $region6: #{nature_tqn_forward.4} parent=0 // pred_check
    _
  $region7: #{nature_tqn_forward.4} parent=0 // pred_check_branch
    %11 = sbr.rel (0) target = $region9
  $region8: #{nature_tqn_forward.4} parent=0 // pred_region
    _
  $region9: #{nature_tqn_forward.4} parent=0 // pred_fallthru
    _
  // Predicated region
  $region10: #{nature_tqn_forward.4} parent=0 // pred_check
    _
  $region11: #{nature_tqn_forward.4} parent=0 // pred_check_branch
    %13 = sbr.rel (0) target = $region13
  $region12: #{nature_tqn_forward.4} parent=0 // pred_region
    _
  $region13: #{nature_tqn_forward.4} parent=0 // pred_fallthru
    _
  %v15 = vld [vmem:[%s0] sm:$0xff]
  %v16 = vld [vmem:[%s0 + $0x8] sm:$0xff]
  %v17 = vld [vmem:[%s0 + $0x10] sm:$0xff]
  %v18 = vld [vmem:[%s0 + $0x18] sm:$0xff]
  %v19 = vld [vmem:[%s0 + $0x20] sm:$0xff]
  %v20 = vld [vmem:[%s0 + $0x28] sm:$0xff]
  %v21 = vld [vmem:[%s0 + $0x30] sm:$0xff]
  %v22 = vld [vmem:[%s0 + $0x38] sm:$0xff]
  %v23 = vld [vmem:[%s0 + $0x40] sm:$0xff]
  %v24 = vld [vmem:[%s0 + $0x48] sm:$0xff]
  %v25 = vld [vmem:[%s0 + $0x50] sm:$0xff]
  %v26 = vld [vmem:[%s0 + $0x58] sm:$0xff]
  %v27 = vld [vmem:[%s0 + $0x60] sm:$0xff]
  %v28 = vld [vmem:[%s0 + $0x68] sm:$0xff]
  %v29 = vld [vmem:[%s0 + $0x70] sm:$0xff]
  %v30 = vld [vmem:[%s0 + $0x78] sm:$0xff]
  %v31 = vld [vmem:[%s0 + $0x80] sm:$0xff]
  %v32 = vld [vmem:[%s0 + $0x88] sm:$0xff]
  %v33 = vld [vmem:[%s0 + $0x90] sm:$0xff]
  %v34 = vld [vmem:[%s0 + $0x98] sm:$0xff]
  %v35 = vld [vmem:[%s0 + $0xa0] sm:$0xff]
  %v36 = vld [vmem:[%s0 + $0xa8] sm:$0xff]
  %v37 = vld [vmem:[%s0 + $0xb0] sm:$0xff]
  %v38 = vld [vmem:[%s0 + $0xb8] sm:$0xff]
  %v39 = vld [vmem:[%s0 + $0xc0] sm:$0xff]
  %v40 = vld [vmem:[%s0 + $0xc8] sm:$0xff]
  %v41 = vld [vmem:[%s0 + $0xd0] sm:$0xff]
  %v42 = vld [vmem:[%s0 + $0xd8] sm:$0xff]
  %v43 = vld [vmem:[%s0 + $0xe0] sm:$0xff]
  %v44 = vld [vmem:[%s0 + $0xe8] sm:$0xff]
  %v45 = vld [vmem:[%s0 + $0xf0] sm:$0xff]
  %v46 = vld [vmem:[%s0 + $0xf8] sm:$0xff]
  %v47 = vld [vmem:[%s0 + $0x100] sm:$0xff]
  %v48 = vld [vmem:[%s0 + $0x108] sm:$0xff]
  %v49 = vld [vmem:[%s0 + $0x110] sm:$0xff]
  %v50 = vld [vmem:[%s0 + $0x118] sm:$0xff]
  %v51 = vld [vmem:[%s0 + $0x120] sm:$0xff]
  %v52 = vld [vmem:[%s0 + $0x128] sm:$0xff]
  %v53 = vld [vmem:[%s0 + $0x130] sm:$0xff]
  %v54 = vld [vmem:[%s0 + $0x138] sm:$0xff]
  %v55 = vld [vmem:[%s0 + $0x140] sm:$0xff]
  %v56 = vld [vmem:[%s0 + $0x148] sm:$0xff]
  %v57 = vld [vmem:[%s0 + $0x150] sm:$0xff]
  %v58 = vld [vmem:[%s0 + $0x158] sm:$0xff]
  %v59 = vld [vmem:[%s0 + $0x160] sm:$0xff]
  %v60 = vld [vmem:[%s0 + $0x168] sm:$0xff]
  %v61 = vld [vmem:[%s0 + $0x170] sm:$0xff]
  %v62 = vld [vmem:[%s0 + $0x178] sm:$0xff]
  %v63 = vld [vmem:[%s0 + $0x180] sm:$0xff]
  %v64 = vld [vmem:[%s0 + $0x188] sm:$0xff]
  %v65 = vld [vmem:[%s0 + $0x190] sm:$0xff]
  %v66 = vld [vmem:[%s0 + $0x198] sm:$0xff]
  %v67 = vld [vmem:[%s0 + $0x1a0] sm:$0xff]
  %v68 = vld [vmem:[%s0 + $0x1a8] sm:$0xff]
  %v69 = vld [vmem:[%s0 + $0x1b0] sm:$0xff]
  %v70 = vld [vmem:[%s0 + $0x1b8] sm:$0xff]
  %v71 = vld [vmem:[%s0 + $0x1c0] sm:$0xff]
  %v72 = vld [vmem:[%s0 + $0x1c8] sm:$0xff]
  %v73 = vld [vmem:[%s0 + $0x1d0] sm:$0xff]
  %v74 = vld [vmem:[%s0 + $0x1d8] sm:$0xff]
  %v75 = vld [vmem:[%s0 + $0x1e0] sm:$0xff]
  %v76 = vld [vmem:[%s0 + $0x1e8] sm:$0xff]
  %v77 = vld [vmem:[%s0 + $0x1f0] sm:$0xff]
  %v78 = vld [vmem:[%s0 + $0x1f8] sm:$0xff]
  %v79 = vld [vmem:[%s0 + $0x200] sm:$0xff]
  %v80 = vld [vmem:[%s0 + $0x208] sm:$0xff]
  %v81 = vld [vmem:[%s0 + $0x210] sm:$0xff]
  %v82 = vld [vmem:[%s0 + $0x218] sm:$0xff]
  %v83 = vld [vmem:[%s0 + $0x220] sm:$0xff]
  %v84 = vld [vmem:[%s0 + $0x228] sm:$0xff]
  %v85 = vld [vmem:[%s0 + $0x230] sm:$0xff]
  %v86 = vld [vmem:[%s0 + $0x238] sm:$0xff]
  %v87 = vld [vmem:[%s0 + $0x240] sm:$0xff]
  %v88 = vld [vmem:[%s0 + $0x248] sm:$0xff]
  %v89 = vld [vmem:[%s0 + $0x250] sm:$0xff]
  %v90 = vld [vmem:[%s0 + $0x258] sm:$0xff]
  %v91 = vld [vmem:[%s0 + $0x260] sm:$0xff]
  %v92 = vld [vmem:[%s0 + $0x268] sm:$0xff]
  %v93 = vld [vmem:[%s0 + $0x270] sm:$0xff]
  %v94 = vld [vmem:[%s0 + $0x278] sm:$0xff]
  %v95 = vld [vmem:[%s0 + $0x280] sm:$0xff]
  %v96 = vld [vmem:[%s0 + $0x288] sm:$0xff]
  %v97 = vld [vmem:[%s0 + $0x290] sm:$0xff]
  %v98 = vld [vmem:[%s0 + $0x298] sm:$0xff]
  %v99 = vld [vmem:[%s0 + $0x2a0] sm:$0xff]
  %v100 = vld [vmem:[%s0 + $0x2a8] sm:$0xff]
  %v101 = vld [vmem:[%s0 + $0x2b0] sm:$0xff]
  %v102 = vld [vmem:[%s0 + $0x2b8] sm:$0xff]
  %v103 = vld [vmem:[%s0 + $0x2c0] sm:$0xff]
  %v104 = vld [vmem:[%s0 + $0x2c8] sm:$0xff]
  %v105 = vld [vmem:[%s0 + $0x2d0] sm:$0xff]
  %v106 = vld [vmem:[%s0 + $0x2d8] sm:$0xff]
  %v107 = vld [vmem:[%s0 + $0x2e0] sm:$0xff]
  %v108 = vld [vmem:[%s0 + $0x2e8] sm:$0xff]
  %v109 = vld [vmem:[%s0 + $0x2f0] sm:$0xff]
  %v110 = vld [vmem:[%s0 + $0x2f8] sm:$0xff]
  %v111 = vld [vmem:[%s0 + $0x300] sm:$0xff]
  %v112 = vld [vmem:[%s0 + $0x308] sm:$0xff]
  %v113 = vld [vmem:[%s0 + $0x310] sm:$0xff]
  %v114 = vld [vmem:[%s0 + $0x318] sm:$0xff]
  %v115 = vpack.c.bf16 %v16, %v15
  %v116 = vpack.c.bf16 %v18, %v17
  %v117 = vpack.c.bf16 %v20, %v19
  %v118 = vpack.c.bf16 %v22, %v21
  %v119 = vpack.c.bf16 %v24, %v23
  %v120 = vpack.c.bf16 %v26, %v25
  %v121 = vpack.c.bf16 %v28, %v27
  %v122 = vpack.c.bf16 %v30, %v29
  %v123 = vpack.c.bf16 %v32, %v31
  %v124 = vpack.c.bf16 %v34, %v33
  %v125 = vpack.c.bf16 %v36, %v35
  %v126 = vpack.c.bf16 %v38, %v37
  %v127 = vpack.c.bf16 %v40, %v39
  %v128 = vpack.c.bf16 %v42, %v41
  %v129 = vpack.c.bf16 %v44, %v43
  %v130 = vpack.c.bf16 %v46, %v45
  %v131 = vpack.c.bf16 %v48, %v47
  %v132 = vpack.c.bf16 %v50, %v49
  %v133 = vpack.c.bf16 %v52, %v51
  %v134 = vpack.c.bf16 %v54, %v53
  %v135 = vpack.c.bf16 %v56, %v55
  %v136 = vpack.c.bf16 %v58, %v57
  %v137 = vpack.c.bf16 %v60, %v59
  %v138 = vpack.c.bf16 %v62, %v61
  %v139 = vpack.c.bf16 %v64, %v63
  %v140 = vpack.c.bf16 %v66, %v65
  %v141 = vpack.c.bf16 %v68, %v67
  %v142 = vpack.c.bf16 %v70, %v69
  %v143 = vpack.c.bf16 %v72, %v71
  %v144 = vpack.c.bf16 %v74, %v73
  %v145 = vpack.c.bf16 %v76, %v75
  %v146 = vpack.c.bf16 %v78, %v77
  %v147 = vpack.c.bf16 %v80, %v79
  %v148 = vpack.c.bf16 %v82, %v81
  %v149 = vpack.c.bf16 %v84, %v83
  %v150 = vpack.c.bf16 %v86, %v85
  %v151 = vpack.c.bf16 %v88, %v87
  %v152 = vpack.c.bf16 %v90, %v89
  %v153 = vpack.c.bf16 %v92, %v91
  %v154 = vpack.c.bf16 %v94, %v93
  %v155 = vpack.c.bf16 %v96, %v95
  %v156 = vpack.c.bf16 %v98, %v97
  %v157 = vpack.c.bf16 %v100, %v99
  %v158 = vpack.c.bf16 %v102, %v101
  %v159 = vpack.c.bf16 %v104, %v103
  %v160 = vpack.c.bf16 %v106, %v105
  %v161 = vpack.c.bf16 %v108, %v107
  %v162 = vpack.c.bf16 %v110, %v109
  %v163 = vpack.c.bf16 %v112, %v111
  %v164 = vpack.c.bf16 %v114, %v113
  %v165 = vld [vmem:[%s1] sm:$0xf]
  %v166 = vld [vmem:[%s1 + $0x4] sm:$0xf]
  %v167 = vld [vmem:[%s1 + $0x8] sm:$0xf]
  %v168 = vld [vmem:[%s1 + $0xc] sm:$0xf]
  %v169 = vld [vmem:[%s1 + $0x10] sm:$0xf]
  %v170 = vld [vmem:[%s1 + $0x14] sm:$0xf]
  %v171 = vld [vmem:[%s1 + $0x18] sm:$0xf]
  %v172 = vld [vmem:[%s1 + $0x1c] sm:$0xf]
  %v173 = vld [vmem:[%s2] sm:$0x1]
  %v175 = vperm.slane %v173, 0
  %v185 = vunpack.c.l.b16 %v165
  %v186 = vunpack.c.l.b16 %v166
  %v187 = vunpack.c.l.b16 %v167
  %v188 = vunpack.c.l.b16 %v168
  %v189 = vunpack.c.l.b16 %v169
  %v190 = vunpack.c.l.b16 %v170
  %v191 = vunpack.c.l.b16 %v171
  %v192 = vunpack.c.l.b16 %v172
  %v193 = vpack.c.b16 %v186, %v185
  %v194 = vpack.c.b16 %v188, %v187
  %v195 = vpack.c.b16 %v190, %v189
  %v196 = vpack.c.b16 %v192, %v191
  %vm201 = vcmask 523264
  %v203 = vsel %vm201, %v115, 0
  %v206 = vsel %vm201, %v116, 0
  %v209 = vsel %vm201, %v117, 0
  %v212 = vsel %vm201, %v118, 0
  %v215 = vsel %vm201, %v119, 0
  %v218 = vsel %vm201, %v120, 0
  %v221 = vsel %vm201, %v121, 0
  %v224 = vsel %vm201, %v122, 0
  %v227 = vsel %vm201, %v123, 0
  %v230 = vsel %vm201, %v124, 0
  %v233 = vsel %vm201, %v125, 0
  %v236 = vsel %vm201, %v126, 0
  %v239 = vsel %vm201, %v127, 0
  %v242 = vsel %vm201, %v128, 0
  %v245 = vsel %vm201, %v129, 0
  %v248 = vsel %vm201, %v130, 0
  %v251 = vsel %vm201, %v131, 0
  %v254 = vsel %vm201, %v132, 0
  %v257 = vsel %vm201, %v133, 0
  %v260 = vsel %vm201, %v134, 0
  %v263 = vsel %vm201, %v135, 0
  %v266 = vsel %vm201, %v136, 0
  %v269 = vsel %vm201, %v137, 0
  %v272 = vsel %vm201, %v138, 0
  %v275 = vsel %vm201, %v139, 0
  %v278 = vsel %vm201, %v140, 0
  %v281 = vsel %vm201, %v141, 0
  %v284 = vsel %vm201, %v142, 0
  %v287 = vsel %vm201, %v143, 0
  %v290 = vsel %vm201, %v144, 0
  %v293 = vsel %vm201, %v145, 0
  %v296 = vsel %vm201, %v146, 0
  %v299 = vsel %vm201, %v147, 0
  %v302 = vsel %vm201, %v148, 0
  %v305 = vsel %vm201, %v149, 0
  %v308 = vsel %vm201, %v150, 0
  %v311 = vsel %vm201, %v151, 0
  %v314 = vsel %vm201, %v152, 0
  %v317 = vsel %vm201, %v153, 0
  %v320 = vsel %vm201, %v154, 0
  %v323 = vsel %vm201, %v155, 0
  %v326 = vsel %vm201, %v156, 0
  %v329 = vsel %vm201, %v157, 0
  %v332 = vsel %vm201, %v158, 0
  %v335 = vsel %vm201, %v159, 0
  %v338 = vsel %vm201, %v160, 0
  %v341 = vsel %vm201, %v161, 0
  %v344 = vsel %vm201, %v162, 0
  %v347 = vsel %vm201, %v163, 0
  %v350 = vsel %vm201, %v164, 0
  %352 = vmatpush.bf16.msra.mxu0 0
  %353 = vmatpush.bf16.msra.mxu0 0
  %354 = vmatpush.bf16.msra.mxu0 0
  %355 = vmatpush.bf16.msra.mxu0 0
  %356 = vmatpush.bf16.msra.mxu0 %v196
  %357 = vmatpush.bf16.msra.mxu0 %v195
  %358 = vmatpush.bf16.msra.mxu0 %v194
  %359 = vmatpush.bf16.msra.mxu0 %v193
  %360 = vmatmul.bf16.gmra.mxu0 %v203
  %v361 = vpop.f32.mrf.mxu0
  %v362 = vadd.f32 %v175, %v361
  %v363 = vpop.f32.mrf.mxu0
  %v364 = vadd.f32 %v175, %v363
  %365 = vmatmul.bf16.gmra.mxu0 %v206
  %v366 = vpop.f32.mrf.mxu0
  %v367 = vadd.f32 %v175, %v366
  %v368 = vpop.f32.mrf.mxu0
  %v369 = vadd.f32 %v175, %v368
  %370 = vmatmul.bf16.gmra.mxu0 %v209
  %v371 = vpop.f32.mrf.mxu0
  %v372 = vadd.f32 %v175, %v371
  %v373 = vpop.f32.mrf.mxu0
  %v374 = vadd.f32 %v175, %v373
  %375 = vmatmul.bf16.gmra.mxu0 %v212
  %v376 = vpop.f32.mrf.mxu0
  %v377 = vadd.f32 %v175, %v376
  %v378 = vpop.f32.mrf.mxu0
  %v379 = vadd.f32 %v175, %v378
  %380 = vmatmul.bf16.gmra.mxu0 %v215
  %v381 = vpop.f32.mrf.mxu0
  %v382 = vadd.f32 %v175, %v381
  %v383 = vpop.f32.mrf.mxu0
  %v384 = vadd.f32 %v175, %v383
  %385 = vmatmul.bf16.gmra.mxu0 %v218
  %v386 = vpop.f32.mrf.mxu0
  %v387 = vadd.f32 %v175, %v386
  %v388 = vpop.f32.mrf.mxu0
  %v389 = vadd.f32 %v175, %v388
  %390 = vmatmul.bf16.gmra.mxu0 %v221
  %v391 = vpop.f32.mrf.mxu0
  %v392 = vadd.f32 %v175, %v391
  %v393 = vpop.f32.mrf.mxu0
  %v394 = vadd.f32 %v175, %v393
  %395 = vmatmul.bf16.gmra.mxu0 %v224
  %v396 = vpop.f32.mrf.mxu0
  %v397 = vadd.f32 %v175, %v396
  %v398 = vpop.f32.mrf.mxu0
  %v399 = vadd.f32 %v175, %v398
  %400 = vmatmul.bf16.gmra.mxu0 %v227
  %v401 = vpop.f32.mrf.mxu0
  %v402 = vadd.f32 %v175, %v401
  %v403 = vpop.f32.mrf.mxu0
  %v404 = vadd.f32 %v175, %v403
  %405 = vmatmul.bf16.gmra.mxu0 %v230
  %v406 = vpop.f32.mrf.mxu0
  %v407 = vadd.f32 %v175, %v406
  %v408 = vpop.f32.mrf.mxu0
  %v409 = vadd.f32 %v175, %v408
  %410 = vmatmul.bf16.gmra.mxu0 %v233
  %v411 = vpop.f32.mrf.mxu0
  %v412 = vadd.f32 %v175, %v411
  %v413 = vpop.f32.mrf.mxu0
  %v414 = vadd.f32 %v175, %v413
  %415 = vmatmul.bf16.gmra.mxu0 %v236
  %v416 = vpop.f32.mrf.mxu0
  %v417 = vadd.f32 %v175, %v416
  %v418 = vpop.f32.mrf.mxu0
  %v419 = vadd.f32 %v175, %v418
  %420 = vmatmul.bf16.gmra.mxu0 %v239
  %v421 = vpop.f32.mrf.mxu0
  %v422 = vadd.f32 %v175, %v421
  %v423 = vpop.f32.mrf.mxu0
  %v424 = vadd.f32 %v175, %v423
  %425 = vmatmul.bf16.gmra.mxu0 %v242
  %v426 = vpop.f32.mrf.mxu0
  %v427 = vadd.f32 %v175, %v426
  %v428 = vpop.f32.mrf.mxu0
  %v429 = vadd.f32 %v175, %v428
  %430 = vmatmul.bf16.gmra.mxu0 %v245
  %v431 = vpop.f32.mrf.mxu0
  %v432 = vadd.f32 %v175, %v431
  %v433 = vpop.f32.mrf.mxu0
  %v434 = vadd.f32 %v175, %v433
  %435 = vmatmul.bf16.gmra.mxu0 %v248
  %v436 = vpop.f32.mrf.mxu0
  %v437 = vadd.f32 %v175, %v436
  %v438 = vpop.f32.mrf.mxu0
  %v439 = vadd.f32 %v175, %v438
  %440 = vmatmul.bf16.gmra.mxu0 %v251
  %v441 = vpop.f32.mrf.mxu0
  %v442 = vadd.f32 %v175, %v441
  %v443 = vpop.f32.mrf.mxu0
  %v444 = vadd.f32 %v175, %v443
  %445 = vmatmul.bf16.gmra.mxu0 %v254
  %v446 = vpop.f32.mrf.mxu0
  %v447 = vadd.f32 %v175, %v446
  %v448 = vpop.f32.mrf.mxu0
  %v449 = vadd.f32 %v175, %v448
  %450 = vmatmul.bf16.gmra.mxu0 %v257
  %v451 = vpop.f32.mrf.mxu0
  %v452 = vadd.f32 %v175, %v451
  %v453 = vpop.f32.mrf.mxu0
  %v454 = vadd.f32 %v175, %v453
  %455 = vmatmul.bf16.gmra.mxu0 %v260
  %v456 = vpop.f32.mrf.mxu0
  %v457 = vadd.f32 %v175, %v456
  %v458 = vpop.f32.mrf.mxu0
  %v459 = vadd.f32 %v175, %v458
  %460 = vmatmul.bf16.gmra.mxu0 %v263
  %v461 = vpop.f32.mrf.mxu0
  %v462 = vadd.f32 %v175, %v461
  %v463 = vpop.f32.mrf.mxu0
  %v464 = vadd.f32 %v175, %v463
  %465 = vmatmul.bf16.gmra.mxu0 %v266
  %v466 = vpop.f32.mrf.mxu0
  %v467 = vadd.f32 %v175, %v466
  %v468 = vpop.f32.mrf.mxu0
  %v469 = vadd.f32 %v175, %v468
  %470 = vmatmul.bf16.gmra.mxu0 %v269
  %v471 = vpop.f32.mrf.mxu0
  %v472 = vadd.f32 %v175, %v471
  %v473 = vpop.f32.mrf.mxu0
  %v474 = vadd.f32 %v175, %v473
  %475 = vmatmul.bf16.gmra.mxu0 %v272
  %v476 = vpop.f32.mrf.mxu0
  %v477 = vadd.f32 %v175, %v476
  %v478 = vpop.f32.mrf.mxu0
  %v479 = vadd.f32 %v175, %v478
  %480 = vmatmul.bf16.gmra.mxu0 %v275
  %v481 = vpop.f32.mrf.mxu0
  %v482 = vadd.f32 %v175, %v481
  %v483 = vpop.f32.mrf.mxu0
  %v484 = vadd.f32 %v175, %v483
  %485 = vmatmul.bf16.gmra.mxu0 %v278
  %v486 = vpop.f32.mrf.mxu0
  %v487 = vadd.f32 %v175, %v486
  %v488 = vpop.f32.mrf.mxu0
  %v489 = vadd.f32 %v175, %v488
  %490 = vmatmul.bf16.gmra.mxu0 %v281
  %v491 = vpop.f32.mrf.mxu0
  %v492 = vadd.f32 %v175, %v491
  %v493 = vpop.f32.mrf.mxu0
  %v494 = vadd.f32 %v175, %v493
  %495 = vmatmul.bf16.gmra.mxu0 %v284
  %v496 = vpop.f32.mrf.mxu0
  %v497 = vadd.f32 %v175, %v496
  %v498 = vpop.f32.mrf.mxu0
  %v499 = vadd.f32 %v175, %v498
  %500 = vmatmul.bf16.gmra.mxu0 %v287
  %v501 = vpop.f32.mrf.mxu0
  %v502 = vadd.f32 %v175, %v501
  %v503 = vpop.f32.mrf.mxu0
  %v504 = vadd.f32 %v175, %v503
  %505 = vmatmul.bf16.gmra.mxu0 %v290
  %v506 = vpop.f32.mrf.mxu0
  %v507 = vadd.f32 %v175, %v506
  %v508 = vpop.f32.mrf.mxu0
  %v509 = vadd.f32 %v175, %v508
  %510 = vmatmul.bf16.gmra.mxu0 %v293
  %v511 = vpop.f32.mrf.mxu0
  %v512 = vadd.f32 %v175, %v511
  %v513 = vpop.f32.mrf.mxu0
  %v514 = vadd.f32 %v175, %v513
  %515 = vmatmul.bf16.gmra.mxu0 %v296
  %v516 = vpop.f32.mrf.mxu0
  %v517 = vadd.f32 %v175, %v516
  %v518 = vpop.f32.mrf.mxu0
  %v519 = vadd.f32 %v175, %v518
  %520 = vmatmul.bf16.gmra.mxu0 %v299
  %v521 = vpop.f32.mrf.mxu0
  %v522 = vadd.f32 %v175, %v521
  %v523 = vpop.f32.mrf.mxu0
  %v524 = vadd.f32 %v175, %v523
  %525 = vmatmul.bf16.gmra.mxu0 %v302
  %v526 = vpop.f32.mrf.mxu0
  %v527 = vadd.f32 %v175, %v526
  %v528 = vpop.f32.mrf.mxu0
  %v529 = vadd.f32 %v175, %v528
  %530 = vmatmul.bf16.gmra.mxu0 %v305
  %v531 = vpop.f32.mrf.mxu0
  %v532 = vadd.f32 %v175, %v531
  %v533 = vpop.f32.mrf.mxu0
  %v534 = vadd.f32 %v175, %v533
  %535 = vmatmul.bf16.gmra.mxu0 %v308
  %v536 = vpop.f32.mrf.mxu0
  %v537 = vadd.f32 %v175, %v536
  %v538 = vpop.f32.mrf.mxu0
  %v539 = vadd.f32 %v175, %v538
  %540 = vmatmul.bf16.gmra.mxu0 %v311
  %v541 = vpop.f32.mrf.mxu0
  %v542 = vadd.f32 %v175, %v541
  %v543 = vpop.f32.mrf.mxu0
  %v544 = vadd.f32 %v175, %v543
  %545 = vmatmul.bf16.gmra.mxu0 %v314
  %v546 = vpop.f32.mrf.mxu0
  %v547 = vadd.f32 %v175, %v546
  %v548 = vpop.f32.mrf.mxu0
  %v549 = vadd.f32 %v175, %v548
  %550 = vmatmul.bf16.gmra.mxu0 %v317
  %v551 = vpop.f32.mrf.mxu0
  %v552 = vadd.f32 %v175, %v551
  %v553 = vpop.f32.mrf.mxu0
  %v554 = vadd.f32 %v175, %v553
  %555 = vmatmul.bf16.gmra.mxu0 %v320
  %v556 = vpop.f32.mrf.mxu0
  %v557 = vadd.f32 %v175, %v556
  %v558 = vpop.f32.mrf.mxu0
  %v559 = vadd.f32 %v175, %v558
  %560 = vmatmul.bf16.gmra.mxu0 %v323
  %v561 = vpop.f32.mrf.mxu0
  %v562 = vadd.f32 %v175, %v561
  %v563 = vpop.f32.mrf.mxu0
  %v564 = vadd.f32 %v175, %v563
  %565 = vmatmul.bf16.gmra.mxu0 %v326
  %v566 = vpop.f32.mrf.mxu0
  %v567 = vadd.f32 %v175, %v566
  %v568 = vpop.f32.mrf.mxu0
  %v569 = vadd.f32 %v175, %v568
  %570 = vmatmul.bf16.gmra.mxu0 %v329
  %v571 = vpop.f32.mrf.mxu0
  %v572 = vadd.f32 %v175, %v571
  %v573 = vpop.f32.mrf.mxu0
  %v574 = vadd.f32 %v175, %v573
  %575 = vmatmul.bf16.gmra.mxu0 %v332
  %v576 = vpop.f32.mrf.mxu0
  %v577 = vadd.f32 %v175, %v576
  %v578 = vpop.f32.mrf.mxu0
  %v579 = vadd.f32 %v175, %v578
  %580 = vmatmul.bf16.gmra.mxu0 %v335
  %v581 = vpop.f32.mrf.mxu0
  %v582 = vadd.f32 %v175, %v581
  %v583 = vpop.f32.mrf.mxu0
  %v584 = vadd.f32 %v175, %v583
  %585 = vmatmul.bf16.gmra.mxu0 %v338
  %v586 = vpop.f32.mrf.mxu0
  %v587 = vadd.f32 %v175, %v586
  %v588 = vpop.f32.mrf.mxu0
  %v589 = vadd.f32 %v175, %v588
  %590 = vmatmul.bf16.gmra.mxu0 %v341
  %v591 = vpop.f32.mrf.mxu0
  %v592 = vadd.f32 %v175, %v591
  %v593 = vpop.f32.mrf.mxu0
  %v594 = vadd.f32 %v175, %v593
  %595 = vmatmul.bf16.gmra.mxu0 %v344
  %v596 = vpop.f32.mrf.mxu0
  %v597 = vadd.f32 %v175, %v596
  %v598 = vpop.f32.mrf.mxu0
  %v599 = vadd.f32 %v175, %v598
  %600 = vmatmul.bf16.gmra.mxu0 %v347
  %v601 = vpop.f32.mrf.mxu0
  %v602 = vadd.f32 %v175, %v601
  %v603 = vpop.f32.mrf.mxu0
  %v604 = vadd.f32 %v175, %v603
  %605 = vmatmul.bf16.gmra.mxu0 %v350
  %v606 = vpop.f32.mrf.mxu0
  %v607 = vadd.f32 %v175, %v606
  %v608 = vpop.f32.mrf.mxu0
  %v609 = vadd.f32 %v175, %v608
  %610 = vdwg.mxu0
  %v611 = vmax.f32 %v362, 0.0
  %v612 = vmax.f32 %v364, 0.0
  %v613 = vmax.f32 %v367, 0.0
  %v614 = vmax.f32 %v369, 0.0
  %v615 = vmax.f32 %v372, 0.0
  %v616 = vmax.f32 %v374, 0.0
  %v617 = vmax.f32 %v377, 0.0
  %v618 = vmax.f32 %v379, 0.0
  %v619 = vmax.f32 %v382, 0.0
  %v620 = vmax.f32 %v384, 0.0
  %v621 = vmax.f32 %v387, 0.0
  %v622 = vmax.f32 %v389, 0.0
  %v623 = vmax.f32 %v392, 0.0
  %v624 = vmax.f32 %v394, 0.0
  %v625 = vmax.f32 %v397, 0.0
  %v626 = vmax.f32 %v399, 0.0
  %v627 = vmax.f32 %v402, 0.0
  %v628 = vmax.f32 %v404, 0.0
  %v629 = vmax.f32 %v407, 0.0
  %v630 = vmax.f32 %v409, 0.0
  %v631 = vmax.f32 %v412, 0.0
  %v632 = vmax.f32 %v414, 0.0
  %v633 = vmax.f32 %v417, 0.0
  %v634 = vmax.f32 %v419, 0.0
  %v635 = vmax.f32 %v422, 0.0
  %v636 = vmax.f32 %v424, 0.0
  %v637 = vmax.f32 %v427, 0.0
  %v638 = vmax.f32 %v429, 0.0
  %v639 = vmax.f32 %v432, 0.0
  %v640 = vmax.f32 %v434, 0.0
  %v641 = vmax.f32 %v437, 0.0
  %v642 = vmax.f32 %v439, 0.0
  %v643 = vmax.f32 %v442, 0.0
  %v644 = vmax.f32 %v444, 0.0
  %v645 = vmax.f32 %v447, 0.0
  %v646 = vmax.f32 %v449, 0.0
  %v647 = vmax.f32 %v452, 0.0
  %v648 = vmax.f32 %v454, 0.0
  %v649 = vmax.f32 %v457, 0.0
  %v650 = vmax.f32 %v459, 0.0
  %v651 = vmax.f32 %v462, 0.0
  %v652 = vmax.f32 %v464, 0.0
  %v653 = vmax.f32 %v467, 0.0
  %v654 = vmax.f32 %v469, 0.0
  %v655 = vmax.f32 %v472, 0.0
  %v656 = vmax.f32 %v474, 0.0
  %v657 = vmax.f32 %v477, 0.0
  %v658 = vmax.f32 %v479, 0.0
  %v659 = vmax.f32 %v482, 0.0
  %v660 = vmax.f32 %v484, 0.0
  %v661 = vmax.f32 %v487, 0.0
  %v662 = vmax.f32 %v489, 0.0
  %v663 = vmax.f32 %v492, 0.0
  %v664 = vmax.f32 %v494, 0.0
  %v665 = vmax.f32 %v497, 0.0
  %v666 = vmax.f32 %v499, 0.0
  %v667 = vmax.f32 %v502, 0.0
  %v668 = vmax.f32 %v504, 0.0
  %v669 = vmax.f32 %v507, 0.0
  %v670 = vmax.f32 %v509, 0.0
  %v671 = vmax.f32 %v512, 0.0
  %v672 = vmax.f32 %v514, 0.0
  %v673 = vmax.f32 %v517, 0.0
  %v674 = vmax.f32 %v519, 0.0
  %v675 = vmax.f32 %v522, 0.0
  %v676 = vmax.f32 %v524, 0.0
  %v677 = vmax.f32 %v527, 0.0
  %v678 = vmax.f32 %v529, 0.0
  %v679 = vmax.f32 %v532, 0.0
  %v680 = vmax.f32 %v534, 0.0
  %v681 = vmax.f32 %v537, 0.0
  %v682 = vmax.f32 %v539, 0.0
  %v683 = vmax.f32 %v542, 0.0
  %v684 = vmax.f32 %v544, 0.0
  %v685 = vmax.f32 %v547, 0.0
  %v686 = vmax.f32 %v549, 0.0
  %v687 = vmax.f32 %v552, 0.0
  %v688 = vmax.f32 %v554, 0.0
  %v689 = vmax.f32 %v557, 0.0
  %v690 = vmax.f32 %v559, 0.0
  %v691 = vmax.f32 %v562, 0.0
  %v692 = vmax.f32 %v564, 0.0
  %v693 = vmax.f32 %v567, 0.0
  %v694 = vmax.f32 %v569, 0.0
  %v695 = vmax.f32 %v572, 0.0
  %v696 = vmax.f32 %v574, 0.0
  %v697 = vmax.f32 %v577, 0.0
  %v698 = vmax.f32 %v579, 0.0
  %v699 = vmax.f32 %v582, 0.0
  %v700 = vmax.f32 %v584, 0.0
  %v701 = vmax.f32 %v587, 0.0
  %v702 = vmax.f32 %v589, 0.0
  %v703 = vmax.f32 %v592, 0.0
  %v704 = vmax.f32 %v594, 0.0
  %v705 = vmax.f32 %v597, 0.0
  %v706 = vmax.f32 %v599, 0.0
  %v707 = vmax.f32 %v602, 0.0
  %v708 = vmax.f32 %v604, 0.0
  %v709 = vmax.f32 %v607, 0.0
  %v710 = vmax.f32 %v609, 0.0
  %vm711 = vcmask 261120
  %712 = vst.msk [vmem:[%s3] sm:$0xff] %vm711, %v611
  %713 = vst.msk [vmem:[%s3 + $0x8] sm:$0xff] %vm711, %v612
  %714 = vst.msk [vmem:[%s3 + $0x10] sm:$0xff] %vm711, %v613
  %715 = vst.msk [vmem:[%s3 + $0x18] sm:$0xff] %vm711, %v614
  %716 = vst.msk [vmem:[%s3 + $0x20] sm:$0xff] %vm711, %v615
  %717 = vst.msk [vmem:[%s3 + $0x28] sm:$0xff] %vm711, %v616
  %718 = vst.msk [vmem:[%s3 + $0x30] sm:$0xff] %vm711, %v617
  %719 = vst.msk [vmem:[%s3 + $0x38] sm:$0xff] %vm711, %v618
  %720 = vst.msk [vmem:[%s3 + $0x40] sm:$0xff] %vm711, %v619
  %721 = vst.msk [vmem:[%s3 + $0x48] sm:$0xff] %vm711, %v620
  %722 = vst.msk [vmem:[%s3 + $0x50] sm:$0xff] %vm711, %v621
  %723 = vst.msk [vmem:[%s3 + $0x58] sm:$0xff] %vm711, %v622
  %724 = vst.msk [vmem:[%s3 + $0x60] sm:$0xff] %vm711, %v623
  %725 = vst.msk [vmem:[%s3 + $0x68] sm:$0xff] %vm711, %v624
  %726 = vst.msk [vmem:[%s3 + $0x70] sm:$0xff] %vm711, %v625
  %727 = vst.msk [vmem:[%s3 + $0x78] sm:$0xff] %vm711, %v626
  %728 = vst.msk [vmem:[%s3 + $0x80] sm:$0xff] %vm711, %v627
  %729 = vst.msk [vmem:[%s3 + $0x88] sm:$0xff] %vm711, %v628
  %730 = vst.msk [vmem:[%s3 + $0x90] sm:$0xff] %vm711, %v629
  %731 = vst.msk [vmem:[%s3 + $0x98] sm:$0xff] %vm711, %v630
  %732 = vst.msk [vmem:[%s3 + $0xa0] sm:$0xff] %vm711, %v631
  %733 = vst.msk [vmem:[%s3 + $0xa8] sm:$0xff] %vm711, %v632
  %734 = vst.msk [vmem:[%s3 + $0xb0] sm:$0xff] %vm711, %v633
  %735 = vst.msk [vmem:[%s3 + $0xb8] sm:$0xff] %vm711, %v634
  %736 = vst.msk [vmem:[%s3 + $0xc0] sm:$0xff] %vm711, %v635
  %737 = vst.msk [vmem:[%s3 + $0xc8] sm:$0xff] %vm711, %v636
  %738 = vst.msk [vmem:[%s3 + $0xd0] sm:$0xff] %vm711, %v637
  %739 = vst.msk [vmem:[%s3 + $0xd8] sm:$0xff] %vm711, %v638
  %740 = vst.msk [vmem:[%s3 + $0xe0] sm:$0xff] %vm711, %v639
  %741 = vst.msk [vmem:[%s3 + $0xe8] sm:$0xff] %vm711, %v640
  %742 = vst.msk [vmem:[%s3 + $0xf0] sm:$0xff] %vm711, %v641
  %743 = vst.msk [vmem:[%s3 + $0xf8] sm:$0xff] %vm711, %v642
  %744 = vst.msk [vmem:[%s3 + $0x100] sm:$0xff] %vm711, %v643
  %745 = vst.msk [vmem:[%s3 + $0x108] sm:$0xff] %vm711, %v644
  %746 = vst.msk [vmem:[%s3 + $0x110] sm:$0xff] %vm711, %v645
  %747 = vst.msk [vmem:[%s3 + $0x118] sm:$0xff] %vm711, %v646
  %748 = vst.msk [vmem:[%s3 + $0x120] sm:$0xff] %vm711, %v647
  %749 = vst.msk [vmem:[%s3 + $0x128] sm:$0xff] %vm711, %v648
  %750 = vst.msk [vmem:[%s3 + $0x130] sm:$0xff] %vm711, %v649
  %751 = vst.msk [vmem:[%s3 + $0x138] sm:$0xff] %vm711, %v650
  %752 = vst.msk [vmem:[%s3 + $0x140] sm:$0xff] %vm711, %v651
  %753 = vst.msk [vmem:[%s3 + $0x148] sm:$0xff] %vm711, %v652
  %754 = vst.msk [vmem:[%s3 + $0x150] sm:$0xff] %vm711, %v653
  %755 = vst.msk [vmem:[%s3 + $0x158] sm:$0xff] %vm711, %v654
  %756 = vst.msk [vmem:[%s3 + $0x160] sm:$0xff] %vm711, %v655
  %757 = vst.msk [vmem:[%s3 + $0x168] sm:$0xff] %vm711, %v656
  %758 = vst.msk [vmem:[%s3 + $0x170] sm:$0xff] %vm711, %v657
  %759 = vst.msk [vmem:[%s3 + $0x178] sm:$0xff] %vm711, %v658
  %760 = vst.msk [vmem:[%s3 + $0x180] sm:$0xff] %vm711, %v659
  %761 = vst.msk [vmem:[%s3 + $0x188] sm:$0xff] %vm711, %v660
  %762 = vst.msk [vmem:[%s3 + $0x190] sm:$0xff] %vm711, %v661
  %763 = vst.msk [vmem:[%s3 + $0x198] sm:$0xff] %vm711, %v662
  %764 = vst.msk [vmem:[%s3 + $0x1a0] sm:$0xff] %vm711, %v663
  %765 = vst.msk [vmem:[%s3 + $0x1a8] sm:$0xff] %vm711, %v664
  %766 = vst.msk [vmem:[%s3 + $0x1b0] sm:$0xff] %vm711, %v665
  %767 = vst.msk [vmem:[%s3 + $0x1b8] sm:$0xff] %vm711, %v666
  %768 = vst.msk [vmem:[%s3 + $0x1c0] sm:$0xff] %vm711, %v667
  %769 = vst.msk [vmem:[%s3 + $0x1c8] sm:$0xff] %vm711, %v668
  %770 = vst.msk [vmem:[%s3 + $0x1d0] sm:$0xff] %vm711, %v669
  %771 = vst.msk [vmem:[%s3 + $0x1d8] sm:$0xff] %vm711, %v670
  %772 = vst.msk [vmem:[%s3 + $0x1e0] sm:$0xff] %vm711, %v671
  %773 = vst.msk [vmem:[%s3 + $0x1e8] sm:$0xff] %vm711, %v672
  %774 = vst.msk [vmem:[%s3 + $0x1f0] sm:$0xff] %vm711, %v673
  %775 = vst.msk [vmem:[%s3 + $0x1f8] sm:$0xff] %vm711, %v674
  %776 = vst.msk [vmem:[%s3 + $0x200] sm:$0xff] %vm711, %v675
  %777 = vst.msk [vmem:[%s3 + $0x208] sm:$0xff] %vm711, %v676
  %778 = vst.msk [vmem:[%s3 + $0x210] sm:$0xff] %vm711, %v677
  %779 = vst.msk [vmem:[%s3 + $0x218] sm:$0xff] %vm711, %v678
  %780 = vst.msk [vmem:[%s3 + $0x220] sm:$0xff] %vm711, %v679
  %781 = vst.msk [vmem:[%s3 + $0x228] sm:$0xff] %vm711, %v680
  %782 = vst.msk [vmem:[%s3 + $0x230] sm:$0xff] %vm711, %v681
  %783 = vst.msk [vmem:[%s3 + $0x238] sm:$0xff] %vm711, %v682
  %784 = vst.msk [vmem:[%s3 + $0x240] sm:$0xff] %vm711, %v683
  %785 = vst.msk [vmem:[%s3 + $0x248] sm:$0xff] %vm711, %v684
  %786 = vst.msk [vmem:[%s3 + $0x250] sm:$0xff] %vm711, %v685
  %787 = vst.msk [vmem:[%s3 + $0x258] sm:$0xff] %vm711, %v686
  %788 = vst.msk [vmem:[%s3 + $0x260] sm:$0xff] %vm711, %v687
  %789 = vst.msk [vmem:[%s3 + $0x268] sm:$0xff] %vm711, %v688
  %790 = vst.msk [vmem:[%s3 + $0x270] sm:$0xff] %vm711, %v689
  %791 = vst.msk [vmem:[%s3 + $0x278] sm:$0xff] %vm711, %v690
  %792 = vst.msk [vmem:[%s3 + $0x280] sm:$0xff] %vm711, %v691
  %793 = vst.msk [vmem:[%s3 + $0x288] sm:$0xff] %vm711, %v692
  %794 = vst.msk [vmem:[%s3 + $0x290] sm:$0xff] %vm711, %v693
  %795 = vst.msk [vmem:[%s3 + $0x298] sm:$0xff] %vm711, %v694
  %796 = vst.msk [vmem:[%s3 + $0x2a0] sm:$0xff] %vm711, %v695
  %797 = vst.msk [vmem:[%s3 + $0x2a8] sm:$0xff] %vm711, %v696
  %798 = vst.msk [vmem:[%s3 + $0x2b0] sm:$0xff] %vm711, %v697
  %799 = vst.msk [vmem:[%s3 + $0x2b8] sm:$0xff] %vm711, %v698
  %800 = vst.msk [vmem:[%s3 + $0x2c0] sm:$0xff] %vm711, %v699
  %801 = vst.msk [vmem:[%s3 + $0x2c8] sm:$0xff] %vm711, %v700
  %802 = vst.msk [vmem:[%s3 + $0x2d0] sm:$0xff] %vm711, %v701
  %803 = vst.msk [vmem:[%s3 + $0x2d8] sm:$0xff] %vm711, %v702
  %804 = vst.msk [vmem:[%s3 + $0x2e0] sm:$0xff] %vm711, %v703
  %805 = vst.msk [vmem:[%s3 + $0x2e8] sm:$0xff] %vm711, %v704
  %806 = vst.msk [vmem:[%s3 + $0x2f0] sm:$0xff] %vm711, %v705
  %807 = vst.msk [vmem:[%s3 + $0x2f8] sm:$0xff] %vm711, %v706
  %808 = vst.msk [vmem:[%s3 + $0x300] sm:$0xff] %vm711, %v707
  %809 = vst.msk [vmem:[%s3 + $0x308] sm:$0xff] %vm711, %v708
  %810 = vst.msk [vmem:[%s3 + $0x310] sm:$0xff] %vm711, %v709
  %811 = vst.msk [vmem:[%s3 + $0x318] sm:$0xff] %vm711, %v710
  // Predicated region
  $region14: #{nature_tqn_forward.4} parent=0 // pred_check
    _
  $region15: #{nature_tqn_forward.4} parent=0 // pred_check_branch
    %813 = sbr.rel (0) target = $region17
  $region16: #{nature_tqn_forward.4} parent=0 // pred_region
    _
  $region17: #{nature_tqn_forward.4} parent=0 // pred_fallthru
    _
  // Predicated region
  $region18: #{nature_tqn_forward.4} parent=0 // pred_check
    _
  $region19: #{nature_tqn_forward.4} parent=0 // pred_check_branch
    %815 = sbr.rel (0) target = $region21
  $region20: #{nature_tqn_forward.4} parent=0 // pred_region
    _
  $region21: #{nature_tqn_forward.4} parent=0 // pred_fallthru
    _

// kernel: nature_tqn_forward.5
$region0: #{nature_tqn_forward.5}
  #allocation0 [shape = 'u32[]', space=smem, size = 0x4, offset = 0x4, fixed_abs, tag = 'smem constant byte address 0x4 - core index']
  #allocation1 [shape = 'u32[72,128]{1,0:T(1,128)}', space=vmem, size = 0x9000, scoped, tag = 'internal scratch']
  %s0 = inlined_call_operand.vmem [shape: f32[162,512], index: 0, kind: input, shape index: {}]
  %s1 = inlined_call_operand.vmem [shape: bf16[512,64], index: 1, kind: input, shape index: {}]
  %s2 = inlined_call_operand.vmem [shape: f32[1,64], index: 2, kind: input, shape index: {}]
  %s3 = inlined_call_operand.vmem [shape: f32[162,64], index: 3, kind: output, shape index: {}]
  %s4 = sld [smem:[#allocation0]]
  $region22: #{nature_tqn_forward.5} parent=0
    _
  %s6 = ssub.s32 1, %s4
  %s7 = scalar_select 0, %s6, %s4
  // Predicated region
  $region2: #{nature_tqn_forward.5} parent=0 // pred_check
    _
  $region3: #{nature_tqn_forward.5} parent=0 // pred_check_branch
    %9 = sbr.rel (0) target = $region5
  $region4: #{nature_tqn_forward.5} parent=0 // pred_region
    _
  $region5: #{nature_tqn_forward.5} parent=0 // pred_fallthru
    _
  // Predicated region
  $region6: #{nature_tqn_forward.5} parent=0 // pred_check
    _
  $region7: #{nature_tqn_forward.5} parent=0 // pred_check_branch
    %11 = sbr.rel (0) target = $region9
  $region8: #{nature_tqn_forward.5} parent=0 // pred_region
    _
  $region9: #{nature_tqn_forward.5} parent=0 // pred_fallthru
    _
  // Predicated region
  $region10: #{nature_tqn_forward.5} parent=0 // pred_check
    _
  $region11: #{nature_tqn_forward.5} parent=0 // pred_check_branch
    %13 = sbr.rel (0) target = $region13
  $region12: #{nature_tqn_forward.5} parent=0 // pred_region
    _
  $region13: #{nature_tqn_forward.5} parent=0 // pred_fallthru
    _
  %v14 = vld [vmem:[%s0] sm:$0xff]
  %v15 = vld [vmem:[%s0 + $0x8] sm:$0xff]
  %v16 = vld [vmem:[%s0 + $0x10] sm:$0xff]
  %v17 = vld [vmem:[%s0 + $0x18] sm:$0xff]
  %v18 = vld [vmem:[%s0 + $0x20] sm:$0xff]
  %v19 = vld [vmem:[%s0 + $0x28] sm:$0xff]
  %v20 = vld [vmem:[%s0 + $0x30] sm:$0xff]
  %v21 = vld [vmem:[%s0 + $0x38] sm:$0xff]
  %v22 = vld [vmem:[%s0 + $0x40] sm:$0xff]
  %v23 = vld [vmem:[%s0 + $0x48] sm:$0xff]
  %v24 = vld [vmem:[%s0 + $0x50] sm:$0xff]
  %v25 = vld [vmem:[%s0 + $0x58] sm:$0xff]
  %v26 = vld [vmem:[%s0 + $0x60] sm:$0xff]
  %v27 = vld [vmem:[%s0 + $0x68] sm:$0xff]
  %v28 = vld [vmem:[%s0 + $0x70] sm:$0xff]
  %v29 = vld [vmem:[%s0 + $0x78] sm:$0xff]
  %v30 = vld [vmem:[%s0 + $0x80] sm:$0xff]
  %v31 = vld [vmem:[%s0 + $0x88] sm:$0xff]
  %v32 = vld [vmem:[%s0 + $0x90] sm:$0xff]
  %v33 = vld [vmem:[%s0 + $0x98] sm:$0xff]
  %v34 = vld [vmem:[%s0 + $0xa0] sm:$0xff]
  %v35 = vld [vmem:[%s0 + $0xa8] sm:$0xff]
  %v36 = vld [vmem:[%s0 + $0xb0] sm:$0xff]
  %v37 = vld [vmem:[%s0 + $0xb8] sm:$0xff]
  %v38 = vld [vmem:[%s0 + $0xc0] sm:$0xff]
  %v39 = vld [vmem:[%s0 + $0xc8] sm:$0xff]
  %v40 = vld [vmem:[%s0 + $0xd0] sm:$0xff]
  %v41 = vld [vmem:[%s0 + $0xd8] sm:$0xff]
  %v42 = vld [vmem:[%s0 + $0xe0] sm:$0xff]
  %v43 = vld [vmem:[%s0 + $0xe8] sm:$0xff]
  %v44 = vld [vmem:[%s0 + $0xf0] sm:$0xff]
  %v45 = vld [vmem:[%s0 + $0xf8] sm:$0xff]
  %v46 = vld [vmem:[%s0 + $0x100] sm:$0xff]
  %v47 = vld [vmem:[%s0 + $0x108] sm:$0xff]
  %v48 = vld [vmem:[%s0 + $0x110] sm:$0xff]
  %v49 = vld [vmem:[%s0 + $0x118] sm:$0xff]
  %v50 = vld [vmem:[%s0 + $0x120] sm:$0xff]
  %v51 = vld [vmem:[%s0 + $0x128] sm:$0xff]
  %v52 = vld [vmem:[%s0 + $0x130] sm:$0xff]
  %v53 = vld [vmem:[%s0 + $0x138] sm:$0xff]
  %v54 = vld [vmem:[%s0 + $0x140] sm:$0xff]
  %v55 = vld [vmem:[%s0 + $0x148] sm:$0xff]
  %v56 = vld [vmem:[%s0 + $0x150] sm:$0xff]
  %v57 = vld [vmem:[%s0 + $0x158] sm:$0xff]
  %v58 = vld [vmem:[%s0 + $0x160] sm:$0xff]
  %v59 = vld [vmem:[%s0 + $0x168] sm:$0xff]
  %v60 = vld [vmem:[%s0 + $0x170] sm:$0xff]
  %v61 = vld [vmem:[%s0 + $0x178] sm:$0xff]
  %v62 = vld [vmem:[%s0 + $0x180] sm:$0xff]
  %v63 = vld [vmem:[%s0 + $0x188] sm:$0xff]
  %v64 = vld [vmem:[%s0 + $0x190] sm:$0xff]
  %v65 = vld [vmem:[%s0 + $0x198] sm:$0xff]
  %v66 = vld [vmem:[%s0 + $0x1a0] sm:$0xff]
  %v67 = vld [vmem:[%s0 + $0x1a8] sm:$0xff]
  %v68 = vld [vmem:[%s0 + $0x1b0] sm:$0xff]
  %v69 = vld [vmem:[%s0 + $0x1b8] sm:$0xff]
  %v70 = vld [vmem:[%s0 + $0x1c0] sm:$0xff]
  %v71 = vld [vmem:[%s0 + $0x1c8] sm:$0xff]
  %v72 = vld [vmem:[%s0 + $0x1d0] sm:$0xff]
  %v73 = vld [vmem:[%s0 + $0x1d8] sm:$0xff]
  %v74 = vld [vmem:[%s0 + $0x1e0] sm:$0xff]
  %v75 = vld [vmem:[%s0 + $0x1e8] sm:$0xff]
  %v76 = vld [vmem:[%s0 + $0x1f0] sm:$0xff]
  %v77 = vld [vmem:[%s0 + $0x1f8] sm:$0xff]
  %v78 = vld [vmem:[%s0 + $0x200] sm:$0xff]
  %v79 = vld [vmem:[%s0 + $0x208] sm:$0xff]
  %v80 = vld [vmem:[%s0 + $0x210] sm:$0xff]
  %v81 = vld [vmem:[%s0 + $0x218] sm:$0xff]
  %v82 = vld [vmem:[%s0 + $0x220] sm:$0xff]
  %v83 = vld [vmem:[%s0 + $0x228] sm:$0xff]
  %v84 = vld [vmem:[%s0 + $0x230] sm:$0xff]
  %v85 = vld [vmem:[%s0 + $0x238] sm:$0xff]
  %v86 = vld [vmem:[%s0 + $0x240] sm:$0xff]
  %v87 = vld [vmem:[%s0 + $0x248] sm:$0xff]
  %v88 = vld [vmem:[%s0 + $0x250] sm:$0xff]
  %v89 = vld [vmem:[%s0 + $0x258] sm:$0xff]
  %v90 = vld [vmem:[%s0 + $0x260] sm:$0xff]
  %v91 = vld [vmem:[%s0 + $0x268] sm:$0xff]
  %v92 = vld [vmem:[%s0 + $0x270] sm:$0xff]
  %v93 = vld [vmem:[%s0 + $0x278] sm:$0xff]
  %v94 = vld [vmem:[%s0 + $0x280] sm:$0x3]
  %v95 = vld [vmem:[%s0 + $0x288] sm:$0x3]
  %v96 = vld [vmem:[%s0 + $0x290] sm:$0x3]
  %v97 = vld [vmem:[%s0 + $0x298] sm:$0x3]
  %v98 = vpack.c.bf16 %v18, %v14
  %v99 = vpack.c.bf16 %v19, %v15
  %v100 = vpack.c.bf16 %v20, %v16
  %v101 = vpack.c.bf16 %v21, %v17
  %v102 = vpack.c.bf16 %v26, %v22
  %v103 = vpack.c.bf16 %v27, %v23
  %v104 = vpack.c.bf16 %v28, %v24
  %v105 = vpack.c.bf16 %v29, %v25
  %v106 = vpack.c.bf16 %v34, %v30
  %v107 = vpack.c.bf16 %v35, %v31
  %v108 = vpack.c.bf16 %v36, %v32
  %v109 = vpack.c.bf16 %v37, %v33
  %v110 = vpack.c.bf16 %v42, %v38
  %v111 = vpack.c.bf16 %v43, %v39
  %v112 = vpack.c.bf16 %v44, %v40
  %v113 = vpack.c.bf16 %v45, %v41
  %v114 = vpack.c.bf16 %v50, %v46
  %v115 = vpack.c.bf16 %v51, %v47
  %v116 = vpack.c.bf16 %v52, %v48
  %v117 = vpack.c.bf16 %v53, %v49
  %v118 = vpack.c.bf16 %v58, %v54
  %v119 = vpack.c.bf16 %v59, %v55
  %v120 = vpack.c.bf16 %v60, %v56
  %v121 = vpack.c.bf16 %v61, %v57
  %v122 = vpack.c.bf16 %v66, %v62
  %v123 = vpack.c.bf16 %v67, %v63
  %v124 = vpack.c.bf16 %v68, %v64
  %v125 = vpack.c.bf16 %v69, %v65
  %v126 = vpack.c.bf16 %v74, %v70
  %v127 = vpack.c.bf16 %v75, %v71
  %v128 = vpack.c.bf16 %v76, %v72
  %v129 = vpack.c.bf16 %v77, %v73
  %v130 = vpack.c.bf16 %v82, %v78
  %v131 = vpack.c.bf16 %v83, %v79
  %v132 = vpack.c.bf16 %v84, %v80
  %v133 = vpack.c.bf16 %v85, %v81
  %v134 = vpack.c.bf16 %v90, %v86
  %v135 = vpack.c.bf16 %v91, %v87
  %v136 = vpack.c.bf16 %v92, %v88
  %v137 = vpack.c.bf16 %v93, %v89
  %v138 = vpack.c.bf16 %v94, %v94
  %v139 = vpack.c.bf16 %v95, %v95
  %v140 = vpack.c.bf16 %v96, %v96
  %v141 = vpack.c.bf16 %v97, %v97
  %v142 = vld [vmem:[%s1] sm:$0xf]
  %v143 = vld [vmem:[%s1 + $0x4] sm:$0xf]
  %v144 = vld [vmem:[%s1 + $0x8] sm:$0xf]
  %v145 = vld [vmem:[%s1 + $0xc] sm:$0xf]
  %v146 = vld [vmem:[%s1 + $0x10] sm:$0xf]
  %v147 = vld [vmem:[%s1 + $0x14] sm:$0xf]
  %v148 = vld [vmem:[%s1 + $0x18] sm:$0xf]
  %v149 = vld [vmem:[%s1 + $0x1c] sm:$0xf]
  %v150 = vld [vmem:[%s1 + $0x20] sm:$0xf]
  %v151 = vld [vmem:[%s1 + $0x24] sm:$0xf]
  %v152 = vld [vmem:[%s1 + $0x28] sm:$0xf]
  %v153 = vld [vmem:[%s1 + $0x2c] sm:$0xf]
  %v154 = vld [vmem:[%s1 + $0x30] sm:$0xf]
  %v155 = vld [vmem:[%s1 + $0x34] sm:$0xf]
  %v156 = vld [vmem:[%s1 + $0x38] sm:$0xf]
  %v157 = vld [vmem:[%s1 + $0x3c] sm:$0xf]
  %v158 = vld [vmem:[%s1 + $0x40] sm:$0xf]
  %v159 = vld [vmem:[%s1 + $0x44] sm:$0xf]
  %v160 = vld [vmem:[%s1 + $0x48] sm:$0xf]
  %v161 = vld [vmem:[%s1 + $0x4c] sm:$0xf]
  %v162 = vld [vmem:[%s1 + $0x50] sm:$0xf]
  %v163 = vld [vmem:[%s1 + $0x54] sm:$0xf]
  %v164 = vld [vmem:[%s1 + $0x58] sm:$0xf]
  %v165 = vld [vmem:[%s1 + $0x5c] sm:$0xf]
  %v166 = vld [vmem:[%s1 + $0x60] sm:$0xf]
  %v167 = vld [vmem:[%s1 + $0x64] sm:$0xf]
  %v168 = vld [vmem:[%s1 + $0x68] sm:$0xf]
  %v169 = vld [vmem:[%s1 + $0x6c] sm:$0xf]
  %v170 = vld [vmem:[%s1 + $0x70] sm:$0xf]
  %v171 = vld [vmem:[%s1 + $0x74] sm:$0xf]
  %v172 = vld [vmem:[%s1 + $0x78] sm:$0xf]
  %v173 = vld [vmem:[%s1 + $0x7c] sm:$0xf]
  %v174 = vld [vmem:[%s1 + $0x80] sm:$0xf]
  %v175 = vld [vmem:[%s1 + $0x84] sm:$0xf]
  %v176 = vld [vmem:[%s1 + $0x88] sm:$0xf]
  %v177 = vld [vmem:[%s1 + $0x8c] sm:$0xf]
  %v178 = vld [vmem:[%s1 + $0x90] sm:$0xf]
  %v179 = vld [vmem:[%s1 + $0x94] sm:$0xf]
  %v180 = vld [vmem:[%s1 + $0x98] sm:$0xf]
  %v181 = vld [vmem:[%s1 + $0x9c] sm:$0xf]
  %v182 = vld [vmem:[%s1 + $0xa0] sm:$0xf]
  %v183 = vld [vmem:[%s1 + $0xa4] sm:$0xf]
  %v184 = vld [vmem:[%s1 + $0xa8] sm:$0xf]
  %v185 = vld [vmem:[%s1 + $0xac] sm:$0xf]
  %v186 = vld [vmem:[%s1 + $0xb0] sm:$0xf]
  %v187 = vld [vmem:[%s1 + $0xb4] sm:$0xf]
  %v188 = vld [vmem:[%s1 + $0xb8] sm:$0xf]
  %v189 = vld [vmem:[%s1 + $0xbc] sm:$0xf]
  %v190 = vld [vmem:[%s1 + $0xc0] sm:$0xf]
  %v191 = vld [vmem:[%s1 + $0xc4] sm:$0xf]
  %v192 = vld [vmem:[%s1 + $0xc8] sm:$0xf]
  %v193 = vld [vmem:[%s1 + $0xcc] sm:$0xf]
  %v194 = vld [vmem:[%s1 + $0xd0] sm:$0xf]
  %v195 = vld [vmem:[%s1 + $0xd4] sm:$0xf]
  %v196 = vld [vmem:[%s1 + $0xd8] sm:$0xf]
  %v197 = vld [vmem:[%s1 + $0xdc] sm:$0xf]
  %v198 = vld [vmem:[%s1 + $0xe0] sm:$0xf]
  %v199 = vld [vmem:[%s1 + $0xe4] sm:$0xf]
  %v200 = vld [vmem:[%s1 + $0xe8] sm:$0xf]
  %v201 = vld [vmem:[%s1 + $0xec] sm:$0xf]
  %v202 = vld [vmem:[%s1 + $0xf0] sm:$0xf]
  %v203 = vld [vmem:[%s1 + $0xf4] sm:$0xf]
  %v204 = vld [vmem:[%s1 + $0xf8] sm:$0xf]
  %v205 = vld [vmem:[%s1 + $0xfc] sm:$0xf]
  %v206 = vld [vmem:[%s2] sm:$0x1]
  %v208 = vperm.slane %v206, 0
  %v274 = vunpack.c.l.b16 %v142
  %v275 = vunpack.c.l.b16 %v143
  %v276 = vunpack.c.l.b16 %v144
  %v277 = vunpack.c.l.b16 %v145
  %v278 = vunpack.c.l.b16 %v146
  %v279 = vunpack.c.l.b16 %v147
  %v280 = vunpack.c.l.b16 %v148
  %v281 = vunpack.c.l.b16 %v149
  %v282 = vunpack.c.l.b16 %v150
  %v283 = vunpack.c.l.b16 %v151
  %v284 = vunpack.c.l.b16 %v152
  %v285 = vunpack.c.l.b16 %v153
  %v286 = vunpack.c.l.b16 %v154
  %v287 = vunpack.c.l.b16 %v155
  %v288 = vunpack.c.l.b16 %v156
  %v289 = vunpack.c.l.b16 %v157
  %v290 = vunpack.c.l.b16 %v158
  %v291 = vunpack.c.l.b16 %v159
  %v292 = vunpack.c.l.b16 %v160
  %v293 = vunpack.c.l.b16 %v161
  %v294 = vunpack.c.l.b16 %v162
  %v295 = vunpack.c.l.b16 %v163
  %v296 = vunpack.c.l.b16 %v164
  %v297 = vunpack.c.l.b16 %v165
  %v298 = vunpack.c.l.b16 %v166
  %v299 = vunpack.c.l.b16 %v167
  %v300 = vunpack.c.l.b16 %v168
  %v301 = vunpack.c.l.b16 %v169
  %v302 = vunpack.c.l.b16 %v170
  %v303 = vunpack.c.l.b16 %v171
  %v304 = vunpack.c.l.b16 %v172
  %v305 = vunpack.c.l.b16 %v173
  %v306 = vunpack.c.l.b16 %v174
  %v307 = vunpack.c.l.b16 %v175
  %v308 = vunpack.c.l.b16 %v176
  %v309 = vunpack.c.l.b16 %v177
  %v310 = vunpack.c.l.b16 %v178
  %v311 = vunpack.c.l.b16 %v179
  %v312 = vunpack.c.l.b16 %v180
  %v313 = vunpack.c.l.b16 %v181
  %v314 = vunpack.c.l.b16 %v182
  %v315 = vunpack.c.l.b16 %v183
  %v316 = vunpack.c.l.b16 %v184
  %v317 = vunpack.c.l.b16 %v185
  %v318 = vunpack.c.l.b16 %v186
  %v319 = vunpack.c.l.b16 %v187
  %v320 = vunpack.c.l.b16 %v188
  %v321 = vunpack.c.l.b16 %v189
  %v322 = vunpack.c.l.b16 %v190
  %v323 = vunpack.c.l.b16 %v191
  %v324 = vunpack.c.l.b16 %v192
  %v325 = vunpack.c.l.b16 %v193
  %v326 = vunpack.c.l.b16 %v194
  %v327 = vunpack.c.l.b16 %v195
  %v328 = vunpack.c.l.b16 %v196
  %v329 = vunpack.c.l.b16 %v197
  %v330 = vunpack.c.l.b16 %v198
  %v331 = vunpack.c.l.b16 %v199
  %v332 = vunpack.c.l.b16 %v200
  %v333 = vunpack.c.l.b16 %v201
  %v334 = vunpack.c.l.b16 %v202
  %v335 = vunpack.c.l.b16 %v203
  %v336 = vunpack.c.l.b16 %v204
  %v337 = vunpack.c.l.b16 %v205
  %v338 = vpack.c.b16 %v275, %v274
  %v339 = vpack.c.b16 %v277, %v276
  %v340 = vpack.c.b16 %v279, %v278
  %v341 = vpack.c.b16 %v281, %v280
  %v342 = vpack.c.b16 %v283, %v282
  %v343 = vpack.c.b16 %v285, %v284
  %v344 = vpack.c.b16 %v287, %v286
  %v345 = vpack.c.b16 %v289, %v288
  %v346 = vpack.c.b16 %v291, %v290
  %v347 = vpack.c.b16 %v293, %v292
  %v348 = vpack.c.b16 %v295, %v294
  %v349 = vpack.c.b16 %v297, %v296
  %v350 = vpack.c.b16 %v299, %v298
  %v351 = vpack.c.b16 %v301, %v300
  %v352 = vpack.c.b16 %v303, %v302
  %v353 = vpack.c.b16 %v305, %v304
  %v354 = vpack.c.b16 %v307, %v306
  %v355 = vpack.c.b16 %v309, %v308
  %v356 = vpack.c.b16 %v311, %v310
  %v357 = vpack.c.b16 %v313, %v312
  %v358 = vpack.c.b16 %v315, %v314
  %v359 = vpack.c.b16 %v317, %v316
  %v360 = vpack.c.b16 %v319, %v318
  %v361 = vpack.c.b16 %v321, %v320
  %v362 = vpack.c.b16 %v323, %v322
  %v363 = vpack.c.b16 %v325, %v324
  %v364 = vpack.c.b16 %v327, %v326
  %v365 = vpack.c.b16 %v329, %v328
  %v366 = vpack.c.b16 %v331, %v330
  %v367 = vpack.c.b16 %v333, %v332
  %v368 = vpack.c.b16 %v335, %v334
  %v369 = vpack.c.b16 %v337, %v336
  %402 = vmatpush.bf16.msra.mxu0 %v345
  %403 = vmatpush.bf16.msra.mxu0 %v344
  %404 = vmatpush.bf16.msra.mxu0 %v343
  %405 = vmatpush.bf16.msra.mxu0 %v342
  %406 = vmatpush.bf16.msra.mxu0 %v341
  %407 = vmatpush.bf16.msra.mxu0 %v340
  %408 = vmatpush.bf16.msra.mxu0 %v339
  %409 = vmatpush.bf16.msra.mxu0 %v338
  %410 = vmatmul.bf16.gmra.mxu0 %v98
  %v411 = vpop.f32.mrf.mxu0
  %v412 = vadd.f32 %v208, %v411
  %v413 = vpop.f32.mrf.mxu0
  %v414 = vadd.f32 %v208, %v413
  %415 = vmatmul.bf16.gmra.mxu0 %v102
  %v416 = vpop.f32.mrf.mxu0
  %v417 = vadd.f32 %v208, %v416
  %v418 = vpop.f32.mrf.mxu0
  %v419 = vadd.f32 %v208, %v418
  %420 = vmatmul.bf16.gmra.mxu0 %v106
  %v421 = vpop.f32.mrf.mxu0
  %v422 = vadd.f32 %v208, %v421
  %v423 = vpop.f32.mrf.mxu0
  %v424 = vadd.f32 %v208, %v423
  %425 = vmatmul.bf16.gmra.mxu0 %v110
  %v426 = vpop.f32.mrf.mxu0
  %v427 = vadd.f32 %v208, %v426
  %v428 = vpop.f32.mrf.mxu0
  %v429 = vadd.f32 %v208, %v428
  %430 = vmatmul.bf16.gmra.mxu0 %v114
  %v431 = vpop.f32.mrf.mxu0
  %v432 = vadd.f32 %v208, %v431
  %v433 = vpop.f32.mrf.mxu0
  %v434 = vadd.f32 %v208, %v433
  %435 = vmatmul.bf16.gmra.mxu0 %v118
  %v436 = vpop.f32.mrf.mxu0
  %v437 = vadd.f32 %v208, %v436
  %v438 = vpop.f32.mrf.mxu0
  %v439 = vadd.f32 %v208, %v438
  %440 = vmatmul.bf16.gmra.mxu0 %v122
  %v441 = vpop.f32.mrf.mxu0
  %v442 = vadd.f32 %v208, %v441
  %v443 = vpop.f32.mrf.mxu0
  %v444 = vadd.f32 %v208, %v443
  %445 = vmatmul.bf16.gmra.mxu0 %v126
  %v446 = vpop.f32.mrf.mxu0
  %v447 = vadd.f32 %v208, %v446
  %v448 = vpop.f32.mrf.mxu0
  %v449 = vadd.f32 %v208, %v448
  %450 = vmatmul.bf16.gmra.mxu0 %v130
  %v451 = vpop.f32.mrf.mxu0
  %v452 = vadd.f32 %v208, %v451
  %v453 = vpop.f32.mrf.mxu0
  %v454 = vadd.f32 %v208, %v453
  %455 = vmatmul.bf16.gmra.mxu0 %v134
  %v456 = vpop.f32.mrf.mxu0
  %v457 = vadd.f32 %v208, %v456
  %v458 = vpop.f32.mrf.mxu0
  %v459 = vadd.f32 %v208, %v458
  %460 = vmatmul.bf16.gmra.mxu0 %v138
  %v461 = vpop.f32.mrf.mxu0
  %v462 = vadd.f32 %v208, %v461
  %v463 = vpop.f32.mrf.mxu0
  %464 = vdwg.mxu0
  %465 = vmatpush.bf16.msra.mxu0 %v353
  %466 = vmatpush.bf16.msra.mxu0 %v352
  %467 = vmatpush.bf16.msra.mxu0 %v351
  %468 = vmatpush.bf16.msra.mxu0 %v350
  %469 = vmatpush.bf16.msra.mxu0 %v349
  %470 = vmatpush.bf16.msra.mxu0 %v348
  %471 = vmatpush.bf16.msra.mxu0 %v347
  %472 = vmatpush.bf16.msra.mxu0 %v346
  %473 = vmatmul.bf16.gmra.mxu0 %v99
  %v474 = vpop.f32.mrf.mxu0
  %v475 = vadd.f32 %v412, %v474
  %v476 = vpop.f32.mrf.mxu0
  %v477 = vadd.f32 %v414, %v476
  %478 = vmatmul.bf16.gmra.mxu0 %v103
  %v479 = vpop.f32.mrf.mxu0
  %v480 = vadd.f32 %v417, %v479
  %v481 = vpop.f32.mrf.mxu0
  %v482 = vadd.f32 %v419, %v481
  %483 = vmatmul.bf16.gmra.mxu0 %v107
  %v484 = vpop.f32.mrf.mxu0
  %v485 = vadd.f32 %v422, %v484
  %v486 = vpop.f32.mrf.mxu0
  %v487 = vadd.f32 %v424, %v486
  %488 = vmatmul.bf16.gmra.mxu0 %v111
  %v489 = vpop.f32.mrf.mxu0
  %v490 = vadd.f32 %v427, %v489
  %v491 = vpop.f32.mrf.mxu0
  %v492 = vadd.f32 %v429, %v491
  %493 = vmatmul.bf16.gmra.mxu0 %v115
  %v494 = vpop.f32.mrf.mxu0
  %v495 = vadd.f32 %v432, %v494
  %v496 = vpop.f32.mrf.mxu0
  %v497 = vadd.f32 %v434, %v496
  %498 = vmatmul.bf16.gmra.mxu0 %v119
  %v499 = vpop.f32.mrf.mxu0
  %v500 = vadd.f32 %v437, %v499
  %v501 = vpop.f32.mrf.mxu0
  %v502 = vadd.f32 %v439, %v501
  %503 = vmatmul.bf16.gmra.mxu0 %v123
  %v504 = vpop.f32.mrf.mxu0
  %v505 = vadd.f32 %v442, %v504
  %v506 = vpop.f32.mrf.mxu0
  %v507 = vadd.f32 %v444, %v506
  %508 = vmatmul.bf16.gmra.mxu0 %v127
  %v509 = vpop.f32.mrf.mxu0
  %v510 = vadd.f32 %v447, %v509
  %v511 = vpop.f32.mrf.mxu0
  %v512 = vadd.f32 %v449, %v511
  %513 = vmatmul.bf16.gmra.mxu0 %v131
  %v514 = vpop.f32.mrf.mxu0
  %v515 = vadd.f32 %v452, %v514
  %v516 = vpop.f32.mrf.mxu0
  %v517 = vadd.f32 %v454, %v516
  %518 = vmatmul.bf16.gmra.mxu0 %v135
  %v519 = vpop.f32.mrf.mxu0
  %v520 = vadd.f32 %v457, %v519
  %v521 = vpop.f32.mrf.mxu0
  %v522 = vadd.f32 %v459, %v521
  %523 = vmatmul.bf16.gmra.mxu0 %v139
  %v524 = vpop.f32.mrf.mxu0
  %v525 = vadd.f32 %v462, %v524
  %v526 = vpop.f32.mrf.mxu0
  %527 = vdwg.mxu0
  %528 = vmatpush.bf16.msra.mxu0 %v361
  %529 = vmatpush.bf16.msra.mxu0 %v360
  %530 = vmatpush.bf16.msra.mxu0 %v359
  %531 = vmatpush.bf16.msra.mxu0 %v358
  %532 = vmatpush.bf16.msra.mxu0 %v357
  %533 = vmatpush.bf16.msra.mxu0 %v356
  %534 = vmatpush.bf16.msra.mxu0 %v355
  %535 = vmatpush.bf16.msra.mxu0 %v354
  %536 = vmatmul.bf16.gmra.mxu0 %v100
  %v537 = vpop.f32.mrf.mxu0
  %v538 = vadd.f32 %v475, %v537
  %v539 = vpop.f32.mrf.mxu0
  %v540 = vadd.f32 %v477, %v539
  %541 = vmatmul.bf16.gmra.mxu0 %v104
  %v542 = vpop.f32.mrf.mxu0
  %v543 = vadd.f32 %v480, %v542
  %v544 = vpop.f32.mrf.mxu0
  %v545 = vadd.f32 %v482, %v544
  %546 = vmatmul.bf16.gmra.mxu0 %v108
  %v547 = vpop.f32.mrf.mxu0
  %v548 = vadd.f32 %v485, %v547
  %v549 = vpop.f32.mrf.mxu0
  %v550 = vadd.f32 %v487, %v549
  %551 = vmatmul.bf16.gmra.mxu0 %v112
  %v552 = vpop.f32.mrf.mxu0
  %v553 = vadd.f32 %v490, %v552
  %v554 = vpop.f32.mrf.mxu0
  %v555 = vadd.f32 %v492, %v554
  %556 = vmatmul.bf16.gmra.mxu0 %v116
  %v557 = vpop.f32.mrf.mxu0
  %v558 = vadd.f32 %v495, %v557
  %v559 = vpop.f32.mrf.mxu0
  %v560 = vadd.f32 %v497, %v559
  %561 = vmatmul.bf16.gmra.mxu0 %v120
  %v562 = vpop.f32.mrf.mxu0
  %v563 = vadd.f32 %v500, %v562
  %v564 = vpop.f32.mrf.mxu0
  %v565 = vadd.f32 %v502, %v564
  %566 = vmatmul.bf16.gmra.mxu0 %v124
  %v567 = vpop.f32.mrf.mxu0
  %v568 = vadd.f32 %v505, %v567
  %v569 = vpop.f32.mrf.mxu0
  %v570 = vadd.f32 %v507, %v569
  %571 = vmatmul.bf16.gmra.mxu0 %v128
  %v572 = vpop.f32.mrf.mxu0
  %v573 = vadd.f32 %v510, %v572
  %v574 = vpop.f32.mrf.mxu0
  %v575 = vadd.f32 %v512, %v574
  %576 = vmatmul.bf16.gmra.mxu0 %v132
  %v577 = vpop.f32.mrf.mxu0
  %v578 = vadd.f32 %v515, %v577
  %v579 = vpop.f32.mrf.mxu0
  %v580 = vadd.f32 %v517, %v579
  %581 = vmatmul.bf16.gmra.mxu0 %v136
  %v582 = vpop.f32.mrf.mxu0
  %v583 = vadd.f32 %v520, %v582
  %v584 = vpop.f32.mrf.mxu0
  %v585 = vadd.f32 %v522, %v584
  %586 = vmatmul.bf16.gmra.mxu0 %v140
  %v587 = vpop.f32.mrf.mxu0
  %v588 = vadd.f32 %v525, %v587
  %v589 = vpop.f32.mrf.mxu0
  %590 = vdwg.mxu0
  %591 = vmatpush.bf16.msra.mxu0 %v369
  %592 = vmatpush.bf16.msra.mxu0 %v368
  %593 = vmatpush.bf16.msra.mxu0 %v367
  %594 = vmatpush.bf16.msra.mxu0 %v366
  %595 = vmatpush.bf16.msra.mxu0 %v365
  %596 = vmatpush.bf16.msra.mxu0 %v364
  %597 = vmatpush.bf16.msra.mxu0 %v363
  %598 = vmatpush.bf16.msra.mxu0 %v362
  %599 = vmatmul.bf16.gmra.mxu0 %v101
  %v600 = vpop.f32.mrf.mxu0
  %v601 = vadd.f32 %v538, %v600
  %v602 = vpop.f32.mrf.mxu0
  %v603 = vadd.f32 %v540, %v602
  %604 = vmatmul.bf16.gmra.mxu0 %v105
  %v605 = vpop.f32.mrf.mxu0
  %v606 = vadd.f32 %v543, %v605
  %v607 = vpop.f32.mrf.mxu0
  %v608 = vadd.f32 %v545, %v607
  %609 = vmatmul.bf16.gmra.mxu0 %v109
  %v610 = vpop.f32.mrf.mxu0
  %v611 = vadd.f32 %v548, %v610
  %v612 = vpop.f32.mrf.mxu0
  %v613 = vadd.f32 %v550, %v612
  %614 = vmatmul.bf16.gmra.mxu0 %v113
  %v615 = vpop.f32.mrf.mxu0
  %v616 = vadd.f32 %v553, %v615
  %v617 = vpop.f32.mrf.mxu0
  %v618 = vadd.f32 %v555, %v617
  %619 = vmatmul.bf16.gmra.mxu0 %v117
  %v620 = vpop.f32.mrf.mxu0
  %v621 = vadd.f32 %v558, %v620
  %v622 = vpop.f32.mrf.mxu0
  %v623 = vadd.f32 %v560, %v622
  %624 = vmatmul.bf16.gmra.mxu0 %v121
  %v625 = vpop.f32.mrf.mxu0
  %v626 = vadd.f32 %v563, %v625
  %v627 = vpop.f32.mrf.mxu0
  %v628 = vadd.f32 %v565, %v627
  %629 = vmatmul.bf16.gmra.mxu0 %v125
  %v630 = vpop.f32.mrf.mxu0
  %v631 = vadd.f32 %v568, %v630
  %v632 = vpop.f32.mrf.mxu0
  %v633 = vadd.f32 %v570, %v632
  %634 = vmatmul.bf16.gmra.mxu0 %v129
  %v635 = vpop.f32.mrf.mxu0
  %v636 = vadd.f32 %v573, %v635
  %v637 = vpop.f32.mrf.mxu0
  %v638 = vadd.f32 %v575, %v637
  %639 = vmatmul.bf16.gmra.mxu0 %v133
  %v640 = vpop.f32.mrf.mxu0
  %v641 = vadd.f32 %v578, %v640
  %v642 = vpop.f32.mrf.mxu0
  %v643 = vadd.f32 %v580, %v642
  %644 = vmatmul.bf16.gmra.mxu0 %v137
  %v645 = vpop.f32.mrf.mxu0
  %v646 = vadd.f32 %v583, %v645
  %v647 = vpop.f32.mrf.mxu0
  %v648 = vadd.f32 %v585, %v647
  %649 = vmatmul.bf16.gmra.mxu0 %v141
  %v650 = vpop.f32.mrf.mxu0
  %v651 = vadd.f32 %v588, %v650
  %v652 = vpop.f32.mrf.mxu0
  %653 = vdwg.mxu0
  %v654 = vmax.f32 %v601, 0.0
  %v655 = vmax.f32 %v603, 0.0
  %v656 = vmax.f32 %v606, 0.0
  %v657 = vmax.f32 %v608, 0.0
  %v658 = vmax.f32 %v611, 0.0
  %v659 = vmax.f32 %v613, 0.0
  %v660 = vmax.f32 %v616, 0.0
  %v661 = vmax.f32 %v618, 0.0
  %v662 = vmax.f32 %v621, 0.0
  %v663 = vmax.f32 %v623, 0.0
  %v664 = vmax.f32 %v626, 0.0
  %v665 = vmax.f32 %v628, 0.0
  %v666 = vmax.f32 %v631, 0.0
  %v667 = vmax.f32 %v633, 0.0
  %v668 = vmax.f32 %v636, 0.0
  %v669 = vmax.f32 %v638, 0.0
  %v670 = vmax.f32 %v641, 0.0
  %v671 = vmax.f32 %v643, 0.0
  %v672 = vmax.f32 %v646, 0.0
  %v673 = vmax.f32 %v648, 0.0
  %v674 = vmax.f32 %v651, 0.0
  %vm675 = vcmask 523264
  %676 = vst.msk [vmem:[%s3] sm:$0xff] %vm675, %v654
  %677 = vst.msk [vmem:[%s3 + $0x8] sm:$0xff] %vm675, %v655
  %678 = vst.msk [vmem:[%s3 + $0x10] sm:$0xff] %vm675, %v656
  %679 = vst.msk [vmem:[%s3 + $0x18] sm:$0xff] %vm675, %v657
  %680 = vst.msk [vmem:[%s3 + $0x20] sm:$0xff] %vm675, %v658
  %681 = vst.msk [vmem:[%s3 + $0x28] sm:$0xff] %vm675, %v659
  %682 = vst.msk [vmem:[%s3 + $0x30] sm:$0xff] %vm675, %v660
  %683 = vst.msk [vmem:[%s3 + $0x38] sm:$0xff] %vm675, %v661
  %684 = vst.msk [vmem:[%s3 + $0x40] sm:$0xff] %vm675, %v662
  %685 = vst.msk [vmem:[%s3 + $0x48] sm:$0xff] %vm675, %v663
  %686 = vst.msk [vmem:[%s3 + $0x50] sm:$0xff] %vm675, %v664
  %687 = vst.msk [vmem:[%s3 + $0x58] sm:$0xff] %vm675, %v665
  %688 = vst.msk [vmem:[%s3 + $0x60] sm:$0xff] %vm675, %v666
  %689 = vst.msk [vmem:[%s3 + $0x68] sm:$0xff] %vm675, %v667
  %690 = vst.msk [vmem:[%s3 + $0x70] sm:$0xff] %vm675, %v668
  %691 = vst.msk [vmem:[%s3 + $0x78] sm:$0xff] %vm675, %v669
  %692 = vst.msk [vmem:[%s3 + $0x80] sm:$0xff] %vm675, %v670
  %693 = vst.msk [vmem:[%s3 + $0x88] sm:$0xff] %vm675, %v671
  %694 = vst.msk [vmem:[%s3 + $0x90] sm:$0xff] %vm675, %v672
  %695 = vst.msk [vmem:[%s3 + $0x98] sm:$0xff] %vm675, %v673
  %vm696 = vcmask 517120
  %697 = vst.msk [vmem:[%s3 + $0xa0] sm:$0x3] %vm696, %v674
  // Predicated region
  $region14: #{nature_tqn_forward.5} parent=0 // pred_check
    _
  $region15: #{nature_tqn_forward.5} parent=0 // pred_check_branch
    %699 = sbr.rel (0) target = $region17
  $region16: #{nature_tqn_forward.5} parent=0 // pred_region
    _
  $region17: #{nature_tqn_forward.5} parent=0 // pred_fallthru
    _
  // Predicated region
  $region18: #{nature_tqn_forward.5} parent=0 // pred_check
    _
  $region19: #{nature_tqn_forward.5} parent=0 // pred_check_branch
    %701 = sbr.rel (0) target = $region21
  $region20: #{nature_tqn_forward.5} parent=0 // pred_region
    _
  $region21: #{nature_tqn_forward.5} parent=0 // pred_fallthru
    _

// kernel: nature_tqn_forward.6
$region0: #{nature_tqn_forward.6}
  #allocation0 [shape = 'u32[]', space=smem, size = 0x4, offset = 0x4, fixed_abs, tag = 'smem constant byte address 0x4 - core index']
  #allocation1 [shape = 'u32[72,128]{1,0:T(1,128)}', space=vmem, size = 0x9000, scoped, tag = 'internal scratch']
  %s0 = inlined_call_operand.vmem [shape: f32[98,576], index: 0, kind: input, shape index: {}]
  %s1 = inlined_call_operand.vmem [shape: bf16[576,64], index: 1, kind: input, shape index: {}]
  %s2 = inlined_call_operand.vmem [shape: f32[1,64], index: 2, kind: input, shape index: {}]
  %s3 = inlined_call_operand.vmem [shape: f32[98,64], index: 3, kind: output, shape index: {}]
  %s4 = sld [smem:[#allocation0]]
  $region22: #{nature_tqn_forward.6} parent=0
    _
  %s6 = ssub.s32 1, %s4
  %s7 = scalar_select 0, %s6, %s4
  // Predicated region
  $region2: #{nature_tqn_forward.6} parent=0 // pred_check
    _
  $region3: #{nature_tqn_forward.6} parent=0 // pred_check_branch
    %9 = sbr.rel (0) target = $region5
  $region4: #{nature_tqn_forward.6} parent=0 // pred_region
    _
  $region5: #{nature_tqn_forward.6} parent=0 // pred_fallthru
    _
  // Predicated region
  $region6: #{nature_tqn_forward.6} parent=0 // pred_check
    _
  $region7: #{nature_tqn_forward.6} parent=0 // pred_check_branch
    %11 = sbr.rel (0) target = $region9
  $region8: #{nature_tqn_forward.6} parent=0 // pred_region
    _
  $region9: #{nature_tqn_forward.6} parent=0 // pred_fallthru
    _
  // Predicated region
  $region10: #{nature_tqn_forward.6} parent=0 // pred_check
    _
  $region11: #{nature_tqn_forward.6} parent=0 // pred_check_branch
    %13 = sbr.rel (0) target = $region13
  $region12: #{nature_tqn_forward.6} parent=0 // pred_region
    _
  $region13: #{nature_tqn_forward.6} parent=0 // pred_fallthru
    _
  %v15 = vld [vmem:[%s0] sm:$0xff]
  %v16 = vld [vmem:[%s0 + $0x8] sm:$0xff]
  %v17 = vld [vmem:[%s0 + $0x10] sm:$0xff]
  %v18 = vld [vmem:[%s0 + $0x18] sm:$0xff]
  %v19 = vld [vmem:[%s0 + $0x20] sm:$0xff]
  %v20 = vld [vmem:[%s0 + $0x28] sm:$0xff]
  %v21 = vld [vmem:[%s0 + $0x30] sm:$0xff]
  %v22 = vld [vmem:[%s0 + $0x38] sm:$0xff]
  %v23 = vld [vmem:[%s0 + $0x40] sm:$0xff]
  %v24 = vld [vmem:[%s0 + $0x48] sm:$0xff]
  %v25 = vld [vmem:[%s0 + $0x50] sm:$0xff]
  %v26 = vld [vmem:[%s0 + $0x58] sm:$0xff]
  %v27 = vld [vmem:[%s0 + $0x60] sm:$0xff]
  %v28 = vld [vmem:[%s0 + $0x68] sm:$0xff]
  %v29 = vld [vmem:[%s0 + $0x70] sm:$0xff]
  %v30 = vld [vmem:[%s0 + $0x78] sm:$0xff]
  %v31 = vld [vmem:[%s0 + $0x80] sm:$0xff]
  %v32 = vld [vmem:[%s0 + $0x88] sm:$0xff]
  %v33 = vld [vmem:[%s0 + $0x90] sm:$0xff]
  %v34 = vld [vmem:[%s0 + $0x98] sm:$0xff]
  %v35 = vld [vmem:[%s0 + $0xa0] sm:$0xff]
  %v36 = vld [vmem:[%s0 + $0xa8] sm:$0xff]
  %v37 = vld [vmem:[%s0 + $0xb0] sm:$0xff]
  %v38 = vld [vmem:[%s0 + $0xb8] sm:$0xff]
  %v39 = vld [vmem:[%s0 + $0xc0] sm:$0xff]
  %v40 = vld [vmem:[%s0 + $0xc8] sm:$0xff]
  %v41 = vld [vmem:[%s0 + $0xd0] sm:$0xff]
  %v42 = vld [vmem:[%s0 + $0xd8] sm:$0xff]
  %v43 = vld [vmem:[%s0 + $0xe0] sm:$0xff]
  %v44 = vld [vmem:[%s0 + $0xe8] sm:$0xff]
  %v45 = vld [vmem:[%s0 + $0xf0] sm:$0xff]
  %v46 = vld [vmem:[%s0 + $0xf8] sm:$0xff]
  %v47 = vld [vmem:[%s0 + $0x100] sm:$0xff]
  %v48 = vld [vmem:[%s0 + $0x108] sm:$0xff]
  %v49 = vld [vmem:[%s0 + $0x110] sm:$0xff]
  %v50 = vld [vmem:[%s0 + $0x118] sm:$0xff]
  %v51 = vld [vmem:[%s0 + $0x120] sm:$0xff]
  %v52 = vld [vmem:[%s0 + $0x128] sm:$0xff]
  %v53 = vld [vmem:[%s0 + $0x130] sm:$0xff]
  %v54 = vld [vmem:[%s0 + $0x138] sm:$0xff]
  %v55 = vld [vmem:[%s0 + $0x140] sm:$0xff]
  %v56 = vld [vmem:[%s0 + $0x148] sm:$0xff]
  %v57 = vld [vmem:[%s0 + $0x150] sm:$0xff]
  %v58 = vld [vmem:[%s0 + $0x158] sm:$0xff]
  %v59 = vld [vmem:[%s0 + $0x160] sm:$0xff]
  %v60 = vld [vmem:[%s0 + $0x168] sm:$0xff]
  %v61 = vld [vmem:[%s0 + $0x170] sm:$0xff]
  %v62 = vld [vmem:[%s0 + $0x178] sm:$0xff]
  %v63 = vld [vmem:[%s0 + $0x180] sm:$0xff]
  %v64 = vld [vmem:[%s0 + $0x188] sm:$0xff]
  %v65 = vld [vmem:[%s0 + $0x190] sm:$0xff]
  %v66 = vld [vmem:[%s0 + $0x198] sm:$0xff]
  %v67 = vld [vmem:[%s0 + $0x1a0] sm:$0xff]
  %v68 = vld [vmem:[%s0 + $0x1a8] sm:$0xff]
  %v69 = vld [vmem:[%s0 + $0x1b0] sm:$0xff]
  %v70 = vld [vmem:[%s0 + $0x1b8] sm:$0xff]
  %v71 = vld [vmem:[%s0 + $0x1c0] sm:$0xff]
  %v72 = vld [vmem:[%s0 + $0x1c8] sm:$0xff]
  %v73 = vld [vmem:[%s0 + $0x1d0] sm:$0xff]
  %v74 = vld [vmem:[%s0 + $0x1d8] sm:$0xff]
  %v75 = vld [vmem:[%s0 + $0x1e0] sm:$0x3]
  %v76 = vld [vmem:[%s0 + $0x1e8] sm:$0x3]
  %v77 = vld [vmem:[%s0 + $0x1f0] sm:$0x3]
  %v78 = vld [vmem:[%s0 + $0x1f8] sm:$0x3]
  %v79 = vld [vmem:[%s0 + $0x200] sm:$0x3]
  %v80 = vpack.c.bf16 %v20, %v15
  %v81 = vpack.c.bf16 %v21, %v16
  %v82 = vpack.c.bf16 %v22, %v17
  %v83 = vpack.c.bf16 %v23, %v18
  %v84 = vpack.c.bf16 %v24, %v19
  %v85 = vpack.c.bf16 %v30, %v25
  %v86 = vpack.c.bf16 %v31, %v26
  %v87 = vpack.c.bf16 %v32, %v27
  %v88 = vpack.c.bf16 %v33, %v28
  %v89 = vpack.c.bf16 %v34, %v29
  %v90 = vpack.c.bf16 %v40, %v35
  %v91 = vpack.c.bf16 %v41, %v36
  %v92 = vpack.c.bf16 %v42, %v37
  %v93 = vpack.c.bf16 %v43, %v38
  %v94 = vpack.c.bf16 %v44, %v39
  %v95 = vpack.c.bf16 %v50, %v45
  %v96 = vpack.c.bf16 %v51, %v46
  %v97 = vpack.c.bf16 %v52, %v47
  %v98 = vpack.c.bf16 %v53, %v48
  %v99 = vpack.c.bf16 %v54, %v49
  %v100 = vpack.c.bf16 %v60, %v55
  %v101 = vpack.c.bf16 %v61, %v56
  %v102 = vpack.c.bf16 %v62, %v57
  %v103 = vpack.c.bf16 %v63, %v58
  %v104 = vpack.c.bf16 %v64, %v59
  %v105 = vpack.c.bf16 %v70, %v65
  %v106 = vpack.c.bf16 %v71, %v66
  %v107 = vpack.c.bf16 %v72, %v67
  %v108 = vpack.c.bf16 %v73, %v68
  %v109 = vpack.c.bf16 %v74, %v69
  %v110 = vpack.c.bf16 %v75, %v75
  %v111 = vpack.c.bf16 %v76, %v76
  %v112 = vpack.c.bf16 %v77, %v77
  %v113 = vpack.c.bf16 %v78, %v78
  %v114 = vpack.c.bf16 %v79, %v79
  %v115 = vld [vmem:[%s1] sm:$0xf]
  %v116 = vld [vmem:[%s1 + $0x4] sm:$0xf]
  %v117 = vld [vmem:[%s1 + $0x8] sm:$0xf]
  %v118 = vld [vmem:[%s1 + $0xc] sm:$0xf]
  %v119 = vld [vmem:[%s1 + $0x10] sm:$0xf]
  %v120 = vld [vmem:[%s1 + $0x14] sm:$0xf]
  %v121 = vld [vmem:[%s1 + $0x18] sm:$0xf]
  %v122 = vld [vmem:[%s1 + $0x1c] sm:$0xf]
  %v123 = vld [vmem:[%s1 + $0x20] sm:$0xf]
  %v124 = vld [vmem:[%s1 + $0x24] sm:$0xf]
  %v125 = vld [vmem:[%s1 + $0x28] sm:$0xf]
  %v126 = vld [vmem:[%s1 + $0x2c] sm:$0xf]
  %v127 = vld [vmem:[%s1 + $0x30] sm:$0xf]
  %v128 = vld [vmem:[%s1 + $0x34] sm:$0xf]
  %v129 = vld [vmem:[%s1 + $0x38] sm:$0xf]
  %v130 = vld [vmem:[%s1 + $0x3c] sm:$0xf]
  %v131 = vld [vmem:[%s1 + $0x40] sm:$0xf]
  %v132 = vld [vmem:[%s1 + $0x44] sm:$0xf]
  %v133 = vld [vmem:[%s1 + $0x48] sm:$0xf]
  %v134 = vld [vmem:[%s1 + $0x4c] sm:$0xf]
  %v135 = vld [vmem:[%s1 + $0x50] sm:$0xf]
  %v136 = vld [vmem:[%s1 + $0x54] sm:$0xf]
  %v137 = vld [vmem:[%s1 + $0x58] sm:$0xf]
  %v138 = vld [vmem:[%s1 + $0x5c] sm:$0xf]
  %v139 = vld [vmem:[%s1 + $0x60] sm:$0xf]
  %v140 = vld [vmem:[%s1 + $0x64] sm:$0xf]
  %v141 = vld [vmem:[%s1 + $0x68] sm:$0xf]
  %v142 = vld [vmem:[%s1 + $0x6c] sm:$0xf]
  %v143 = vld [vmem:[%s1 + $0x70] sm:$0xf]
  %v144 = vld [vmem:[%s1 + $0x74] sm:$0xf]
  %v145 = vld [vmem:[%s1 + $0x78] sm:$0xf]
  %v146 = vld [vmem:[%s1 + $0x7c] sm:$0xf]
  %v147 = vld [vmem:[%s1 + $0x80] sm:$0xf]
  %v148 = vld [vmem:[%s1 + $0x84] sm:$0xf]
  %v149 = vld [vmem:[%s1 + $0x88] sm:$0xf]
  %v150 = vld [vmem:[%s1 + $0x8c] sm:$0xf]
  %v151 = vld [vmem:[%s1 + $0x90] sm:$0xf]
  %v152 = vld [vmem:[%s1 + $0x94] sm:$0xf]
  %v153 = vld [vmem:[%s1 + $0x98] sm:$0xf]
  %v154 = vld [vmem:[%s1 + $0x9c] sm:$0xf]
  %v155 = vld [vmem:[%s1 + $0xa0] sm:$0xf]
  %v156 = vld [vmem:[%s1 + $0xa4] sm:$0xf]
  %v157 = vld [vmem:[%s1 + $0xa8] sm:$0xf]
  %v158 = vld [vmem:[%s1 + $0xac] sm:$0xf]
  %v159 = vld [vmem:[%s1 + $0xb0] sm:$0xf]
  %v160 = vld [vmem:[%s1 + $0xb4] sm:$0xf]
  %v161 = vld [vmem:[%s1 + $0xb8] sm:$0xf]
  %v162 = vld [vmem:[%s1 + $0xbc] sm:$0xf]
  %v163 = vld [vmem:[%s1 + $0xc0] sm:$0xf]
  %v164 = vld [vmem:[%s1 + $0xc4] sm:$0xf]
  %v165 = vld [vmem:[%s1 + $0xc8] sm:$0xf]
  %v166 = vld [vmem:[%s1 + $0xcc] sm:$0xf]
  %v167 = vld [vmem:[%s1 + $0xd0] sm:$0xf]
  %v168 = vld [vmem:[%s1 + $0xd4] sm:$0xf]
  %v169 = vld [vmem:[%s1 + $0xd8] sm:$0xf]
  %v170 = vld [vmem:[%s1 + $0xdc] sm:$0xf]
  %v171 = vld [vmem:[%s1 + $0xe0] sm:$0xf]
  %v172 = vld [vmem:[%s1 + $0xe4] sm:$0xf]
  %v173 = vld [vmem:[%s1 + $0xe8] sm:$0xf]
  %v174 = vld [vmem:[%s1 + $0xec] sm:$0xf]
  %v175 = vld [vmem:[%s1 + $0xf0] sm:$0xf]
  %v176 = vld [vmem:[%s1 + $0xf4] sm:$0xf]
  %v177 = vld [vmem:[%s1 + $0xf8] sm:$0xf]
  %v178 = vld [vmem:[%s1 + $0xfc] sm:$0xf]
  %v179 = vld [vmem:[%s1 + $0x100] sm:$0xf]
  %v180 = vld [vmem:[%s1 + $0x104] sm:$0xf]
  %v181 = vld [vmem:[%s1 + $0x108] sm:$0xf]
  %v182 = vld [vmem:[%s1 + $0x10c] sm:$0xf]
  %v183 = vld [vmem:[%s1 + $0x110] sm:$0xf]
  %v184 = vld [vmem:[%s1 + $0x114] sm:$0xf]
  %v185 = vld [vmem:[%s1 + $0x118] sm:$0xf]
  %v186 = vld [vmem:[%s1 + $0x11c] sm:$0xf]
  %v187 = vld [vmem:[%s2] sm:$0x1]
  %v189 = vperm.slane %v187, 0
  %v263 = vunpack.c.l.b16 %v115
  %v264 = vunpack.c.l.b16 %v116
  %v265 = vunpack.c.l.b16 %v117
  %v266 = vunpack.c.l.b16 %v118
  %v267 = vunpack.c.l.b16 %v119
  %v268 = vunpack.c.l.b16 %v120
  %v269 = vunpack.c.l.b16 %v121
  %v270 = vunpack.c.l.b16 %v122
  %v271 = vunpack.c.l.b16 %v123
  %v272 = vunpack.c.l.b16 %v124
  %v273 = vunpack.c.l.b16 %v125
  %v274 = vunpack.c.l.b16 %v126
  %v275 = vunpack.c.l.b16 %v127
  %v276 = vunpack.c.l.b16 %v128
  %v277 = vunpack.c.l.b16 %v129
  %v278 = vunpack.c.l.b16 %v130
  %v279 = vunpack.c.l.b16 %v131
  %v280 = vunpack.c.l.b16 %v132
  %v281 = vunpack.c.l.b16 %v133
  %v282 = vunpack.c.l.b16 %v134
  %v283 = vunpack.c.l.b16 %v135
  %v284 = vunpack.c.l.b16 %v136
  %v285 = vunpack.c.l.b16 %v137
  %v286 = vunpack.c.l.b16 %v138
  %v287 = vunpack.c.l.b16 %v139
  %v288 = vunpack.c.l.b16 %v140
  %v289 = vunpack.c.l.b16 %v141
  %v290 = vunpack.c.l.b16 %v142
  %v291 = vunpack.c.l.b16 %v143
  %v292 = vunpack.c.l.b16 %v144
  %v293 = vunpack.c.l.b16 %v145
  %v294 = vunpack.c.l.b16 %v146
  %v295 = vunpack.c.l.b16 %v147
  %v296 = vunpack.c.l.b16 %v148
  %v297 = vunpack.c.l.b16 %v149
  %v298 = vunpack.c.l.b16 %v150
  %v299 = vunpack.c.l.b16 %v151
  %v300 = vunpack.c.l.b16 %v152
  %v301 = vunpack.c.l.b16 %v153
  %v302 = vunpack.c.l.b16 %v154
  %v303 = vunpack.c.l.b16 %v155
  %v304 = vunpack.c.l.b16 %v156
  %v305 = vunpack.c.l.b16 %v157
  %v306 = vunpack.c.l.b16 %v158
  %v307 = vunpack.c.l.b16 %v159
  %v308 = vunpack.c.l.b16 %v160
  %v309 = vunpack.c.l.b16 %v161
  %v310 = vunpack.c.l.b16 %v162
  %v311 = vunpack.c.l.b16 %v163
  %v312 = vunpack.c.l.b16 %v164
  %v313 = vunpack.c.l.b16 %v165
  %v314 = vunpack.c.l.b16 %v166
  %v315 = vunpack.c.l.b16 %v167
  %v316 = vunpack.c.l.b16 %v168
  %v317 = vunpack.c.l.b16 %v169
  %v318 = vunpack.c.l.b16 %v170
  %v319 = vunpack.c.l.b16 %v171
  %v320 = vunpack.c.l.b16 %v172
  %v321 = vunpack.c.l.b16 %v173
  %v322 = vunpack.c.l.b16 %v174
  %v323 = vunpack.c.l.b16 %v175
  %v324 = vunpack.c.l.b16 %v176
  %v325 = vunpack.c.l.b16 %v177
  %v326 = vunpack.c.l.b16 %v178
  %v327 = vunpack.c.l.b16 %v179
  %v328 = vunpack.c.l.b16 %v180
  %v329 = vunpack.c.l.b16 %v181
  %v330 = vunpack.c.l.b16 %v182
  %v331 = vunpack.c.l.b16 %v183
  %v332 = vunpack.c.l.b16 %v184
  %v333 = vunpack.c.l.b16 %v185
  %v334 = vunpack.c.l.b16 %v186
  %v335 = vpack.c.b16 %v264, %v263
  %v336 = vpack.c.b16 %v266, %v265
  %v337 = vpack.c.b16 %v268, %v267
  %v338 = vpack.c.b16 %v270, %v269
  %v339 = vpack.c.b16 %v272, %v271
  %v340 = vpack.c.b16 %v274, %v273
  %v341 = vpack.c.b16 %v276, %v275
  %v342 = vpack.c.b16 %v278, %v277
  %v343 = vpack.c.b16 %v280, %v279
  %v344 = vpack.c.b16 %v282, %v281
  %v345 = vpack.c.b16 %v284, %v283
  %v346 = vpack.c.b16 %v286, %v285
  %v347 = vpack.c.b16 %v288, %v287
  %v348 = vpack.c.b16 %v290, %v289
  %v349 = vpack.c.b16 %v292, %v291
  %v350 = vpack.c.b16 %v294, %v293
  %v351 = vpack.c.b16 %v296, %v295
  %v352 = vpack.c.b16 %v298, %v297
  %v353 = vpack.c.b16 %v300, %v299
  %v354 = vpack.c.b16 %v302, %v301
  %v355 = vpack.c.b16 %v304, %v303
  %v356 = vpack.c.b16 %v306, %v305
  %v357 = vpack.c.b16 %v308, %v307
  %v358 = vpack.c.b16 %v310, %v309
  %v359 = vpack.c.b16 %v312, %v311
  %v360 = vpack.c.b16 %v314, %v313
  %v361 = vpack.c.b16 %v316, %v315
  %v362 = vpack.c.b16 %v318, %v317
  %v363 = vpack.c.b16 %v320, %v319
  %v364 = vpack.c.b16 %v322, %v321
  %v365 = vpack.c.b16 %v324, %v323
  %v366 = vpack.c.b16 %v326, %v325
  %v367 = vpack.c.b16 %v328, %v327
  %v368 = vpack.c.b16 %v330, %v329
  %v369 = vpack.c.b16 %v332, %v331
  %v370 = vpack.c.b16 %v334, %v333
  %vm407 = vcmask 523264
  %v409 = vsel %vm407, %v84, 0
  %v412 = vsel %vm407, %v89, 0
  %v415 = vsel %vm407, %v94, 0
  %v418 = vsel %vm407, %v99, 0
  %v421 = vsel %vm407, %v104, 0
  %v424 = vsel %vm407, %v109, 0
  %v427 = vsel %vm407, %v114, 0
  %429 = vmatpush.bf16.msra.mxu0 %v342
  %430 = vmatpush.bf16.msra.mxu0 %v341
  %431 = vmatpush.bf16.msra.mxu0 %v340
  %432 = vmatpush.bf16.msra.mxu0 %v339
  %433 = vmatpush.bf16.msra.mxu0 %v338
  %434 = vmatpush.bf16.msra.mxu0 %v337
  %435 = vmatpush.bf16.msra.mxu0 %v336
  %436 = vmatpush.bf16.msra.mxu0 %v335
  %437 = vmatmul.bf16.gmra.mxu0 %v80
  %v438 = vpop.f32.mrf.mxu0
  %v439 = vadd.f32 %v189, %v438
  %v440 = vpop.f32.mrf.mxu0
  %v441 = vadd.f32 %v189, %v440
  %442 = vmatmul.bf16.gmra.mxu0 %v85
  %v443 = vpop.f32.mrf.mxu0
  %v444 = vadd.f32 %v189, %v443
  %v445 = vpop.f32.mrf.mxu0
  %v446 = vadd.f32 %v189, %v445
  %447 = vmatmul.bf16.gmra.mxu0 %v90
  %v448 = vpop.f32.mrf.mxu0
  %v449 = vadd.f32 %v189, %v448
  %v450 = vpop.f32.mrf.mxu0
  %v451 = vadd.f32 %v189, %v450
  %452 = vmatmul.bf16.gmra.mxu0 %v95
  %v453 = vpop.f32.mrf.mxu0
  %v454 = vadd.f32 %v189, %v453
  %v455 = vpop.f32.mrf.mxu0
  %v456 = vadd.f32 %v189, %v455
  %457 = vmatmul.bf16.gmra.mxu0 %v100
  %v458 = vpop.f32.mrf.mxu0
  %v459 = vadd.f32 %v189, %v458
  %v460 = vpop.f32.mrf.mxu0
  %v461 = vadd.f32 %v189, %v460
  %462 = vmatmul.bf16.gmra.mxu0 %v105
  %v463 = vpop.f32.mrf.mxu0
  %v464 = vadd.f32 %v189, %v463
  %v465 = vpop.f32.mrf.mxu0
  %v466 = vadd.f32 %v189, %v465
  %467 = vmatmul.bf16.gmra.mxu0 %v110
  %v468 = vpop.f32.mrf.mxu0
  %v469 = vadd.f32 %v189, %v468
  %v470 = vpop.f32.mrf.mxu0
  %471 = vdwg.mxu0
  %472 = vmatpush.bf16.msra.mxu0 %v350
  %473 = vmatpush.bf16.msra.mxu0 %v349
  %474 = vmatpush.bf16.msra.mxu0 %v348
  %475 = vmatpush.bf16.msra.mxu0 %v347
  %476 = vmatpush.bf16.msra.mxu0 %v346
  %477 = vmatpush.bf16.msra.mxu0 %v345
  %478 = vmatpush.bf16.msra.mxu0 %v344
  %479 = vmatpush.bf16.msra.mxu0 %v343
  %480 = vmatmul.bf16.gmra.mxu0 %v81
  %v481 = vpop.f32.mrf.mxu0
  %v482 = vadd.f32 %v439, %v481
  %v483 = vpop.f32.mrf.mxu0
  %v484 = vadd.f32 %v441, %v483
  %485 = vmatmul.bf16.gmra.mxu0 %v86
  %v486 = vpop.f32.mrf.mxu0
  %v487 = vadd.f32 %v444, %v486
  %v488 = vpop.f32.mrf.mxu0
  %v489 = vadd.f32 %v446, %v488
  %490 = vmatmul.bf16.gmra.mxu0 %v91
  %v491 = vpop.f32.mrf.mxu0
  %v492 = vadd.f32 %v449, %v491
  %v493 = vpop.f32.mrf.mxu0
  %v494 = vadd.f32 %v451, %v493
  %495 = vmatmul.bf16.gmra.mxu0 %v96
  %v496 = vpop.f32.mrf.mxu0
  %v497 = vadd.f32 %v454, %v496
  %v498 = vpop.f32.mrf.mxu0
  %v499 = vadd.f32 %v456, %v498
  %500 = vmatmul.bf16.gmra.mxu0 %v101
  %v501 = vpop.f32.mrf.mxu0
  %v502 = vadd.f32 %v459, %v501
  %v503 = vpop.f32.mrf.mxu0
  %v504 = vadd.f32 %v461, %v503
  %505 = vmatmul.bf16.gmra.mxu0 %v106
  %v506 = vpop.f32.mrf.mxu0
  %v507 = vadd.f32 %v464, %v506
  %v508 = vpop.f32.mrf.mxu0
  %v509 = vadd.f32 %v466, %v508
  %510 = vmatmul.bf16.gmra.mxu0 %v111
  %v511 = vpop.f32.mrf.mxu0
  %v512 = vadd.f32 %v469, %v511
  %v513 = vpop.f32.mrf.mxu0
  %514 = vdwg.mxu0
  %515 = vmatpush.bf16.msra.mxu0 %v358
  %516 = vmatpush.bf16.msra.mxu0 %v357
  %517 = vmatpush.bf16.msra.mxu0 %v356
  %518 = vmatpush.bf16.msra.mxu0 %v355
  %519 = vmatpush.bf16.msra.mxu0 %v354
  %520 = vmatpush.bf16.msra.mxu0 %v353
  %521 = vmatpush.bf16.msra.mxu0 %v352
  %522 = vmatpush.bf16.msra.mxu0 %v351
  %523 = vmatmul.bf16.gmra.mxu0 %v82
  %v524 = vpop.f32.mrf.mxu0
  %v525 = vadd.f32 %v482, %v524
  %v526 = vpop.f32.mrf.mxu0
  %v527 = vadd.f32 %v484, %v526
  %528 = vmatmul.bf16.gmra.mxu0 %v87
  %v529 = vpop.f32.mrf.mxu0
  %v530 = vadd.f32 %v487, %v529
  %v531 = vpop.f32.mrf.mxu0
  %v532 = vadd.f32 %v489, %v531
  %533 = vmatmul.bf16.gmra.mxu0 %v92
  %v534 = vpop.f32.mrf.mxu0
  %v535 = vadd.f32 %v492, %v534
  %v536 = vpop.f32.mrf.mxu0
  %v537 = vadd.f32 %v494, %v536
  %538 = vmatmul.bf16.gmra.mxu0 %v97
  %v539 = vpop.f32.mrf.mxu0
  %v540 = vadd.f32 %v497, %v539
  %v541 = vpop.f32.mrf.mxu0
  %v542 = vadd.f32 %v499, %v541
  %543 = vmatmul.bf16.gmra.mxu0 %v102
  %v544 = vpop.f32.mrf.mxu0
  %v545 = vadd.f32 %v502, %v544
  %v546 = vpop.f32.mrf.mxu0
  %v547 = vadd.f32 %v504, %v546
  %548 = vmatmul.bf16.gmra.mxu0 %v107
  %v549 = vpop.f32.mrf.mxu0
  %v550 = vadd.f32 %v507, %v549
  %v551 = vpop.f32.mrf.mxu0
  %v552 = vadd.f32 %v509, %v551
  %553 = vmatmul.bf16.gmra.mxu0 %v112
  %v554 = vpop.f32.mrf.mxu0
  %v555 = vadd.f32 %v512, %v554
  %v556 = vpop.f32.mrf.mxu0
  %557 = vdwg.mxu0
  %558 = vmatpush.bf16.msra.mxu0 %v366
  %559 = vmatpush.bf16.msra.mxu0 %v365
  %560 = vmatpush.bf16.msra.mxu0 %v364
  %561 = vmatpush.bf16.msra.mxu0 %v363
  %562 = vmatpush.bf16.msra.mxu0 %v362
  %563 = vmatpush.bf16.msra.mxu0 %v361
  %564 = vmatpush.bf16.msra.mxu0 %v360
  %565 = vmatpush.bf16.msra.mxu0 %v359
  %566 = vmatmul.bf16.gmra.mxu0 %v83
  %v567 = vpop.f32.mrf.mxu0
  %v568 = vadd.f32 %v525, %v567
  %v569 = vpop.f32.mrf.mxu0
  %v570 = vadd.f32 %v527, %v569
  %571 = vmatmul.bf16.gmra.mxu0 %v88
  %v572 = vpop.f32.mrf.mxu0
  %v573 = vadd.f32 %v530, %v572
  %v574 = vpop.f32.mrf.mxu0
  %v575 = vadd.f32 %v532, %v574
  %576 = vmatmul.bf16.gmra.mxu0 %v93
  %v577 = vpop.f32.mrf.mxu0
  %v578 = vadd.f32 %v535, %v577
  %v579 = vpop.f32.mrf.mxu0
  %v580 = vadd.f32 %v537, %v579
  %581 = vmatmul.bf16.gmra.mxu0 %v98
  %v582 = vpop.f32.mrf.mxu0
  %v583 = vadd.f32 %v540, %v582
  %v584 = vpop.f32.mrf.mxu0
  %v585 = vadd.f32 %v542, %v584
  %586 = vmatmul.bf16.gmra.mxu0 %v103
  %v587 = vpop.f32.mrf.mxu0
  %v588 = vadd.f32 %v545, %v587
  %v589 = vpop.f32.mrf.mxu0
  %v590 = vadd.f32 %v547, %v589
  %591 = vmatmul.bf16.gmra.mxu0 %v108
  %v592 = vpop.f32.mrf.mxu0
  %v593 = vadd.f32 %v550, %v592
  %v594 = vpop.f32.mrf.mxu0
  %v595 = vadd.f32 %v552, %v594
  %596 = vmatmul.bf16.gmra.mxu0 %v113
  %v597 = vpop.f32.mrf.mxu0
  %v598 = vadd.f32 %v555, %v597
  %v599 = vpop.f32.mrf.mxu0
  %600 = vdwg.mxu0
  %601 = vmatpush.bf16.msra.mxu0 0
  %602 = vmatpush.bf16.msra.mxu0 0
  %603 = vmatpush.bf16.msra.mxu0 0
  %604 = vmatpush.bf16.msra.mxu0 0
  %605 = vmatpush.bf16.msra.mxu0 %v370
  %606 = vmatpush.bf16.msra.mxu0 %v369
  %607 = vmatpush.bf16.msra.mxu0 %v368
  %608 = vmatpush.bf16.msra.mxu0 %v367
  %609 = vmatmul.bf16.gmra.mxu0 %v409
  %v610 = vpop.f32.mrf.mxu0
  %v611 = vadd.f32 %v568, %v610
  %v612 = vpop.f32.mrf.mxu0
  %v613 = vadd.f32 %v570, %v612
  %614 = vmatmul.bf16.gmra.mxu0 %v412
  %v615 = vpop.f32.mrf.mxu0
  %v616 = vadd.f32 %v573, %v615
  %v617 = vpop.f32.mrf.mxu0
  %v618 = vadd.f32 %v575, %v617
  %619 = vmatmul.bf16.gmra.mxu0 %v415
  %v620 = vpop.f32.mrf.mxu0
  %v621 = vadd.f32 %v578, %v620
  %v622 = vpop.f32.mrf.mxu0
  %v623 = vadd.f32 %v580, %v622
  %624 = vmatmul.bf16.gmra.mxu0 %v418
  %v625 = vpop.f32.mrf.mxu0
  %v626 = vadd.f32 %v583, %v625
  %v627 = vpop.f32.mrf.mxu0
  %v628 = vadd.f32 %v585, %v627
  %629 = vmatmul.bf16.gmra.mxu0 %v421
  %v630 = vpop.f32.mrf.mxu0
  %v631 = vadd.f32 %v588, %v630
  %v632 = vpop.f32.mrf.mxu0
  %v633 = vadd.f32 %v590, %v632
  %634 = vmatmul.bf16.gmra.mxu0 %v424
  %v635 = vpop.f32.mrf.mxu0
  %v636 = vadd.f32 %v593, %v635
  %v637 = vpop.f32.mrf.mxu0
  %v638 = vadd.f32 %v595, %v637
  %639 = vmatmul.bf16.gmra.mxu0 %v427
  %v640 = vpop.f32.mrf.mxu0
  %v641 = vadd.f32 %v598, %v640
  %v642 = vpop.f32.mrf.mxu0
  %643 = vdwg.mxu0
  %v644 = vmax.f32 %v611, 0.0
  %v645 = vmax.f32 %v613, 0.0
  %v646 = vmax.f32 %v616, 0.0
  %v647 = vmax.f32 %v618, 0.0
  %v648 = vmax.f32 %v621, 0.0
  %v649 = vmax.f32 %v623, 0.0
  %v650 = vmax.f32 %v626, 0.0
  %v651 = vmax.f32 %v628, 0.0
  %v652 = vmax.f32 %v631, 0.0
  %v653 = vmax.f32 %v633, 0.0
  %v654 = vmax.f32 %v636, 0.0
  %v655 = vmax.f32 %v638, 0.0
  %v656 = vmax.f32 %v641, 0.0
  %657 = vst.msk [vmem:[%s3] sm:$0xff] %vm407, %v644
  %658 = vst.msk [vmem:[%s3 + $0x8] sm:$0xff] %vm407, %v645
  %659 = vst.msk [vmem:[%s3 + $0x10] sm:$0xff] %vm407, %v646
  %660 = vst.msk [vmem:[%s3 + $0x18] sm:$0xff] %vm407, %v647
  %661 = vst.msk [vmem:[%s3 + $0x20] sm:$0xff] %vm407, %v648
  %662 = vst.msk [vmem:[%s3 + $0x28] sm:$0xff] %vm407, %v649
  %663 = vst.msk [vmem:[%s3 + $0x30] sm:$0xff] %vm407, %v650
  %664 = vst.msk [vmem:[%s3 + $0x38] sm:$0xff] %vm407, %v651
  %665 = vst.msk [vmem:[%s3 + $0x40] sm:$0xff] %vm407, %v652
  %666 = vst.msk [vmem:[%s3 + $0x48] sm:$0xff] %vm407, %v653
  %667 = vst.msk [vmem:[%s3 + $0x50] sm:$0xff] %vm407, %v654
  %668 = vst.msk [vmem:[%s3 + $0x58] sm:$0xff] %vm407, %v655
  %vm669 = vcmask 517120
  %670 = vst.msk [vmem:[%s3 + $0x60] sm:$0x3] %vm669, %v656
  // Predicated region
  $region14: #{nature_tqn_forward.6} parent=0 // pred_check
    _
  $region15: #{nature_tqn_forward.6} parent=0 // pred_check_branch
    %672 = sbr.rel (0) target = $region17
  $region16: #{nature_tqn_forward.6} parent=0 // pred_region
    _
  $region17: #{nature_tqn_forward.6} parent=0 // pred_fallthru
    _
  // Predicated region
  $region18: #{nature_tqn_forward.6} parent=0 // pred_check
    _
  $region19: #{nature_tqn_forward.6} parent=0 // pred_check_branch
    %674 = sbr.rel (0) target = $region21
  $region20: #{nature_tqn_forward.6} parent=0 // pred_region
    _
  $region21: #{nature_tqn_forward.6} parent=0 // pred_fallthru
    _

// kernel: nature_tqn_forward.7
$region0: #{nature_tqn_forward.7}
  #allocation0 [shape = 'u32[]', space=smem, size = 0x4, offset = 0x4, fixed_abs, tag = 'smem constant byte address 0x4 - core index']
  #allocation1 [shape = 'u32[72,128]{1,0:T(1,128)}', space=vmem, size = 0x9000, scoped, tag = 'internal scratch']
  %s0 = inlined_call_operand.vmem [shape: f32[2,3136], index: 0, kind: input, shape index: {}]
  %s1 = inlined_call_operand.vmem [shape: f32[2,1], index: 1, kind: input, shape index: {}]
  %s2 = inlined_call_operand.vmem [shape: bf16[3136,512], index: 2, kind: input, shape index: {}]
  %s3 = inlined_call_operand.vmem [shape: bf16[10,512], index: 3, kind: input, shape index: {}]
  %s4 = inlined_call_operand.vmem [shape: f32[1,512], index: 4, kind: input, shape index: {}]
  %s5 = inlined_call_operand.vmem [shape: f32[1,10], index: 5, kind: input, shape index: {}]
  %s6 = inlined_call_operand.vmem [shape: f32[1,10], index: 6, kind: input, shape index: {}]
  %s7 = inlined_call_operand.vmem [shape: bf16[512,10], index: 7, kind: input, shape index: {}]
  %s8 = inlined_call_operand.vmem [shape: f32[1,10], index: 8, kind: input, shape index: {}]
  %s9 = inlined_call_operand.hbm [shape: f32[2,10], index: 9, kind: output, shape index: {}]
  %s10 = sld [smem:[#allocation0]]
  $region170: #{nature_tqn_forward.7} parent=0
    _
  %s12 = ssub.s32 1, %s10
  %s13 = scalar_select 0, %s12, %s10
  $region1: #{nature_tqn_forward.7} parent=0
    #allocation2 [shape = 'u8[1605632]{0}', space=vmem, size = 0x188000, scoped, tag = 'input window, operand 2']
    #allocation3 [shape = 'u8[8192]{0}', space=vmem, size = 0x2000, scoped, tag = 'input window, operand 3']
    #allocation4 [shape = 'u8[1024]{0}', space=vmem, size = 0x400, scoped, tag = 'output window, operand 0, single buffered']
    #allocation5 [shape = 's32[2]{0}', space=sflag, size = 0x8, scoped, tag = 'scoped memory for nature_tqn_forward.7']
    %14 = vsyncpa [#allocation5], 0
    loop: start=0, step=1, limit=6
    $region2: #{nature_tqn_forward.7} parent=1 // loop_pre_header
      _
    $region3: #{nature_tqn_forward.7} parent=1 // loop_header
      %s16 = sphi 0, %s20
      %p17 = scmp.ge.s32.totalorder %s16, 6
      %s24 = sphi 0, %s24
      %s26 = sphi 0, %s24
      %s27 = sphi 0, %s26
      %s41 = sphi 0, %s27
      %s45 = sphi 0, %s45
      %s47 = sphi 0, %s45
      %s48 = sphi 0, %s47
      %s62 = sphi 0, %s48
      %s68 = sphi 0, %s70
      %s71 = sphi 0, %s68
      %s72 = sphi 0, %s71
      %s88 = sphi 0, %s72
      %s94 = sphi 0, %s96
      %s97 = sphi 0, %s94
      %s98 = sphi 0, %s97
      %s114 = sphi 0, %s98
      %s120 = sphi 0, %s122
      %s123 = sphi 0, %s120
      %s124 = sphi 0, %s123
      %s140 = sphi 0, %s124
      %s144 = sphi 0, %s144
      %s146 = sphi 0, %s144
      %s147 = sphi 0, %s146
      %s161 = sphi 0, %s147
      %s165 = sphi 0, %s165
      %s167 = sphi 0, %s165
      %s168 = sphi 0, %s167
      %s182 = sphi 0, %s168
      %s188 = sphi 0, %s190
      %s191 = sphi 0, %s188
      %s192 = sphi 0, %s191
      %s208 = sphi 0, %s192
      %s212 = sphi 0, %s212
      %s214 = sphi 0, %s212
      %s215 = sphi 0, %s214
      %s229 = sphi 0, %s215
      %s233 = sphi 0, %s233
      %s235 = sphi 0, %s233
      %s236 = sphi 0, %s235
      %s250 = sphi 0, %s236
    $region4: #{nature_tqn_forward.7} parent=1 // loop_header_branch
      %19 = sbr.rel (%p17) target = $region8
    $region5: #{nature_tqn_forward.7} parent=1 // loop_body
      %s21 = ssub.s32 %s16, 1
      %s22 = ssub.s32 %s16, 2
      %s23 = sadd.s32 %s16, 1
      %s25 = sadd.s32 %s24, 1
      %p28 = scmp.eq.s32.totalorder %s16, 3
      %p29 = scmp.ne.s32.totalorder %s24, %s26
      %p30 = scmp.eq.s32.totalorder %s16, 0
      %p31 = por %p29, %p30
      %p32 = scmp.ne.s32.totalorder %s24, %s26
      %p33 = scmp.eq.s32.totalorder %s21, 3
      %p34 = por %p32, %p33
      %p35 = scmp.ne.s32.totalorder %s26, %s27
      %p36 = scmp.eq.s32.totalorder %s21, 0
      %p37 = por %p35, %p36
      %p38 = scmp.ne.s32.totalorder %s26, %s27
      %p39 = scmp.eq.s32.totalorder %s22, 3
      %p40 = por %p38, %p39
      %p42 = scmp.ne.s32.totalorder %s27, %s41
      %p43 = scmp.eq.s32.totalorder %s22, 0
      %p44 = por %p42, %p43
      %s46 = sadd.s32 %s45, 1
      %p49 = scmp.eq.s32.totalorder %s16, 3
      %p50 = scmp.ne.s32.totalorder %s45, %s47
      %p51 = scmp.eq.s32.totalorder %s16, 0
      %p52 = por %p50, %p51
      %p53 = scmp.ne.s32.totalorder %s45, %s47
      %p54 = scmp.eq.s32.totalorder %s21, 3
      %p55 = por %p53, %p54
      %p56 = scmp.ne.s32.totalorder %s47, %s48
      %p57 = scmp.eq.s32.totalorder %s21, 0
      %p58 = por %p56, %p57
      %p59 = scmp.ne.s32.totalorder %s47, %s48
      %p60 = scmp.eq.s32.totalorder %s22, 3
      %p61 = por %p59, %p60
      %p63 = scmp.ne.s32.totalorder %s48, %s62
      %p64 = scmp.eq.s32.totalorder %s22, 0
      %p65 = por %p63, %p64
      %s66 = ssub.s32 %s16, %s23
      %p67 = scmp.eq.s32.totalorder %s66, 0
      %s69 = sadd.s32 %s68, 1
      %s70 = scalar_select %p67, %s68, %s69
      %p73 = pneg %p67
      %p74 = scmp.eq.s32.totalorder %s16, 3
      %p75 = por %p73, %p74
      %p76 = scmp.ne.s32.totalorder %s68, %s71
      %p77 = scmp.eq.s32.totalorder %s16, 0
      %p78 = por %p76, %p77
      %p79 = scmp.ne.s32.totalorder %s68, %s71
      %p80 = scmp.eq.s32.totalorder %s21, 3
      %p81 = por %p79, %p80
      %p82 = scmp.ne.s32.totalorder %s71, %s72
      %p83 = scmp.eq.s32.totalorder %s21, 0
      %p84 = por %p82, %p83
      %p85 = scmp.ne.s32.totalorder %s71, %s72
      %p86 = scmp.eq.s32.totalorder %s22, 3
      %p87 = por %p85, %p86
      %p89 = scmp.ne.s32.totalorder %s72, %s88
      %p90 = scmp.eq.s32.totalorder %s22, 0
      %p91 = por %p89, %p90
      %s92 = ssub.s32 %s16, %s23
      %p93 = scmp.eq.s32.totalorder %s92, 0
      %s95 = sadd.s32 %s94, 1
      %s96 = scalar_select %p93, %s94, %s95
      %p99 = pneg %p93
      %p100 = scmp.eq.s32.totalorder %s16, 3
      %p101 = por %p99, %p100
      %p102 = scmp.ne.s32.totalorder %s94, %s97
      %p103 = scmp.eq.s32.totalorder %s16, 0
      %p104 = por %p102, %p103
      %p105 = scmp.ne.s32.totalorder %s94, %s97
      %p106 = scmp.eq.s32.totalorder %s21, 3
      %p107 = por %p105, %p106
      %p108 = scmp.ne.s32.totalorder %s97, %s98
      %p109 = scmp.eq.s32.totalorder %s21, 0
      %p110 = por %p108, %p109
      %p111 = scmp.ne.s32.totalorder %s97, %s98
      %p112 = scmp.eq.s32.totalorder %s22, 3
      %p113 = por %p111, %p112
      %p115 = scmp.ne.s32.totalorder %s98, %s114
      %p116 = scmp.eq.s32.totalorder %s22, 0
      %p117 = por %p115, %p116
      %s118 = ssub.s32 %s16, %s23
      %p119 = scmp.eq.s32.totalorder %s118, 0
      %s121 = sadd.s32 %s120, 1
      %s122 = scalar_select %p119, %s120, %s121
      %p125 = pneg %p119
      %p126 = scmp.eq.s32.totalorder %s16, 3
      %p127 = por %p125, %p126
      %p128 = scmp.ne.s32.totalorder %s120, %s123
      %p129 = scmp.eq.s32.totalorder %s16, 0
      %p130 = por %p128, %p129
      %p131 = scmp.ne.s32.totalorder %s120, %s123
      %p132 = scmp.eq.s32.totalorder %s21, 3
      %p133 = por %p131, %p132
      %p134 = scmp.ne.s32.totalorder %s123, %s124
      %p135 = scmp.eq.s32.totalorder %s21, 0
      %p136 = por %p134, %p135
      %p137 = scmp.ne.s32.totalorder %s123, %s124
      %p138 = scmp.eq.s32.totalorder %s22, 3
      %p139 = por %p137, %p138
      %p141 = scmp.ne.s32.totalorder %s124, %s140
      %p142 = scmp.eq.s32.totalorder %s22, 0
      %p143 = por %p141, %p142
      %s145 = sadd.s32 %s144, 1
      %p148 = scmp.eq.s32.totalorder %s16, 3
      %p149 = scmp.ne.s32.totalorder %s144, %s146
      %p150 = scmp.eq.s32.totalorder %s16, 0
      %p151 = por %p149, %p150
      %p152 = scmp.ne.s32.totalorder %s144, %s146
      %p153 = scmp.eq.s32.totalorder %s21, 3
      %p154 = por %p152, %p153
      %p155 = scmp.ne.s32.totalorder %s146, %s147
      %p156 = scmp.eq.s32.totalorder %s21, 0
      %p157 = por %p155, %p156
      %p158 = scmp.ne.s32.totalorder %s146, %s147
      %p159 = scmp.eq.s32.totalorder %s22, 3
      %p160 = por %p158, %p159
      %p162 = scmp.ne.s32.totalorder %s147, %s161
      %p163 = scmp.eq.s32.totalorder %s22, 0
      %p164 = por %p162, %p163
      %s166 = sadd.s32 %s165, 1
      %p169 = scmp.eq.s32.totalorder %s16, 3
      %p170 = scmp.ne.s32.totalorder %s165, %s167
      %p171 = scmp.eq.s32.totalorder %s16, 0
      %p172 = por %p170, %p171
      %p173 = scmp.ne.s32.totalorder %s165, %s167
      %p174 = scmp.eq.s32.totalorder %s21, 3
      %p175 = por %p173, %p174
      %p176 = scmp.ne.s32.totalorder %s167, %s168
      %p177 = scmp.eq.s32.totalorder %s21, 0
      %p178 = por %p176, %p177
      %p179 = scmp.ne.s32.totalorder %s167, %s168
      %p180 = scmp.eq.s32.totalorder %s22, 3
      %p181 = por %p179, %p180
      %p183 = scmp.ne.s32.totalorder %s168, %s182
      %p184 = scmp.eq.s32.totalorder %s22, 0
      %p185 = por %p183, %p184
      %s186 = ssub.s32 %s16, %s23
      %p187 = scmp.eq.s32.totalorder %s186, 0
      %s189 = sadd.s32 %s188, 1
      %s190 = scalar_select %p187, %s188, %s189
      %p193 = pneg %p187
      %p194 = scmp.eq.s32.totalorder %s16, 3
      %p195 = por %p193, %p194
      %p196 = scmp.ne.s32.totalorder %s188, %s191
      %p197 = scmp.eq.s32.totalorder %s16, 0
      %p198 = por %p196, %p197
      %p199 = scmp.ne.s32.totalorder %s188, %s191
      %p200 = scmp.eq.s32.totalorder %s21, 3
      %p201 = por %p199, %p200
      %p202 = scmp.ne.s32.totalorder %s191, %s192
      %p203 = scmp.eq.s32.totalorder %s21, 0
      %p204 = por %p202, %p203
      %p205 = scmp.ne.s32.totalorder %s191, %s192
      %p206 = scmp.eq.s32.totalorder %s22, 3
      %p207 = por %p205, %p206
      %p209 = scmp.ne.s32.totalorder %s192, %s208
      %p210 = scmp.eq.s32.totalorder %s22, 0
      %p211 = por %p209, %p210
      %s213 = sadd.s32 %s212, 1
      %p216 = scmp.eq.s32.totalorder %s16, 3
      %p217 = scmp.ne.s32.totalorder %s212, %s214
      %p218 = scmp.eq.s32.totalorder %s16, 0
      %p219 = por %p217, %p218
      %p220 = scmp.ne.s32.totalorder %s212, %s214
      %p221 = scmp.eq.s32.totalorder %s21, 3
      %p222 = por %p220, %p221
      %p223 = scmp.ne.s32.totalorder %s214, %s215
      %p224 = scmp.eq.s32.totalorder %s21, 0
      %p225 = por %p223, %p224
      %p226 = scmp.ne.s32.totalorder %s214, %s215
      %p227 = scmp.eq.s32.totalorder %s22, 3
      %p228 = por %p226, %p227
      %p230 = scmp.ne.s32.totalorder %s215, %s229
      %p231 = scmp.eq.s32.totalorder %s22, 0
      %p232 = por %p230, %p231
      %s234 = sadd.s32 %s233, 1
      %p237 = scmp.eq.s32.totalorder %s16, 3
      %p238 = scmp.ne.s32.totalorder %s233, %s235
      %p239 = scmp.eq.s32.totalorder %s16, 0
      %p240 = por %p238, %p239
      %p241 = scmp.ne.s32.totalorder %s233, %s235
      %p242 = scmp.eq.s32.totalorder %s21, 3
      %p243 = por %p241, %p242
      %p244 = scmp.ne.s32.totalorder %s235, %s236
      %p245 = scmp.eq.s32.totalorder %s21, 0
      %p246 = por %p244, %p245
      %p247 = scmp.ne.s32.totalorder %s235, %s236
      %p248 = scmp.eq.s32.totalorder %s22, 3
      %p249 = por %p247, %p248
      %p251 = scmp.ne.s32.totalorder %s236, %s250
      %p252 = scmp.eq.s32.totalorder %s22, 0
      %p253 = por %p251, %p252
      %p254 = scmp.le.s32.totalorder 1, %s16
      %p255 = scmp.lt.s32.totalorder %s16, 5
      %p256 = pnand %p254, %p255
      %p257 = pneg %p256
      // Predicated region
      $region9: #{nature_tqn_forward.7} parent=5 // pred_check
        _
      $region10: #{nature_tqn_forward.7} parent=5 // pred_check_branch
        %259 = sbr.rel (%p256) target = $region12
      $region11: #{nature_tqn_forward.7} parent=5 // pred_region
        %s260 = ssub.s32 %s16, 1
        // Predicated region
        $region13: #{nature_tqn_forward.7} parent=11 // pred_check
          %p261 = pneg %p37
        $region14: #{nature_tqn_forward.7} parent=11 // pred_check_branch
          %263 = sbr.rel (%p261) target = $region16
        $region15: #{nature_tqn_forward.7} parent=11 // pred_region
          _
        $region16: #{nature_tqn_forward.7} parent=11 // pred_fallthru
          _
        // Predicated region
        $region17: #{nature_tqn_forward.7} parent=11 // pred_check
          %p264 = pneg %p58
        $region18: #{nature_tqn_forward.7} parent=11 // pred_check_branch
          %266 = sbr.rel (%p264) target = $region20
        $region19: #{nature_tqn_forward.7} parent=11 // pred_region
          _
        $region20: #{nature_tqn_forward.7} parent=11 // pred_fallthru
          _
        // Predicated region
        $region21: #{nature_tqn_forward.7} parent=11 // pred_check
          %p267 = pneg %p157
        $region22: #{nature_tqn_forward.7} parent=11 // pred_check_branch
          %269 = sbr.rel (%p267) target = $region24
        $region23: #{nature_tqn_forward.7} parent=11 // pred_region
          _
        $region24: #{nature_tqn_forward.7} parent=11 // pred_fallthru
          _
        // Predicated region
        $region25: #{nature_tqn_forward.7} parent=11 // pred_check
          %p270 = pneg %p178
        $region26: #{nature_tqn_forward.7} parent=11 // pred_check_branch
          %272 = sbr.rel (%p270) target = $region28
        $region27: #{nature_tqn_forward.7} parent=11 // pred_region
          _
        $region28: #{nature_tqn_forward.7} parent=11 // pred_fallthru
          _
        // Predicated region
        $region29: #{nature_tqn_forward.7} parent=11 // pred_check
          %p273 = pneg %p225
        $region30: #{nature_tqn_forward.7} parent=11 // pred_check_branch
          %275 = sbr.rel (%p273) target = $region32
        $region31: #{nature_tqn_forward.7} parent=11 // pred_region
          _
        $region32: #{nature_tqn_forward.7} parent=11 // pred_fallthru
          _
      $region12: #{nature_tqn_forward.7} parent=5 // pred_fallthru
        _
      %p276 = scmp.lt.s32.totalorder %s16, 4
      // Predicated region
      $region33: #{nature_tqn_forward.7} parent=5 // pred_check
        %p277 = pneg %p276
      $region34: #{nature_tqn_forward.7} parent=5 // pred_check_branch
        %279 = sbr.rel (%p277) target = $region36
      $region35: #{nature_tqn_forward.7} parent=5 // pred_region
        // Predicated region
        $region37: #{nature_tqn_forward.7} parent=35 // pred_check
          %p280 = pneg %p78
        $region38: #{nature_tqn_forward.7} parent=35 // pred_check_branch
          %282 = sbr.rel (%p280) target = $region40
        $region39: #{nature_tqn_forward.7} parent=35 // pred_region
          %s283 = sand.u32 %s68, 1
          %s284 = sand.u32 %s68, 1
          %s285 = smul.addr %s284, 1568
          %s286 = scalar_lea.vmem [#allocation2], %s285
          %s287 = smul.addr %s16, 4
          %s288 = scalar_lea.vmem %s2, %s287
          // Predicated region
          $region41: #{nature_tqn_forward.7} parent=39 // pred_check
            _
          $region42: #{nature_tqn_forward.7} parent=39 // pred_check_branch
            %290 = sbr.rel (0) target = $region44
          $region43: #{nature_tqn_forward.7} parent=39 // pred_region
            // Predicated region
            $region45: #{nature_tqn_forward.7} parent=43 // pred_check
              _
            $region46: #{nature_tqn_forward.7} parent=43 // pred_check_branch
              %292 = sbr.rel target = $region48
            $region47: #{nature_tqn_forward.7} parent=43 // pred_region
              // Predicated region
              $region60: #{nature_tqn_forward.7} parent=47 // pred_check
                _
              $region61: #{nature_tqn_forward.7} parent=47 // pred_check_branch
                %1090 = sbr.rel target = $region63
              $region62: #{nature_tqn_forward.7} parent=47 // pred_region
                loop: start=0, step=1, limit=0
                $region64: #{nature_tqn_forward.7} parent=62 // loop_pre_header
                  _
                $region65: #{nature_tqn_forward.7} parent=62 // loop_header
                  %s1092 = sphi 0, %s1096
                  %p1093 = scmp.ge.s32.totalorder %s1092, 0
                  %s1097 = sphi 0, %s1886
                  %s1098 = sphi %s288, %s1889
                  %s1099 = sphi %s286, %s1890
                $region66: #{nature_tqn_forward.7} parent=62 // loop_header_branch
                  %1095 = sbr.rel (%p1093) target = $region70
                $region67: #{nature_tqn_forward.7} parent=62 // loop_body
                  %v1100 = vld [vmem:[%s1098] sm:$0xff]
                  %1101 = vst [vmem:[%s1099] sm:$0xff] %v1100
                  %v1102 = vld [vmem:[%s1098 + $0x10] sm:$0xff]
                  %1103 = vst [vmem:[%s1099 + $0x4] sm:$0xff] %v1102
                  %v1104 = vld [vmem:[%s1098 + $0x20] sm:$0xff]
                  %1105 = vst [vmem:[%s1099 + $0x8] sm:$0xff] %v1104
                  %v1106 = vld [vmem:[%s1098 + $0x30] sm:$0xff]
                  %1107 = vst [vmem:[%s1099 + $0xc] sm:$0xff] %v1106
                  %v1108 = vld [vmem:[%s1098 + $0x40] sm:$0xff]
                  %1109 = vst [vmem:[%s1099 + $0x10] sm:$0xff] %v1108
                  %v1110 = vld [vmem:[%s1098 + $0x50] sm:$0xff]
                  %1111 = vst [vmem:[%s1099 + $0x14] sm:$0xff] %v1110
                  %v1112 = vld [vmem:[%s1098 + $0x60] sm:$0xff]
                  %1113 = vst [vmem:[%s1099 + $0x18] sm:$0xff] %v1112
                  %v1114 = vld [vmem:[%s1098 + $0x70] sm:$0xff]
                  %1115 = vst [vmem:[%s1099 + $0x1c] sm:$0xff] %v1114
                  %v1116 = vld [vmem:[%s1098 + $0x80] sm:$0xff]
                  %1117 = vst [vmem:[%s1099 + $0x20] sm:$0xff] %v1116
                  %v1118 = vld [vmem:[%s1098 + $0x90] sm:$0xff]
                  %1119 = vst [vmem:[%s1099 + $0x24] sm:$0xff] %v1118
                  %v1120 = vld [vmem:[%s1098 + $0xa0] sm:$0xff]
                  %1121 = vst [vmem:[%s1099 + $0x28] sm:$0xff] %v1120
                  %v1122 = vld [vmem:[%s1098 + $0xb0] sm:$0xff]
                  %1123 = vst [vmem:[%s1099 + $0x2c] sm:$0xff] %v1122
                  %v1124 = vld [vmem:[%s1098 + $0xc0] sm:$0xff]
                  %1125 = vst [vmem:[%s1099 + $0x30] sm:$0xff] %v1124
                  %v1126 = vld [vmem:[%s1098 + $0xd0] sm:$0xff]
                  %1127 = vst [vmem:[%s1099 + $0x34] sm:$0xff] %v1126
                  %v1128 = vld [vmem:[%s1098 + $0xe0] sm:$0xff]
                  %1129 = vst [vmem:[%s1099 + $0x38] sm:$0xff] %v1128
                  %v1130 = vld [vmem:[%s1098 + $0xf0] sm:$0xff]
                  %1131 = vst [vmem:[%s1099 + $0x3c] sm:$0xff] %v1130
                  %v1132 = vld [vmem:[%s1098 + $0x100] sm:$0xff]
                  %1133 = vst [vmem:[%s1099 + $0x40] sm:$0xff] %v1132
                  %v1134 = vld [vmem:[%s1098 + $0x110] sm:$0xff]
                  %1135 = vst [vmem:[%s1099 + $0x44] sm:$0xff] %v1134
                  %v1136 = vld [vmem:[%s1098 + $0x120] sm:$0xff]
                  %1137 = vst [vmem:[%s1099 + $0x48] sm:$0xff] %v1136
                  %v1138 = vld [vmem:[%s1098 + $0x130] sm:$0xff]
                  %1139 = vst [vmem:[%s1099 + $0x4c] sm:$0xff] %v1138
                  %v1140 = vld [vmem:[%s1098 + $0x140] sm:$0xff]
                  %1141 = vst [vmem:[%s1099 + $0x50] sm:$0xff] %v1140
                  %v1142 = vld [vmem:[%s1098 + $0x150] sm:$0xff]
                  %1143 = vst [vmem:[%s1099 + $0x54] sm:$0xff] %v1142
                  %v1144 = vld [vmem:[%s1098 + $0x160] sm:$0xff]
                  %1145 = vst [vmem:[%s1099 + $0x58] sm:$0xff] %v1144
                  %v1146 = vld [vmem:[%s1098 + $0x170] sm:$0xff]
                  %1147 = vst [vmem:[%s1099 + $0x5c] sm:$0xff] %v1146
                  %v1148 = vld [vmem:[%s1098 + $0x180] sm:$0xff]
                  %1149 = vst [vmem:[%s1099 + $0x60] sm:$0xff] %v1148
                  %v1150 = vld [vmem:[%s1098 + $0x190] sm:$0xff]
                  %1151 = vst [vmem:[%s1099 + $0x64] sm:$0xff] %v1150
                  %v1152 = vld [vmem:[%s1098 + $0x1a0] sm:$0xff]
                  %1153 = vst [vmem:[%s1099 + $0x68] sm:$0xff] %v1152
                  %v1154 = vld [vmem:[%s1098 + $0x1b0] sm:$0xff]
                  %1155 = vst [vmem:[%s1099 + $0x6c] sm:$0xff] %v1154
                  %v1156 = vld [vmem:[%s1098 + $0x1c0] sm:$0xff]
                  %1157 = vst [vmem:[%s1099 + $0x70] sm:$0xff] %v1156
                  %v1158 = vld [vmem:[%s1098 + $0x1d0] sm:$0xff]
                  %1159 = vst [vmem:[%s1099 + $0x74] sm:$0xff] %v1158
                  %v1160 = vld [vmem:[%s1098 + $0x1e0] sm:$0xff]
                  %1161 = vst [vmem:[%s1099 + $0x78] sm:$0xff] %v1160
                  %v1162 = vld [vmem:[%s1098 + $0x1f0] sm:$0xff]
                  %1163 = vst [vmem:[%s1099 + $0x7c] sm:$0xff] %v1162
                  %v1164 = vld [vmem:[%s1098 + $0x200] sm:$0xff]
                  %1165 = vst [vmem:[%s1099 + $0x80] sm:$0xff] %v1164
                  %v1166 = vld [vmem:[%s1098 + $0x210] sm:$0xff]
                  %1167 = vst [vmem:[%s1099 + $0x84] sm:$0xff] %v1166
                  %v1168 = vld [vmem:[%s1098 + $0x220] sm:$0xff]
                  %1169 = vst [vmem:[%s1099 + $0x88] sm:$0xff] %v1168
                  %v1170 = vld [vmem:[%s1098 + $0x230] sm:$0xff]
                  %1171 = vst [vmem:[%s1099 + $0x8c] sm:$0xff] %v1170
                  %v1172 = vld [vmem:[%s1098 + $0x240] sm:$0xff]
                  %1173 = vst [vmem:[%s1099 + $0x90] sm:$0xff] %v1172
                  %v1174 = vld [vmem:[%s1098 + $0x250] sm:$0xff]
                  %1175 = vst [vmem:[%s1099 + $0x94] sm:$0xff] %v1174
                  %v1176 = vld [vmem:[%s1098 + $0x260] sm:$0xff]
                  %1177 = vst [vmem:[%s1099 + $0x98] sm:$0xff] %v1176
                  %v1178 = vld [vmem:[%s1098 + $0x270] sm:$0xff]
                  %1179 = vst [vmem:[%s1099 + $0x9c] sm:$0xff] %v1178
                  %v1180 = vld [vmem:[%s1098 + $0x280] sm:$0xff]
                  %1181 = vst [vmem:[%s1099 + $0xa0] sm:$0xff] %v1180
                  %v1182 = vld [vmem:[%s1098 + $0x290] sm:$0xff]
                  %1183 = vst [vmem:[%s1099 + $0xa4] sm:$0xff] %v1182
                  %v1184 = vld [vmem:[%s1098 + $0x2a0] sm:$0xff]
                  %1185 = vst [vmem:[%s1099 + $0xa8] sm:$0xff] %v1184
                  %v1186 = vld [vmem:[%s1098 + $0x2b0] sm:$0xff]
                  %1187 = vst [vmem:[%s1099 + $0xac] sm:$0xff] %v1186
                  %v1188 = vld [vmem:[%s1098 + $0x2c0] sm:$0xff]
                  %1189 = vst [vmem:[%s1099 + $0xb0] sm:$0xff] %v1188
                  %v1190 = vld [vmem:[%s1098 + $0x2d0] sm:$0xff]
                  %1191 = vst [vmem:[%s1099 + $0xb4] sm:$0xff] %v1190
                  %v1192 = vld [vmem:[%s1098 + $0x2e0] sm:$0xff]
                  %1193 = vst [vmem:[%s1099 + $0xb8] sm:$0xff] %v1192
                  %v1194 = vld [vmem:[%s1098 + $0x2f0] sm:$0xff]
                  %1195 = vst [vmem:[%s1099 + $0xbc] sm:$0xff] %v1194
                  %v1196 = vld [vmem:[%s1098 + $0x300] sm:$0xff]
                  %1197 = vst [vmem:[%s1099 + $0xc0] sm:$0xff] %v1196
                  %v1198 = vld [vmem:[%s1098 + $0x310] sm:$0xff]
                  %1199 = vst [vmem:[%s1099 + $0xc4] sm:$0xff] %v1198
                  %v1200 = vld [vmem:[%s1098 + $0x320] sm:$0xff]
                  %1201 = vst [vmem:[%s1099 + $0xc8] sm:$0xff] %v1200
                  %v1202 = vld [vmem:[%s1098 + $0x330] sm:$0xff]
                  %1203 = vst [vmem:[%s1099 + $0xcc] sm:$0xff] %v1202
                  %v1204 = vld [vmem:[%s1098 + $0x340] sm:$0xff]
                  %1205 = vst [vmem:[%s1099 + $0xd0] sm:$0xff] %v1204
                  %v1206 = vld [vmem:[%s1098 + $0x350] sm:$0xff]
                  %1207 = vst [vmem:[%s1099 + $0xd4] sm:$0xff] %v1206
                  %v1208 = vld [vmem:[%s1098 + $0x360] sm:$0xff]
                  %1209 = vst [vmem:[%s1099 + $0xd8] sm:$0xff] %v1208
                  %v1210 = vld [vmem:[%s1098 + $0x370] sm:$0xff]
                  %1211 = vst [vmem:[%s1099 + $0xdc] sm:$0xff] %v1210
                  %v1212 = vld [vmem:[%s1098 + $0x380] sm:$0xff]
                  %1213 = vst [vmem:[%s1099 + $0xe0] sm:$0xff] %v1212
                  %v1214 = vld [vmem:[%s1098 + $0x390] sm:$0xff]
                  %1215 = vst [vmem:[%s1099 + $0xe4] sm:$0xff] %v1214
                  %v1216 = vld [vmem:[%s1098 + $0x3a0] sm:$0xff]
                  %1217 = vst [vmem:[%s1099 + $0xe8] sm:$0xff] %v1216
                  %v1218 = vld [vmem:[%s1098 + $0x3b0] sm:$0xff]
                  %1219 = vst [vmem:[%s1099 + $0xec] sm:$0xff] %v1218
                  %v1220 = vld [vmem:[%s1098 + $0x3c0] sm:$0xff]
                  %1221 = vst [vmem:[%s1099 + $0xf0] sm:$0xff] %v1220
                  %v1222 = vld [vmem:[%s1098 + $0x3d0] sm:$0xff]
                  %1223 = vst [vmem:[%s1099 + $0xf4] sm:$0xff] %v1222
                  %v1224 = vld [vmem:[%s1098 + $0x3e0] sm:$0xff]
                  %1225 = vst [vmem:[%s1099 + $0xf8] sm:$0xff] %v1224
                  %v1226 = vld [vmem:[%s1098 + $0x3f0] sm:$0xff]
                  %1227 = vst [vmem:[%s1099 + $0xfc] sm:$0xff] %v1226
                  %v1228 = vld [vmem:[%s1098 + $0x400] sm:$0xff]
                  %1229 = vst [vmem:[%s1099 + $0x100] sm:$0xff] %v1228
                  %v1230 = vld [vmem:[%s1098 + $0x410] sm:$0xff]
                  %1231 = vst [vmem:[%s1099 + $0x104] sm:$0xff] %v1230
                  %v1232 = vld [vmem:[%s1098 + $0x420] sm:$0xff]
                  %1233 = vst [vmem:[%s1099 + $0x108] sm:$0xff] %v1232
                  %v1234 = vld [vmem:[%s1098 + $0x430] sm:$0xff]
                  %1235 = vst [vmem:[%s1099 + $0x10c] sm:$0xff] %v1234
                  %v1236 = vld [vmem:[%s1098 + $0x440] sm:$0xff]
                  %1237 = vst [vmem:[%s1099 + $0x110] sm:$0xff] %v1236
                  %v1238 = vld [vmem:[%s1098 + $0x450] sm:$0xff]
                  %1239 = vst [vmem:[%s1099 + $0x114] sm:$0xff] %v1238
                  %v1240 = vld [vmem:[%s1098 + $0x460] sm:$0xff]
                  %1241 = vst [vmem:[%s1099 + $0x118] sm:$0xff] %v1240
                  %v1242 = vld [vmem:[%s1098 + $0x470] sm:$0xff]
                  %1243 = vst [vmem:[%s1099 + $0x11c] sm:$0xff] %v1242
                  %v1244 = vld [vmem:[%s1098 + $0x480] sm:$0xff]
                  %1245 = vst [vmem:[%s1099 + $0x120] sm:$0xff] %v1244
                  %v1246 = vld [vmem:[%s1098 + $0x490] sm:$0xff]
                  %1247 = vst [vmem:[%s1099 + $0x124] sm:$0xff] %v1246
                  %v1248 = vld [vmem:[%s1098 + $0x4a0] sm:$0xff]
                  %1249 = vst [vmem:[%s1099 + $0x128] sm:$0xff] %v1248
                  %v1250 = vld [vmem:[%s1098 + $0x4b0] sm:$0xff]
                  %1251 = vst [vmem:[%s1099 + $0x12c] sm:$0xff] %v1250
                  %v1252 = vld [vmem:[%s1098 + $0x4c0] sm:$0xff]
                  %1253 = vst [vmem:[%s1099 + $0x130] sm:$0xff] %v1252
                  %v1254 = vld [vmem:[%s1098 + $0x4d0] sm:$0xff]
                  %1255 = vst [vmem:[%s1099 + $0x134] sm:$0xff] %v1254
                  %v1256 = vld [vmem:[%s1098 + $0x4e0] sm:$0xff]
                  %1257 = vst [vmem:[%s1099 + $0x138] sm:$0xff] %v1256
                  %v1258 = vld [vmem:[%s1098 + $0x4f0] sm:$0xff]
                  %1259 = vst [vmem:[%s1099 + $0x13c] sm:$0xff] %v1258
                  %v1260 = vld [vmem:[%s1098 + $0x500] sm:$0xff]
                  %1261 = vst [vmem:[%s1099 + $0x140] sm:$0xff] %v1260
                  %v1262 = vld [vmem:[%s1098 + $0x510] sm:$0xff]
                  %1263 = vst [vmem:[%s1099 + $0x144] sm:$0xff] %v1262
                  %v1264 = vld [vmem:[%s1098 + $0x520] sm:$0xff]
                  %1265 = vst [vmem:[%s1099 + $0x148] sm:$0xff] %v1264
                  %v1266 = vld [vmem:[%s1098 + $0x530] sm:$0xff]
                  %1267 = vst [vmem:[%s1099 + $0x14c] sm:$0xff] %v1266
                  %v1268 = vld [vmem:[%s1098 + $0x540] sm:$0xff]
                  %1269 = vst [vmem:[%s1099 + $0x150] sm:$0xff] %v1268
                  %v1270 = vld [vmem:[%s1098 + $0x550] sm:$0xff]
                  %1271 = vst [vmem:[%s1099 + $0x154] sm:$0xff] %v1270
                  %v1272 = vld [vmem:[%s1098 + $0x560] sm:$0xff]
                  %1273 = vst [vmem:[%s1099 + $0x158] sm:$0xff] %v1272
                  %v1274 = vld [vmem:[%s1098 + $0x570] sm:$0xff]
                  %1275 = vst [vmem:[%s1099 + $0x15c] sm:$0xff] %v1274
                  %v1276 = vld [vmem:[%s1098 + $0x580] sm:$0xff]
                  %1277 = vst [vmem:[%s1099 + $0x160] sm:$0xff] %v1276
                  %v1278 = vld [vmem:[%s1098 + $0x590] sm:$0xff]
                  %1279 = vst [vmem:[%s1099 + $0x164] sm:$0xff] %v1278
                  %v1280 = vld [vmem:[%s1098 + $0x5a0] sm:$0xff]
                  %1281 = vst [vmem:[%s1099 + $0x168] sm:$0xff] %v1280
                  %v1282 = vld [vmem:[%s1098 + $0x5b0] sm:$0xff]
                  %1283 = vst [vmem:[%s1099 + $0x16c] sm:$0xff] %v1282
                  %v1284 = vld [vmem:[%s1098 + $0x5c0] sm:$0xff]
                  %1285 = vst [vmem:[%s1099 + $0x170] sm:$0xff] %v1284
                  %v1286 = vld [vmem:[%s1098 + $0x5d0] sm:$0xff]
                  %1287 = vst [vmem:[%s1099 + $0x174] sm:$0xff] %v1286
                  %v1288 = vld [vmem:[%s1098 + $0x5e0] sm:$0xff]
                  %1289 = vst [vmem:[%s1099 + $0x178] sm:$0xff] %v1288
                  %v1290 = vld [vmem:[%s1098 + $0x5f0] sm:$0xff]
                  %1291 = vst [vmem:[%s1099 + $0x17c] sm:$0xff] %v1290
                  %v1292 = vld [vmem:[%s1098 + $0x600] sm:$0xff]
                  %1293 = vst [vmem:[%s1099 + $0x180] sm:$0xff] %v1292
                  %v1294 = vld [vmem:[%s1098 + $0x610] sm:$0xff]
                  %1295 = vst [vmem:[%s1099 + $0x184] sm:$0xff] %v1294
                  %v1296 = vld [vmem:[%s1098 + $0x620] sm:$0xff]
                  %1297 = vst [vmem:[%s1099 + $0x188] sm:$0xff] %v1296
                  %v1298 = vld [vmem:[%s1098 + $0x630] sm:$0xff]
                  %1299 = vst [vmem:[%s1099 + $0x18c] sm:$0xff] %v1298
                  %v1300 = vld [vmem:[%s1098 + $0x640] sm:$0xff]
                  %1301 = vst [vmem:[%s1099 + $0x190] sm:$0xff] %v1300
                  %v1302 = vld [vmem:[%s1098 + $0x650] sm:$0xff]
                  %1303 = vst [vmem:[%s1099 + $0x194] sm:$0xff] %v1302
                  %v1304 = vld [vmem:[%s1098 + $0x660] sm:$0xff]
                  %1305 = vst [vmem:[%s1099 + $0x198] sm:$0xff] %v1304
                  %v1306 = vld [vmem:[%s1098 + $0x670] sm:$0xff]
                  %1307 = vst [vmem:[%s1099 + $0x19c] sm:$0xff] %v1306
                  %v1308 = vld [vmem:[%s1098 + $0x680] sm:$0xff]
                  %1309 = vst [vmem:[%s1099 + $0x1a0] sm:$0xff] %v1308
                  %v1310 = vld [vmem:[%s1098 + $0x690] sm:$0xff]
                  %1311 = vst [vmem:[%s1099 + $0x1a4] sm:$0xff] %v1310
                  %v1312 = vld [vmem:[%s1098 + $0x6a0] sm:$0xff]
                  %1313 = vst [vmem:[%s1099 + $0x1a8] sm:$0xff] %v1312
                  %v1314 = vld [vmem:[%s1098 + $0x6b0] sm:$0xff]
                  %1315 = vst [vmem:[%s1099 + $0x1ac] sm:$0xff] %v1314
                  %v1316 = vld [vmem:[%s1098 + $0x6c0] sm:$0xff]
                  %1317 = vst [vmem:[%s1099 + $0x1b0] sm:$0xff] %v1316
                  %v1318 = vld [vmem:[%s1098 + $0x6d0] sm:$0xff]
                  %1319 = vst [vmem:[%s1099 + $0x1b4] sm:$0xff] %v1318
                  %v1320 = vld [vmem:[%s1098 + $0x6e0] sm:$0xff]
                  %1321 = vst [vmem:[%s1099 + $0x1b8] sm:$0xff] %v1320
                  %v1322 = vld [vmem:[%s1098 + $0x6f0] sm:$0xff]
                  %1323 = vst [vmem:[%s1099 + $0x1bc] sm:$0xff] %v1322
                  %v1324 = vld [vmem:[%s1098 + $0x700] sm:$0xff]
                  %1325 = vst [vmem:[%s1099 + $0x1c0] sm:$0xff] %v1324
                  %v1326 = vld [vmem:[%s1098 + $0x710] sm:$0xff]
                  %1327 = vst [vmem:[%s1099 + $0x1c4] sm:$0xff] %v1326
                  %v1328 = vld [vmem:[%s1098 + $0x720] sm:$0xff]
                  %1329 = vst [vmem:[%s1099 + $0x1c8] sm:$0xff] %v1328
                  %v1330 = vld [vmem:[%s1098 + $0x730] sm:$0xff]
                  %1331 = vst [vmem:[%s1099 + $0x1cc] sm:$0xff] %v1330
                  %v1332 = vld [vmem:[%s1098 + $0x740] sm:$0xff]
                  %1333 = vst [vmem:[%s1099 + $0x1d0] sm:$0xff] %v1332
                  %v1334 = vld [vmem:[%s1098 + $0x750] sm:$0xff]
                  %1335 = vst [vmem:[%s1099 + $0x1d4] sm:$0xff] %v1334
                  %v1336 = vld [vmem:[%s1098 + $0x760] sm:$0xff]
                  %1337 = vst [vmem:[%s1099 + $0x1d8] sm:$0xff] %v1336
                  %v1338 = vld [vmem:[%s1098 + $0x770] sm:$0xff]
                  %1339 = vst [vmem:[%s1099 + $0x1dc] sm:$0xff] %v1338
                  %v1340 = vld [vmem:[%s1098 + $0x780] sm:$0xff]
                  %1341 = vst [vmem:[%s1099 + $0x1e0] sm:$0xff] %v1340
                  %v1342 = vld [vmem:[%s1098 + $0x790] sm:$0xff]
                  %1343 = vst [vmem:[%s1099 + $0x1e4] sm:$0xff] %v1342
                  %v1344 = vld [vmem:[%s1098 + $0x7a0] sm:$0xff]
                  %1345 = vst [vmem:[%s1099 + $0x1e8] sm:$0xff] %v1344
                  %v1346 = vld [vmem:[%s1098 + $0x7b0] sm:$0xff]
                  %1347 = vst [vmem:[%s1099 + $0x1ec] sm:$0xff] %v1346
                  %v1348 = vld [vmem:[%s1098 + $0x7c0] sm:$0xff]
                  %1349 = vst [vmem:[%s1099 + $0x1f0] sm:$0xff] %v1348
                  %v1350 = vld [vmem:[%s1098 + $0x7d0] sm:$0xff]
                  %1351 = vst [vmem:[%s1099 + $0x1f4] sm:$0xff] %v1350
                  %v1352 = vld [vmem:[%s1098 + $0x7e0] sm:$0xff]
                  %1353 = vst [vmem:[%s1099 + $0x1f8] sm:$0xff] %v1352
                  %v1354 = vld [vmem:[%s1098 + $0x7f0] sm:$0xff]
                  %1355 = vst [vmem:[%s1099 + $0x1fc] sm:$0xff] %v1354
                  %v1356 = vld [vmem:[%s1098 + $0x800] sm:$0xff]
                  %1357 = vst [vmem:[%s1099 + $0x200] sm:$0xff] %v1356
                  %v1358 = vld [vmem:[%s1098 + $0x810] sm:$0xff]
                  %1359 = vst [vmem:[%s1099 + $0x204] sm:$0xff] %v1358
                  %v1360 = vld [vmem:[%s1098 + $0x820] sm:$0xff]
                  %1361 = vst [vmem:[%s1099 + $0x208] sm:$0xff] %v1360
                  %v1362 = vld [vmem:[%s1098 + $0x830] sm:$0xff]
                  %1363 = vst [vmem:[%s1099 + $0x20c] sm:$0xff] %v1362
                  %v1364 = vld [vmem:[%s1098 + $0x840] sm:$0xff]
                  %1365 = vst [vmem:[%s1099 + $0x210] sm:$0xff] %v1364
                  %v1366 = vld [vmem:[%s1098 + $0x850] sm:$0xff]
                  %1367 = vst [vmem:[%s1099 + $0x214] sm:$0xff] %v1366
                  %v1368 = vld [vmem:[%s1098 + $0x860] sm:$0xff]
                  %1369 = vst [vmem:[%s1099 + $0x218] sm:$0xff] %v1368
                  %v1370 = vld [vmem:[%s1098 + $0x870] sm:$0xff]
                  %1371 = vst [vmem:[%s1099 + $0x21c] sm:$0xff] %v1370
                  %v1372 = vld [vmem:[%s1098 + $0x880] sm:$0xff]
                  %1373 = vst [vmem:[%s1099 + $0x220] sm:$0xff] %v1372
                  %v1374 = vld [vmem:[%s1098 + $0x890] sm:$0xff]
                  %1375 = vst [vmem:[%s1099 + $0x224] sm:$0xff] %v1374
                  %v1376 = vld [vmem:[%s1098 + $0x8a0] sm:$0xff]
                  %1377 = vst [vmem:[%s1099 + $0x228] sm:$0xff] %v1376
                  %v1378 = vld [vmem:[%s1098 + $0x8b0] sm:$0xff]
                  %1379 = vst [vmem:[%s1099 + $0x22c] sm:$0xff] %v1378
                  %v1380 = vld [vmem:[%s1098 + $0x8c0] sm:$0xff]
                  %1381 = vst [vmem:[%s1099 + $0x230] sm:$0xff] %v1380
                  %v1382 = vld [vmem:[%s1098 + $0x8d0] sm:$0xff]
                  %1383 = vst [vmem:[%s1099 + $0x234] sm:$0xff] %v1382
                  %v1384 = vld [vmem:[%s1098 + $0x8e0] sm:$0xff]
                  %1385 = vst [vmem:[%s1099 + $0x238] sm:$0xff] %v1384
                  %v1386 = vld [vmem:[%s1098 + $0x8f0] sm:$0xff]
                  %1387 = vst [vmem:[%s1099 + $0x23c] sm:$0xff] %v1386
                  %v1388 = vld [vmem:[%s1098 + $0x900] sm:$0xff]
                  %1389 = vst [vmem:[%s1099 + $0x240] sm:$0xff] %v1388
                  %v1390 = vld [vmem:[%s1098 + $0x910] sm:$0xff]
                  %1391 = vst [vmem:[%s1099 + $0x244] sm:$0xff] %v1390
                  %v1392 = vld [vmem:[%s1098 + $0x920] sm:$0xff]
                  %1393 = vst [vmem:[%s1099 + $0x248] sm:$0xff] %v1392
                  %v1394 = vld [vmem:[%s1098 + $0x930] sm:$0xff]
                  %1395 = vst [vmem:[%s1099 + $0x24c] sm:$0xff] %v1394
                  %v1396 = vld [vmem:[%s1098 + $0x940] sm:$0xff]
                  %1397 = vst [vmem:[%s1099 + $0x250] sm:$0xff] %v1396
                  %v1398 = vld [vmem:[%s1098 + $0x950] sm:$0xff]
                  %1399 = vst [vmem:[%s1099 + $0x254] sm:$0xff] %v1398
                  %v1400 = vld [vmem:[%s1098 + $0x960] sm:$0xff]
                  %1401 = vst [vmem:[%s1099 + $0x258] sm:$0xff] %v1400
                  %v1402 = vld [vmem:[%s1098 + $0x970] sm:$0xff]
                  %1403 = vst [vmem:[%s1099 + $0x25c] sm:$0xff] %v1402
                  %v1404 = vld [vmem:[%s1098 + $0x980] sm:$0xff]
                  %1405 = vst [vmem:[%s1099 + $0x260] sm:$0xff] %v1404
                  %v1406 = vld [vmem:[%s1098 + $0x990] sm:$0xff]
                  %1407 = vst [vmem:[%s1099 + $0x264] sm:$0xff] %v1406
                  %v1408 = vld [vmem:[%s1098 + $0x9a0] sm:$0xff]
                  %1409 = vst [vmem:[%s1099 + $0x268] sm:$0xff] %v1408
                  %v1410 = vld [vmem:[%s1098 + $0x9b0] sm:$0xff]
                  %1411 = vst [vmem:[%s1099 + $0x26c] sm:$0xff] %v1410
                  %v1412 = vld [vmem:[%s1098 + $0x9c0] sm:$0xff]
                  %1413 = vst [vmem:[%s1099 + $0x270] sm:$0xff] %v1412
                  %v1414 = vld [vmem:[%s1098 + $0x9d0] sm:$0xff]
                  %1415 = vst [vmem:[%s1099 + $0x274] sm:$0xff] %v1414
                  %v1416 = vld [vmem:[%s1098 + $0x9e0] sm:$0xff]
                  %1417 = vst [vmem:[%s1099 + $0x278] sm:$0xff] %v1416
                  %v1418 = vld [vmem:[%s1098 + $0x9f0] sm:$0xff]
                  %1419 = vst [vmem:[%s1099 + $0x27c] sm:$0xff] %v1418
                  %v1420 = vld [vmem:[%s1098 + $0xa00] sm:$0xff]
                  %1421 = vst [vmem:[%s1099 + $0x280] sm:$0xff] %v1420
                  %v1422 = vld [vmem:[%s1098 + $0xa10] sm:$0xff]
                  %1423 = vst [vmem:[%s1099 + $0x284] sm:$0xff] %v1422
                  %v1424 = vld [vmem:[%s1098 + $0xa20] sm:$0xff]
                  %1425 = vst [vmem:[%s1099 + $0x288] sm:$0xff] %v1424
                  %v1426 = vld [vmem:[%s1098 + $0xa30] sm:$0xff]
                  %1427 = vst [vmem:[%s1099 + $0x28c] sm:$0xff] %v1426
                  %v1428 = vld [vmem:[%s1098 + $0xa40] sm:$0xff]
                  %1429 = vst [vmem:[%s1099 + $0x290] sm:$0xff] %v1428
                  %v1430 = vld [vmem:[%s1098 + $0xa50] sm:$0xff]
                  %1431 = vst [vmem:[%s1099 + $0x294] sm:$0xff] %v1430
                  %v1432 = vld [vmem:[%s1098 + $0xa60] sm:$0xff]
                  %1433 = vst [vmem:[%s1099 + $0x298] sm:$0xff] %v1432
                  %v1434 = vld [vmem:[%s1098 + $0xa70] sm:$0xff]
                  %1435 = vst [vmem:[%s1099 + $0x29c] sm:$0xff] %v1434
                  %v1436 = vld [vmem:[%s1098 + $0xa80] sm:$0xff]
                  %1437 = vst [vmem:[%s1099 + $0x2a0] sm:$0xff] %v1436
                  %v1438 = vld [vmem:[%s1098 + $0xa90] sm:$0xff]
                  %1439 = vst [vmem:[%s1099 + $0x2a4] sm:$0xff] %v1438
                  %v1440 = vld [vmem:[%s1098 + $0xaa0] sm:$0xff]
                  %1441 = vst [vmem:[%s1099 + $0x2a8] sm:$0xff] %v1440
                  %v1442 = vld [vmem:[%s1098 + $0xab0] sm:$0xff]
                  %1443 = vst [vmem:[%s1099 + $0x2ac] sm:$0xff] %v1442
                  %v1444 = vld [vmem:[%s1098 + $0xac0] sm:$0xff]
                  %1445 = vst [vmem:[%s1099 + $0x2b0] sm:$0xff] %v1444
                  %v1446 = vld [vmem:[%s1098 + $0xad0] sm:$0xff]
                  %1447 = vst [vmem:[%s1099 + $0x2b4] sm:$0xff] %v1446
                  %v1448 = vld [vmem:[%s1098 + $0xae0] sm:$0xff]
                  %1449 = vst [vmem:[%s1099 + $0x2b8] sm:$0xff] %v1448
                  %v1450 = vld [vmem:[%s1098 + $0xaf0] sm:$0xff]
                  %1451 = vst [vmem:[%s1099 + $0x2bc] sm:$0xff] %v1450
                  %v1452 = vld [vmem:[%s1098 + $0xb00] sm:$0xff]
                  %1453 = vst [vmem:[%s1099 + $0x2c0] sm:$0xff] %v1452
                  %v1454 = vld [vmem:[%s1098 + $0xb10] sm:$0xff]
                  %1455 = vst [vmem:[%s1099 + $0x2c4] sm:$0xff] %v1454
                  %v1456 = vld [vmem:[%s1098 + $0xb20] sm:$0xff]
                  %1457 = vst [vmem:[%s1099 + $0x2c8] sm:$0xff] %v1456
                  %v1458 = vld [vmem:[%s1098 + $0xb30] sm:$0xff]
                  %1459 = vst [vmem:[%s1099 + $0x2cc] sm:$0xff] %v1458
                  %v1460 = vld [vmem:[%s1098 + $0xb40] sm:$0xff]
                  %1461 = vst [vmem:[%s1099 + $0x2d0] sm:$0xff] %v1460
                  %v1462 = vld [vmem:[%s1098 + $0xb50] sm:$0xff]
                  %1463 = vst [vmem:[%s1099 + $0x2d4] sm:$0xff] %v1462
                  %v1464 = vld [vmem:[%s1098 + $0xb60] sm:$0xff]
                  %1465 = vst [vmem:[%s1099 + $0x2d8] sm:$0xff] %v1464
                  %v1466 = vld [vmem:[%s1098 + $0xb70] sm:$0xff]
                  %1467 = vst [vmem:[%s1099 + $0x2dc] sm:$0xff] %v1466
                  %v1468 = vld [vmem:[%s1098 + $0xb80] sm:$0xff]
                  %1469 = vst [vmem:[%s1099 + $0x2e0] sm:$0xff] %v1468
                  %v1470 = vld [vmem:[%s1098 + $0xb90] sm:$0xff]
                  %1471 = vst [vmem:[%s1099 + $0x2e4] sm:$0xff] %v1470
                  %v1472 = vld [vmem:[%s1098 + $0xba0] sm:$0xff]
                  %1473 = vst [vmem:[%s1099 + $0x2e8] sm:$0xff] %v1472
                  %v1474 = vld [vmem:[%s1098 + $0xbb0] sm:$0xff]
                  %1475 = vst [vmem:[%s1099 + $0x2ec] sm:$0xff] %v1474
                  %v1476 = vld [vmem:[%s1098 + $0xbc0] sm:$0xff]
                  %1477 = vst [vmem:[%s1099 + $0x2f0] sm:$0xff] %v1476
                  %v1478 = vld [vmem:[%s1098 + $0xbd0] sm:$0xff]
                  %1479 = vst [vmem:[%s1099 + $0x2f4] sm:$0xff] %v1478
                  %v1480 = vld [vmem:[%s1098 + $0xbe0] sm:$0xff]
                  %1481 = vst [vmem:[%s1099 + $0x2f8] sm:$0xff] %v1480
                  %v1482 = vld [vmem:[%s1098 + $0xbf0] sm:$0xff]
                  %1483 = vst [vmem:[%s1099 + $0x2fc] sm:$0xff] %v1482
                  %v1484 = vld [vmem:[%s1098 + $0xc00] sm:$0xff]
                  %1485 = vst [vmem:[%s1099 + $0x300] sm:$0xff] %v1484
                  %v1486 = vld [vmem:[%s1098 + $0xc10] sm:$0xff]
                  %1487 = vst [vmem:[%s1099 + $0x304] sm:$0xff] %v1486
                  %v1488 = vld [vmem:[%s1098 + $0xc20] sm:$0xff]
                  %1489 = vst [vmem:[%s1099 + $0x308] sm:$0xff] %v1488
                  %v1490 = vld [vmem:[%s1098 + $0xc30] sm:$0xff]
                  %1491 = vst [vmem:[%s1099 + $0x30c] sm:$0xff] %v1490
                  %v1492 = vld [vmem:[%s1098 + $0xc40] sm:$0xff]
                  %1493 = vst [vmem:[%s1099 + $0x310] sm:$0xff] %v1492
                  %v1494 = vld [vmem:[%s1098 + $0xc50] sm:$0xff]
                  %1495 = vst [vmem:[%s1099 + $0x314] sm:$0xff] %v1494
                  %v1496 = vld [vmem:[%s1098 + $0xc60] sm:$0xff]
                  %1497 = vst [vmem:[%s1099 + $0x318] sm:$0xff] %v1496
                  %v1498 = vld [vmem:[%s1098 + $0xc70] sm:$0xff]
                  %1499 = vst [vmem:[%s1099 + $0x31c] sm:$0xff] %v1498
                  %v1500 = vld [vmem:[%s1098 + $0xc80] sm:$0xff]
                  %1501 = vst [vmem:[%s1099 + $0x320] sm:$0xff] %v1500
                  %v1502 = vld [vmem:[%s1098 + $0xc90] sm:$0xff]
                  %1503 = vst [vmem:[%s1099 + $0x324] sm:$0xff] %v1502
                  %v1504 = vld [vmem:[%s1098 + $0xca0] sm:$0xff]
                  %1505 = vst [vmem:[%s1099 + $0x328] sm:$0xff] %v1504
                  %v1506 = vld [vmem:[%s1098 + $0xcb0] sm:$0xff]
                  %1507 = vst [vmem:[%s1099 + $0x32c] sm:$0xff] %v1506
                  %v1508 = vld [vmem:[%s1098 + $0xcc0] sm:$0xff]
                  %1509 = vst [vmem:[%s1099 + $0x330] sm:$0xff] %v1508
                  %v1510 = vld [vmem:[%s1098 + $0xcd0] sm:$0xff]
                  %1511 = vst [vmem:[%s1099 + $0x334] sm:$0xff] %v1510
                  %v1512 = vld [vmem:[%s1098 + $0xce0] sm:$0xff]
                  %1513 = vst [vmem:[%s1099 + $0x338] sm:$0xff] %v1512
                  %v1514 = vld [vmem:[%s1098 + $0xcf0] sm:$0xff]
                  %1515 = vst [vmem:[%s1099 + $0x33c] sm:$0xff] %v1514
                  %v1516 = vld [vmem:[%s1098 + $0xd00] sm:$0xff]
                  %1517 = vst [vmem:[%s1099 + $0x340] sm:$0xff] %v1516
                  %v1518 = vld [vmem:[%s1098 + $0xd10] sm:$0xff]
                  %1519 = vst [vmem:[%s1099 + $0x344] sm:$0xff] %v1518
                  %v1520 = vld [vmem:[%s1098 + $0xd20] sm:$0xff]
                  %1521 = vst [vmem:[%s1099 + $0x348] sm:$0xff] %v1520
                  %v1522 = vld [vmem:[%s1098 + $0xd30] sm:$0xff]
                  %1523 = vst [vmem:[%s1099 + $0x34c] sm:$0xff] %v1522
                  %v1524 = vld [vmem:[%s1098 + $0xd40] sm:$0xff]
                  %1525 = vst [vmem:[%s1099 + $0x350] sm:$0xff] %v1524
                  %v1526 = vld [vmem:[%s1098 + $0xd50] sm:$0xff]
                  %1527 = vst [vmem:[%s1099 + $0x354] sm:$0xff] %v1526
                  %v1528 = vld [vmem:[%s1098 + $0xd60] sm:$0xff]
                  %1529 = vst [vmem:[%s1099 + $0x358] sm:$0xff] %v1528
                  %v1530 = vld [vmem:[%s1098 + $0xd70] sm:$0xff]
                  %1531 = vst [vmem:[%s1099 + $0x35c] sm:$0xff] %v1530
                  %v1532 = vld [vmem:[%s1098 + $0xd80] sm:$0xff]
                  %1533 = vst [vmem:[%s1099 + $0x360] sm:$0xff] %v1532
                  %v1534 = vld [vmem:[%s1098 + $0xd90] sm:$0xff]
                  %1535 = vst [vmem:[%s1099 + $0x364] sm:$0xff] %v1534
                  %v1536 = vld [vmem:[%s1098 + $0xda0] sm:$0xff]
                  %1537 = vst [vmem:[%s1099 + $0x368] sm:$0xff] %v1536
                  %v1538 = vld [vmem:[%s1098 + $0xdb0] sm:$0xff]
                  %1539 = vst [vmem:[%s1099 + $0x36c] sm:$0xff] %v1538
                  %v1540 = vld [vmem:[%s1098 + $0xdc0] sm:$0xff]
                  %1541 = vst [vmem:[%s1099 + $0x370] sm:$0xff] %v1540
                  %v1542 = vld [vmem:[%s1098 + $0xdd0] sm:$0xff]
                  %1543 = vst [vmem:[%s1099 + $0x374] sm:$0xff] %v1542
                  %v1544 = vld [vmem:[%s1098 + $0xde0] sm:$0xff]
                  %1545 = vst [vmem:[%s1099 + $0x378] sm:$0xff] %v1544
                  %v1546 = vld [vmem:[%s1098 + $0xdf0] sm:$0xff]
                  %1547 = vst [vmem:[%s1099 + $0x37c] sm:$0xff] %v1546
                  %v1548 = vld [vmem:[%s1098 + $0xe00] sm:$0xff]
                  %1549 = vst [vmem:[%s1099 + $0x380] sm:$0xff] %v1548
                  %v1550 = vld [vmem:[%s1098 + $0xe10] sm:$0xff]
                  %1551 = vst [vmem:[%s1099 + $0x384] sm:$0xff] %v1550
                  %v1552 = vld [vmem:[%s1098 + $0xe20] sm:$0xff]
                  %1553 = vst [vmem:[%s1099 + $0x388] sm:$0xff] %v1552
                  %v1554 = vld [vmem:[%s1098 + $0xe30] sm:$0xff]
                  %1555 = vst [vmem:[%s1099 + $0x38c] sm:$0xff] %v1554
                  %v1556 = vld [vmem:[%s1098 + $0xe40] sm:$0xff]
                  %1557 = vst [vmem:[%s1099 + $0x390] sm:$0xff] %v1556
                  %v1558 = vld [vmem:[%s1098 + $0xe50] sm:$0xff]
                  %1559 = vst [vmem:[%s1099 + $0x394] sm:$0xff] %v1558
                  %v1560 = vld [vmem:[%s1098 + $0xe60] sm:$0xff]
                  %1561 = vst [vmem:[%s1099 + $0x398] sm:$0xff] %v1560
                  %v1562 = vld [vmem:[%s1098 + $0xe70] sm:$0xff]
                  %1563 = vst [vmem:[%s1099 + $0x39c] sm:$0xff] %v1562
                  %v1564 = vld [vmem:[%s1098 + $0xe80] sm:$0xff]
                  %1565 = vst [vmem:[%s1099 + $0x3a0] sm:$0xff] %v1564
                  %v1566 = vld [vmem:[%s1098 + $0xe90] sm:$0xff]
                  %1567 = vst [vmem:[%s1099 + $0x3a4] sm:$0xff] %v1566
                  %v1568 = vld [vmem:[%s1098 + $0xea0] sm:$0xff]
                  %1569 = vst [vmem:[%s1099 + $0x3a8] sm:$0xff] %v1568
                  %v1570 = vld [vmem:[%s1098 + $0xeb0] sm:$0xff]
                  %1571 = vst [vmem:[%s1099 + $0x3ac] sm:$0xff] %v1570
                  %v1572 = vld [vmem:[%s1098 + $0xec0] sm:$0xff]
                  %1573 = vst [vmem:[%s1099 + $0x3b0] sm:$0xff] %v1572
                  %v1574 = vld [vmem:[%s1098 + $0xed0] sm:$0xff]
                  %1575 = vst [vmem:[%s1099 + $0x3b4] sm:$0xff] %v1574
                  %v1576 = vld [vmem:[%s1098 + $0xee0] sm:$0xff]
                  %1577 = vst [vmem:[%s1099 + $0x3b8] sm:$0xff] %v1576
                  %v1578 = vld [vmem:[%s1098 + $0xef0] sm:$0xff]
                  %1579 = vst [vmem:[%s1099 + $0x3bc] sm:$0xff] %v1578
                  %v1580 = vld [vmem:[%s1098 + $0xf00] sm:$0xff]
                  %1581 = vst [vmem:[%s1099 + $0x3c0] sm:$0xff] %v1580
                  %v1582 = vld [vmem:[%s1098 + $0xf10] sm:$0xff]
                  %1583 = vst [vmem:[%s1099 + $0x3c4] sm:$0xff] %v1582
                  %v1584 = vld [vmem:[%s1098 + $0xf20] sm:$0xff]
                  %1585 = vst [vmem:[%s1099 + $0x3c8] sm:$0xff] %v1584
                  %v1586 = vld [vmem:[%s1098 + $0xf30] sm:$0xff]
                  %1587 = vst [vmem:[%s1099 + $0x3cc] sm:$0xff] %v1586
                  %v1588 = vld [vmem:[%s1098 + $0xf40] sm:$0xff]
                  %1589 = vst [vmem:[%s1099 + $0x3d0] sm:$0xff] %v1588
                  %v1590 = vld [vmem:[%s1098 + $0xf50] sm:$0xff]
                  %1591 = vst [vmem:[%s1099 + $0x3d4] sm:$0xff] %v1590
                  %v1592 = vld [vmem:[%s1098 + $0xf60] sm:$0xff]
                  %1593 = vst [vmem:[%s1099 + $0x3d8] sm:$0xff] %v1592
                  %v1594 = vld [vmem:[%s1098 + $0xf70] sm:$0xff]
                  %1595 = vst [vmem:[%s1099 + $0x3dc] sm:$0xff] %v1594
                  %v1596 = vld [vmem:[%s1098 + $0xf80] sm:$0xff]
                  %1597 = vst [vmem:[%s1099 + $0x3e0] sm:$0xff] %v1596
                  %v1598 = vld [vmem:[%s1098 + $0xf90] sm:$0xff]
                  %1599 = vst [vmem:[%s1099 + $0x3e4] sm:$0xff] %v1598
                  %v1600 = vld [vmem:[%s1098 + $0xfa0] sm:$0xff]
                  %1601 = vst [vmem:[%s1099 + $0x3e8] sm:$0xff] %v1600
                  %v1602 = vld [vmem:[%s1098 + $0xfb0] sm:$0xff]
                  %1603 = vst [vmem:[%s1099 + $0x3ec] sm:$0xff] %v1602
                  %v1604 = vld [vmem:[%s1098 + $0xfc0] sm:$0xff]
                  %1605 = vst [vmem:[%s1099 + $0x3f0] sm:$0xff] %v1604
                  %v1606 = vld [vmem:[%s1098 + $0xfd0] sm:$0xff]
                  %1607 = vst [vmem:[%s1099 + $0x3f4] sm:$0xff] %v1606
                  %v1608 = vld [vmem:[%s1098 + $0xfe0] sm:$0xff]
                  %1609 = vst [vmem:[%s1099 + $0x3f8] sm:$0xff] %v1608
                  %v1610 = vld [vmem:[%s1098 + $0xff0] sm:$0xff]
                  %1611 = vst [vmem:[%s1099 + $0x3fc] sm:$0xff] %v1610
                  %v1612 = vld [vmem:[%s1098 + $0x1000] sm:$0xff]
                  %1613 = vst [vmem:[%s1099 + $0x400] sm:$0xff] %v1612
                  %v1614 = vld [vmem:[%s1098 + $0x1010] sm:$0xff]
                  %1615 = vst [vmem:[%s1099 + $0x404] sm:$0xff] %v1614
                  %v1616 = vld [vmem:[%s1098 + $0x1020] sm:$0xff]
                  %1617 = vst [vmem:[%s1099 + $0x408] sm:$0xff] %v1616
                  %v1618 = vld [vmem:[%s1098 + $0x1030] sm:$0xff]
                  %1619 = vst [vmem:[%s1099 + $0x40c] sm:$0xff] %v1618
                  %v1620 = vld [vmem:[%s1098 + $0x1040] sm:$0xff]
                  %1621 = vst [vmem:[%s1099 + $0x410] sm:$0xff] %v1620
                  %v1622 = vld [vmem:[%s1098 + $0x1050] sm:$0xff]
                  %1623 = vst [vmem:[%s1099 + $0x414] sm:$0xff] %v1622
                  %v1624 = vld [vmem:[%s1098 + $0x1060] sm:$0xff]
                  %1625 = vst [vmem:[%s1099 + $0x418] sm:$0xff] %v1624
                  %v1626 = vld [vmem:[%s1098 + $0x1070] sm:$0xff]
                  %1627 = vst [vmem:[%s1099 + $0x41c] sm:$0xff] %v1626
                  %v1628 = vld [vmem:[%s1098 + $0x1080] sm:$0xff]
                  %1629 = vst [vmem:[%s1099 + $0x420] sm:$0xff] %v1628
                  %v1630 = vld [vmem:[%s1098 + $0x1090] sm:$0xff]
                  %1631 = vst [vmem:[%s1099 + $0x424] sm:$0xff] %v1630
                  %v1632 = vld [vmem:[%s1098 + $0x10a0] sm:$0xff]
                  %1633 = vst [vmem:[%s1099 + $0x428] sm:$0xff] %v1632
                  %v1634 = vld [vmem:[%s1098 + $0x10b0] sm:$0xff]
                  %1635 = vst [vmem:[%s1099 + $0x42c] sm:$0xff] %v1634
                  %v1636 = vld [vmem:[%s1098 + $0x10c0] sm:$0xff]
                  %1637 = vst [vmem:[%s1099 + $0x430] sm:$0xff] %v1636
                  %v1638 = vld [vmem:[%s1098 + $0x10d0] sm:$0xff]
                  %1639 = vst [vmem:[%s1099 + $0x434] sm:$0xff] %v1638
                  %v1640 = vld [vmem:[%s1098 + $0x10e0] sm:$0xff]
                  %1641 = vst [vmem:[%s1099 + $0x438] sm:$0xff] %v1640
                  %v1642 = vld [vmem:[%s1098 + $0x10f0] sm:$0xff]
                  %1643 = vst [vmem:[%s1099 + $0x43c] sm:$0xff] %v1642
                  %v1644 = vld [vmem:[%s1098 + $0x1100] sm:$0xff]
                  %1645 = vst [vmem:[%s1099 + $0x440] sm:$0xff] %v1644
                  %v1646 = vld [vmem:[%s1098 + $0x1110] sm:$0xff]
                  %1647 = vst [vmem:[%s1099 + $0x444] sm:$0xff] %v1646
                  %v1648 = vld [vmem:[%s1098 + $0x1120] sm:$0xff]
                  %1649 = vst [vmem:[%s1099 + $0x448] sm:$0xff] %v1648
                  %v1650 = vld [vmem:[%s1098 + $0x1130] sm:$0xff]
                  %1651 = vst [vmem:[%s1099 + $0x44c] sm:$0xff] %v1650
                  %v1652 = vld [vmem:[%s1098 + $0x1140] sm:$0xff]
                  %1653 = vst [vmem:[%s1099 + $0x450] sm:$0xff] %v1652
                  %v1654 = vld [vmem:[%s1098 + $0x1150] sm:$0xff]
                  %1655 = vst [vmem:[%s1099 + $0x454] sm:$0xff] %v1654
                  %v1656 = vld [vmem:[%s1098 + $0x1160] sm:$0xff]
                  %1657 = vst [vmem:[%s1099 + $0x458] sm:$0xff] %v1656
                  %v1658 = vld [vmem:[%s1098 + $0x1170] sm:$0xff]
                  %1659 = vst [vmem:[%s1099 + $0x45c] sm:$0xff] %v1658
                  %v1660 = vld [vmem:[%s1098 + $0x1180] sm:$0xff]
                  %1661 = vst [vmem:[%s1099 + $0x460] sm:$0xff] %v1660
                  %v1662 = vld [vmem:[%s1098 + $0x1190] sm:$0xff]
                  %1663 = vst [vmem:[%s1099 + $0x464] sm:$0xff] %v1662
                  %v1664 = vld [vmem:[%s1098 + $0x11a0] sm:$0xff]
                  %1665 = vst [vmem:[%s1099 + $0x468] sm:$0xff] %v1664
                  %v1666 = vld [vmem:[%s1098 + $0x11b0] sm:$0xff]
                  %1667 = vst [vmem:[%s1099 + $0x46c] sm:$0xff] %v1666
                  %v1668 = vld [vmem:[%s1098 + $0x11c0] sm:$0xff]
                  %1669 = vst [vmem:[%s1099 + $0x470] sm:$0xff] %v1668
                  %v1670 = vld [vmem:[%s1098 + $0x11d0] sm:$0xff]
                  %1671 = vst [vmem:[%s1099 + $0x474] sm:$0xff] %v1670
                  %v1672 = vld [vmem:[%s1098 + $0x11e0] sm:$0xff]
                  %1673 = vst [vmem:[%s1099 + $0x478] sm:$0xff] %v1672
                  %v1674 = vld [vmem:[%s1098 + $0x11f0] sm:$0xff]
                  %1675 = vst [vmem:[%s1099 + $0x47c] sm:$0xff] %v1674
                  %v1676 = vld [vmem:[%s1098 + $0x1200] sm:$0xff]
                  %1677 = vst [vmem:[%s1099 + $0x480] sm:$0xff] %v1676
                  %v1678 = vld [vmem:[%s1098 + $0x1210] sm:$0xff]
                  %1679 = vst [vmem:[%s1099 + $0x484] sm:$0xff] %v1678
                  %v1680 = vld [vmem:[%s1098 + $0x1220] sm:$0xff]
                  %1681 = vst [vmem:[%s1099 + $0x488] sm:$0xff] %v1680
                  %v1682 = vld [vmem:[%s1098 + $0x1230] sm:$0xff]
                  %1683 = vst [vmem:[%s1099 + $0x48c] sm:$0xff] %v1682
                  %v1684 = vld [vmem:[%s1098 + $0x1240] sm:$0xff]
                  %1685 = vst [vmem:[%s1099 + $0x490] sm:$0xff] %v1684
                  %v1686 = vld [vmem:[%s1098 + $0x1250] sm:$0xff]
                  %1687 = vst [vmem:[%s1099 + $0x494] sm:$0xff] %v1686
                  %v1688 = vld [vmem:[%s1098 + $0x1260] sm:$0xff]
                  %1689 = vst [vmem:[%s1099 + $0x498] sm:$0xff] %v1688
                  %v1690 = vld [vmem:[%s1098 + $0x1270] sm:$0xff]
                  %1691 = vst [vmem:[%s1099 + $0x49c] sm:$0xff] %v1690
                  %v1692 = vld [vmem:[%s1098 + $0x1280] sm:$0xff]
                  %1693 = vst [vmem:[%s1099 + $0x4a0] sm:$0xff] %v1692
                  %v1694 = vld [vmem:[%s1098 + $0x1290] sm:$0xff]
                  %1695 = vst [vmem:[%s1099 + $0x4a4] sm:$0xff] %v1694
                  %v1696 = vld [vmem:[%s1098 + $0x12a0] sm:$0xff]
                  %1697 = vst [vmem:[%s1099 + $0x4a8] sm:$0xff] %v1696
                  %v1698 = vld [vmem:[%s1098 + $0x12b0] sm:$0xff]
                  %1699 = vst [vmem:[%s1099 + $0x4ac] sm:$0xff] %v1698
                  %v1700 = vld [vmem:[%s1098 + $0x12c0] sm:$0xff]
                  %1701 = vst [vmem:[%s1099 + $0x4b0] sm:$0xff] %v1700
                  %v1702 = vld [vmem:[%s1098 + $0x12d0] sm:$0xff]
                  %1703 = vst [vmem:[%s1099 + $0x4b4] sm:$0xff] %v1702
                  %v1704 = vld [vmem:[%s1098 + $0x12e0] sm:$0xff]
                  %1705 = vst [vmem:[%s1099 + $0x4b8] sm:$0xff] %v1704
                  %v1706 = vld [vmem:[%s1098 + $0x12f0] sm:$0xff]
                  %1707 = vst [vmem:[%s1099 + $0x4bc] sm:$0xff] %v1706
                  %v1708 = vld [vmem:[%s1098 + $0x1300] sm:$0xff]
                  %1709 = vst [vmem:[%s1099 + $0x4c0] sm:$0xff] %v1708
                  %v1710 = vld [vmem:[%s1098 + $0x1310] sm:$0xff]
                  %1711 = vst [vmem:[%s1099 + $0x4c4] sm:$0xff] %v1710
                  %v1712 = vld [vmem:[%s1098 + $0x1320] sm:$0xff]
                  %1713 = vst [vmem:[%s1099 + $0x4c8] sm:$0xff] %v1712
                  %v1714 = vld [vmem:[%s1098 + $0x1330] sm:$0xff]
                  %1715 = vst [vmem:[%s1099 + $0x4cc] sm:$0xff] %v1714
                  %v1716 = vld [vmem:[%s1098 + $0x1340] sm:$0xff]
                  %1717 = vst [vmem:[%s1099 + $0x4d0] sm:$0xff] %v1716
                  %v1718 = vld [vmem:[%s1098 + $0x1350] sm:$0xff]
                  %1719 = vst [vmem:[%s1099 + $0x4d4] sm:$0xff] %v1718
                  %v1720 = vld [vmem:[%s1098 + $0x1360] sm:$0xff]
                  %1721 = vst [vmem:[%s1099 + $0x4d8] sm:$0xff] %v1720
                  %v1722 = vld [vmem:[%s1098 + $0x1370] sm:$0xff]
                  %1723 = vst [vmem:[%s1099 + $0x4dc] sm:$0xff] %v1722
                  %v1724 = vld [vmem:[%s1098 + $0x1380] sm:$0xff]
                  %1725 = vst [vmem:[%s1099 + $0x4e0] sm:$0xff] %v1724
                  %v1726 = vld [vmem:[%s1098 + $0x1390] sm:$0xff]
                  %1727 = vst [vmem:[%s1099 + $0x4e4] sm:$0xff] %v1726
                  %v1728 = vld [vmem:[%s1098 + $0x13a0] sm:$0xff]
                  %1729 = vst [vmem:[%s1099 + $0x4e8] sm:$0xff] %v1728
                  %v1730 = vld [vmem:[%s1098 + $0x13b0] sm:$0xff]
                  %1731 = vst [vmem:[%s1099 + $0x4ec] sm:$0xff] %v1730
                  %v1732 = vld [vmem:[%s1098 + $0x13c0] sm:$0xff]
                  %1733 = vst [vmem:[%s1099 + $0x4f0] sm:$0xff] %v1732
                  %v1734 = vld [vmem:[%s1098 + $0x13d0] sm:$0xff]
                  %1735 = vst [vmem:[%s1099 + $0x4f4] sm:$0xff] %v1734
                  %v1736 = vld [vmem:[%s1098 + $0x13e0] sm:$0xff]
                  %1737 = vst [vmem:[%s1099 + $0x4f8] sm:$0xff] %v1736
                  %v1738 = vld [vmem:[%s1098 + $0x13f0] sm:$0xff]
                  %1739 = vst [vmem:[%s1099 + $0x4fc] sm:$0xff] %v1738
                  %v1740 = vld [vmem:[%s1098 + $0x1400] sm:$0xff]
                  %1741 = vst [vmem:[%s1099 + $0x500] sm:$0xff] %v1740
                  %v1742 = vld [vmem:[%s1098 + $0x1410] sm:$0xff]
                  %1743 = vst [vmem:[%s1099 + $0x504] sm:$0xff] %v1742
                  %v1744 = vld [vmem:[%s1098 + $0x1420] sm:$0xff]
                  %1745 = vst [vmem:[%s1099 + $0x508] sm:$0xff] %v1744
                  %v1746 = vld [vmem:[%s1098 + $0x1430] sm:$0xff]
                  %1747 = vst [vmem:[%s1099 + $0x50c] sm:$0xff] %v1746
                  %v1748 = vld [vmem:[%s1098 + $0x1440] sm:$0xff]
                  %1749 = vst [vmem:[%s1099 + $0x510] sm:$0xff] %v1748
                  %v1750 = vld [vmem:[%s1098 + $0x1450] sm:$0xff]
                  %1751 = vst [vmem:[%s1099 + $0x514] sm:$0xff] %v1750
                  %v1752 = vld [vmem:[%s1098 + $0x1460] sm:$0xff]
                  %1753 = vst [vmem:[%s1099 + $0x518] sm:$0xff] %v1752
                  %v1754 = vld [vmem:[%s1098 + $0x1470] sm:$0xff]
                  %1755 = vst [vmem:[%s1099 + $0x51c] sm:$0xff] %v1754
                  %v1756 = vld [vmem:[%s1098 + $0x1480] sm:$0xff]
                  %1757 = vst [vmem:[%s1099 + $0x520] sm:$0xff] %v1756
                  %v1758 = vld [vmem:[%s1098 + $0x1490] sm:$0xff]
                  %1759 = vst [vmem:[%s1099 + $0x524] sm:$0xff] %v1758
                  %v1760 = vld [vmem:[%s1098 + $0x14a0] sm:$0xff]
                  %1761 = vst [vmem:[%s1099 + $0x528] sm:$0xff] %v1760
                  %v1762 = vld [vmem:[%s1098 + $0x14b0] sm:$0xff]
                  %1763 = vst [vmem:[%s1099 + $0x52c] sm:$0xff] %v1762
                  %v1764 = vld [vmem:[%s1098 + $0x14c0] sm:$0xff]
                  %1765 = vst [vmem:[%s1099 + $0x530] sm:$0xff] %v1764
                  %v1766 = vld [vmem:[%s1098 + $0x14d0] sm:$0xff]
                  %1767 = vst [vmem:[%s1099 + $0x534] sm:$0xff] %v1766
                  %v1768 = vld [vmem:[%s1098 + $0x14e0] sm:$0xff]
                  %1769 = vst [vmem:[%s1099 + $0x538] sm:$0xff] %v1768
                  %v1770 = vld [vmem:[%s1098 + $0x14f0] sm:$0xff]
                  %1771 = vst [vmem:[%s1099 + $0x53c] sm:$0xff] %v1770
                  %v1772 = vld [vmem:[%s1098 + $0x1500] sm:$0xff]
                  %1773 = vst [vmem:[%s1099 + $0x540] sm:$0xff] %v1772
                  %v1774 = vld [vmem:[%s1098 + $0x1510] sm:$0xff]
                  %1775 = vst [vmem:[%s1099 + $0x544] sm:$0xff] %v1774
                  %v1776 = vld [vmem:[%s1098 + $0x1520] sm:$0xff]
                  %1777 = vst [vmem:[%s1099 + $0x548] sm:$0xff] %v1776
                  %v1778 = vld [vmem:[%s1098 + $0x1530] sm:$0xff]
                  %1779 = vst [vmem:[%s1099 + $0x54c] sm:$0xff] %v1778
                  %v1780 = vld [vmem:[%s1098 + $0x1540] sm:$0xff]
                  %1781 = vst [vmem:[%s1099 + $0x550] sm:$0xff] %v1780
                  %v1782 = vld [vmem:[%s1098 + $0x1550] sm:$0xff]
                  %1783 = vst [vmem:[%s1099 + $0x554] sm:$0xff] %v1782
                  %v1784 = vld [vmem:[%s1098 + $0x1560] sm:$0xff]
                  %1785 = vst [vmem:[%s1099 + $0x558] sm:$0xff] %v1784
                  %v1786 = vld [vmem:[%s1098 + $0x1570] sm:$0xff]
                  %1787 = vst [vmem:[%s1099 + $0x55c] sm:$0xff] %v1786
                  %v1788 = vld [vmem:[%s1098 + $0x1580] sm:$0xff]
                  %1789 = vst [vmem:[%s1099 + $0x560] sm:$0xff] %v1788
                  %v1790 = vld [vmem:[%s1098 + $0x1590] sm:$0xff]
                  %1791 = vst [vmem:[%s1099 + $0x564] sm:$0xff] %v1790
                  %v1792 = vld [vmem:[%s1098 + $0x15a0] sm:$0xff]
                  %1793 = vst [vmem:[%s1099 + $0x568] sm:$0xff] %v1792
                  %v1794 = vld [vmem:[%s1098 + $0x15b0] sm:$0xff]
                  %1795 = vst [vmem:[%s1099 + $0x56c] sm:$0xff] %v1794
                  %v1796 = vld [vmem:[%s1098 + $0x15c0] sm:$0xff]
                  %1797 = vst [vmem:[%s1099 + $0x570] sm:$0xff] %v1796
                  %v1798 = vld [vmem:[%s1098 + $0x15d0] sm:$0xff]
                  %1799 = vst [vmem:[%s1099 + $0x574] sm:$0xff] %v1798
                  %v1800 = vld [vmem:[%s1098 + $0x15e0] sm:$0xff]
                  %1801 = vst [vmem:[%s1099 + $0x578] sm:$0xff] %v1800
                  %v1802 = vld [vmem:[%s1098 + $0x15f0] sm:$0xff]
                  %1803 = vst [vmem:[%s1099 + $0x57c] sm:$0xff] %v1802
                  %v1804 = vld [vmem:[%s1098 + $0x1600] sm:$0xff]
                  %1805 = vst [vmem:[%s1099 + $0x580] sm:$0xff] %v1804
                  %v1806 = vld [vmem:[%s1098 + $0x1610] sm:$0xff]
                  %1807 = vst [vmem:[%s1099 + $0x584] sm:$0xff] %v1806
                  %v1808 = vld [vmem:[%s1098 + $0x1620] sm:$0xff]
                  %1809 = vst [vmem:[%s1099 + $0x588] sm:$0xff] %v1808
                  %v1810 = vld [vmem:[%s1098 + $0x1630] sm:$0xff]
                  %1811 = vst [vmem:[%s1099 + $0x58c] sm:$0xff] %v1810
                  %v1812 = vld [vmem:[%s1098 + $0x1640] sm:$0xff]
                  %1813 = vst [vmem:[%s1099 + $0x590] sm:$0xff] %v1812
                  %v1814 = vld [vmem:[%s1098 + $0x1650] sm:$0xff]
                  %1815 = vst [vmem:[%s1099 + $0x594] sm:$0xff] %v1814
                  %v1816 = vld [vmem:[%s1098 + $0x1660] sm:$0xff]
                  %1817 = vst [vmem:[%s1099 + $0x598] sm:$0xff] %v1816
                  %v1818 = vld [vmem:[%s1098 + $0x1670] sm:$0xff]
                  %1819 = vst [vmem:[%s1099 + $0x59c] sm:$0xff] %v1818
                  %v1820 = vld [vmem:[%s1098 + $0x1680] sm:$0xff]
                  %1821 = vst [vmem:[%s1099 + $0x5a0] sm:$0xff] %v1820
                  %v1822 = vld [vmem:[%s1098 + $0x1690] sm:$0xff]
                  %1823 = vst [vmem:[%s1099 + $0x5a4] sm:$0xff] %v1822
                  %v1824 = vld [vmem:[%s1098 + $0x16a0] sm:$0xff]
                  %1825 = vst [vmem:[%s1099 + $0x5a8] sm:$0xff] %v1824
                  %v1826 = vld [vmem:[%s1098 + $0x16b0] sm:$0xff]
                  %1827 = vst [vmem:[%s1099 + $0x5ac] sm:$0xff] %v1826
                  %v1828 = vld [vmem:[%s1098 + $0x16c0] sm:$0xff]
                  %1829 = vst [vmem:[%s1099 + $0x5b0] sm:$0xff] %v1828
                  %v1830 = vld [vmem:[%s1098 + $0x16d0] sm:$0xff]
                  %1831 = vst [vmem:[%s1099 + $0x5b4] sm:$0xff] %v1830
                  %v1832 = vld [vmem:[%s1098 + $0x16e0] sm:$0xff]
                  %1833 = vst [vmem:[%s1099 + $0x5b8] sm:$0xff] %v1832
                  %v1834 = vld [vmem:[%s1098 + $0x16f0] sm:$0xff]
                  %1835 = vst [vmem:[%s1099 + $0x5bc] sm:$0xff] %v1834
                  %v1836 = vld [vmem:[%s1098 + $0x1700] sm:$0xff]
                  %1837 = vst [vmem:[%s1099 + $0x5c0] sm:$0xff] %v1836
                  %v1838 = vld [vmem:[%s1098 + $0x1710] sm:$0xff]
                  %1839 = vst [vmem:[%s1099 + $0x5c4] sm:$0xff] %v1838
                  %v1840 = vld [vmem:[%s1098 + $0x1720] sm:$0xff]
                  %1841 = vst [vmem:[%s1099 + $0x5c8] sm:$0xff] %v1840
                  %v1842 = vld [vmem:[%s1098 + $0x1730] sm:$0xff]
                  %1843 = vst [vmem:[%s1099 + $0x5cc] sm:$0xff] %v1842
                  %v1844 = vld [vmem:[%s1098 + $0x1740] sm:$0xff]
                  %1845 = vst [vmem:[%s1099 + $0x5d0] sm:$0xff] %v1844
                  %v1846 = vld [vmem:[%s1098 + $0x1750] sm:$0xff]
                  %1847 = vst [vmem:[%s1099 + $0x5d4] sm:$0xff] %v1846
                  %v1848 = vld [vmem:[%s1098 + $0x1760] sm:$0xff]
                  %1849 = vst [vmem:[%s1099 + $0x5d8] sm:$0xff] %v1848
                  %v1850 = vld [vmem:[%s1098 + $0x1770] sm:$0xff]
                  %1851 = vst [vmem:[%s1099 + $0x5dc] sm:$0xff] %v1850
                  %v1852 = vld [vmem:[%s1098 + $0x1780] sm:$0xff]
                  %1853 = vst [vmem:[%s1099 + $0x5e0] sm:$0xff] %v1852
                  %v1854 = vld [vmem:[%s1098 + $0x1790] sm:$0xff]
                  %1855 = vst [vmem:[%s1099 + $0x5e4] sm:$0xff] %v1854
                  %v1856 = vld [vmem:[%s1098 + $0x17a0] sm:$0xff]
                  %1857 = vst [vmem:[%s1099 + $0x5e8] sm:$0xff] %v1856
                  %v1858 = vld [vmem:[%s1098 + $0x17b0] sm:$0xff]
                  %1859 = vst [vmem:[%s1099 + $0x5ec] sm:$0xff] %v1858
                  %v1860 = vld [vmem:[%s1098 + $0x17c0] sm:$0xff]
                  %1861 = vst [vmem:[%s1099 + $0x5f0] sm:$0xff] %v1860
                  %v1862 = vld [vmem:[%s1098 + $0x17d0] sm:$0xff]
                  %1863 = vst [vmem:[%s1099 + $0x5f4] sm:$0xff] %v1862
                  %v1864 = vld [vmem:[%s1098 + $0x17e0] sm:$0xff]
                  %1865 = vst [vmem:[%s1099 + $0x5f8] sm:$0xff] %v1864
                  %v1866 = vld [vmem:[%s1098 + $0x17f0] sm:$0xff]
                  %1867 = vst [vmem:[%s1099 + $0x5fc] sm:$0xff] %v1866
                  %v1868 = vld [vmem:[%s1098 + $0x1800] sm:$0xff]
                  %1869 = vst [vmem:[%s1099 + $0x600] sm:$0xff] %v1868
                  %v1870 = vld [vmem:[%s1098 + $0x1810] sm:$0xff]
                  %1871 = vst [vmem:[%s1099 + $0x604] sm:$0xff] %v1870
                  %v1872 = vld [vmem:[%s1098 + $0x1820] sm:$0xff]
                  %1873 = vst [vmem:[%s1099 + $0x608] sm:$0xff] %v1872
                  %v1874 = vld [vmem:[%s1098 + $0x1830] sm:$0xff]
                  %1875 = vst [vmem:[%s1099 + $0x60c] sm:$0xff] %v1874
                  %v1876 = vld [vmem:[%s1098 + $0x1840] sm:$0xff]
                  %1877 = vst [vmem:[%s1099 + $0x610] sm:$0xff] %v1876
                  %v1878 = vld [vmem:[%s1098 + $0x1850] sm:$0xff]
                  %1879 = vst [vmem:[%s1099 + $0x614] sm:$0xff] %v1878
                  %v1880 = vld [vmem:[%s1098 + $0x1860] sm:$0xff]
                  %1881 = vst [vmem:[%s1099 + $0x618] sm:$0xff] %v1880
                  %v1882 = vld [vmem:[%s1098 + $0x1870] sm:$0xff]
                  %1883 = vst [vmem:[%s1099 + $0x61c] sm:$0xff] %v1882
                  %s1884 = sadd.s32 1, %s1097
                  %p1885 = scmp.ge.s32.totalorder %s1884, 0
                  %s1886 = scalar_select %p1885, 0, %s1884
                  %s1887 = smul.u32 %s1886, 8
                  %s1888 = smul.u32 %s1886, 8
                  %s1889 = scalar_lea.vmem %s288, %s1887
                  %s1890 = scalar_lea.vmem %s286, %s1888 [#allocation2]
                $region68: #{nature_tqn_forward.7} parent=62 // loop_footer
                  %s1096 = sadd.s32 1, %s1092
                $region69: #{nature_tqn_forward.7} parent=62 // loop_footer_branch
                  %1091 = sbr.rel target = $region65
                $region70: #{nature_tqn_forward.7} parent=62 // loop_exit
                  _
              $region63: #{nature_tqn_forward.7} parent=47 // pred_fallthru
                _
              // Predicated region
              $region71: #{nature_tqn_forward.7} parent=47 // pred_check
                _
              $region72: #{nature_tqn_forward.7} parent=47 // pred_check_branch
                %1892 = sbr.rel (0) target = $region74
              $region73: #{nature_tqn_forward.7} parent=47 // pred_region
                loop: start=0, step=1, limit=0
                $region75: #{nature_tqn_forward.7} parent=73 // loop_pre_header
                  _
                $region76: #{nature_tqn_forward.7} parent=73 // loop_header
                  %s1894 = sphi 0, %s1898
                  %p1895 = scmp.ge.s32.totalorder %s1894, 0
                  %s1899 = sphi 0, %s2688
                  %s1900 = sphi %s288, %s2691
                  %s1901 = sphi %s286, %s2692
                $region77: #{nature_tqn_forward.7} parent=73 // loop_header_branch
                  %1897 = sbr.rel (%p1895) target = $region81
                $region78: #{nature_tqn_forward.7} parent=73 // loop_body
                  %v1902 = vld [vmem:[%s1900] sm:$0xff]
                  %1903 = vst [vmem:[%s1901] sm:$0xff] %v1902
                  %v1904 = vld [vmem:[%s1900 + $0x10] sm:$0xff]
                  %1905 = vst [vmem:[%s1901 + $0x4] sm:$0xff] %v1904
                  %v1906 = vld [vmem:[%s1900 + $0x20] sm:$0xff]
                  %1907 = vst [vmem:[%s1901 + $0x8] sm:$0xff] %v1906
                  %v1908 = vld [vmem:[%s1900 + $0x30] sm:$0xff]
                  %1909 = vst [vmem:[%s1901 + $0xc] sm:$0xff] %v1908
                  %v1910 = vld [vmem:[%s1900 + $0x40] sm:$0xff]
                  %1911 = vst [vmem:[%s1901 + $0x10] sm:$0xff] %v1910
                  %v1912 = vld [vmem:[%s1900 + $0x50] sm:$0xff]
                  %1913 = vst [vmem:[%s1901 + $0x14] sm:$0xff] %v1912
                  %v1914 = vld [vmem:[%s1900 + $0x60] sm:$0xff]
                  %1915 = vst [vmem:[%s1901 + $0x18] sm:$0xff] %v1914
                  %v1916 = vld [vmem:[%s1900 + $0x70] sm:$0xff]
                  %1917 = vst [vmem:[%s1901 + $0x1c] sm:$0xff] %v1916
                  %v1918 = vld [vmem:[%s1900 + $0x80] sm:$0xff]
                  %1919 = vst [vmem:[%s1901 + $0x20] sm:$0xff] %v1918
                  %v1920 = vld [vmem:[%s1900 + $0x90] sm:$0xff]
                  %1921 = vst [vmem:[%s1901 + $0x24] sm:$0xff] %v1920
                  %v1922 = vld [vmem:[%s1900 + $0xa0] sm:$0xff]
                  %1923 = vst [vmem:[%s1901 + $0x28] sm:$0xff] %v1922
                  %v1924 = vld [vmem:[%s1900 + $0xb0] sm:$0xff]
                  %1925 = vst [vmem:[%s1901 + $0x2c] sm:$0xff] %v1924
                  %v1926 = vld [vmem:[%s1900 + $0xc0] sm:$0xff]
                  %1927 = vst [vmem:[%s1901 + $0x30] sm:$0xff] %v1926
                  %v1928 = vld [vmem:[%s1900 + $0xd0] sm:$0xff]
                  %1929 = vst [vmem:[%s1901 + $0x34] sm:$0xff] %v1928
                  %v1930 = vld [vmem:[%s1900 + $0xe0] sm:$0xff]
                  %1931 = vst [vmem:[%s1901 + $0x38] sm:$0xff] %v1930
                  %v1932 = vld [vmem:[%s1900 + $0xf0] sm:$0xff]
                  %1933 = vst [vmem:[%s1901 + $0x3c] sm:$0xff] %v1932
                  %v1934 = vld [vmem:[%s1900 + $0x100] sm:$0xff]
                  %1935 = vst [vmem:[%s1901 + $0x40] sm:$0xff] %v1934
                  %v1936 = vld [vmem:[%s1900 + $0x110] sm:$0xff]
                  %1937 = vst [vmem:[%s1901 + $0x44] sm:$0xff] %v1936
                  %v1938 = vld [vmem:[%s1900 + $0x120] sm:$0xff]
                  %1939 = vst [vmem:[%s1901 + $0x48] sm:$0xff] %v1938
                  %v1940 = vld [vmem:[%s1900 + $0x130] sm:$0xff]
                  %1941 = vst [vmem:[%s1901 + $0x4c] sm:$0xff] %v1940
                  %v1942 = vld [vmem:[%s1900 + $0x140] sm:$0xff]
                  %1943 = vst [vmem:[%s1901 + $0x50] sm:$0xff] %v1942
                  %v1944 = vld [vmem:[%s1900 + $0x150] sm:$0xff]
                  %1945 = vst [vmem:[%s1901 + $0x54] sm:$0xff] %v1944
                  %v1946 = vld [vmem:[%s1900 + $0x160] sm:$0xff]
                  %1947 = vst [vmem:[%s1901 + $0x58] sm:$0xff] %v1946
                  %v1948 = vld [vmem:[%s1900 + $0x170] sm:$0xff]
                  %1949 = vst [vmem:[%s1901 + $0x5c] sm:$0xff] %v1948
                  %v1950 = vld [vmem:[%s1900 + $0x180] sm:$0xff]
                  %1951 = vst [vmem:[%s1901 + $0x60] sm:$0xff] %v1950
                  %v1952 = vld [vmem:[%s1900 + $0x190] sm:$0xff]
                  %1953 = vst [vmem:[%s1901 + $0x64] sm:$0xff] %v1952
                  %v1954 = vld [vmem:[%s1900 + $0x1a0] sm:$0xff]
                  %1955 = vst [vmem:[%s1901 + $0x68] sm:$0xff] %v1954
                  %v1956 = vld [vmem:[%s1900 + $0x1b0] sm:$0xff]
                  %1957 = vst [vmem:[%s1901 + $0x6c] sm:$0xff] %v1956
                  %v1958 = vld [vmem:[%s1900 + $0x1c0] sm:$0xff]
                  %1959 = vst [vmem:[%s1901 + $0x70] sm:$0xff] %v1958
                  %v1960 = vld [vmem:[%s1900 + $0x1d0] sm:$0xff]
                  %1961 = vst [vmem:[%s1901 + $0x74] sm:$0xff] %v1960
                  %v1962 = vld [vmem:[%s1900 + $0x1e0] sm:$0xff]
                  %1963 = vst [vmem:[%s1901 + $0x78] sm:$0xff] %v1962
                  %v1964 = vld [vmem:[%s1900 + $0x1f0] sm:$0xff]
                  %1965 = vst [vmem:[%s1901 + $0x7c] sm:$0xff] %v1964
                  %v1966 = vld [vmem:[%s1900 + $0x200] sm:$0xff]
                  %1967 = vst [vmem:[%s1901 + $0x80] sm:$0xff] %v1966
                  %v1968 = vld [vmem:[%s1900 + $0x210] sm:$0xff]
                  %1969 = vst [vmem:[%s1901 + $0x84] sm:$0xff] %v1968
                  %v1970 = vld [vmem:[%s1900 + $0x220] sm:$0xff]
                  %1971 = vst [vmem:[%s1901 + $0x88] sm:$0xff] %v1970
                  %v1972 = vld [vmem:[%s1900 + $0x230] sm:$0xff]
                  %1973 = vst [vmem:[%s1901 + $0x8c] sm:$0xff] %v1972
                  %v1974 = vld [vmem:[%s1900 + $0x240] sm:$0xff]
                  %1975 = vst [vmem:[%s1901 + $0x90] sm:$0xff] %v1974
                  %v1976 = vld [vmem:[%s1900 + $0x250] sm:$0xff]
                  %1977 = vst [vmem:[%s1901 + $0x94] sm:$0xff] %v1976
                  %v1978 = vld [vmem:[%s1900 + $0x260] sm:$0xff]
                  %1979 = vst [vmem:[%s1901 + $0x98] sm:$0xff] %v1978
                  %v1980 = vld [vmem:[%s1900 + $0x270] sm:$0xff]
                  %1981 = vst [vmem:[%s1901 + $0x9c] sm:$0xff] %v1980
                  %v1982 = vld [vmem:[%s1900 + $0x280] sm:$0xff]
                  %1983 = vst [vmem:[%s1901 + $0xa0] sm:$0xff] %v1982
                  %v1984 = vld [vmem:[%s1900 + $0x290] sm:$0xff]
                  %1985 = vst [vmem:[%s1901 + $0xa4] sm:$0xff] %v1984
                  %v1986 = vld [vmem:[%s1900 + $0x2a0] sm:$0xff]
                  %1987 = vst [vmem:[%s1901 + $0xa8] sm:$0xff] %v1986
                  %v1988 = vld [vmem:[%s1900 + $0x2b0] sm:$0xff]
                  %1989 = vst [vmem:[%s1901 + $0xac] sm:$0xff] %v1988
                  %v1990 = vld [vmem:[%s1900 + $0x2c0] sm:$0xff]
                  %1991 = vst [vmem:[%s1901 + $0xb0] sm:$0xff] %v1990
                  %v1992 = vld [vmem:[%s1900 + $0x2d0] sm:$0xff]
                  %1993 = vst [vmem:[%s1901 + $0xb4] sm:$0xff] %v1992
                  %v1994 = vld [vmem:[%s1900 + $0x2e0] sm:$0xff]
                  %1995 = vst [vmem:[%s1901 + $0xb8] sm:$0xff] %v1994
                  %v1996 = vld [vmem:[%s1900 + $0x2f0] sm:$0xff]
                  %1997 = vst [vmem:[%s1901 + $0xbc] sm:$0xff] %v1996
                  %v1998 = vld [vmem:[%s1900 + $0x300] sm:$0xff]
                  %1999 = vst [vmem:[%s1901 + $0xc0] sm:$0xff] %v1998
                  %v2000 = vld [vmem:[%s1900 + $0x310] sm:$0xff]
                  %2001 = vst [vmem:[%s1901 + $0xc4] sm:$0xff] %v2000
                  %v2002 = vld [vmem:[%s1900 + $0x320] sm:$0xff]
                  %2003 = vst [vmem:[%s1901 + $0xc8] sm:$0xff] %v2002
                  %v2004 = vld [vmem:[%s1900 + $0x330] sm:$0xff]
                  %2005 = vst [vmem:[%s1901 + $0xcc] sm:$0xff] %v2004
                  %v2006 = vld [vmem:[%s1900 + $0x340] sm:$0xff]
                  %2007 = vst [vmem:[%s1901 + $0xd0] sm:$0xff] %v2006
                  %v2008 = vld [vmem:[%s1900 + $0x350] sm:$0xff]
                  %2009 = vst [vmem:[%s1901 + $0xd4] sm:$0xff] %v2008
                  %v2010 = vld [vmem:[%s1900 + $0x360] sm:$0xff]
                  %2011 = vst [vmem:[%s1901 + $0xd8] sm:$0xff] %v2010
                  %v2012 = vld [vmem:[%s1900 + $0x370] sm:$0xff]
                  %2013 = vst [vmem:[%s1901 + $0xdc] sm:$0xff] %v2012
                  %v2014 = vld [vmem:[%s1900 + $0x380] sm:$0xff]
                  %2015 = vst [vmem:[%s1901 + $0xe0] sm:$0xff] %v2014
                  %v2016 = vld [vmem:[%s1900 + $0x390] sm:$0xff]
                  %2017 = vst [vmem:[%s1901 + $0xe4] sm:$0xff] %v2016
                  %v2018 = vld [vmem:[%s1900 + $0x3a0] sm:$0xff]
                  %2019 = vst [vmem:[%s1901 + $0xe8] sm:$0xff] %v2018
                  %v2020 = vld [vmem:[%s1900 + $0x3b0] sm:$0xff]
                  %2021 = vst [vmem:[%s1901 + $0xec] sm:$0xff] %v2020
                  %v2022 = vld [vmem:[%s1900 + $0x3c0] sm:$0xff]
                  %2023 = vst [vmem:[%s1901 + $0xf0] sm:$0xff] %v2022
                  %v2024 = vld [vmem:[%s1900 + $0x3d0] sm:$0xff]
                  %2025 = vst [vmem:[%s1901 + $0xf4] sm:$0xff] %v2024
                  %v2026 = vld [vmem:[%s1900 + $0x3e0] sm:$0xff]
                  %2027 = vst [vmem:[%s1901 + $0xf8] sm:$0xff] %v2026
                  %v2028 = vld [vmem:[%s1900 + $0x3f0] sm:$0xff]
                  %2029 = vst [vmem:[%s1901 + $0xfc] sm:$0xff] %v2028
                  %v2030 = vld [vmem:[%s1900 + $0x400] sm:$0xff]
                  %2031 = vst [vmem:[%s1901 + $0x100] sm:$0xff] %v2030
                  %v2032 = vld [vmem:[%s1900 + $0x410] sm:$0xff]
                  %2033 = vst [vmem:[%s1901 + $0x104] sm:$0xff] %v2032
                  %v2034 = vld [vmem:[%s1900 + $0x420] sm:$0xff]
                  %2035 = vst [vmem:[%s1901 + $0x108] sm:$0xff] %v2034
                  %v2036 = vld [vmem:[%s1900 + $0x430] sm:$0xff]
                  %2037 = vst [vmem:[%s1901 + $0x10c] sm:$0xff] %v2036
                  %v2038 = vld [vmem:[%s1900 + $0x440] sm:$0xff]
                  %2039 = vst [vmem:[%s1901 + $0x110] sm:$0xff] %v2038
                  %v2040 = vld [vmem:[%s1900 + $0x450] sm:$0xff]
                  %2041 = vst [vmem:[%s1901 + $0x114] sm:$0xff] %v2040
                  %v2042 = vld [vmem:[%s1900 + $0x460] sm:$0xff]
                  %2043 = vst [vmem:[%s1901 + $0x118] sm:$0xff] %v2042
                  %v2044 = vld [vmem:[%s1900 + $0x470] sm:$0xff]
                  %2045 = vst [vmem:[%s1901 + $0x11c] sm:$0xff] %v2044
                  %v2046 = vld [vmem:[%s1900 + $0x480] sm:$0xff]
                  %2047 = vst [vmem:[%s1901 + $0x120] sm:$0xff] %v2046
                  %v2048 = vld [vmem:[%s1900 + $0x490] sm:$0xff]
                  %2049 = vst [vmem:[%s1901 + $0x124] sm:$0xff] %v2048
                  %v2050 = vld [vmem:[%s1900 + $0x4a0] sm:$0xff]
                  %2051 = vst [vmem:[%s1901 + $0x128] sm:$0xff] %v2050
                  %v2052 = vld [vmem:[%s1900 + $0x4b0] sm:$0xff]
                  %2053 = vst [vmem:[%s1901 + $0x12c] sm:$0xff] %v2052
                  %v2054 = vld [vmem:[%s1900 + $0x4c0] sm:$0xff]
                  %2055 = vst [vmem:[%s1901 + $0x130] sm:$0xff] %v2054
                  %v2056 = vld [vmem:[%s1900 + $0x4d0] sm:$0xff]
                  %2057 = vst [vmem:[%s1901 + $0x134] sm:$0xff] %v2056
                  %v2058 = vld [vmem:[%s1900 + $0x4e0] sm:$0xff]
                  %2059 = vst [vmem:[%s1901 + $0x138] sm:$0xff] %v2058
                  %v2060 = vld [vmem:[%s1900 + $0x4f0] sm:$0xff]
                  %2061 = vst [vmem:[%s1901 + $0x13c] sm:$0xff] %v2060
                  %v2062 = vld [vmem:[%s1900 + $0x500] sm:$0xff]
                  %2063 = vst [vmem:[%s1901 + $0x140] sm:$0xff] %v2062
                  %v2064 = vld [vmem:[%s1900 + $0x510] sm:$0xff]
                  %2065 = vst [vmem:[%s1901 + $0x144] sm:$0xff] %v2064
                  %v2066 = vld [vmem:[%s1900 + $0x520] sm:$0xff]
                  %2067 = vst [vmem:[%s1901 + $0x148] sm:$0xff] %v2066
                  %v2068 = vld [vmem:[%s1900 + $0x530] sm:$0xff]
                  %2069 = vst [vmem:[%s1901 + $0x14c] sm:$0xff] %v2068
                  %v2070 = vld [vmem:[%s1900 + $0x540] sm:$0xff]
                  %2071 = vst [vmem:[%s1901 + $0x150] sm:$0xff] %v2070
                  %v2072 = vld [vmem:[%s1900 + $0x550] sm:$0xff]
                  %2073 = vst [vmem:[%s1901 + $0x154] sm:$0xff] %v2072
                  %v2074 = vld [vmem:[%s1900 + $0x560] sm:$0xff]
                  %2075 = vst [vmem:[%s1901 + $0x158] sm:$0xff] %v2074
                  %v2076 = vld [vmem:[%s1900 + $0x570] sm:$0xff]
                  %2077 = vst [vmem:[%s1901 + $0x15c] sm:$0xff] %v2076
                  %v2078 = vld [vmem:[%s1900 + $0x580] sm:$0xff]
                  %2079 = vst [vmem:[%s1901 + $0x160] sm:$0xff] %v2078
                  %v2080 = vld [vmem:[%s1900 + $0x590] sm:$0xff]
                  %2081 = vst [vmem:[%s1901 + $0x164] sm:$0xff] %v2080
                  %v2082 = vld [vmem:[%s1900 + $0x5a0] sm:$0xff]
                  %2083 = vst [vmem:[%s1901 + $0x168] sm:$0xff] %v2082
                  %v2084 = vld [vmem:[%s1900 + $0x5b0] sm:$0xff]
                  %2085 = vst [vmem:[%s1901 + $0x16c] sm:$0xff] %v2084
                  %v2086 = vld [vmem:[%s1900 + $0x5c0] sm:$0xff]
                  %2087 = vst [vmem:[%s1901 + $0x170] sm:$0xff] %v2086
                  %v2088 = vld [vmem:[%s1900 + $0x5d0] sm:$0xff]
                  %2089 = vst [vmem:[%s1901 + $0x174] sm:$0xff] %v2088
                  %v2090 = vld [vmem:[%s1900 + $0x5e0] sm:$0xff]
                  %2091 = vst [vmem:[%s1901 + $0x178] sm:$0xff] %v2090
                  %v2092 = vld [vmem:[%s1900 + $0x5f0] sm:$0xff]
                  %2093 = vst [vmem:[%s1901 + $0x17c] sm:$0xff] %v2092
                  %v2094 = vld [vmem:[%s1900 + $0x600] sm:$0xff]
                  %2095 = vst [vmem:[%s1901 + $0x180] sm:$0xff] %v2094
                  %v2096 = vld [vmem:[%s1900 + $0x610] sm:$0xff]
                  %2097 = vst [vmem:[%s1901 + $0x184] sm:$0xff] %v2096
                  %v2098 = vld [vmem:[%s1900 + $0x620] sm:$0xff]
                  %2099 = vst [vmem:[%s1901 + $0x188] sm:$0xff] %v2098
                  %v2100 = vld [vmem:[%s1900 + $0x630] sm:$0xff]
                  %2101 = vst [vmem:[%s1901 + $0x18c] sm:$0xff] %v2100
                  %v2102 = vld [vmem:[%s1900 + $0x640] sm:$0xff]
                  %2103 = vst [vmem:[%s1901 + $0x190] sm:$0xff] %v2102
                  %v2104 = vld [vmem:[%s1900 + $0x650] sm:$0xff]
                  %2105 = vst [vmem:[%s1901 + $0x194] sm:$0xff] %v2104
                  %v2106 = vld [vmem:[%s1900 + $0x660] sm:$0xff]
                  %2107 = vst [vmem:[%s1901 + $0x198] sm:$0xff] %v2106
                  %v2108 = vld [vmem:[%s1900 + $0x670] sm:$0xff]
                  %2109 = vst [vmem:[%s1901 + $0x19c] sm:$0xff] %v2108
                  %v2110 = vld [vmem:[%s1900 + $0x680] sm:$0xff]
                  %2111 = vst [vmem:[%s1901 + $0x1a0] sm:$0xff] %v2110
                  %v2112 = vld [vmem:[%s1900 + $0x690] sm:$0xff]
                  %2113 = vst [vmem:[%s1901 + $0x1a4] sm:$0xff] %v2112
                  %v2114 = vld [vmem:[%s1900 + $0x6a0] sm:$0xff]
                  %2115 = vst [vmem:[%s1901 + $0x1a8] sm:$0xff] %v2114
                  %v2116 = vld [vmem:[%s1900 + $0x6b0] sm:$0xff]
                  %2117 = vst [vmem:[%s1901 + $0x1ac] sm:$0xff] %v2116
                  %v2118 = vld [vmem:[%s1900 + $0x6c0] sm:$0xff]
                  %2119 = vst [vmem:[%s1901 + $0x1b0] sm:$0xff] %v2118
                  %v2120 = vld [vmem:[%s1900 + $0x6d0] sm:$0xff]
                  %2121 = vst [vmem:[%s1901 + $0x1b4] sm:$0xff] %v2120
                  %v2122 = vld [vmem:[%s1900 + $0x6e0] sm:$0xff]
                  %2123 = vst [vmem:[%s1901 + $0x1b8] sm:$0xff] %v2122
                  %v2124 = vld [vmem:[%s1900 + $0x6f0] sm:$0xff]
                  %2125 = vst [vmem:[%s1901 + $0x1bc] sm:$0xff] %v2124
                  %v2126 = vld [vmem:[%s1900 + $0x700] sm:$0xff]
                  %2127 = vst [vmem:[%s1901 + $0x1c0] sm:$0xff] %v2126
                  %v2128 = vld [vmem:[%s1900 + $0x710] sm:$0xff]
                  %2129 = vst [vmem:[%s1901 + $0x1c4] sm:$0xff] %v2128
                  %v2130 = vld [vmem:[%s1900 + $0x720] sm:$0xff]
                  %2131 = vst [vmem:[%s1901 + $0x1c8] sm:$0xff] %v2130
                  %v2132 = vld [vmem:[%s1900 + $0x730] sm:$0xff]
                  %2133 = vst [vmem:[%s1901 + $0x1cc] sm:$0xff] %v2132
                  %v2134 = vld [vmem:[%s1900 + $0x740] sm:$0xff]
                  %2135 = vst [vmem:[%s1901 + $0x1d0] sm:$0xff] %v2134
                  %v2136 = vld [vmem:[%s1900 + $0x750] sm:$0xff]
                  %2137 = vst [vmem:[%s1901 + $0x1d4] sm:$0xff] %v2136
                  %v2138 = vld [vmem:[%s1900 + $0x760] sm:$0xff]
                  %2139 = vst [vmem:[%s1901 + $0x1d8] sm:$0xff] %v2138
                  %v2140 = vld [vmem:[%s1900 + $0x770] sm:$0xff]
                  %2141 = vst [vmem:[%s1901 + $0x1dc] sm:$0xff] %v2140
                  %v2142 = vld [vmem:[%s1900 + $0x780] sm:$0xff]
                  %2143 = vst [vmem:[%s1901 + $0x1e0] sm:$0xff] %v2142
                  %v2144 = vld [vmem:[%s1900 + $0x790] sm:$0xff]
                  %2145 = vst [vmem:[%s1901 + $0x1e4] sm:$0xff] %v2144
                  %v2146 = vld [vmem:[%s1900 + $0x7a0] sm:$0xff]
                  %2147 = vst [vmem:[%s1901 + $0x1e8] sm:$0xff] %v2146
                  %v2148 = vld [vmem:[%s1900 + $0x7b0] sm:$0xff]
                  %2149 = vst [vmem:[%s1901 + $0x1ec] sm:$0xff] %v2148
                  %v2150 = vld [vmem:[%s1900 + $0x7c0] sm:$0xff]
                  %2151 = vst [vmem:[%s1901 + $0x1f0] sm:$0xff] %v2150
                  %v2152 = vld [vmem:[%s1900 + $0x7d0] sm:$0xff]
                  %2153 = vst [vmem:[%s1901 + $0x1f4] sm:$0xff] %v2152
                  %v2154 = vld [vmem:[%s1900 + $0x7e0] sm:$0xff]
                  %2155 = vst [vmem:[%s1901 + $0x1f8] sm:$0xff] %v2154
                  %v2156 = vld [vmem:[%s1900 + $0x7f0] sm:$0xff]
                  %2157 = vst [vmem:[%s1901 + $0x1fc] sm:$0xff] %v2156
                  %v2158 = vld [vmem:[%s1900 + $0x800] sm:$0xff]
                  %2159 = vst [vmem:[%s1901 + $0x200] sm:$0xff] %v2158
                  %v2160 = vld [vmem:[%s1900 + $0x810] sm:$0xff]
                  %2161 = vst [vmem:[%s1901 + $0x204] sm:$0xff] %v2160
                  %v2162 = vld [vmem:[%s1900 + $0x820] sm:$0xff]
                  %2163 = vst [vmem:[%s1901 + $0x208] sm:$0xff] %v2162
                  %v2164 = vld [vmem:[%s1900 + $0x830] sm:$0xff]
                  %2165 = vst [vmem:[%s1901 + $0x20c] sm:$0xff] %v2164
                  %v2166 = vld [vmem:[%s1900 + $0x840] sm:$0xff]
                  %2167 = vst [vmem:[%s1901 + $0x210] sm:$0xff] %v2166
                  %v2168 = vld [vmem:[%s1900 + $0x850] sm:$0xff]
                  %2169 = vst [vmem:[%s1901 + $0x214] sm:$0xff] %v2168
                  %v2170 = vld [vmem:[%s1900 + $0x860] sm:$0xff]
                  %2171 = vst [vmem:[%s1901 + $0x218] sm:$0xff] %v2170
                  %v2172 = vld [vmem:[%s1900 + $0x870] sm:$0xff]
                  %2173 = vst [vmem:[%s1901 + $0x21c] sm:$0xff] %v2172
                  %v2174 = vld [vmem:[%s1900 + $0x880] sm:$0xff]
                  %2175 = vst [vmem:[%s1901 + $0x220] sm:$0xff] %v2174
                  %v2176 = vld [vmem:[%s1900 + $0x890] sm:$0xff]
                  %2177 = vst [vmem:[%s1901 + $0x224] sm:$0xff] %v2176
                  %v2178 = vld [vmem:[%s1900 + $0x8a0] sm:$0xff]
                  %2179 = vst [vmem:[%s1901 + $0x228] sm:$0xff] %v2178
                  %v2180 = vld [vmem:[%s1900 + $0x8b0] sm:$0xff]
                  %2181 = vst [vmem:[%s1901 + $0x22c] sm:$0xff] %v2180
                  %v2182 = vld [vmem:[%s1900 + $0x8c0] sm:$0xff]
                  %2183 = vst [vmem:[%s1901 + $0x230] sm:$0xff] %v2182
                  %v2184 = vld [vmem:[%s1900 + $0x8d0] sm:$0xff]
                  %2185 = vst [vmem:[%s1901 + $0x234] sm:$0xff] %v2184
                  %v2186 = vld [vmem:[%s1900 + $0x8e0] sm:$0xff]
                  %2187 = vst [vmem:[%s1901 + $0x238] sm:$0xff] %v2186
                  %v2188 = vld [vmem:[%s1900 + $0x8f0] sm:$0xff]
                  %2189 = vst [vmem:[%s1901 + $0x23c] sm:$0xff] %v2188
                  %v2190 = vld [vmem:[%s1900 + $0x900] sm:$0xff]
                  %2191 = vst [vmem:[%s1901 + $0x240] sm:$0xff] %v2190
                  %v2192 = vld [vmem:[%s1900 + $0x910] sm:$0xff]
                  %2193 = vst [vmem:[%s1901 + $0x244] sm:$0xff] %v2192
                  %v2194 = vld [vmem:[%s1900 + $0x920] sm:$0xff]
                  %2195 = vst [vmem:[%s1901 + $0x248] sm:$0xff] %v2194
                  %v2196 = vld [vmem:[%s1900 + $0x930] sm:$0xff]
                  %2197 = vst [vmem:[%s1901 + $0x24c] sm:$0xff] %v2196
                  %v2198 = vld [vmem:[%s1900 + $0x940] sm:$0xff]
                  %2199 = vst [vmem:[%s1901 + $0x250] sm:$0xff] %v2198
                  %v2200 = vld [vmem:[%s1900 + $0x950] sm:$0xff]
                  %2201 = vst [vmem:[%s1901 + $0x254] sm:$0xff] %v2200
                  %v2202 = vld [vmem:[%s1900 + $0x960] sm:$0xff]
                  %2203 = vst [vmem:[%s1901 + $0x258] sm:$0xff] %v2202
                  %v2204 = vld [vmem:[%s1900 + $0x970] sm:$0xff]
                  %2205 = vst [vmem:[%s1901 + $0x25c] sm:$0xff] %v2204
                  %v2206 = vld [vmem:[%s1900 + $0x980] sm:$0xff]
                  %2207 = vst [vmem:[%s1901 + $0x260] sm:$0xff] %v2206
                  %v2208 = vld [vmem:[%s1900 + $0x990] sm:$0xff]
                  %2209 = vst [vmem:[%s1901 + $0x264] sm:$0xff] %v2208
                  %v2210 = vld [vmem:[%s1900 + $0x9a0] sm:$0xff]
                  %2211 = vst [vmem:[%s1901 + $0x268] sm:$0xff] %v2210
                  %v2212 = vld [vmem:[%s1900 + $0x9b0] sm:$0xff]
                  %2213 = vst [vmem:[%s1901 + $0x26c] sm:$0xff] %v2212
                  %v2214 = vld [vmem:[%s1900 + $0x9c0] sm:$0xff]
                  %2215 = vst [vmem:[%s1901 + $0x270] sm:$0xff] %v2214
                  %v2216 = vld [vmem:[%s1900 + $0x9d0] sm:$0xff]
                  %2217 = vst [vmem:[%s1901 + $0x274] sm:$0xff] %v2216
                  %v2218 = vld [vmem:[%s1900 + $0x9e0] sm:$0xff]
                  %2219 = vst [vmem:[%s1901 + $0x278] sm:$0xff] %v2218
                  %v2220 = vld [vmem:[%s1900 + $0x9f0] sm:$0xff]
                  %2221 = vst [vmem:[%s1901 + $0x27c] sm:$0xff] %v2220
                  %v2222 = vld [vmem:[%s1900 + $0xa00] sm:$0xff]
                  %2223 = vst [vmem:[%s1901 + $0x280] sm:$0xff] %v2222
                  %v2224 = vld [vmem:[%s1900 + $0xa10] sm:$0xff]
                  %2225 = vst [vmem:[%s1901 + $0x284] sm:$0xff] %v2224
                  %v2226 = vld [vmem:[%s1900 + $0xa20] sm:$0xff]
                  %2227 = vst [vmem:[%s1901 + $0x288] sm:$0xff] %v2226
                  %v2228 = vld [vmem:[%s1900 + $0xa30] sm:$0xff]
                  %2229 = vst [vmem:[%s1901 + $0x28c] sm:$0xff] %v2228
                  %v2230 = vld [vmem:[%s1900 + $0xa40] sm:$0xff]
                  %2231 = vst [vmem:[%s1901 + $0x290] sm:$0xff] %v2230
                  %v2232 = vld [vmem:[%s1900 + $0xa50] sm:$0xff]
                  %2233 = vst [vmem:[%s1901 + $0x294] sm:$0xff] %v2232
                  %v2234 = vld [vmem:[%s1900 + $0xa60] sm:$0xff]
                  %2235 = vst [vmem:[%s1901 + $0x298] sm:$0xff] %v2234
                  %v2236 = vld [vmem:[%s1900 + $0xa70] sm:$0xff]
                  %2237 = vst [vmem:[%s1901 + $0x29c] sm:$0xff] %v2236
                  %v2238 = vld [vmem:[%s1900 + $0xa80] sm:$0xff]
                  %2239 = vst [vmem:[%s1901 + $0x2a0] sm:$0xff] %v2238
                  %v2240 = vld [vmem:[%s1900 + $0xa90] sm:$0xff]
                  %2241 = vst [vmem:[%s1901 + $0x2a4] sm:$0xff] %v2240
                  %v2242 = vld [vmem:[%s1900 + $0xaa0] sm:$0xff]
                  %2243 = vst [vmem:[%s1901 + $0x2a8] sm:$0xff] %v2242
                  %v2244 = vld [vmem:[%s1900 + $0xab0] sm:$0xff]
                  %2245 = vst [vmem:[%s1901 + $0x2ac] sm:$0xff] %v2244
                  %v2246 = vld [vmem:[%s1900 + $0xac0] sm:$0xff]
                  %2247 = vst [vmem:[%s1901 + $0x2b0] sm:$0xff] %v2246
                  %v2248 = vld [vmem:[%s1900 + $0xad0] sm:$0xff]
                  %2249 = vst [vmem:[%s1901 + $0x2b4] sm:$0xff] %v2248
                  %v2250 = vld [vmem:[%s1900 + $0xae0] sm:$0xff]
                  %2251 = vst [vmem:[%s1901 + $0x2b8] sm:$0xff] %v2250
                  %v2252 = vld [vmem:[%s1900 + $0xaf0] sm:$0xff]
                  %2253 = vst [vmem:[%s1901 + $0x2bc] sm:$0xff] %v2252
                  %v2254 = vld [vmem:[%s1900 + $0xb00] sm:$0xff]
                  %2255 = vst [vmem:[%s1901 + $0x2c0] sm:$0xff] %v2254
                  %v2256 = vld [vmem:[%s1900 + $0xb10] sm:$0xff]
                  %2257 = vst [vmem:[%s1901 + $0x2c4] sm:$0xff] %v2256
                  %v2258 = vld [vmem:[%s1900 + $0xb20] sm:$0xff]
                  %2259 = vst [vmem:[%s1901 + $0x2c8] sm:$0xff] %v2258
                  %v2260 = vld [vmem:[%s1900 + $0xb30] sm:$0xff]
                  %2261 = vst [vmem:[%s1901 + $0x2cc] sm:$0xff] %v2260
                  %v2262 = vld [vmem:[%s1900 + $0xb40] sm:$0xff]
                  %2263 = vst [vmem:[%s1901 + $0x2d0] sm:$0xff] %v2262
                  %v2264 = vld [vmem:[%s1900 + $0xb50] sm:$0xff]
                  %2265 = vst [vmem:[%s1901 + $0x2d4] sm:$0xff] %v2264
                  %v2266 = vld [vmem:[%s1900 + $0xb60] sm:$0xff]
                  %2267 = vst [vmem:[%s1901 + $0x2d8] sm:$0xff] %v2266
                  %v2268 = vld [vmem:[%s1900 + $0xb70] sm:$0xff]
                  %2269 = vst [vmem:[%s1901 + $0x2dc] sm:$0xff] %v2268
                  %v2270 = vld [vmem:[%s1900 + $0xb80] sm:$0xff]
                  %2271 = vst [vmem:[%s1901 + $0x2e0] sm:$0xff] %v2270
                  %v2272 = vld [vmem:[%s1900 + $0xb90] sm:$0xff]
                  %2273 = vst [vmem:[%s1901 + $0x2e4] sm:$0xff] %v2272
                  %v2274 = vld [vmem:[%s1900 + $0xba0] sm:$0xff]
                  %2275 = vst [vmem:[%s1901 + $0x2e8] sm:$0xff] %v2274
                  %v2276 = vld [vmem:[%s1900 + $0xbb0] sm:$0xff]
                  %2277 = vst [vmem:[%s1901 + $0x2ec] sm:$0xff] %v2276
                  %v2278 = vld [vmem:[%s1900 + $0xbc0] sm:$0xff]
                  %2279 = vst [vmem:[%s1901 + $0x2f0] sm:$0xff] %v2278
                  %v2280 = vld [vmem:[%s1900 + $0xbd0] sm:$0xff]
                  %2281 = vst [vmem:[%s1901 + $0x2f4] sm:$0xff] %v2280
                  %v2282 = vld [vmem:[%s1900 + $0xbe0] sm:$0xff]
                  %2283 = vst [vmem:[%s1901 + $0x2f8] sm:$0xff] %v2282
                  %v2284 = vld [vmem:[%s1900 + $0xbf0] sm:$0xff]
                  %2285 = vst [vmem:[%s1901 + $0x2fc] sm:$0xff] %v2284
                  %v2286 = vld [vmem:[%s1900 + $0xc00] sm:$0xff]
                  %2287 = vst [vmem:[%s1901 + $0x300] sm:$0xff] %v2286
                  %v2288 = vld [vmem:[%s1900 + $0xc10] sm:$0xff]
                  %2289 = vst [vmem:[%s1901 + $0x304] sm:$0xff] %v2288
                  %v2290 = vld [vmem:[%s1900 + $0xc20] sm:$0xff]
                  %2291 = vst [vmem:[%s1901 + $0x308] sm:$0xff] %v2290
                  %v2292 = vld [vmem:[%s1900 + $0xc30] sm:$0xff]
                  %2293 = vst [vmem:[%s1901 + $0x30c] sm:$0xff] %v2292
                  %v2294 = vld [vmem:[%s1900 + $0xc40] sm:$0xff]
                  %2295 = vst [vmem:[%s1901 + $0x310] sm:$0xff] %v2294
                  %v2296 = vld [vmem:[%s1900 + $0xc50] sm:$0xff]
                  %2297 = vst [vmem:[%s1901 + $0x314] sm:$0xff] %v2296
                  %v2298 = vld [vmem:[%s1900 + $0xc60] sm:$0xff]
                  %2299 = vst [vmem:[%s1901 + $0x318] sm:$0xff] %v2298
                  %v2300 = vld [vmem:[%s1900 + $0xc70] sm:$0xff]
                  %2301 = vst [vmem:[%s1901 + $0x31c] sm:$0xff] %v2300
                  %v2302 = vld [vmem:[%s1900 + $0xc80] sm:$0xff]
                  %2303 = vst [vmem:[%s1901 + $0x320] sm:$0xff] %v2302
                  %v2304 = vld [vmem:[%s1900 + $0xc90] sm:$0xff]
                  %2305 = vst [vmem:[%s1901 + $0x324] sm:$0xff] %v2304
                  %v2306 = vld [vmem:[%s1900 + $0xca0] sm:$0xff]
                  %2307 = vst [vmem:[%s1901 + $0x328] sm:$0xff] %v2306
                  %v2308 = vld [vmem:[%s1900 + $0xcb0] sm:$0xff]
                  %2309 = vst [vmem:[%s1901 + $0x32c] sm:$0xff] %v2308
                  %v2310 = vld [vmem:[%s1900 + $0xcc0] sm:$0xff]
                  %2311 = vst [vmem:[%s1901 + $0x330] sm:$0xff] %v2310
                  %v2312 = vld [vmem:[%s1900 + $0xcd0] sm:$0xff]
                  %2313 = vst [vmem:[%s1901 + $0x334] sm:$0xff] %v2312
                  %v2314 = vld [vmem:[%s1900 + $0xce0] sm:$0xff]
                  %2315 = vst [vmem:[%s1901 + $0x338] sm:$0xff] %v2314
                  %v2316 = vld [vmem:[%s1900 + $0xcf0] sm:$0xff]
                  %2317 = vst [vmem:[%s1901 + $0x33c] sm:$0xff] %v2316
                  %v2318 = vld [vmem:[%s1900 + $0xd00] sm:$0xff]
                  %2319 = vst [vmem:[%s1901 + $0x340] sm:$0xff] %v2318
                  %v2320 = vld [vmem:[%s1900 + $0xd10] sm:$0xff]
                  %2321 = vst [vmem:[%s1901 + $0x344] sm:$0xff] %v2320
                  %v2322 = vld [vmem:[%s1900 + $0xd20] sm:$0xff]
                  %2323 = vst [vmem:[%s1901 + $0x348] sm:$0xff] %v2322
                  %v2324 = vld [vmem:[%s1900 + $0xd30] sm:$0xff]
                  %2325 = vst [vmem:[%s1901 + $0x34c] sm:$0xff] %v2324
                  %v2326 = vld [vmem:[%s1900 + $0xd40] sm:$0xff]
                  %2327 = vst [vmem:[%s1901 + $0x350] sm:$0xff] %v2326
                  %v2328 = vld [vmem:[%s1900 + $0xd50] sm:$0xff]
                  %2329 = vst [vmem:[%s1901 + $0x354] sm:$0xff] %v2328
                  %v2330 = vld [vmem:[%s1900 + $0xd60] sm:$0xff]
                  %2331 = vst [vmem:[%s1901 + $0x358] sm:$0xff] %v2330
                  %v2332 = vld [vmem:[%s1900 + $0xd70] sm:$0xff]
                  %2333 = vst [vmem:[%s1901 + $0x35c] sm:$0xff] %v2332
                  %v2334 = vld [vmem:[%s1900 + $0xd80] sm:$0xff]
                  %2335 = vst [vmem:[%s1901 + $0x360] sm:$0xff] %v2334
                  %v2336 = vld [vmem:[%s1900 + $0xd90] sm:$0xff]
                  %2337 = vst [vmem:[%s1901 + $0x364] sm:$0xff] %v2336
                  %v2338 = vld [vmem:[%s1900 + $0xda0] sm:$0xff]
                  %2339 = vst [vmem:[%s1901 + $0x368] sm:$0xff] %v2338
                  %v2340 = vld [vmem:[%s1900 + $0xdb0] sm:$0xff]
                  %2341 = vst [vmem:[%s1901 + $0x36c] sm:$0xff] %v2340
                  %v2342 = vld [vmem:[%s1900 + $0xdc0] sm:$0xff]
                  %2343 = vst [vmem:[%s1901 + $0x370] sm:$0xff] %v2342
                  %v2344 = vld [vmem:[%s1900 + $0xdd0] sm:$0xff]
                  %2345 = vst [vmem:[%s1901 + $0x374] sm:$0xff] %v2344
                  %v2346 = vld [vmem:[%s1900 + $0xde0] sm:$0xff]
                  %2347 = vst [vmem:[%s1901 + $0x378] sm:$0xff] %v2346
                  %v2348 = vld [vmem:[%s1900 + $0xdf0] sm:$0xff]
                  %2349 = vst [vmem:[%s1901 + $0x37c] sm:$0xff] %v2348
                  %v2350 = vld [vmem:[%s1900 + $0xe00] sm:$0xff]
                  %2351 = vst [vmem:[%s1901 + $0x380] sm:$0xff] %v2350
                  %v2352 = vld [vmem:[%s1900 + $0xe10] sm:$0xff]
                  %2353 = vst [vmem:[%s1901 + $0x384] sm:$0xff] %v2352
                  %v2354 = vld [vmem:[%s1900 + $0xe20] sm:$0xff]
                  %2355 = vst [vmem:[%s1901 + $0x388] sm:$0xff] %v2354
                  %v2356 = vld [vmem:[%s1900 + $0xe30] sm:$0xff]
                  %2357 = vst [vmem:[%s1901 + $0x38c] sm:$0xff] %v2356
                  %v2358 = vld [vmem:[%s1900 + $0xe40] sm:$0xff]
                  %2359 = vst [vmem:[%s1901 + $0x390] sm:$0xff] %v2358
                  %v2360 = vld [vmem:[%s1900 + $0xe50] sm:$0xff]
                  %2361 = vst [vmem:[%s1901 + $0x394] sm:$0xff] %v2360
                  %v2362 = vld [vmem:[%s1900 + $0xe60] sm:$0xff]
                  %2363 = vst [vmem:[%s1901 + $0x398] sm:$0xff] %v2362
                  %v2364 = vld [vmem:[%s1900 + $0xe70] sm:$0xff]
                  %2365 = vst [vmem:[%s1901 + $0x39c] sm:$0xff] %v2364
                  %v2366 = vld [vmem:[%s1900 + $0xe80] sm:$0xff]
                  %2367 = vst [vmem:[%s1901 + $0x3a0] sm:$0xff] %v2366
                  %v2368 = vld [vmem:[%s1900 + $0xe90] sm:$0xff]
                  %2369 = vst [vmem:[%s1901 + $0x3a4] sm:$0xff] %v2368
                  %v2370 = vld [vmem:[%s1900 + $0xea0] sm:$0xff]
                  %2371 = vst [vmem:[%s1901 + $0x3a8] sm:$0xff] %v2370
                  %v2372 = vld [vmem:[%s1900 + $0xeb0] sm:$0xff]
                  %2373 = vst [vmem:[%s1901 + $0x3ac] sm:$0xff] %v2372
                  %v2374 = vld [vmem:[%s1900 + $0xec0] sm:$0xff]
                  %2375 = vst [vmem:[%s1901 + $0x3b0] sm:$0xff] %v2374
                  %v2376 = vld [vmem:[%s1900 + $0xed0] sm:$0xff]
                  %2377 = vst [vmem:[%s1901 + $0x3b4] sm:$0xff] %v2376
                  %v2378 = vld [vmem:[%s1900 + $0xee0] sm:$0xff]
                  %2379 = vst [vmem:[%s1901 + $0x3b8] sm:$0xff] %v2378
                  %v2380 = vld [vmem:[%s1900 + $0xef0] sm:$0xff]
                  %2381 = vst [vmem:[%s1901 + $0x3bc] sm:$0xff] %v2380
                  %v2382 = vld [vmem:[%s1900 + $0xf00] sm:$0xff]
                  %2383 = vst [vmem:[%s1901 + $0x3c0] sm:$0xff] %v2382
                  %v2384 = vld [vmem:[%s1900 + $0xf10] sm:$0xff]
                  %2385 = vst [vmem:[%s1901 + $0x3c4] sm:$0xff] %v2384
                  %v2386 = vld [vmem:[%s1900 + $0xf20] sm:$0xff]
                  %2387 = vst [vmem:[%s1901 + $0x3c8] sm:$0xff] %v2386
                  %v2388 = vld [vmem:[%s1900 + $0xf30] sm:$0xff]
                  %2389 = vst [vmem:[%s1901 + $0x3cc] sm:$0xff] %v2388
                  %v2390 = vld [vmem:[%s1900 + $0xf40] sm:$0xff]
                  %2391 = vst [vmem:[%s1901 + $0x3d0] sm:$0xff] %v2390
                  %v2392 = vld [vmem:[%s1900 + $0xf50] sm:$0xff]
                  %2393 = vst [vmem:[%s1901 + $0x3d4] sm:$0xff] %v2392
                  %v2394 = vld [vmem:[%s1900 + $0xf60] sm:$0xff]
                  %2395 = vst [vmem:[%s1901 + $0x3d8] sm:$0xff] %v2394
                  %v2396 = vld [vmem:[%s1900 + $0xf70] sm:$0xff]
                  %2397 = vst [vmem:[%s1901 + $0x3dc] sm:$0xff] %v2396
                  %v2398 = vld [vmem:[%s1900 + $0xf80] sm:$0xff]
                  %2399 = vst [vmem:[%s1901 + $0x3e0] sm:$0xff] %v2398
                  %v2400 = vld [vmem:[%s1900 + $0xf90] sm:$0xff]
                  %2401 = vst [vmem:[%s1901 + $0x3e4] sm:$0xff] %v2400
                  %v2402 = vld [vmem:[%s1900 + $0xfa0] sm:$0xff]
                  %2403 = vst [vmem:[%s1901 + $0x3e8] sm:$0xff] %v2402
                  %v2404 = vld [vmem:[%s1900 + $0xfb0] sm:$0xff]
                  %2405 = vst [vmem:[%s1901 + $0x3ec] sm:$0xff] %v2404
                  %v2406 = vld [vmem:[%s1900 + $0xfc0] sm:$0xff]
                  %2407 = vst [vmem:[%s1901 + $0x3f0] sm:$0xff] %v2406
                  %v2408 = vld [vmem:[%s1900 + $0xfd0] sm:$0xff]
                  %2409 = vst [vmem:[%s1901 + $0x3f4] sm:$0xff] %v2408
                  %v2410 = vld [vmem:[%s1900 + $0xfe0] sm:$0xff]
                  %2411 = vst [vmem:[%s1901 + $0x3f8] sm:$0xff] %v2410
                  %v2412 = vld [vmem:[%s1900 + $0xff0] sm:$0xff]
                  %2413 = vst [vmem:[%s1901 + $0x3fc] sm:$0xff] %v2412
                  %v2414 = vld [vmem:[%s1900 + $0x1000] sm:$0xff]
                  %2415 = vst [vmem:[%s1901 + $0x400] sm:$0xff] %v2414
                  %v2416 = vld [vmem:[%s1900 + $0x1010] sm:$0xff]
                  %2417 = vst [vmem:[%s1901 + $0x404] sm:$0xff] %v2416
                  %v2418 = vld [vmem:[%s1900 + $0x1020] sm:$0xff]
                  %2419 = vst [vmem:[%s1901 + $0x408] sm:$0xff] %v2418
                  %v2420 = vld [vmem:[%s1900 + $0x1030] sm:$0xff]
                  %2421 = vst [vmem:[%s1901 + $0x40c] sm:$0xff] %v2420
                  %v2422 = vld [vmem:[%s1900 + $0x1040] sm:$0xff]
                  %2423 = vst [vmem:[%s1901 + $0x410] sm:$0xff] %v2422
                  %v2424 = vld [vmem:[%s1900 + $0x1050] sm:$0xff]
                  %2425 = vst [vmem:[%s1901 + $0x414] sm:$0xff] %v2424
                  %v2426 = vld [vmem:[%s1900 + $0x1060] sm:$0xff]
                  %2427 = vst [vmem:[%s1901 + $0x418] sm:$0xff] %v2426
                  %v2428 = vld [vmem:[%s1900 + $0x1070] sm:$0xff]
                  %2429 = vst [vmem:[%s1901 + $0x41c] sm:$0xff] %v2428
                  %v2430 = vld [vmem:[%s1900 + $0x1080] sm:$0xff]
                  %2431 = vst [vmem:[%s1901 + $0x420] sm:$0xff] %v2430
                  %v2432 = vld [vmem:[%s1900 + $0x1090] sm:$0xff]
                  %2433 = vst [vmem:[%s1901 + $0x424] sm:$0xff] %v2432
                  %v2434 = vld [vmem:[%s1900 + $0x10a0] sm:$0xff]
                  %2435 = vst [vmem:[%s1901 + $0x428] sm:$0xff] %v2434
                  %v2436 = vld [vmem:[%s1900 + $0x10b0] sm:$0xff]
                  %2437 = vst [vmem:[%s1901 + $0x42c] sm:$0xff] %v2436
                  %v2438 = vld [vmem:[%s1900 + $0x10c0] sm:$0xff]
                  %2439 = vst [vmem:[%s1901 + $0x430] sm:$0xff] %v2438
                  %v2440 = vld [vmem:[%s1900 + $0x10d0] sm:$0xff]
                  %2441 = vst [vmem:[%s1901 + $0x434] sm:$0xff] %v2440
                  %v2442 = vld [vmem:[%s1900 + $0x10e0] sm:$0xff]
                  %2443 = vst [vmem:[%s1901 + $0x438] sm:$0xff] %v2442
                  %v2444 = vld [vmem:[%s1900 + $0x10f0] sm:$0xff]
                  %2445 = vst [vmem:[%s1901 + $0x43c] sm:$0xff] %v2444
                  %v2446 = vld [vmem:[%s1900 + $0x1100] sm:$0xff]
                  %2447 = vst [vmem:[%s1901 + $0x440] sm:$0xff] %v2446
                  %v2448 = vld [vmem:[%s1900 + $0x1110] sm:$0xff]
                  %2449 = vst [vmem:[%s1901 + $0x444] sm:$0xff] %v2448
                  %v2450 = vld [vmem:[%s1900 + $0x1120] sm:$0xff]
                  %2451 = vst [vmem:[%s1901 + $0x448] sm:$0xff] %v2450
                  %v2452 = vld [vmem:[%s1900 + $0x1130] sm:$0xff]
                  %2453 = vst [vmem:[%s1901 + $0x44c] sm:$0xff] %v2452
                  %v2454 = vld [vmem:[%s1900 + $0x1140] sm:$0xff]
                  %2455 = vst [vmem:[%s1901 + $0x450] sm:$0xff] %v2454
                  %v2456 = vld [vmem:[%s1900 + $0x1150] sm:$0xff]
                  %2457 = vst [vmem:[%s1901 + $0x454] sm:$0xff] %v2456
                  %v2458 = vld [vmem:[%s1900 + $0x1160] sm:$0xff]
                  %2459 = vst [vmem:[%s1901 + $0x458] sm:$0xff] %v2458
                  %v2460 = vld [vmem:[%s1900 + $0x1170] sm:$0xff]
                  %2461 = vst [vmem:[%s1901 + $0x45c] sm:$0xff] %v2460
                  %v2462 = vld [vmem:[%s1900 + $0x1180] sm:$0xff]
                  %2463 = vst [vmem:[%s1901 + $0x460] sm:$0xff] %v2462
                  %v2464 = vld [vmem:[%s1900 + $0x1190] sm:$0xff]
                  %2465 = vst [vmem:[%s1901 + $0x464] sm:$0xff] %v2464
                  %v2466 = vld [vmem:[%s1900 + $0x11a0] sm:$0xff]
                  %2467 = vst [vmem:[%s1901 + $0x468] sm:$0xff] %v2466
                  %v2468 = vld [vmem:[%s1900 + $0x11b0] sm:$0xff]
                  %2469 = vst [vmem:[%s1901 + $0x46c] sm:$0xff] %v2468
                  %v2470 = vld [vmem:[%s1900 + $0x11c0] sm:$0xff]
                  %2471 = vst [vmem:[%s1901 + $0x470] sm:$0xff] %v2470
                  %v2472 = vld [vmem:[%s1900 + $0x11d0] sm:$0xff]
                  %2473 = vst [vmem:[%s1901 + $0x474] sm:$0xff] %v2472
                  %v2474 = vld [vmem:[%s1900 + $0x11e0] sm:$0xff]
                  %2475 = vst [vmem:[%s1901 + $0x478] sm:$0xff] %v2474
                  %v2476 = vld [vmem:[%s1900 + $0x11f0] sm:$0xff]
                  %2477 = vst [vmem:[%s1901 + $0x47c] sm:$0xff] %v2476
                  %v2478 = vld [vmem:[%s1900 + $0x1200] sm:$0xff]
                  %2479 = vst [vmem:[%s1901 + $0x480] sm:$0xff] %v2478
                  %v2480 = vld [vmem:[%s1900 + $0x1210] sm:$0xff]
                  %2481 = vst [vmem:[%s1901 + $0x484] sm:$0xff] %v2480
                  %v2482 = vld [vmem:[%s1900 + $0x1220] sm:$0xff]
                  %2483 = vst [vmem:[%s1901 + $0x488] sm:$0xff] %v2482
                  %v2484 = vld [vmem:[%s1900 + $0x1230] sm:$0xff]
                  %2485 = vst [vmem:[%s1901 + $0x48c] sm:$0xff] %v2484
                  %v2486 = vld [vmem:[%s1900 + $0x1240] sm:$0xff]
                  %2487 = vst [vmem:[%s1901 + $0x490] sm:$0xff] %v2486
                  %v2488 = vld [vmem:[%s1900 + $0x1250] sm:$0xff]
                  %2489 = vst [vmem:[%s1901 + $0x494] sm:$0xff] %v2488
                  %v2490 = vld [vmem:[%s1900 + $0x1260] sm:$0xff]
                  %2491 = vst [vmem:[%s1901 + $0x498] sm:$0xff] %v2490
                  %v2492 = vld [vmem:[%s1900 + $0x1270] sm:$0xff]
                  %2493 = vst [vmem:[%s1901 + $0x49c] sm:$0xff] %v2492
                  %v2494 = vld [vmem:[%s1900 + $0x1280] sm:$0xff]
                  %2495 = vst [vmem:[%s1901 + $0x4a0] sm:$0xff] %v2494
                  %v2496 = vld [vmem:[%s1900 + $0x1290] sm:$0xff]
                  %2497 = vst [vmem:[%s1901 + $0x4a4] sm:$0xff] %v2496
                  %v2498 = vld [vmem:[%s1900 + $0x12a0] sm:$0xff]
                  %2499 = vst [vmem:[%s1901 + $0x4a8] sm:$0xff] %v2498
                  %v2500 = vld [vmem:[%s1900 + $0x12b0] sm:$0xff]
                  %2501 = vst [vmem:[%s1901 + $0x4ac] sm:$0xff] %v2500
                  %v2502 = vld [vmem:[%s1900 + $0x12c0] sm:$0xff]
                  %2503 = vst [vmem:[%s1901 + $0x4b0] sm:$0xff] %v2502
                  %v2504 = vld [vmem:[%s1900 + $0x12d0] sm:$0xff]
                  %2505 = vst [vmem:[%s1901 + $0x4b4] sm:$0xff] %v2504
                  %v2506 = vld [vmem:[%s1900 + $0x12e0] sm:$0xff]
                  %2507 = vst [vmem:[%s1901 + $0x4b8] sm:$0xff] %v2506
                  %v2508 = vld [vmem:[%s1900 + $0x12f0] sm:$0xff]
                  %2509 = vst [vmem:[%s1901 + $0x4bc] sm:$0xff] %v2508
                  %v2510 = vld [vmem:[%s1900 + $0x1300] sm:$0xff]
                  %2511 = vst [vmem:[%s1901 + $0x4c0] sm:$0xff] %v2510
                  %v2512 = vld [vmem:[%s1900 + $0x1310] sm:$0xff]
                  %2513 = vst [vmem:[%s1901 + $0x4c4] sm:$0xff] %v2512
                  %v2514 = vld [vmem:[%s1900 + $0x1320] sm:$0xff]
                  %2515 = vst [vmem:[%s1901 + $0x4c8] sm:$0xff] %v2514
                  %v2516 = vld [vmem:[%s1900 + $0x1330] sm:$0xff]
                  %2517 = vst [vmem:[%s1901 + $0x4cc] sm:$0xff] %v2516
                  %v2518 = vld [vmem:[%s1900 + $0x1340] sm:$0xff]
                  %2519 = vst [vmem:[%s1901 + $0x4d0] sm:$0xff] %v2518
                  %v2520 = vld [vmem:[%s1900 + $0x1350] sm:$0xff]
                  %2521 = vst [vmem:[%s1901 + $0x4d4] sm:$0xff] %v2520
                  %v2522 = vld [vmem:[%s1900 + $0x1360] sm:$0xff]
                  %2523 = vst [vmem:[%s1901 + $0x4d8] sm:$0xff] %v2522
                  %v2524 = vld [vmem:[%s1900 + $0x1370] sm:$0xff]
                  %2525 = vst [vmem:[%s1901 + $0x4dc] sm:$0xff] %v2524
                  %v2526 = vld [vmem:[%s1900 + $0x1380] sm:$0xff]
                  %2527 = vst [vmem:[%s1901 + $0x4e0] sm:$0xff] %v2526
                  %v2528 = vld [vmem:[%s1900 + $0x1390] sm:$0xff]
                  %2529 = vst [vmem:[%s1901 + $0x4e4] sm:$0xff] %v2528
                  %v2530 = vld [vmem:[%s1900 + $0x13a0] sm:$0xff]
                  %2531 = vst [vmem:[%s1901 + $0x4e8] sm:$0xff] %v2530
                  %v2532 = vld [vmem:[%s1900 + $0x13b0] sm:$0xff]
                  %2533 = vst [vmem:[%s1901 + $0x4ec] sm:$0xff] %v2532
                  %v2534 = vld [vmem:[%s1900 + $0x13c0] sm:$0xff]
                  %2535 = vst [vmem:[%s1901 + $0x4f0] sm:$0xff] %v2534
                  %v2536 = vld [vmem:[%s1900 + $0x13d0] sm:$0xff]
                  %2537 = vst [vmem:[%s1901 + $0x4f4] sm:$0xff] %v2536
                  %v2538 = vld [vmem:[%s1900 + $0x13e0] sm:$0xff]
                  %2539 = vst [vmem:[%s1901 + $0x4f8] sm:$0xff] %v2538
                  %v2540 = vld [vmem:[%s1900 + $0x13f0] sm:$0xff]
                  %2541 = vst [vmem:[%s1901 + $0x4fc] sm:$0xff] %v2540
                  %v2542 = vld [vmem:[%s1900 + $0x1400] sm:$0xff]
                  %2543 = vst [vmem:[%s1901 + $0x500] sm:$0xff] %v2542
                  %v2544 = vld [vmem:[%s1900 + $0x1410] sm:$0xff]
                  %2545 = vst [vmem:[%s1901 + $0x504] sm:$0xff] %v2544
                  %v2546 = vld [vmem:[%s1900 + $0x1420] sm:$0xff]
                  %2547 = vst [vmem:[%s1901 + $0x508] sm:$0xff] %v2546
                  %v2548 = vld [vmem:[%s1900 + $0x1430] sm:$0xff]
                  %2549 = vst [vmem:[%s1901 + $0x50c] sm:$0xff] %v2548
                  %v2550 = vld [vmem:[%s1900 + $0x1440] sm:$0xff]
                  %2551 = vst [vmem:[%s1901 + $0x510] sm:$0xff] %v2550
                  %v2552 = vld [vmem:[%s1900 + $0x1450] sm:$0xff]
                  %2553 = vst [vmem:[%s1901 + $0x514] sm:$0xff] %v2552
                  %v2554 = vld [vmem:[%s1900 + $0x1460] sm:$0xff]
                  %2555 = vst [vmem:[%s1901 + $0x518] sm:$0xff] %v2554
                  %v2556 = vld [vmem:[%s1900 + $0x1470] sm:$0xff]
                  %2557 = vst [vmem:[%s1901 + $0x51c] sm:$0xff] %v2556
                  %v2558 = vld [vmem:[%s1900 + $0x1480] sm:$0xff]
                  %2559 = vst [vmem:[%s1901 + $0x520] sm:$0xff] %v2558
                  %v2560 = vld [vmem:[%s1900 + $0x1490] sm:$0xff]
                  %2561 = vst [vmem:[%s1901 + $0x524] sm:$0xff] %v2560
                  %v2562 = vld [vmem:[%s1900 + $0x14a0] sm:$0xff]
                  %2563 = vst [vmem:[%s1901 + $0x528] sm:$0xff] %v2562
                  %v2564 = vld [vmem:[%s1900 + $0x14b0] sm:$0xff]
                  %2565 = vst [vmem:[%s1901 + $0x52c] sm:$0xff] %v2564
                  %v2566 = vld [vmem:[%s1900 + $0x14c0] sm:$0xff]
                  %2567 = vst [vmem:[%s1901 + $0x530] sm:$0xff] %v2566
                  %v2568 = vld [vmem:[%s1900 + $0x14d0] sm:$0xff]
                  %2569 = vst [vmem:[%s1901 + $0x534] sm:$0xff] %v2568
                  %v2570 = vld [vmem:[%s1900 + $0x14e0] sm:$0xff]
                  %2571 = vst [vmem:[%s1901 + $0x538] sm:$0xff] %v2570
                  %v2572 = vld [vmem:[%s1900 + $0x14f0] sm:$0xff]
                  %2573 = vst [vmem:[%s1901 + $0x53c] sm:$0xff] %v2572
                  %v2574 = vld [vmem:[%s1900 + $0x1500] sm:$0xff]
                  %2575 = vst [vmem:[%s1901 + $0x540] sm:$0xff] %v2574
                  %v2576 = vld [vmem:[%s1900 + $0x1510] sm:$0xff]
                  %2577 = vst [vmem:[%s1901 + $0x544] sm:$0xff] %v2576
                  %v2578 = vld [vmem:[%s1900 + $0x1520] sm:$0xff]
                  %2579 = vst [vmem:[%s1901 + $0x548] sm:$0xff] %v2578
                  %v2580 = vld [vmem:[%s1900 + $0x1530] sm:$0xff]
                  %2581 = vst [vmem:[%s1901 + $0x54c] sm:$0xff] %v2580
                  %v2582 = vld [vmem:[%s1900 + $0x1540] sm:$0xff]
                  %2583 = vst [vmem:[%s1901 + $0x550] sm:$0xff] %v2582
                  %v2584 = vld [vmem:[%s1900 + $0x1550] sm:$0xff]
                  %2585 = vst [vmem:[%s1901 + $0x554] sm:$0xff] %v2584
                  %v2586 = vld [vmem:[%s1900 + $0x1560] sm:$0xff]
                  %2587 = vst [vmem:[%s1901 + $0x558] sm:$0xff] %v2586
                  %v2588 = vld [vmem:[%s1900 + $0x1570] sm:$0xff]
                  %2589 = vst [vmem:[%s1901 + $0x55c] sm:$0xff] %v2588
                  %v2590 = vld [vmem:[%s1900 + $0x1580] sm:$0xff]
                  %2591 = vst [vmem:[%s1901 + $0x560] sm:$0xff] %v2590
                  %v2592 = vld [vmem:[%s1900 + $0x1590] sm:$0xff]
                  %2593 = vst [vmem:[%s1901 + $0x564] sm:$0xff] %v2592
                  %v2594 = vld [vmem:[%s1900 + $0x15a0] sm:$0xff]
                  %2595 = vst [vmem:[%s1901 + $0x568] sm:$0xff] %v2594
                  %v2596 = vld [vmem:[%s1900 + $0x15b0] sm:$0xff]
                  %2597 = vst [vmem:[%s1901 + $0x56c] sm:$0xff] %v2596
                  %v2598 = vld [vmem:[%s1900 + $0x15c0] sm:$0xff]
                  %2599 = vst [vmem:[%s1901 + $0x570] sm:$0xff] %v2598
                  %v2600 = vld [vmem:[%s1900 + $0x15d0] sm:$0xff]
                  %2601 = vst [vmem:[%s1901 + $0x574] sm:$0xff] %v2600
                  %v2602 = vld [vmem:[%s1900 + $0x15e0] sm:$0xff]
                  %2603 = vst [vmem:[%s1901 + $0x578] sm:$0xff] %v2602
                  %v2604 = vld [vmem:[%s1900 + $0x15f0] sm:$0xff]
                  %2605 = vst [vmem:[%s1901 + $0x57c] sm:$0xff] %v2604
                  %v2606 = vld [vmem:[%s1900 + $0x1600] sm:$0xff]
                  %2607 = vst [vmem:[%s1901 + $0x580] sm:$0xff] %v2606
                  %v2608 = vld [vmem:[%s1900 + $0x1610] sm:$0xff]
                  %2609 = vst [vmem:[%s1901 + $0x584] sm:$0xff] %v2608
                  %v2610 = vld [vmem:[%s1900 + $0x1620] sm:$0xff]
                  %2611 = vst [vmem:[%s1901 + $0x588] sm:$0xff] %v2610
                  %v2612 = vld [vmem:[%s1900 + $0x1630] sm:$0xff]
                  %2613 = vst [vmem:[%s1901 + $0x58c] sm:$0xff] %v2612
                  %v2614 = vld [vmem:[%s1900 + $0x1640] sm:$0xff]
                  %2615 = vst [vmem:[%s1901 + $0x590] sm:$0xff] %v2614
                  %v2616 = vld [vmem:[%s1900 + $0x1650] sm:$0xff]
                  %2617 = vst [vmem:[%s1901 + $0x594] sm:$0xff] %v2616
                  %v2618 = vld [vmem:[%s1900 + $0x1660] sm:$0xff]
                  %2619 = vst [vmem:[%s1901 + $0x598] sm:$0xff] %v2618
                  %v2620 = vld [vmem:[%s1900 + $0x1670] sm:$0xff]
                  %2621 = vst [vmem:[%s1901 + $0x59c] sm:$0xff] %v2620
                  %v2622 = vld [vmem:[%s1900 + $0x1680] sm:$0xff]
                  %2623 = vst [vmem:[%s1901 + $0x5a0] sm:$0xff] %v2622
                  %v2624 = vld [vmem:[%s1900 + $0x1690] sm:$0xff]
                  %2625 = vst [vmem:[%s1901 + $0x5a4] sm:$0xff] %v2624
                  %v2626 = vld [vmem:[%s1900 + $0x16a0] sm:$0xff]
                  %2627 = vst [vmem:[%s1901 + $0x5a8] sm:$0xff] %v2626
                  %v2628 = vld [vmem:[%s1900 + $0x16b0] sm:$0xff]
                  %2629 = vst [vmem:[%s1901 + $0x5ac] sm:$0xff] %v2628
                  %v2630 = vld [vmem:[%s1900 + $0x16c0] sm:$0xff]
                  %2631 = vst [vmem:[%s1901 + $0x5b0] sm:$0xff] %v2630
                  %v2632 = vld [vmem:[%s1900 + $0x16d0] sm:$0xff]
                  %2633 = vst [vmem:[%s1901 + $0x5b4] sm:$0xff] %v2632
                  %v2634 = vld [vmem:[%s1900 + $0x16e0] sm:$0xff]
                  %2635 = vst [vmem:[%s1901 + $0x5b8] sm:$0xff] %v2634
                  %v2636 = vld [vmem:[%s1900 + $0x16f0] sm:$0xff]
                  %2637 = vst [vmem:[%s1901 + $0x5bc] sm:$0xff] %v2636
                  %v2638 = vld [vmem:[%s1900 + $0x1700] sm:$0xff]
                  %2639 = vst [vmem:[%s1901 + $0x5c0] sm:$0xff] %v2638
                  %v2640 = vld [vmem:[%s1900 + $0x1710] sm:$0xff]
                  %2641 = vst [vmem:[%s1901 + $0x5c4] sm:$0xff] %v2640
                  %v2642 = vld [vmem:[%s1900 + $0x1720] sm:$0xff]
                  %2643 = vst [vmem:[%s1901 + $0x5c8] sm:$0xff] %v2642
                  %v2644 = vld [vmem:[%s1900 + $0x1730] sm:$0xff]
                  %2645 = vst [vmem:[%s1901 + $0x5cc] sm:$0xff] %v2644
                  %v2646 = vld [vmem:[%s1900 + $0x1740] sm:$0xff]
                  %2647 = vst [vmem:[%s1901 + $0x5d0] sm:$0xff] %v2646
                  %v2648 = vld [vmem:[%s1900 + $0x1750] sm:$0xff]
                  %2649 = vst [vmem:[%s1901 + $0x5d4] sm:$0xff] %v2648
                  %v2650 = vld [vmem:[%s1900 + $0x1760] sm:$0xff]
                  %2651 = vst [vmem:[%s1901 + $0x5d8] sm:$0xff] %v2650
                  %v2652 = vld [vmem:[%s1900 + $0x1770] sm:$0xff]
                  %2653 = vst [vmem:[%s1901 + $0x5dc] sm:$0xff] %v2652
                  %v2654 = vld [vmem:[%s1900 + $0x1780] sm:$0xff]
                  %2655 = vst [vmem:[%s1901 + $0x5e0] sm:$0xff] %v2654
                  %v2656 = vld [vmem:[%s1900 + $0x1790] sm:$0xff]
                  %2657 = vst [vmem:[%s1901 + $0x5e4] sm:$0xff] %v2656
                  %v2658 = vld [vmem:[%s1900 + $0x17a0] sm:$0xff]
                  %2659 = vst [vmem:[%s1901 + $0x5e8] sm:$0xff] %v2658
                  %v2660 = vld [vmem:[%s1900 + $0x17b0] sm:$0xff]
                  %2661 = vst [vmem:[%s1901 + $0x5ec] sm:$0xff] %v2660
                  %v2662 = vld [vmem:[%s1900 + $0x17c0] sm:$0xff]
                  %2663 = vst [vmem:[%s1901 + $0x5f0] sm:$0xff] %v2662
                  %v2664 = vld [vmem:[%s1900 + $0x17d0] sm:$0xff]
                  %2665 = vst [vmem:[%s1901 + $0x5f4] sm:$0xff] %v2664
                  %v2666 = vld [vmem:[%s1900 + $0x17e0] sm:$0xff]
                  %2667 = vst [vmem:[%s1901 + $0x5f8] sm:$0xff] %v2666
                  %v2668 = vld [vmem:[%s1900 + $0x17f0] sm:$0xff]
                  %2669 = vst [vmem:[%s1901 + $0x5fc] sm:$0xff] %v2668
                  %v2670 = vld [vmem:[%s1900 + $0x1800] sm:$0xff]
                  %2671 = vst [vmem:[%s1901 + $0x600] sm:$0xff] %v2670
                  %v2672 = vld [vmem:[%s1900 + $0x1810] sm:$0xff]
                  %2673 = vst [vmem:[%s1901 + $0x604] sm:$0xff] %v2672
                  %v2674 = vld [vmem:[%s1900 + $0x1820] sm:$0xff]
                  %2675 = vst [vmem:[%s1901 + $0x608] sm:$0xff] %v2674
                  %v2676 = vld [vmem:[%s1900 + $0x1830] sm:$0xff]
                  %2677 = vst [vmem:[%s1901 + $0x60c] sm:$0xff] %v2676
                  %v2678 = vld [vmem:[%s1900 + $0x1840] sm:$0xff]
                  %2679 = vst [vmem:[%s1901 + $0x610] sm:$0xff] %v2678
                  %v2680 = vld [vmem:[%s1900 + $0x1850] sm:$0xff]
                  %2681 = vst [vmem:[%s1901 + $0x614] sm:$0xff] %v2680
                  %v2682 = vld [vmem:[%s1900 + $0x1860] sm:$0xff]
                  %2683 = vst [vmem:[%s1901 + $0x618] sm:$0xff] %v2682
                  %v2684 = vld [vmem:[%s1900 + $0x1870] sm:$0xff]
                  %2685 = vst [vmem:[%s1901 + $0x61c] sm:$0xff] %v2684
                  %s2686 = sadd.s32 1, %s1899
                  %p2687 = scmp.ge.s32.totalorder %s2686, 0
                  %s2688 = scalar_select %p2687, 0, %s2686
                  %s2689 = smul.u32 %s2688, 8
                  %s2690 = smul.u32 %s2688, 8
                  %s2691 = scalar_lea.vmem %s288, %s2689
                  %s2692 = scalar_lea.vmem %s286, %s2690 [#allocation2]
                $region79: #{nature_tqn_forward.7} parent=73 // loop_footer
                  %s1898 = sadd.s32 1, %s1894
                $region80: #{nature_tqn_forward.7} parent=73 // loop_footer_branch
                  %1893 = sbr.rel target = $region76
                $region81: #{nature_tqn_forward.7} parent=73 // loop_exit
                  _
                %s2694 = ssub.s32 16, 1
                loop: start=0, step=1, limit=1
                $region82: #{nature_tqn_forward.7} parent=73 // loop_pre_header
                  _
                $region83: #{nature_tqn_forward.7} parent=73 // loop_header
                  %s2696 = sphi 0, %s2700
                  %p2697 = scmp.ge.s32.totalorder %s2696, 1
                  %s2701 = sphi %s288, %s288
                  %s2702 = sphi %s286, %s286
                $region84: #{nature_tqn_forward.7} parent=73 // loop_header_branch
                  %2699 = sbr.rel (%p2697) target = $region88
                $region85: #{nature_tqn_forward.7} parent=73 // loop_body
                  %v2703 = vld [vmem:[%s2701] sm:%s2694]
                  %2704 = vst [vmem:[%s2702] sm:%s2694] %v2703
                  %v2705 = vld [vmem:[%s2701 + $0x10] sm:%s2694]
                  %2706 = vst [vmem:[%s2702 + $0x4] sm:%s2694] %v2705
                  %v2707 = vld [vmem:[%s2701 + $0x20] sm:%s2694]
                  %2708 = vst [vmem:[%s2702 + $0x8] sm:%s2694] %v2707
                  %v2709 = vld [vmem:[%s2701 + $0x30] sm:%s2694]
                  %2710 = vst [vmem:[%s2702 + $0xc] sm:%s2694] %v2709
                  %v2711 = vld [vmem:[%s2701 + $0x40] sm:%s2694]
                  %2712 = vst [vmem:[%s2702 + $0x10] sm:%s2694] %v2711
                  %v2713 = vld [vmem:[%s2701 + $0x50] sm:%s2694]
                  %2714 = vst [vmem:[%s2702 + $0x14] sm:%s2694] %v2713
                  %v2715 = vld [vmem:[%s2701 + $0x60] sm:%s2694]
                  %2716 = vst [vmem:[%s2702 + $0x18] sm:%s2694] %v2715
                  %v2717 = vld [vmem:[%s2701 + $0x70] sm:%s2694]
                  %2718 = vst [vmem:[%s2702 + $0x1c] sm:%s2694] %v2717
                  %v2719 = vld [vmem:[%s2701 + $0x80] sm:%s2694]
                  %2720 = vst [vmem:[%s2702 + $0x20] sm:%s2694] %v2719
                  %v2721 = vld [vmem:[%s2701 + $0x90] sm:%s2694]
                  %2722 = vst [vmem:[%s2702 + $0x24] sm:%s2694] %v2721
                  %v2723 = vld [vmem:[%s2701 + $0xa0] sm:%s2694]
                  %2724 = vst [vmem:[%s2702 + $0x28] sm:%s2694] %v2723
                  %v2725 = vld [vmem:[%s2701 + $0xb0] sm:%s2694]
                  %2726 = vst [vmem:[%s2702 + $0x2c] sm:%s2694] %v2725
                  %v2727 = vld [vmem:[%s2701 + $0xc0] sm:%s2694]
                  %2728 = vst [vmem:[%s2702 + $0x30] sm:%s2694] %v2727
                  %v2729 = vld [vmem:[%s2701 + $0xd0] sm:%s2694]
                  %2730 = vst [vmem:[%s2702 + $0x34] sm:%s2694] %v2729
                  %v2731 = vld [vmem:[%s2701 + $0xe0] sm:%s2694]
                  %2732 = vst [vmem:[%s2702 + $0x38] sm:%s2694] %v2731
                  %v2733 = vld [vmem:[%s2701 + $0xf0] sm:%s2694]
                  %2734 = vst [vmem:[%s2702 + $0x3c] sm:%s2694] %v2733
                  %v2735 = vld [vmem:[%s2701 + $0x100] sm:%s2694]
                  %2736 = vst [vmem:[%s2702 + $0x40] sm:%s2694] %v2735
                  %v2737 = vld [vmem:[%s2701 + $0x110] sm:%s2694]
                  %2738 = vst [vmem:[%s2702 + $0x44] sm:%s2694] %v2737
                  %v2739 = vld [vmem:[%s2701 + $0x120] sm:%s2694]
                  %2740 = vst [vmem:[%s2702 + $0x48] sm:%s2694] %v2739
                  %v2741 = vld [vmem:[%s2701 + $0x130] sm:%s2694]
                  %2742 = vst [vmem:[%s2702 + $0x4c] sm:%s2694] %v2741
                  %v2743 = vld [vmem:[%s2701 + $0x140] sm:%s2694]
                  %2744 = vst [vmem:[%s2702 + $0x50] sm:%s2694] %v2743
                  %v2745 = vld [vmem:[%s2701 + $0x150] sm:%s2694]
                  %2746 = vst [vmem:[%s2702 + $0x54] sm:%s2694] %v2745
                  %v2747 = vld [vmem:[%s2701 + $0x160] sm:%s2694]
                  %2748 = vst [vmem:[%s2702 + $0x58] sm:%s2694] %v2747
                  %v2749 = vld [vmem:[%s2701 + $0x170] sm:%s2694]
                  %2750 = vst [vmem:[%s2702 + $0x5c] sm:%s2694] %v2749
                  %v2751 = vld [vmem:[%s2701 + $0x180] sm:%s2694]
                  %2752 = vst [vmem:[%s2702 + $0x60] sm:%s2694] %v2751
                  %v2753 = vld [vmem:[%s2701 + $0x190] sm:%s2694]
                  %2754 = vst [vmem:[%s2702 + $0x64] sm:%s2694] %v2753
                  %v2755 = vld [vmem:[%s2701 + $0x1a0] sm:%s2694]
                  %2756 = vst [vmem:[%s2702 + $0x68] sm:%s2694] %v2755
                  %v2757 = vld [vmem:[%s2701 + $0x1b0] sm:%s2694]
                  %2758 = vst [vmem:[%s2702 + $0x6c] sm:%s2694] %v2757
                  %v2759 = vld [vmem:[%s2701 + $0x1c0] sm:%s2694]
                  %2760 = vst [vmem:[%s2702 + $0x70] sm:%s2694] %v2759
                  %v2761 = vld [vmem:[%s2701 + $0x1d0] sm:%s2694]
                  %2762 = vst [vmem:[%s2702 + $0x74] sm:%s2694] %v2761
                  %v2763 = vld [vmem:[%s2701 + $0x1e0] sm:%s2694]
                  %2764 = vst [vmem:[%s2702 + $0x78] sm:%s2694] %v2763
                  %v2765 = vld [vmem:[%s2701 + $0x1f0] sm:%s2694]
                  %2766 = vst [vmem:[%s2702 + $0x7c] sm:%s2694] %v2765
                  %v2767 = vld [vmem:[%s2701 + $0x200] sm:%s2694]
                  %2768 = vst [vmem:[%s2702 + $0x80] sm:%s2694] %v2767
                  %v2769 = vld [vmem:[%s2701 + $0x210] sm:%s2694]
                  %2770 = vst [vmem:[%s2702 + $0x84] sm:%s2694] %v2769
                  %v2771 = vld [vmem:[%s2701 + $0x220] sm:%s2694]
                  %2772 = vst [vmem:[%s2702 + $0x88] sm:%s2694] %v2771
                  %v2773 = vld [vmem:[%s2701 + $0x230] sm:%s2694]
                  %2774 = vst [vmem:[%s2702 + $0x8c] sm:%s2694] %v2773
                  %v2775 = vld [vmem:[%s2701 + $0x240] sm:%s2694]
                  %2776 = vst [vmem:[%s2702 + $0x90] sm:%s2694] %v2775
                  %v2777 = vld [vmem:[%s2701 + $0x250] sm:%s2694]
                  %2778 = vst [vmem:[%s2702 + $0x94] sm:%s2694] %v2777
                  %v2779 = vld [vmem:[%s2701 + $0x260] sm:%s2694]
                  %2780 = vst [vmem:[%s2702 + $0x98] sm:%s2694] %v2779
                  %v2781 = vld [vmem:[%s2701 + $0x270] sm:%s2694]
                  %2782 = vst [vmem:[%s2702 + $0x9c] sm:%s2694] %v2781
                  %v2783 = vld [vmem:[%s2701 + $0x280] sm:%s2694]
                  %2784 = vst [vmem:[%s2702 + $0xa0] sm:%s2694] %v2783
                  %v2785 = vld [vmem:[%s2701 + $0x290] sm:%s2694]
                  %2786 = vst [vmem:[%s2702 + $0xa4] sm:%s2694] %v2785
                  %v2787 = vld [vmem:[%s2701 + $0x2a0] sm:%s2694]
                  %2788 = vst [vmem:[%s2702 + $0xa8] sm:%s2694] %v2787
                  %v2789 = vld [vmem:[%s2701 + $0x2b0] sm:%s2694]
                  %2790 = vst [vmem:[%s2702 + $0xac] sm:%s2694] %v2789
                  %v2791 = vld [vmem:[%s2701 + $0x2c0] sm:%s2694]
                  %2792 = vst [vmem:[%s2702 + $0xb0] sm:%s2694] %v2791
                  %v2793 = vld [vmem:[%s2701 + $0x2d0] sm:%s2694]
                  %2794 = vst [vmem:[%s2702 + $0xb4] sm:%s2694] %v2793
                  %v2795 = vld [vmem:[%s2701 + $0x2e0] sm:%s2694]
                  %2796 = vst [vmem:[%s2702 + $0xb8] sm:%s2694] %v2795
                  %v2797 = vld [vmem:[%s2701 + $0x2f0] sm:%s2694]
                  %2798 = vst [vmem:[%s2702 + $0xbc] sm:%s2694] %v2797
                  %v2799 = vld [vmem:[%s2701 + $0x300] sm:%s2694]
                  %2800 = vst [vmem:[%s2702 + $0xc0] sm:%s2694] %v2799
                  %v2801 = vld [vmem:[%s2701 + $0x310] sm:%s2694]
                  %2802 = vst [vmem:[%s2702 + $0xc4] sm:%s2694] %v2801
                  %v2803 = vld [vmem:[%s2701 + $0x320] sm:%s2694]
                  %2804 = vst [vmem:[%s2702 + $0xc8] sm:%s2694] %v2803
                  %v2805 = vld [vmem:[%s2701 + $0x330] sm:%s2694]
                  %2806 = vst [vmem:[%s2702 + $0xcc] sm:%s2694] %v2805
                  %v2807 = vld [vmem:[%s2701 + $0x340] sm:%s2694]
                  %2808 = vst [vmem:[%s2702 + $0xd0] sm:%s2694] %v2807
                  %v2809 = vld [vmem:[%s2701 + $0x350] sm:%s2694]
                  %2810 = vst [vmem:[%s2702 + $0xd4] sm:%s2694] %v2809
                  %v2811 = vld [vmem:[%s2701 + $0x360] sm:%s2694]
                  %2812 = vst [vmem:[%s2702 + $0xd8] sm:%s2694] %v2811
                  %v2813 = vld [vmem:[%s2701 + $0x370] sm:%s2694]
                  %2814 = vst [vmem:[%s2702 + $0xdc] sm:%s2694] %v2813
                  %v2815 = vld [vmem:[%s2701 + $0x380] sm:%s2694]
                  %2816 = vst [vmem:[%s2702 + $0xe0] sm:%s2694] %v2815
                  %v2817 = vld [vmem:[%s2701 + $0x390] sm:%s2694]
                  %2818 = vst [vmem:[%s2702 + $0xe4] sm:%s2694] %v2817
                  %v2819 = vld [vmem:[%s2701 + $0x3a0] sm:%s2694]
                  %2820 = vst [vmem:[%s2702 + $0xe8] sm:%s2694] %v2819
                  %v2821 = vld [vmem:[%s2701 + $0x3b0] sm:%s2694]
                  %2822 = vst [vmem:[%s2702 + $0xec] sm:%s2694] %v2821
                  %v2823 = vld [vmem:[%s2701 + $0x3c0] sm:%s2694]
                  %2824 = vst [vmem:[%s2702 + $0xf0] sm:%s2694] %v2823
                  %v2825 = vld [vmem:[%s2701 + $0x3d0] sm:%s2694]
                  %2826 = vst [vmem:[%s2702 + $0xf4] sm:%s2694] %v2825
                  %v2827 = vld [vmem:[%s2701 + $0x3e0] sm:%s2694]
                  %2828 = vst [vmem:[%s2702 + $0xf8] sm:%s2694] %v2827
                  %v2829 = vld [vmem:[%s2701 + $0x3f0] sm:%s2694]
                  %2830 = vst [vmem:[%s2702 + $0xfc] sm:%s2694] %v2829
                  %v2831 = vld [vmem:[%s2701 + $0x400] sm:%s2694]
                  %2832 = vst [vmem:[%s2702 + $0x100] sm:%s2694] %v2831
                  %v2833 = vld [vmem:[%s2701 + $0x410] sm:%s2694]
                  %2834 = vst [vmem:[%s2702 + $0x104] sm:%s2694] %v2833
                  %v2835 = vld [vmem:[%s2701 + $0x420] sm:%s2694]
                  %2836 = vst [vmem:[%s2702 + $0x108] sm:%s2694] %v2835
                  %v2837 = vld [vmem:[%s2701 + $0x430] sm:%s2694]
                  %2838 = vst [vmem:[%s2702 + $0x10c] sm:%s2694] %v2837
                  %v2839 = vld [vmem:[%s2701 + $0x440] sm:%s2694]
                  %2840 = vst [vmem:[%s2702 + $0x110] sm:%s2694] %v2839
                  %v2841 = vld [vmem:[%s2701 + $0x450] sm:%s2694]
                  %2842 = vst [vmem:[%s2702 + $0x114] sm:%s2694] %v2841
                  %v2843 = vld [vmem:[%s2701 + $0x460] sm:%s2694]
                  %2844 = vst [vmem:[%s2702 + $0x118] sm:%s2694] %v2843
                  %v2845 = vld [vmem:[%s2701 + $0x470] sm:%s2694]
                  %2846 = vst [vmem:[%s2702 + $0x11c] sm:%s2694] %v2845
                  %v2847 = vld [vmem:[%s2701 + $0x480] sm:%s2694]
                  %2848 = vst [vmem:[%s2702 + $0x120] sm:%s2694] %v2847
                  %v2849 = vld [vmem:[%s2701 + $0x490] sm:%s2694]
                  %2850 = vst [vmem:[%s2702 + $0x124] sm:%s2694] %v2849
                  %v2851 = vld [vmem:[%s2701 + $0x4a0] sm:%s2694]
                  %2852 = vst [vmem:[%s2702 + $0x128] sm:%s2694] %v2851
                  %v2853 = vld [vmem:[%s2701 + $0x4b0] sm:%s2694]
                  %2854 = vst [vmem:[%s2702 + $0x12c] sm:%s2694] %v2853
                  %v2855 = vld [vmem:[%s2701 + $0x4c0] sm:%s2694]
                  %2856 = vst [vmem:[%s2702 + $0x130] sm:%s2694] %v2855
                  %v2857 = vld [vmem:[%s2701 + $0x4d0] sm:%s2694]
                  %2858 = vst [vmem:[%s2702 + $0x134] sm:%s2694] %v2857
                  %v2859 = vld [vmem:[%s2701 + $0x4e0] sm:%s2694]
                  %2860 = vst [vmem:[%s2702 + $0x138] sm:%s2694] %v2859
                  %v2861 = vld [vmem:[%s2701 + $0x4f0] sm:%s2694]
                  %2862 = vst [vmem:[%s2702 + $0x13c] sm:%s2694] %v2861
                  %v2863 = vld [vmem:[%s2701 + $0x500] sm:%s2694]
                  %2864 = vst [vmem:[%s2702 + $0x140] sm:%s2694] %v2863
                  %v2865 = vld [vmem:[%s2701 + $0x510] sm:%s2694]
                  %2866 = vst [vmem:[%s2702 + $0x144] sm:%s2694] %v2865
                  %v2867 = vld [vmem:[%s2701 + $0x520] sm:%s2694]
                  %2868 = vst [vmem:[%s2702 + $0x148] sm:%s2694] %v2867
                  %v2869 = vld [vmem:[%s2701 + $0x530] sm:%s2694]
                  %2870 = vst [vmem:[%s2702 + $0x14c] sm:%s2694] %v2869
                  %v2871 = vld [vmem:[%s2701 + $0x540] sm:%s2694]
                  %2872 = vst [vmem:[%s2702 + $0x150] sm:%s2694] %v2871
                  %v2873 = vld [vmem:[%s2701 + $0x550] sm:%s2694]
                  %2874 = vst [vmem:[%s2702 + $0x154] sm:%s2694] %v2873
                  %v2875 = vld [vmem:[%s2701 + $0x560] sm:%s2694]
                  %2876 = vst [vmem:[%s2702 + $0x158] sm:%s2694] %v2875
                  %v2877 = vld [vmem:[%s2701 + $0x570] sm:%s2694]
                  %2878 = vst [vmem:[%s2702 + $0x15c] sm:%s2694] %v2877
                  %v2879 = vld [vmem:[%s2701 + $0x580] sm:%s2694]
                  %2880 = vst [vmem:[%s2702 + $0x160] sm:%s2694] %v2879
                  %v2881 = vld [vmem:[%s2701 + $0x590] sm:%s2694]
                  %2882 = vst [vmem:[%s2702 + $0x164] sm:%s2694] %v2881
                  %v2883 = vld [vmem:[%s2701 + $0x5a0] sm:%s2694]
                  %2884 = vst [vmem:[%s2702 + $0x168] sm:%s2694] %v2883
                  %v2885 = vld [vmem:[%s2701 + $0x5b0] sm:%s2694]
                  %2886 = vst [vmem:[%s2702 + $0x16c] sm:%s2694] %v2885
                  %v2887 = vld [vmem:[%s2701 + $0x5c0] sm:%s2694]
                  %2888 = vst [vmem:[%s2702 + $0x170] sm:%s2694] %v2887
                  %v2889 = vld [vmem:[%s2701 + $0x5d0] sm:%s2694]
                  %2890 = vst [vmem:[%s2702 + $0x174] sm:%s2694] %v2889
                  %v2891 = vld [vmem:[%s2701 + $0x5e0] sm:%s2694]
                  %2892 = vst [vmem:[%s2702 + $0x178] sm:%s2694] %v2891
                  %v2893 = vld [vmem:[%s2701 + $0x5f0] sm:%s2694]
                  %2894 = vst [vmem:[%s2702 + $0x17c] sm:%s2694] %v2893
                  %v2895 = vld [vmem:[%s2701 + $0x600] sm:%s2694]
                  %2896 = vst [vmem:[%s2702 + $0x180] sm:%s2694] %v2895
                  %v2897 = vld [vmem:[%s2701 + $0x610] sm:%s2694]
                  %2898 = vst [vmem:[%s2702 + $0x184] sm:%s2694] %v2897
                  %v2899 = vld [vmem:[%s2701 + $0x620] sm:%s2694]
                  %2900 = vst [vmem:[%s2702 + $0x188] sm:%s2694] %v2899
                  %v2901 = vld [vmem:[%s2701 + $0x630] sm:%s2694]
                  %2902 = vst [vmem:[%s2702 + $0x18c] sm:%s2694] %v2901
                  %v2903 = vld [vmem:[%s2701 + $0x640] sm:%s2694]
                  %2904 = vst [vmem:[%s2702 + $0x190] sm:%s2694] %v2903
                  %v2905 = vld [vmem:[%s2701 + $0x650] sm:%s2694]
                  %2906 = vst [vmem:[%s2702 + $0x194] sm:%s2694] %v2905
                  %v2907 = vld [vmem:[%s2701 + $0x660] sm:%s2694]
                  %2908 = vst [vmem:[%s2702 + $0x198] sm:%s2694] %v2907
                  %v2909 = vld [vmem:[%s2701 + $0x670] sm:%s2694]
                  %2910 = vst [vmem:[%s2702 + $0x19c] sm:%s2694] %v2909
                  %v2911 = vld [vmem:[%s2701 + $0x680] sm:%s2694]
                  %2912 = vst [vmem:[%s2702 + $0x1a0] sm:%s2694] %v2911
                  %v2913 = vld [vmem:[%s2701 + $0x690] sm:%s2694]
                  %2914 = vst [vmem:[%s2702 + $0x1a4] sm:%s2694] %v2913
                  %v2915 = vld [vmem:[%s2701 + $0x6a0] sm:%s2694]
                  %2916 = vst [vmem:[%s2702 + $0x1a8] sm:%s2694] %v2915
                  %v2917 = vld [vmem:[%s2701 + $0x6b0] sm:%s2694]
                  %2918 = vst [vmem:[%s2702 + $0x1ac] sm:%s2694] %v2917
                  %v2919 = vld [vmem:[%s2701 + $0x6c0] sm:%s2694]
                  %2920 = vst [vmem:[%s2702 + $0x1b0] sm:%s2694] %v2919
                  %v2921 = vld [vmem:[%s2701 + $0x6d0] sm:%s2694]
                  %2922 = vst [vmem:[%s2702 + $0x1b4] sm:%s2694] %v2921
                  %v2923 = vld [vmem:[%s2701 + $0x6e0] sm:%s2694]
                  %2924 = vst [vmem:[%s2702 + $0x1b8] sm:%s2694] %v2923
                  %v2925 = vld [vmem:[%s2701 + $0x6f0] sm:%s2694]
                  %2926 = vst [vmem:[%s2702 + $0x1bc] sm:%s2694] %v2925
                  %v2927 = vld [vmem:[%s2701 + $0x700] sm:%s2694]
                  %2928 = vst [vmem:[%s2702 + $0x1c0] sm:%s2694] %v2927
                  %v2929 = vld [vmem:[%s2701 + $0x710] sm:%s2694]
                  %2930 = vst [vmem:[%s2702 + $0x1c4] sm:%s2694] %v2929
                  %v2931 = vld [vmem:[%s2701 + $0x720] sm:%s2694]
                  %2932 = vst [vmem:[%s2702 + $0x1c8] sm:%s2694] %v2931
                  %v2933 = vld [vmem:[%s2701 + $0x730] sm:%s2694]
                  %2934 = vst [vmem:[%s2702 + $0x1cc] sm:%s2694] %v2933
                  %v2935 = vld [vmem:[%s2701 + $0x740] sm:%s2694]
                  %2936 = vst [vmem:[%s2702 + $0x1d0] sm:%s2694] %v2935
                  %v2937 = vld [vmem:[%s2701 + $0x750] sm:%s2694]
                  %2938 = vst [vmem:[%s2702 + $0x1d4] sm:%s2694] %v2937
                  %v2939 = vld [vmem:[%s2701 + $0x760] sm:%s2694]
                  %2940 = vst [vmem:[%s2702 + $0x1d8] sm:%s2694] %v2939
                  %v2941 = vld [vmem:[%s2701 + $0x770] sm:%s2694]
                  %2942 = vst [vmem:[%s2702 + $0x1dc] sm:%s2694] %v2941
                  %v2943 = vld [vmem:[%s2701 + $0x780] sm:%s2694]
                  %2944 = vst [vmem:[%s2702 + $0x1e0] sm:%s2694] %v2943
                  %v2945 = vld [vmem:[%s2701 + $0x790] sm:%s2694]
                  %2946 = vst [vmem:[%s2702 + $0x1e4] sm:%s2694] %v2945
                  %v2947 = vld [vmem:[%s2701 + $0x7a0] sm:%s2694]
                  %2948 = vst [vmem:[%s2702 + $0x1e8] sm:%s2694] %v2947
                  %v2949 = vld [vmem:[%s2701 + $0x7b0] sm:%s2694]
                  %2950 = vst [vmem:[%s2702 + $0x1ec] sm:%s2694] %v2949
                  %v2951 = vld [vmem:[%s2701 + $0x7c0] sm:%s2694]
                  %2952 = vst [vmem:[%s2702 + $0x1f0] sm:%s2694] %v2951
                  %v2953 = vld [vmem:[%s2701 + $0x7d0] sm:%s2694]
                  %2954 = vst [vmem:[%s2702 + $0x1f4] sm:%s2694] %v2953
                  %v2955 = vld [vmem:[%s2701 + $0x7e0] sm:%s2694]
                  %2956 = vst [vmem:[%s2702 + $0x1f8] sm:%s2694] %v2955
                  %v2957 = vld [vmem:[%s2701 + $0x7f0] sm:%s2694]
                  %2958 = vst [vmem:[%s2702 + $0x1fc] sm:%s2694] %v2957
                  %v2959 = vld [vmem:[%s2701 + $0x800] sm:%s2694]
                  %2960 = vst [vmem:[%s2702 + $0x200] sm:%s2694] %v2959
                  %v2961 = vld [vmem:[%s2701 + $0x810] sm:%s2694]
                  %2962 = vst [vmem:[%s2702 + $0x204] sm:%s2694] %v2961
                  %v2963 = vld [vmem:[%s2701 + $0x820] sm:%s2694]
                  %2964 = vst [vmem:[%s2702 + $0x208] sm:%s2694] %v2963
                  %v2965 = vld [vmem:[%s2701 + $0x830] sm:%s2694]
                  %2966 = vst [vmem:[%s2702 + $0x20c] sm:%s2694] %v2965
                  %v2967 = vld [vmem:[%s2701 + $0x840] sm:%s2694]
                  %2968 = vst [vmem:[%s2702 + $0x210] sm:%s2694] %v2967
                  %v2969 = vld [vmem:[%s2701 + $0x850] sm:%s2694]
                  %2970 = vst [vmem:[%s2702 + $0x214] sm:%s2694] %v2969
                  %v2971 = vld [vmem:[%s2701 + $0x860] sm:%s2694]
                  %2972 = vst [vmem:[%s2702 + $0x218] sm:%s2694] %v2971
                  %v2973 = vld [vmem:[%s2701 + $0x870] sm:%s2694]
                  %2974 = vst [vmem:[%s2702 + $0x21c] sm:%s2694] %v2973
                  %v2975 = vld [vmem:[%s2701 + $0x880] sm:%s2694]
                  %2976 = vst [vmem:[%s2702 + $0x220] sm:%s2694] %v2975
                  %v2977 = vld [vmem:[%s2701 + $0x890] sm:%s2694]
                  %2978 = vst [vmem:[%s2702 + $0x224] sm:%s2694] %v2977
                  %v2979 = vld [vmem:[%s2701 + $0x8a0] sm:%s2694]
                  %2980 = vst [vmem:[%s2702 + $0x228] sm:%s2694] %v2979
                  %v2981 = vld [vmem:[%s2701 + $0x8b0] sm:%s2694]
                  %2982 = vst [vmem:[%s2702 + $0x22c] sm:%s2694] %v2981
                  %v2983 = vld [vmem:[%s2701 + $0x8c0] sm:%s2694]
                  %2984 = vst [vmem:[%s2702 + $0x230] sm:%s2694] %v2983
                  %v2985 = vld [vmem:[%s2701 + $0x8d0] sm:%s2694]
                  %2986 = vst [vmem:[%s2702 + $0x234] sm:%s2694] %v2985
                  %v2987 = vld [vmem:[%s2701 + $0x8e0] sm:%s2694]
                  %2988 = vst [vmem:[%s2702 + $0x238] sm:%s2694] %v2987
                  %v2989 = vld [vmem:[%s2701 + $0x8f0] sm:%s2694]
                  %2990 = vst [vmem:[%s2702 + $0x23c] sm:%s2694] %v2989
                  %v2991 = vld [vmem:[%s2701 + $0x900] sm:%s2694]
                  %2992 = vst [vmem:[%s2702 + $0x240] sm:%s2694] %v2991
                  %v2993 = vld [vmem:[%s2701 + $0x910] sm:%s2694]
                  %2994 = vst [vmem:[%s2702 + $0x244] sm:%s2694] %v2993
                  %v2995 = vld [vmem:[%s2701 + $0x920] sm:%s2694]
                  %2996 = vst [vmem:[%s2702 + $0x248] sm:%s2694] %v2995
                  %v2997 = vld [vmem:[%s2701 + $0x930] sm:%s2694]
                  %2998 = vst [vmem:[%s2702 + $0x24c] sm:%s2694] %v2997
                  %v2999 = vld [vmem:[%s2701 + $0x940] sm:%s2694]
                  %3000 = vst [vmem:[%s2702 + $0x250] sm:%s2694] %v2999
                  %v3001 = vld [vmem:[%s2701 + $0x950] sm:%s2694]
                  %3002 = vst [vmem:[%s2702 + $0x254] sm:%s2694] %v3001
                  %v3003 = vld [vmem:[%s2701 + $0x960] sm:%s2694]
                  %3004 = vst [vmem:[%s2702 + $0x258] sm:%s2694] %v3003
                  %v3005 = vld [vmem:[%s2701 + $0x970] sm:%s2694]
                  %3006 = vst [vmem:[%s2702 + $0x25c] sm:%s2694] %v3005
                  %v3007 = vld [vmem:[%s2701 + $0x980] sm:%s2694]
                  %3008 = vst [vmem:[%s2702 + $0x260] sm:%s2694] %v3007
                  %v3009 = vld [vmem:[%s2701 + $0x990] sm:%s2694]
                  %3010 = vst [vmem:[%s2702 + $0x264] sm:%s2694] %v3009
                  %v3011 = vld [vmem:[%s2701 + $0x9a0] sm:%s2694]
                  %3012 = vst [vmem:[%s2702 + $0x268] sm:%s2694] %v3011
                  %v3013 = vld [vmem:[%s2701 + $0x9b0] sm:%s2694]
                  %3014 = vst [vmem:[%s2702 + $0x26c] sm:%s2694] %v3013
                  %v3015 = vld [vmem:[%s2701 + $0x9c0] sm:%s2694]
                  %3016 = vst [vmem:[%s2702 + $0x270] sm:%s2694] %v3015
                  %v3017 = vld [vmem:[%s2701 + $0x9d0] sm:%s2694]
                  %3018 = vst [vmem:[%s2702 + $0x274] sm:%s2694] %v3017
                  %v3019 = vld [vmem:[%s2701 + $0x9e0] sm:%s2694]
                  %3020 = vst [vmem:[%s2702 + $0x278] sm:%s2694] %v3019
                  %v3021 = vld [vmem:[%s2701 + $0x9f0] sm:%s2694]
                  %3022 = vst [vmem:[%s2702 + $0x27c] sm:%s2694] %v3021
                  %v3023 = vld [vmem:[%s2701 + $0xa00] sm:%s2694]
                  %3024 = vst [vmem:[%s2702 + $0x280] sm:%s2694] %v3023
                  %v3025 = vld [vmem:[%s2701 + $0xa10] sm:%s2694]
                  %3026 = vst [vmem:[%s2702 + $0x284] sm:%s2694] %v3025
                  %v3027 = vld [vmem:[%s2701 + $0xa20] sm:%s2694]
                  %3028 = vst [vmem:[%s2702 + $0x288] sm:%s2694] %v3027
                  %v3029 = vld [vmem:[%s2701 + $0xa30] sm:%s2694]
                  %3030 = vst [vmem:[%s2702 + $0x28c] sm:%s2694] %v3029
                  %v3031 = vld [vmem:[%s2701 + $0xa40] sm:%s2694]
                  %3032 = vst [vmem:[%s2702 + $0x290] sm:%s2694] %v3031
                  %v3033 = vld [vmem:[%s2701 + $0xa50] sm:%s2694]
                  %3034 = vst [vmem:[%s2702 + $0x294] sm:%s2694] %v3033
                  %v3035 = vld [vmem:[%s2701 + $0xa60] sm:%s2694]
                  %3036 = vst [vmem:[%s2702 + $0x298] sm:%s2694] %v3035
                  %v3037 = vld [vmem:[%s2701 + $0xa70] sm:%s2694]
                  %3038 = vst [vmem:[%s2702 + $0x29c] sm:%s2694] %v3037
                  %v3039 = vld [vmem:[%s2701 + $0xa80] sm:%s2694]
                  %3040 = vst [vmem:[%s2702 + $0x2a0] sm:%s2694] %v3039
                  %v3041 = vld [vmem:[%s2701 + $0xa90] sm:%s2694]
                  %3042 = vst [vmem:[%s2702 + $0x2a4] sm:%s2694] %v3041
                  %v3043 = vld [vmem:[%s2701 + $0xaa0] sm:%s2694]
                  %3044 = vst [vmem:[%s2702 + $0x2a8] sm:%s2694] %v3043
                  %v3045 = vld [vmem:[%s2701 + $0xab0] sm:%s2694]
                  %3046 = vst [vmem:[%s2702 + $0x2ac] sm:%s2694] %v3045
                  %v3047 = vld [vmem:[%s2701 + $0xac0] sm:%s2694]
                  %3048 = vst [vmem:[%s2702 + $0x2b0] sm:%s2694] %v3047
                  %v3049 = vld [vmem:[%s2701 + $0xad0] sm:%s2694]
                  %3050 = vst [vmem:[%s2702 + $0x2b4] sm:%s2694] %v3049
                  %v3051 = vld [vmem:[%s2701 + $0xae0] sm:%s2694]
                  %3052 = vst [vmem:[%s2702 + $0x2b8] sm:%s2694] %v3051
                  %v3053 = vld [vmem:[%s2701 + $0xaf0] sm:%s2694]
                  %3054 = vst [vmem:[%s2702 + $0x2bc] sm:%s2694] %v3053
                  %v3055 = vld [vmem:[%s2701 + $0xb00] sm:%s2694]
                  %3056 = vst [vmem:[%s2702 + $0x2c0] sm:%s2694] %v3055
                  %v3057 = vld [vmem:[%s2701 + $0xb10] sm:%s2694]
                  %3058 = vst [vmem:[%s2702 + $0x2c4] sm:%s2694] %v3057
                  %v3059 = vld [vmem:[%s2701 + $0xb20] sm:%s2694]
                  %3060 = vst [vmem:[%s2702 + $0x2c8] sm:%s2694] %v3059
                  %v3061 = vld [vmem:[%s2701 + $0xb30] sm:%s2694]
                  %3062 = vst [vmem:[%s2702 + $0x2cc] sm:%s2694] %v3061
                  %v3063 = vld [vmem:[%s2701 + $0xb40] sm:%s2694]
                  %3064 = vst [vmem:[%s2702 + $0x2d0] sm:%s2694] %v3063
                  %v3065 = vld [vmem:[%s2701 + $0xb50] sm:%s2694]
                  %3066 = vst [vmem:[%s2702 + $0x2d4] sm:%s2694] %v3065
                  %v3067 = vld [vmem:[%s2701 + $0xb60] sm:%s2694]
                  %3068 = vst [vmem:[%s2702 + $0x2d8] sm:%s2694] %v3067
                  %v3069 = vld [vmem:[%s2701 + $0xb70] sm:%s2694]
                  %3070 = vst [vmem:[%s2702 + $0x2dc] sm:%s2694] %v3069
                  %v3071 = vld [vmem:[%s2701 + $0xb80] sm:%s2694]
                  %3072 = vst [vmem:[%s2702 + $0x2e0] sm:%s2694] %v3071
                  %v3073 = vld [vmem:[%s2701 + $0xb90] sm:%s2694]
                  %3074 = vst [vmem:[%s2702 + $0x2e4] sm:%s2694] %v3073
                  %v3075 = vld [vmem:[%s2701 + $0xba0] sm:%s2694]
                  %3076 = vst [vmem:[%s2702 + $0x2e8] sm:%s2694] %v3075
                  %v3077 = vld [vmem:[%s2701 + $0xbb0] sm:%s2694]
                  %3078 = vst [vmem:[%s2702 + $0x2ec] sm:%s2694] %v3077
                  %v3079 = vld [vmem:[%s2701 + $0xbc0] sm:%s2694]
                  %3080 = vst [vmem:[%s2702 + $0x2f0] sm:%s2694] %v3079
                  %v3081 = vld [vmem:[%s2701 + $0xbd0] sm:%s2694]
                  %3082 = vst [vmem:[%s2702 + $0x2f4] sm:%s2694] %v3081
                  %v3083 = vld [vmem:[%s2701 + $0xbe0] sm:%s2694]
                  %3084 = vst [vmem:[%s2702 + $0x2f8] sm:%s2694] %v3083
                  %v3085 = vld [vmem:[%s2701 + $0xbf0] sm:%s2694]
                  %3086 = vst [vmem:[%s2702 + $0x2fc] sm:%s2694] %v3085
                  %v3087 = vld [vmem:[%s2701 + $0xc00] sm:%s2694]
                  %3088 = vst [vmem:[%s2702 + $0x300] sm:%s2694] %v3087
                  %v3089 = vld [vmem:[%s2701 + $0xc10] sm:%s2694]
                  %3090 = vst [vmem:[%s2702 + $0x304] sm:%s2694] %v3089
                  %v3091 = vld [vmem:[%s2701 + $0xc20] sm:%s2694]
                  %3092 = vst [vmem:[%s2702 + $0x308] sm:%s2694] %v3091
                  %v3093 = vld [vmem:[%s2701 + $0xc30] sm:%s2694]
                  %3094 = vst [vmem:[%s2702 + $0x30c] sm:%s2694] %v3093
                  %v3095 = vld [vmem:[%s2701 + $0xc40] sm:%s2694]
                  %3096 = vst [vmem:[%s2702 + $0x310] sm:%s2694] %v3095
                  %v3097 = vld [vmem:[%s2701 + $0xc50] sm:%s2694]
                  %3098 = vst [vmem:[%s2702 + $0x314] sm:%s2694] %v3097
                  %v3099 = vld [vmem:[%s2701 + $0xc60] sm:%s2694]
                  %3100 = vst [vmem:[%s2702 + $0x318] sm:%s2694] %v3099
                  %v3101 = vld [vmem:[%s2701 + $0xc70] sm:%s2694]
                  %3102 = vst [vmem:[%s2702 + $0x31c] sm:%s2694] %v3101
                  %v3103 = vld [vmem:[%s2701 + $0xc80] sm:%s2694]
                  %3104 = vst [vmem:[%s2702 + $0x320] sm:%s2694] %v3103
                  %v3105 = vld [vmem:[%s2701 + $0xc90] sm:%s2694]
                  %3106 = vst [vmem:[%s2702 + $0x324] sm:%s2694] %v3105
                  %v3107 = vld [vmem:[%s2701 + $0xca0] sm:%s2694]
                  %3108 = vst [vmem:[%s2702 + $0x328] sm:%s2694] %v3107
                  %v3109 = vld [vmem:[%s2701 + $0xcb0] sm:%s2694]
                  %3110 = vst [vmem:[%s2702 + $0x32c] sm:%s2694] %v3109
                  %v3111 = vld [vmem:[%s2701 + $0xcc0] sm:%s2694]
                  %3112 = vst [vmem:[%s2702 + $0x330] sm:%s2694] %v3111
                  %v3113 = vld [vmem:[%s2701 + $0xcd0] sm:%s2694]
                  %3114 = vst [vmem:[%s2702 + $0x334] sm:%s2694] %v3113
                  %v3115 = vld [vmem:[%s2701 + $0xce0] sm:%s2694]
                  %3116 = vst [vmem:[%s2702 + $0x338] sm:%s2694] %v3115
                  %v3117 = vld [vmem:[%s2701 + $0xcf0] sm:%s2694]
                  %3118 = vst [vmem:[%s2702 + $0x33c] sm:%s2694] %v3117
                  %v3119 = vld [vmem:[%s2701 + $0xd00] sm:%s2694]
                  %3120 = vst [vmem:[%s2702 + $0x340] sm:%s2694] %v3119
                  %v3121 = vld [vmem:[%s2701 + $0xd10] sm:%s2694]
                  %3122 = vst [vmem:[%s2702 + $0x344] sm:%s2694] %v3121
                  %v3123 = vld [vmem:[%s2701 + $0xd20] sm:%s2694]
                  %3124 = vst [vmem:[%s2702 + $0x348] sm:%s2694] %v3123
                  %v3125 = vld [vmem:[%s2701 + $0xd30] sm:%s2694]
                  %3126 = vst [vmem:[%s2702 + $0x34c] sm:%s2694] %v3125
                  %v3127 = vld [vmem:[%s2701 + $0xd40] sm:%s2694]
                  %3128 = vst [vmem:[%s2702 + $0x350] sm:%s2694] %v3127
                  %v3129 = vld [vmem:[%s2701 + $0xd50] sm:%s2694]
                  %3130 = vst [vmem:[%s2702 + $0x354] sm:%s2694] %v3129
                  %v3131 = vld [vmem:[%s2701 + $0xd60] sm:%s2694]
                  %3132 = vst [vmem:[%s2702 + $0x358] sm:%s2694] %v3131
                  %v3133 = vld [vmem:[%s2701 + $0xd70] sm:%s2694]
                  %3134 = vst [vmem:[%s2702 + $0x35c] sm:%s2694] %v3133
                  %v3135 = vld [vmem:[%s2701 + $0xd80] sm:%s2694]
                  %3136 = vst [vmem:[%s2702 + $0x360] sm:%s2694] %v3135
                  %v3137 = vld [vmem:[%s2701 + $0xd90] sm:%s2694]
                  %3138 = vst [vmem:[%s2702 + $0x364] sm:%s2694] %v3137
                  %v3139 = vld [vmem:[%s2701 + $0xda0] sm:%s2694]
                  %3140 = vst [vmem:[%s2702 + $0x368] sm:%s2694] %v3139
                  %v3141 = vld [vmem:[%s2701 + $0xdb0] sm:%s2694]
                  %3142 = vst [vmem:[%s2702 + $0x36c] sm:%s2694] %v3141
                  %v3143 = vld [vmem:[%s2701 + $0xdc0] sm:%s2694]
                  %3144 = vst [vmem:[%s2702 + $0x370] sm:%s2694] %v3143
                  %v3145 = vld [vmem:[%s2701 + $0xdd0] sm:%s2694]
                  %3146 = vst [vmem:[%s2702 + $0x374] sm:%s2694] %v3145
                  %v3147 = vld [vmem:[%s2701 + $0xde0] sm:%s2694]
                  %3148 = vst [vmem:[%s2702 + $0x378] sm:%s2694] %v3147
                  %v3149 = vld [vmem:[%s2701 + $0xdf0] sm:%s2694]
                  %3150 = vst [vmem:[%s2702 + $0x37c] sm:%s2694] %v3149
                  %v3151 = vld [vmem:[%s2701 + $0xe00] sm:%s2694]
                  %3152 = vst [vmem:[%s2702 + $0x380] sm:%s2694] %v3151
                  %v3153 = vld [vmem:[%s2701 + $0xe10] sm:%s2694]
                  %3154 = vst [vmem:[%s2702 + $0x384] sm:%s2694] %v3153
                  %v3155 = vld [vmem:[%s2701 + $0xe20] sm:%s2694]
                  %3156 = vst [vmem:[%s2702 + $0x388] sm:%s2694] %v3155
                  %v3157 = vld [vmem:[%s2701 + $0xe30] sm:%s2694]
                  %3158 = vst [vmem:[%s2702 + $0x38c] sm:%s2694] %v3157
                  %v3159 = vld [vmem:[%s2701 + $0xe40] sm:%s2694]
                  %3160 = vst [vmem:[%s2702 + $0x390] sm:%s2694] %v3159
                  %v3161 = vld [vmem:[%s2701 + $0xe50] sm:%s2694]
                  %3162 = vst [vmem:[%s2702 + $0x394] sm:%s2694] %v3161
                  %v3163 = vld [vmem:[%s2701 + $0xe60] sm:%s2694]
                  %3164 = vst [vmem:[%s2702 + $0x398] sm:%s2694] %v3163
                  %v3165 = vld [vmem:[%s2701 + $0xe70] sm:%s2694]
                  %3166 = vst [vmem:[%s2702 + $0x39c] sm:%s2694] %v3165
                  %v3167 = vld [vmem:[%s2701 + $0xe80] sm:%s2694]
                  %3168 = vst [vmem:[%s2702 + $0x3a0] sm:%s2694] %v3167
                  %v3169 = vld [vmem:[%s2701 + $0xe90] sm:%s2694]
                  %3170 = vst [vmem:[%s2702 + $0x3a4] sm:%s2694] %v3169
                  %v3171 = vld [vmem:[%s2701 + $0xea0] sm:%s2694]
                  %3172 = vst [vmem:[%s2702 + $0x3a8] sm:%s2694] %v3171
                  %v3173 = vld [vmem:[%s2701 + $0xeb0] sm:%s2694]
                  %3174 = vst [vmem:[%s2702 + $0x3ac] sm:%s2694] %v3173
                  %v3175 = vld [vmem:[%s2701 + $0xec0] sm:%s2694]
                  %3176 = vst [vmem:[%s2702 + $0x3b0] sm:%s2694] %v3175
                  %v3177 = vld [vmem:[%s2701 + $0xed0] sm:%s2694]
                  %3178 = vst [vmem:[%s2702 + $0x3b4] sm:%s2694] %v3177
                  %v3179 = vld [vmem:[%s2701 + $0xee0] sm:%s2694]
                  %3180 = vst [vmem:[%s2702 + $0x3b8] sm:%s2694] %v3179
                  %v3181 = vld [vmem:[%s2701 + $0xef0] sm:%s2694]
                  %3182 = vst [vmem:[%s2702 + $0x3bc] sm:%s2694] %v3181
                  %v3183 = vld [vmem:[%s2701 + $0xf00] sm:%s2694]
                  %3184 = vst [vmem:[%s2702 + $0x3c0] sm:%s2694] %v3183
                  %v3185 = vld [vmem:[%s2701 + $0xf10] sm:%s2694]
                  %3186 = vst [vmem:[%s2702 + $0x3c4] sm:%s2694] %v3185
                  %v3187 = vld [vmem:[%s2701 + $0xf20] sm:%s2694]
                  %3188 = vst [vmem:[%s2702 + $0x3c8] sm:%s2694] %v3187
                  %v3189 = vld [vmem:[%s2701 + $0xf30] sm:%s2694]
                  %3190 = vst [vmem:[%s2702 + $0x3cc] sm:%s2694] %v3189
                  %v3191 = vld [vmem:[%s2701 + $0xf40] sm:%s2694]
                  %3192 = vst [vmem:[%s2702 + $0x3d0] sm:%s2694] %v3191
                  %v3193 = vld [vmem:[%s2701 + $0xf50] sm:%s2694]
                  %3194 = vst [vmem:[%s2702 + $0x3d4] sm:%s2694] %v3193
                  %v3195 = vld [vmem:[%s2701 + $0xf60] sm:%s2694]
                  %3196 = vst [vmem:[%s2702 + $0x3d8] sm:%s2694] %v3195
                  %v3197 = vld [vmem:[%s2701 + $0xf70] sm:%s2694]
                  %3198 = vst [vmem:[%s2702 + $0x3dc] sm:%s2694] %v3197
                  %v3199 = vld [vmem:[%s2701 + $0xf80] sm:%s2694]
                  %3200 = vst [vmem:[%s2702 + $0x3e0] sm:%s2694] %v3199
                  %v3201 = vld [vmem:[%s2701 + $0xf90] sm:%s2694]
                  %3202 = vst [vmem:[%s2702 + $0x3e4] sm:%s2694] %v3201
                  %v3203 = vld [vmem:[%s2701 + $0xfa0] sm:%s2694]
                  %3204 = vst [vmem:[%s2702 + $0x3e8] sm:%s2694] %v3203
                  %v3205 = vld [vmem:[%s2701 + $0xfb0] sm:%s2694]
                  %3206 = vst [vmem:[%s2702 + $0x3ec] sm:%s2694] %v3205
                  %v3207 = vld [vmem:[%s2701 + $0xfc0] sm:%s2694]
                  %3208 = vst [vmem:[%s2702 + $0x3f0] sm:%s2694] %v3207
                  %v3209 = vld [vmem:[%s2701 + $0xfd0] sm:%s2694]
                  %3210 = vst [vmem:[%s2702 + $0x3f4] sm:%s2694] %v3209
                  %v3211 = vld [vmem:[%s2701 + $0xfe0] sm:%s2694]
                  %3212 = vst [vmem:[%s2702 + $0x3f8] sm:%s2694] %v3211
                  %v3213 = vld [vmem:[%s2701 + $0xff0] sm:%s2694]
                  %3214 = vst [vmem:[%s2702 + $0x3fc] sm:%s2694] %v3213
                  %v3215 = vld [vmem:[%s2701 + $0x1000] sm:%s2694]
                  %3216 = vst [vmem:[%s2702 + $0x400] sm:%s2694] %v3215
                  %v3217 = vld [vmem:[%s2701 + $0x1010] sm:%s2694]
                  %3218 = vst [vmem:[%s2702 + $0x404] sm:%s2694] %v3217
                  %v3219 = vld [vmem:[%s2701 + $0x1020] sm:%s2694]
                  %3220 = vst [vmem:[%s2702 + $0x408] sm:%s2694] %v3219
                  %v3221 = vld [vmem:[%s2701 + $0x1030] sm:%s2694]
                  %3222 = vst [vmem:[%s2702 + $0x40c] sm:%s2694] %v3221
                  %v3223 = vld [vmem:[%s2701 + $0x1040] sm:%s2694]
                  %3224 = vst [vmem:[%s2702 + $0x410] sm:%s2694] %v3223
                  %v3225 = vld [vmem:[%s2701 + $0x1050] sm:%s2694]
                  %3226 = vst [vmem:[%s2702 + $0x414] sm:%s2694] %v3225
                  %v3227 = vld [vmem:[%s2701 + $0x1060] sm:%s2694]
                  %3228 = vst [vmem:[%s2702 + $0x418] sm:%s2694] %v3227
                  %v3229 = vld [vmem:[%s2701 + $0x1070] sm:%s2694]
                  %3230 = vst [vmem:[%s2702 + $0x41c] sm:%s2694] %v3229
                  %v3231 = vld [vmem:[%s2701 + $0x1080] sm:%s2694]
                  %3232 = vst [vmem:[%s2702 + $0x420] sm:%s2694] %v3231
                  %v3233 = vld [vmem:[%s2701 + $0x1090] sm:%s2694]
                  %3234 = vst [vmem:[%s2702 + $0x424] sm:%s2694] %v3233
                  %v3235 = vld [vmem:[%s2701 + $0x10a0] sm:%s2694]
                  %3236 = vst [vmem:[%s2702 + $0x428] sm:%s2694] %v3235
                  %v3237 = vld [vmem:[%s2701 + $0x10b0] sm:%s2694]
                  %3238 = vst [vmem:[%s2702 + $0x42c] sm:%s2694] %v3237
                  %v3239 = vld [vmem:[%s2701 + $0x10c0] sm:%s2694]
                  %3240 = vst [vmem:[%s2702 + $0x430] sm:%s2694] %v3239
                  %v3241 = vld [vmem:[%s2701 + $0x10d0] sm:%s2694]
                  %3242 = vst [vmem:[%s2702 + $0x434] sm:%s2694] %v3241
                  %v3243 = vld [vmem:[%s2701 + $0x10e0] sm:%s2694]
                  %3244 = vst [vmem:[%s2702 + $0x438] sm:%s2694] %v3243
                  %v3245 = vld [vmem:[%s2701 + $0x10f0] sm:%s2694]
                  %3246 = vst [vmem:[%s2702 + $0x43c] sm:%s2694] %v3245
                  %v3247 = vld [vmem:[%s2701 + $0x1100] sm:%s2694]
                  %3248 = vst [vmem:[%s2702 + $0x440] sm:%s2694] %v3247
                  %v3249 = vld [vmem:[%s2701 + $0x1110] sm:%s2694]
                  %3250 = vst [vmem:[%s2702 + $0x444] sm:%s2694] %v3249
                  %v3251 = vld [vmem:[%s2701 + $0x1120] sm:%s2694]
                  %3252 = vst [vmem:[%s2702 + $0x448] sm:%s2694] %v3251
                  %v3253 = vld [vmem:[%s2701 + $0x1130] sm:%s2694]
                  %3254 = vst [vmem:[%s2702 + $0x44c] sm:%s2694] %v3253
                  %v3255 = vld [vmem:[%s2701 + $0x1140] sm:%s2694]
                  %3256 = vst [vmem:[%s2702 + $0x450] sm:%s2694] %v3255
                  %v3257 = vld [vmem:[%s2701 + $0x1150] sm:%s2694]
                  %3258 = vst [vmem:[%s2702 + $0x454] sm:%s2694] %v3257
                  %v3259 = vld [vmem:[%s2701 + $0x1160] sm:%s2694]
                  %3260 = vst [vmem:[%s2702 + $0x458] sm:%s2694] %v3259
                  %v3261 = vld [vmem:[%s2701 + $0x1170] sm:%s2694]
                  %3262 = vst [vmem:[%s2702 + $0x45c] sm:%s2694] %v3261
                  %v3263 = vld [vmem:[%s2701 + $0x1180] sm:%s2694]
                  %3264 = vst [vmem:[%s2702 + $0x460] sm:%s2694] %v3263
                  %v3265 = vld [vmem:[%s2701 + $0x1190] sm:%s2694]
                  %3266 = vst [vmem:[%s2702 + $0x464] sm:%s2694] %v3265
                  %v3267 = vld [vmem:[%s2701 + $0x11a0] sm:%s2694]
                  %3268 = vst [vmem:[%s2702 + $0x468] sm:%s2694] %v3267
                  %v3269 = vld [vmem:[%s2701 + $0x11b0] sm:%s2694]
                  %3270 = vst [vmem:[%s2702 + $0x46c] sm:%s2694] %v3269
                  %v3271 = vld [vmem:[%s2701 + $0x11c0] sm:%s2694]
                  %3272 = vst [vmem:[%s2702 + $0x470] sm:%s2694] %v3271
                  %v3273 = vld [vmem:[%s2701 + $0x11d0] sm:%s2694]
                  %3274 = vst [vmem:[%s2702 + $0x474] sm:%s2694] %v3273
                  %v3275 = vld [vmem:[%s2701 + $0x11e0] sm:%s2694]
                  %3276 = vst [vmem:[%s2702 + $0x478] sm:%s2694] %v3275
                  %v3277 = vld [vmem:[%s2701 + $0x11f0] sm:%s2694]
                  %3278 = vst [vmem:[%s2702 + $0x47c] sm:%s2694] %v3277
                  %v3279 = vld [vmem:[%s2701 + $0x1200] sm:%s2694]
                  %3280 = vst [vmem:[%s2702 + $0x480] sm:%s2694] %v3279
                  %v3281 = vld [vmem:[%s2701 + $0x1210] sm:%s2694]
                  %3282 = vst [vmem:[%s2702 + $0x484] sm:%s2694] %v3281
                  %v3283 = vld [vmem:[%s2701 + $0x1220] sm:%s2694]
                  %3284 = vst [vmem:[%s2702 + $0x488] sm:%s2694] %v3283
                  %v3285 = vld [vmem:[%s2701 + $0x1230] sm:%s2694]
                  %3286 = vst [vmem:[%s2702 + $0x48c] sm:%s2694] %v3285
                  %v3287 = vld [vmem:[%s2701 + $0x1240] sm:%s2694]
                  %3288 = vst [vmem:[%s2702 + $0x490] sm:%s2694] %v3287
                  %v3289 = vld [vmem:[%s2701 + $0x1250] sm:%s2694]
                  %3290 = vst [vmem:[%s2702 + $0x494] sm:%s2694] %v3289
                  %v3291 = vld [vmem:[%s2701 + $0x1260] sm:%s2694]
                  %3292 = vst [vmem:[%s2702 + $0x498] sm:%s2694] %v3291
                  %v3293 = vld [vmem:[%s2701 + $0x1270] sm:%s2694]
                  %3294 = vst [vmem:[%s2702 + $0x49c] sm:%s2694] %v3293
                  %v3295 = vld [vmem:[%s2701 + $0x1280] sm:%s2694]
                  %3296 = vst [vmem:[%s2702 + $0x4a0] sm:%s2694] %v3295
                  %v3297 = vld [vmem:[%s2701 + $0x1290] sm:%s2694]
                  %3298 = vst [vmem:[%s2702 + $0x4a4] sm:%s2694] %v3297
                  %v3299 = vld [vmem:[%s2701 + $0x12a0] sm:%s2694]
                  %3300 = vst [vmem:[%s2702 + $0x4a8] sm:%s2694] %v3299
                  %v3301 = vld [vmem:[%s2701 + $0x12b0] sm:%s2694]
                  %3302 = vst [vmem:[%s2702 + $0x4ac] sm:%s2694] %v3301
                  %v3303 = vld [vmem:[%s2701 + $0x12c0] sm:%s2694]
                  %3304 = vst [vmem:[%s2702 + $0x4b0] sm:%s2694] %v3303
                  %v3305 = vld [vmem:[%s2701 + $0x12d0] sm:%s2694]
                  %3306 = vst [vmem:[%s2702 + $0x4b4] sm:%s2694] %v3305
                  %v3307 = vld [vmem:[%s2701 + $0x12e0] sm:%s2694]
                  %3308 = vst [vmem:[%s2702 + $0x4b8] sm:%s2694] %v3307
                  %v3309 = vld [vmem:[%s2701 + $0x12f0] sm:%s2694]
                  %3310 = vst [vmem:[%s2702 + $0x4bc] sm:%s2694] %v3309
                  %v3311 = vld [vmem:[%s2701 + $0x1300] sm:%s2694]
                  %3312 = vst [vmem:[%s2702 + $0x4c0] sm:%s2694] %v3311
                  %v3313 = vld [vmem:[%s2701 + $0x1310] sm:%s2694]
                  %3314 = vst [vmem:[%s2702 + $0x4c4] sm:%s2694] %v3313
                  %v3315 = vld [vmem:[%s2701 + $0x1320] sm:%s2694]
                  %3316 = vst [vmem:[%s2702 + $0x4c8] sm:%s2694] %v3315
                  %v3317 = vld [vmem:[%s2701 + $0x1330] sm:%s2694]
                  %3318 = vst [vmem:[%s2702 + $0x4cc] sm:%s2694] %v3317
                  %v3319 = vld [vmem:[%s2701 + $0x1340] sm:%s2694]
                  %3320 = vst [vmem:[%s2702 + $0x4d0] sm:%s2694] %v3319
                  %v3321 = vld [vmem:[%s2701 + $0x1350] sm:%s2694]
                  %3322 = vst [vmem:[%s2702 + $0x4d4] sm:%s2694] %v3321
                  %v3323 = vld [vmem:[%s2701 + $0x1360] sm:%s2694]
                  %3324 = vst [vmem:[%s2702 + $0x4d8] sm:%s2694] %v3323
                  %v3325 = vld [vmem:[%s2701 + $0x1370] sm:%s2694]
                  %3326 = vst [vmem:[%s2702 + $0x4dc] sm:%s2694] %v3325
                  %v3327 = vld [vmem:[%s2701 + $0x1380] sm:%s2694]
                  %3328 = vst [vmem:[%s2702 + $0x4e0] sm:%s2694] %v3327
                  %v3329 = vld [vmem:[%s2701 + $0x1390] sm:%s2694]
                  %3330 = vst [vmem:[%s2702 + $0x4e4] sm:%s2694] %v3329
                  %v3331 = vld [vmem:[%s2701 + $0x13a0] sm:%s2694]
                  %3332 = vst [vmem:[%s2702 + $0x4e8] sm:%s2694] %v3331
                  %v3333 = vld [vmem:[%s2701 + $0x13b0] sm:%s2694]
                  %3334 = vst [vmem:[%s2702 + $0x4ec] sm:%s2694] %v3333
                  %v3335 = vld [vmem:[%s2701 + $0x13c0] sm:%s2694]
                  %3336 = vst [vmem:[%s2702 + $0x4f0] sm:%s2694] %v3335
                  %v3337 = vld [vmem:[%s2701 + $0x13d0] sm:%s2694]
                  %3338 = vst [vmem:[%s2702 + $0x4f4] sm:%s2694] %v3337
                  %v3339 = vld [vmem:[%s2701 + $0x13e0] sm:%s2694]
                  %3340 = vst [vmem:[%s2702 + $0x4f8] sm:%s2694] %v3339
                  %v3341 = vld [vmem:[%s2701 + $0x13f0] sm:%s2694]
                  %3342 = vst [vmem:[%s2702 + $0x4fc] sm:%s2694] %v3341
                  %v3343 = vld [vmem:[%s2701 + $0x1400] sm:%s2694]
                  %3344 = vst [vmem:[%s2702 + $0x500] sm:%s2694] %v3343
                  %v3345 = vld [vmem:[%s2701 + $0x1410] sm:%s2694]
                  %3346 = vst [vmem:[%s2702 + $0x504] sm:%s2694] %v3345
                  %v3347 = vld [vmem:[%s2701 + $0x1420] sm:%s2694]
                  %3348 = vst [vmem:[%s2702 + $0x508] sm:%s2694] %v3347
                  %v3349 = vld [vmem:[%s2701 + $0x1430] sm:%s2694]
                  %3350 = vst [vmem:[%s2702 + $0x50c] sm:%s2694] %v3349
                  %v3351 = vld [vmem:[%s2701 + $0x1440] sm:%s2694]
                  %3352 = vst [vmem:[%s2702 + $0x510] sm:%s2694] %v3351
                  %v3353 = vld [vmem:[%s2701 + $0x1450] sm:%s2694]
                  %3354 = vst [vmem:[%s2702 + $0x514] sm:%s2694] %v3353
                  %v3355 = vld [vmem:[%s2701 + $0x1460] sm:%s2694]
                  %3356 = vst [vmem:[%s2702 + $0x518] sm:%s2694] %v3355
                  %v3357 = vld [vmem:[%s2701 + $0x1470] sm:%s2694]
                  %3358 = vst [vmem:[%s2702 + $0x51c] sm:%s2694] %v3357
                  %v3359 = vld [vmem:[%s2701 + $0x1480] sm:%s2694]
                  %3360 = vst [vmem:[%s2702 + $0x520] sm:%s2694] %v3359
                  %v3361 = vld [vmem:[%s2701 + $0x1490] sm:%s2694]
                  %3362 = vst [vmem:[%s2702 + $0x524] sm:%s2694] %v3361
                  %v3363 = vld [vmem:[%s2701 + $0x14a0] sm:%s2694]
                  %3364 = vst [vmem:[%s2702 + $0x528] sm:%s2694] %v3363
                  %v3365 = vld [vmem:[%s2701 + $0x14b0] sm:%s2694]
                  %3366 = vst [vmem:[%s2702 + $0x52c] sm:%s2694] %v3365
                  %v3367 = vld [vmem:[%s2701 + $0x14c0] sm:%s2694]
                  %3368 = vst [vmem:[%s2702 + $0x530] sm:%s2694] %v3367
                  %v3369 = vld [vmem:[%s2701 + $0x14d0] sm:%s2694]
                  %3370 = vst [vmem:[%s2702 + $0x534] sm:%s2694] %v3369
                  %v3371 = vld [vmem:[%s2701 + $0x14e0] sm:%s2694]
                  %3372 = vst [vmem:[%s2702 + $0x538] sm:%s2694] %v3371
                  %v3373 = vld [vmem:[%s2701 + $0x14f0] sm:%s2694]
                  %3374 = vst [vmem:[%s2702 + $0x53c] sm:%s2694] %v3373
                  %v3375 = vld [vmem:[%s2701 + $0x1500] sm:%s2694]
                  %3376 = vst [vmem:[%s2702 + $0x540] sm:%s2694] %v3375
                  %v3377 = vld [vmem:[%s2701 + $0x1510] sm:%s2694]
                  %3378 = vst [vmem:[%s2702 + $0x544] sm:%s2694] %v3377
                  %v3379 = vld [vmem:[%s2701 + $0x1520] sm:%s2694]
                  %3380 = vst [vmem:[%s2702 + $0x548] sm:%s2694] %v3379
                  %v3381 = vld [vmem:[%s2701 + $0x1530] sm:%s2694]
                  %3382 = vst [vmem:[%s2702 + $0x54c] sm:%s2694] %v3381
                  %v3383 = vld [vmem:[%s2701 + $0x1540] sm:%s2694]
                  %3384 = vst [vmem:[%s2702 + $0x550] sm:%s2694] %v3383
                  %v3385 = vld [vmem:[%s2701 + $0x1550] sm:%s2694]
                  %3386 = vst [vmem:[%s2702 + $0x554] sm:%s2694] %v3385
                  %v3387 = vld [vmem:[%s2701 + $0x1560] sm:%s2694]
                  %3388 = vst [vmem:[%s2702 + $0x558] sm:%s2694] %v3387
                  %v3389 = vld [vmem:[%s2701 + $0x1570] sm:%s2694]
                  %3390 = vst [vmem:[%s2702 + $0x55c] sm:%s2694] %v3389
                  %v3391 = vld [vmem:[%s2701 + $0x1580] sm:%s2694]
                  %3392 = vst [vmem:[%s2702 + $0x560] sm:%s2694] %v3391
                  %v3393 = vld [vmem:[%s2701 + $0x1590] sm:%s2694]
                  %3394 = vst [vmem:[%s2702 + $0x564] sm:%s2694] %v3393
                  %v3395 = vld [vmem:[%s2701 + $0x15a0] sm:%s2694]
                  %3396 = vst [vmem:[%s2702 + $0x568] sm:%s2694] %v3395
                  %v3397 = vld [vmem:[%s2701 + $0x15b0] sm:%s2694]
                  %3398 = vst [vmem:[%s2702 + $0x56c] sm:%s2694] %v3397
                  %v3399 = vld [vmem:[%s2701 + $0x15c0] sm:%s2694]
                  %3400 = vst [vmem:[%s2702 + $0x570] sm:%s2694] %v3399
                  %v3401 = vld [vmem:[%s2701 + $0x15d0] sm:%s2694]
                  %3402 = vst [vmem:[%s2702 + $0x574] sm:%s2694] %v3401
                  %v3403 = vld [vmem:[%s2701 + $0x15e0] sm:%s2694]
                  %3404 = vst [vmem:[%s2702 + $0x578] sm:%s2694] %v3403
                  %v3405 = vld [vmem:[%s2701 + $0x15f0] sm:%s2694]
                  %3406 = vst [vmem:[%s2702 + $0x57c] sm:%s2694] %v3405
                  %v3407 = vld [vmem:[%s2701 + $0x1600] sm:%s2694]
                  %3408 = vst [vmem:[%s2702 + $0x580] sm:%s2694] %v3407
                  %v3409 = vld [vmem:[%s2701 + $0x1610] sm:%s2694]
                  %3410 = vst [vmem:[%s2702 + $0x584] sm:%s2694] %v3409
                  %v3411 = vld [vmem:[%s2701 + $0x1620] sm:%s2694]
                  %3412 = vst [vmem:[%s2702 + $0x588] sm:%s2694] %v3411
                  %v3413 = vld [vmem:[%s2701 + $0x1630] sm:%s2694]
                  %3414 = vst [vmem:[%s2702 + $0x58c] sm:%s2694] %v3413
                  %v3415 = vld [vmem:[%s2701 + $0x1640] sm:%s2694]
                  %3416 = vst [vmem:[%s2702 + $0x590] sm:%s2694] %v3415
                  %v3417 = vld [vmem:[%s2701 + $0x1650] sm:%s2694]
                  %3418 = vst [vmem:[%s2702 + $0x594] sm:%s2694] %v3417
                  %v3419 = vld [vmem:[%s2701 + $0x1660] sm:%s2694]
                  %3420 = vst [vmem:[%s2702 + $0x598] sm:%s2694] %v3419
                  %v3421 = vld [vmem:[%s2701 + $0x1670] sm:%s2694]
                  %3422 = vst [vmem:[%s2702 + $0x59c] sm:%s2694] %v3421
                  %v3423 = vld [vmem:[%s2701 + $0x1680] sm:%s2694]
                  %3424 = vst [vmem:[%s2702 + $0x5a0] sm:%s2694] %v3423
                  %v3425 = vld [vmem:[%s2701 + $0x1690] sm:%s2694]
                  %3426 = vst [vmem:[%s2702 + $0x5a4] sm:%s2694] %v3425
                  %v3427 = vld [vmem:[%s2701 + $0x16a0] sm:%s2694]
                  %3428 = vst [vmem:[%s2702 + $0x5a8] sm:%s2694] %v3427
                  %v3429 = vld [vmem:[%s2701 + $0x16b0] sm:%s2694]
                  %3430 = vst [vmem:[%s2702 + $0x5ac] sm:%s2694] %v3429
                  %v3431 = vld [vmem:[%s2701 + $0x16c0] sm:%s2694]
                  %3432 = vst [vmem:[%s2702 + $0x5b0] sm:%s2694] %v3431
                  %v3433 = vld [vmem:[%s2701 + $0x16d0] sm:%s2694]
                  %3434 = vst [vmem:[%s2702 + $0x5b4] sm:%s2694] %v3433
                  %v3435 = vld [vmem:[%s2701 + $0x16e0] sm:%s2694]
                  %3436 = vst [vmem:[%s2702 + $0x5b8] sm:%s2694] %v3435
                  %v3437 = vld [vmem:[%s2701 + $0x16f0] sm:%s2694]
                  %3438 = vst [vmem:[%s2702 + $0x5bc] sm:%s2694] %v3437
                  %v3439 = vld [vmem:[%s2701 + $0x1700] sm:%s2694]
                  %3440 = vst [vmem:[%s2702 + $0x5c0] sm:%s2694] %v3439
                  %v3441 = vld [vmem:[%s2701 + $0x1710] sm:%s2694]
                  %3442 = vst [vmem:[%s2702 + $0x5c4] sm:%s2694] %v3441
                  %v3443 = vld [vmem:[%s2701 + $0x1720] sm:%s2694]
                  %3444 = vst [vmem:[%s2702 + $0x5c8] sm:%s2694] %v3443
                  %v3445 = vld [vmem:[%s2701 + $0x1730] sm:%s2694]
                  %3446 = vst [vmem:[%s2702 + $0x5cc] sm:%s2694] %v3445
                  %v3447 = vld [vmem:[%s2701 + $0x1740] sm:%s2694]
                  %3448 = vst [vmem:[%s2702 + $0x5d0] sm:%s2694] %v3447
                  %v3449 = vld [vmem:[%s2701 + $0x1750] sm:%s2694]
                  %3450 = vst [vmem:[%s2702 + $0x5d4] sm:%s2694] %v3449
                  %v3451 = vld [vmem:[%s2701 + $0x1760] sm:%s2694]
                  %3452 = vst [vmem:[%s2702 + $0x5d8] sm:%s2694] %v3451
                  %v3453 = vld [vmem:[%s2701 + $0x1770] sm:%s2694]
                  %3454 = vst [vmem:[%s2702 + $0x5dc] sm:%s2694] %v3453
                  %v3455 = vld [vmem:[%s2701 + $0x1780] sm:%s2694]
                  %3456 = vst [vmem:[%s2702 + $0x5e0] sm:%s2694] %v3455
                  %v3457 = vld [vmem:[%s2701 + $0x1790] sm:%s2694]
                  %3458 = vst [vmem:[%s2702 + $0x5e4] sm:%s2694] %v3457
                  %v3459 = vld [vmem:[%s2701 + $0x17a0] sm:%s2694]
                  %3460 = vst [vmem:[%s2702 + $0x5e8] sm:%s2694] %v3459
                  %v3461 = vld [vmem:[%s2701 + $0x17b0] sm:%s2694]
                  %3462 = vst [vmem:[%s2702 + $0x5ec] sm:%s2694] %v3461
                  %v3463 = vld [vmem:[%s2701 + $0x17c0] sm:%s2694]
                  %3464 = vst [vmem:[%s2702 + $0x5f0] sm:%s2694] %v3463
                  %v3465 = vld [vmem:[%s2701 + $0x17d0] sm:%s2694]
                  %3466 = vst [vmem:[%s2702 + $0x5f4] sm:%s2694] %v3465
                  %v3467 = vld [vmem:[%s2701 + $0x17e0] sm:%s2694]
                  %3468 = vst [vmem:[%s2702 + $0x5f8] sm:%s2694] %v3467
                  %v3469 = vld [vmem:[%s2701 + $0x17f0] sm:%s2694]
                  %3470 = vst [vmem:[%s2702 + $0x5fc] sm:%s2694] %v3469
                  %v3471 = vld [vmem:[%s2701 + $0x1800] sm:%s2694]
                  %3472 = vst [vmem:[%s2702 + $0x600] sm:%s2694] %v3471
                  %v3473 = vld [vmem:[%s2701 + $0x1810] sm:%s2694]
                  %3474 = vst [vmem:[%s2702 + $0x604] sm:%s2694] %v3473
                  %v3475 = vld [vmem:[%s2701 + $0x1820] sm:%s2694]
                  %3476 = vst [vmem:[%s2702 + $0x608] sm:%s2694] %v3475
                  %v3477 = vld [vmem:[%s2701 + $0x1830] sm:%s2694]
                  %3478 = vst [vmem:[%s2702 + $0x60c] sm:%s2694] %v3477
                  %v3479 = vld [vmem:[%s2701 + $0x1840] sm:%s2694]
                  %3480 = vst [vmem:[%s2702 + $0x610] sm:%s2694] %v3479
                  %v3481 = vld [vmem:[%s2701 + $0x1850] sm:%s2694]
                  %3482 = vst [vmem:[%s2702 + $0x614] sm:%s2694] %v3481
                  %v3483 = vld [vmem:[%s2701 + $0x1860] sm:%s2694]
                  %3484 = vst [vmem:[%s2702 + $0x618] sm:%s2694] %v3483
                  %v3485 = vld [vmem:[%s2701 + $0x1870] sm:%s2694]
                  %3486 = vst [vmem:[%s2702 + $0x61c] sm:%s2694] %v3485
                $region86: #{nature_tqn_forward.7} parent=73 // loop_footer
                  %s2700 = sadd.s32 1, %s2696
                $region87: #{nature_tqn_forward.7} parent=73 // loop_footer_branch
                  %2695 = sbr.rel target = $region83
                $region88: #{nature_tqn_forward.7} parent=73 // loop_exit
                  _
              $region74: #{nature_tqn_forward.7} parent=47 // pred_fallthru
                _
            $region48: #{nature_tqn_forward.7} parent=43 // pred_fallthru
              _
            // Predicated region
            $region49: #{nature_tqn_forward.7} parent=43 // pred_check
              _
            $region50: #{nature_tqn_forward.7} parent=43 // pred_check_branch
              %294 = sbr.rel (0) target = $region52
            $region51: #{nature_tqn_forward.7} parent=43 // pred_region
              %s296 = ssub.s32 16, 1
              loop: start=0, step=1, limit=1
              $region53: #{nature_tqn_forward.7} parent=51 // loop_pre_header
                _
              $region54: #{nature_tqn_forward.7} parent=51 // loop_header
                %s298 = sphi 0, %s302
                %p299 = scmp.ge.s32.totalorder %s298, 1
                %s303 = sphi %s288, %s288
                %s304 = sphi %s286, %s286
              $region55: #{nature_tqn_forward.7} parent=51 // loop_header_branch
                %301 = sbr.rel (%p299) target = $region59
              $region56: #{nature_tqn_forward.7} parent=51 // loop_body
                %v305 = vld [vmem:[%s303] sm:%s296]
                %306 = vst [vmem:[%s304] sm:%s296] %v305
                %v307 = vld [vmem:[%s303 + $0x10] sm:%s296]
                %308 = vst [vmem:[%s304 + $0x4] sm:%s296] %v307
                %v309 = vld [vmem:[%s303 + $0x20] sm:%s296]
                %310 = vst [vmem:[%s304 + $0x8] sm:%s296] %v309
                %v311 = vld [vmem:[%s303 + $0x30] sm:%s296]
                %312 = vst [vmem:[%s304 + $0xc] sm:%s296] %v311
                %v313 = vld [vmem:[%s303 + $0x40] sm:%s296]
                %314 = vst [vmem:[%s304 + $0x10] sm:%s296] %v313
                %v315 = vld [vmem:[%s303 + $0x50] sm:%s296]
                %316 = vst [vmem:[%s304 + $0x14] sm:%s296] %v315
                %v317 = vld [vmem:[%s303 + $0x60] sm:%s296]
                %318 = vst [vmem:[%s304 + $0x18] sm:%s296] %v317
                %v319 = vld [vmem:[%s303 + $0x70] sm:%s296]
                %320 = vst [vmem:[%s304 + $0x1c] sm:%s296] %v319
                %v321 = vld [vmem:[%s303 + $0x80] sm:%s296]
                %322 = vst [vmem:[%s304 + $0x20] sm:%s296] %v321
                %v323 = vld [vmem:[%s303 + $0x90] sm:%s296]
                %324 = vst [vmem:[%s304 + $0x24] sm:%s296] %v323
                %v325 = vld [vmem:[%s303 + $0xa0] sm:%s296]
                %326 = vst [vmem:[%s304 + $0x28] sm:%s296] %v325
                %v327 = vld [vmem:[%s303 + $0xb0] sm:%s296]
                %328 = vst [vmem:[%s304 + $0x2c] sm:%s296] %v327
                %v329 = vld [vmem:[%s303 + $0xc0] sm:%s296]
                %330 = vst [vmem:[%s304 + $0x30] sm:%s296] %v329
                %v331 = vld [vmem:[%s303 + $0xd0] sm:%s296]
                %332 = vst [vmem:[%s304 + $0x34] sm:%s296] %v331
                %v333 = vld [vmem:[%s303 + $0xe0] sm:%s296]
                %334 = vst [vmem:[%s304 + $0x38] sm:%s296] %v333
                %v335 = vld [vmem:[%s303 + $0xf0] sm:%s296]
                %336 = vst [vmem:[%s304 + $0x3c] sm:%s296] %v335
                %v337 = vld [vmem:[%s303 + $0x100] sm:%s296]
                %338 = vst [vmem:[%s304 + $0x40] sm:%s296] %v337
                %v339 = vld [vmem:[%s303 + $0x110] sm:%s296]
                %340 = vst [vmem:[%s304 + $0x44] sm:%s296] %v339
                %v341 = vld [vmem:[%s303 + $0x120] sm:%s296]
                %342 = vst [vmem:[%s304 + $0x48] sm:%s296] %v341
                %v343 = vld [vmem:[%s303 + $0x130] sm:%s296]
                %344 = vst [vmem:[%s304 + $0x4c] sm:%s296] %v343
                %v345 = vld [vmem:[%s303 + $0x140] sm:%s296]
                %346 = vst [vmem:[%s304 + $0x50] sm:%s296] %v345
                %v347 = vld [vmem:[%s303 + $0x150] sm:%s296]
                %348 = vst [vmem:[%s304 + $0x54] sm:%s296] %v347
                %v349 = vld [vmem:[%s303 + $0x160] sm:%s296]
                %350 = vst [vmem:[%s304 + $0x58] sm:%s296] %v349
                %v351 = vld [vmem:[%s303 + $0x170] sm:%s296]
                %352 = vst [vmem:[%s304 + $0x5c] sm:%s296] %v351
                %v353 = vld [vmem:[%s303 + $0x180] sm:%s296]
                %354 = vst [vmem:[%s304 + $0x60] sm:%s296] %v353
                %v355 = vld [vmem:[%s303 + $0x190] sm:%s296]
                %356 = vst [vmem:[%s304 + $0x64] sm:%s296] %v355
                %v357 = vld [vmem:[%s303 + $0x1a0] sm:%s296]
                %358 = vst [vmem:[%s304 + $0x68] sm:%s296] %v357
                %v359 = vld [vmem:[%s303 + $0x1b0] sm:%s296]
                %360 = vst [vmem:[%s304 + $0x6c] sm:%s296] %v359
                %v361 = vld [vmem:[%s303 + $0x1c0] sm:%s296]
                %362 = vst [vmem:[%s304 + $0x70] sm:%s296] %v361
                %v363 = vld [vmem:[%s303 + $0x1d0] sm:%s296]
                %364 = vst [vmem:[%s304 + $0x74] sm:%s296] %v363
                %v365 = vld [vmem:[%s303 + $0x1e0] sm:%s296]
                %366 = vst [vmem:[%s304 + $0x78] sm:%s296] %v365
                %v367 = vld [vmem:[%s303 + $0x1f0] sm:%s296]
                %368 = vst [vmem:[%s304 + $0x7c] sm:%s296] %v367
                %v369 = vld [vmem:[%s303 + $0x200] sm:%s296]
                %370 = vst [vmem:[%s304 + $0x80] sm:%s296] %v369
                %v371 = vld [vmem:[%s303 + $0x210] sm:%s296]
                %372 = vst [vmem:[%s304 + $0x84] sm:%s296] %v371
                %v373 = vld [vmem:[%s303 + $0x220] sm:%s296]
                %374 = vst [vmem:[%s304 + $0x88] sm:%s296] %v373
                %v375 = vld [vmem:[%s303 + $0x230] sm:%s296]
                %376 = vst [vmem:[%s304 + $0x8c] sm:%s296] %v375
                %v377 = vld [vmem:[%s303 + $0x240] sm:%s296]
                %378 = vst [vmem:[%s304 + $0x90] sm:%s296] %v377
                %v379 = vld [vmem:[%s303 + $0x250] sm:%s296]
                %380 = vst [vmem:[%s304 + $0x94] sm:%s296] %v379
                %v381 = vld [vmem:[%s303 + $0x260] sm:%s296]
                %382 = vst [vmem:[%s304 + $0x98] sm:%s296] %v381
                %v383 = vld [vmem:[%s303 + $0x270] sm:%s296]
                %384 = vst [vmem:[%s304 + $0x9c] sm:%s296] %v383
                %v385 = vld [vmem:[%s303 + $0x280] sm:%s296]
                %386 = vst [vmem:[%s304 + $0xa0] sm:%s296] %v385
                %v387 = vld [vmem:[%s303 + $0x290] sm:%s296]
                %388 = vst [vmem:[%s304 + $0xa4] sm:%s296] %v387
                %v389 = vld [vmem:[%s303 + $0x2a0] sm:%s296]
                %390 = vst [vmem:[%s304 + $0xa8] sm:%s296] %v389
                %v391 = vld [vmem:[%s303 + $0x2b0] sm:%s296]
                %392 = vst [vmem:[%s304 + $0xac] sm:%s296] %v391
                %v393 = vld [vmem:[%s303 + $0x2c0] sm:%s296]
                %394 = vst [vmem:[%s304 + $0xb0] sm:%s296] %v393
                %v395 = vld [vmem:[%s303 + $0x2d0] sm:%s296]
                %396 = vst [vmem:[%s304 + $0xb4] sm:%s296] %v395
                %v397 = vld [vmem:[%s303 + $0x2e0] sm:%s296]
                %398 = vst [vmem:[%s304 + $0xb8] sm:%s296] %v397
                %v399 = vld [vmem:[%s303 + $0x2f0] sm:%s296]
                %400 = vst [vmem:[%s304 + $0xbc] sm:%s296] %v399
                %v401 = vld [vmem:[%s303 + $0x300] sm:%s296]
                %402 = vst [vmem:[%s304 + $0xc0] sm:%s296] %v401
                %v403 = vld [vmem:[%s303 + $0x310] sm:%s296]
                %404 = vst [vmem:[%s304 + $0xc4] sm:%s296] %v403
                %v405 = vld [vmem:[%s303 + $0x320] sm:%s296]
                %406 = vst [vmem:[%s304 + $0xc8] sm:%s296] %v405
                %v407 = vld [vmem:[%s303 + $0x330] sm:%s296]
                %408 = vst [vmem:[%s304 + $0xcc] sm:%s296] %v407
                %v409 = vld [vmem:[%s303 + $0x340] sm:%s296]
                %410 = vst [vmem:[%s304 + $0xd0] sm:%s296] %v409
                %v411 = vld [vmem:[%s303 + $0x350] sm:%s296]
                %412 = vst [vmem:[%s304 + $0xd4] sm:%s296] %v411
                %v413 = vld [vmem:[%s303 + $0x360] sm:%s296]
                %414 = vst [vmem:[%s304 + $0xd8] sm:%s296] %v413
                %v415 = vld [vmem:[%s303 + $0x370] sm:%s296]
                %416 = vst [vmem:[%s304 + $0xdc] sm:%s296] %v415
                %v417 = vld [vmem:[%s303 + $0x380] sm:%s296]
                %418 = vst [vmem:[%s304 + $0xe0] sm:%s296] %v417
                %v419 = vld [vmem:[%s303 + $0x390] sm:%s296]
                %420 = vst [vmem:[%s304 + $0xe4] sm:%s296] %v419
                %v421 = vld [vmem:[%s303 + $0x3a0] sm:%s296]
                %422 = vst [vmem:[%s304 + $0xe8] sm:%s296] %v421
                %v423 = vld [vmem:[%s303 + $0x3b0] sm:%s296]
                %424 = vst [vmem:[%s304 + $0xec] sm:%s296] %v423
                %v425 = vld [vmem:[%s303 + $0x3c0] sm:%s296]
                %426 = vst [vmem:[%s304 + $0xf0] sm:%s296] %v425
                %v427 = vld [vmem:[%s303 + $0x3d0] sm:%s296]
                %428 = vst [vmem:[%s304 + $0xf4] sm:%s296] %v427
                %v429 = vld [vmem:[%s303 + $0x3e0] sm:%s296]
                %430 = vst [vmem:[%s304 + $0xf8] sm:%s296] %v429
                %v431 = vld [vmem:[%s303 + $0x3f0] sm:%s296]
                %432 = vst [vmem:[%s304 + $0xfc] sm:%s296] %v431
                %v433 = vld [vmem:[%s303 + $0x400] sm:%s296]
                %434 = vst [vmem:[%s304 + $0x100] sm:%s296] %v433
                %v435 = vld [vmem:[%s303 + $0x410] sm:%s296]
                %436 = vst [vmem:[%s304 + $0x104] sm:%s296] %v435
                %v437 = vld [vmem:[%s303 + $0x420] sm:%s296]
                %438 = vst [vmem:[%s304 + $0x108] sm:%s296] %v437
                %v439 = vld [vmem:[%s303 + $0x430] sm:%s296]
                %440 = vst [vmem:[%s304 + $0x10c] sm:%s296] %v439
                %v441 = vld [vmem:[%s303 + $0x440] sm:%s296]
                %442 = vst [vmem:[%s304 + $0x110] sm:%s296] %v441
                %v443 = vld [vmem:[%s303 + $0x450] sm:%s296]
                %444 = vst [vmem:[%s304 + $0x114] sm:%s296] %v443
                %v445 = vld [vmem:[%s303 + $0x460] sm:%s296]
                %446 = vst [vmem:[%s304 + $0x118] sm:%s296] %v445
                %v447 = vld [vmem:[%s303 + $0x470] sm:%s296]
                %448 = vst [vmem:[%s304 + $0x11c] sm:%s296] %v447
                %v449 = vld [vmem:[%s303 + $0x480] sm:%s296]
                %450 = vst [vmem:[%s304 + $0x120] sm:%s296] %v449
                %v451 = vld [vmem:[%s303 + $0x490] sm:%s296]
                %452 = vst [vmem:[%s304 + $0x124] sm:%s296] %v451
                %v453 = vld [vmem:[%s303 + $0x4a0] sm:%s296]
                %454 = vst [vmem:[%s304 + $0x128] sm:%s296] %v453
                %v455 = vld [vmem:[%s303 + $0x4b0] sm:%s296]
                %456 = vst [vmem:[%s304 + $0x12c] sm:%s296] %v455
                %v457 = vld [vmem:[%s303 + $0x4c0] sm:%s296]
                %458 = vst [vmem:[%s304 + $0x130] sm:%s296] %v457
                %v459 = vld [vmem:[%s303 + $0x4d0] sm:%s296]
                %460 = vst [vmem:[%s304 + $0x134] sm:%s296] %v459
                %v461 = vld [vmem:[%s303 + $0x4e0] sm:%s296]
                %462 = vst [vmem:[%s304 + $0x138] sm:%s296] %v461
                %v463 = vld [vmem:[%s303 + $0x4f0] sm:%s296]
                %464 = vst [vmem:[%s304 + $0x13c] sm:%s296] %v463
                %v465 = vld [vmem:[%s303 + $0x500] sm:%s296]
                %466 = vst [vmem:[%s304 + $0x140] sm:%s296] %v465
                %v467 = vld [vmem:[%s303 + $0x510] sm:%s296]
                %468 = vst [vmem:[%s304 + $0x144] sm:%s296] %v467
                %v469 = vld [vmem:[%s303 + $0x520] sm:%s296]
                %470 = vst [vmem:[%s304 + $0x148] sm:%s296] %v469
                %v471 = vld [vmem:[%s303 + $0x530] sm:%s296]
                %472 = vst [vmem:[%s304 + $0x14c] sm:%s296] %v471
                %v473 = vld [vmem:[%s303 + $0x540] sm:%s296]
                %474 = vst [vmem:[%s304 + $0x150] sm:%s296] %v473
                %v475 = vld [vmem:[%s303 + $0x550] sm:%s296]
                %476 = vst [vmem:[%s304 + $0x154] sm:%s296] %v475
                %v477 = vld [vmem:[%s303 + $0x560] sm:%s296]
                %478 = vst [vmem:[%s304 + $0x158] sm:%s296] %v477
                %v479 = vld [vmem:[%s303 + $0x570] sm:%s296]
                %480 = vst [vmem:[%s304 + $0x15c] sm:%s296] %v479
                %v481 = vld [vmem:[%s303 + $0x580] sm:%s296]
                %482 = vst [vmem:[%s304 + $0x160] sm:%s296] %v481
                %v483 = vld [vmem:[%s303 + $0x590] sm:%s296]
                %484 = vst [vmem:[%s304 + $0x164] sm:%s296] %v483
                %v485 = vld [vmem:[%s303 + $0x5a0] sm:%s296]
                %486 = vst [vmem:[%s304 + $0x168] sm:%s296] %v485
                %v487 = vld [vmem:[%s303 + $0x5b0] sm:%s296]
                %488 = vst [vmem:[%s304 + $0x16c] sm:%s296] %v487
                %v489 = vld [vmem:[%s303 + $0x5c0] sm:%s296]
                %490 = vst [vmem:[%s304 + $0x170] sm:%s296] %v489
                %v491 = vld [vmem:[%s303 + $0x5d0] sm:%s296]
                %492 = vst [vmem:[%s304 + $0x174] sm:%s296] %v491
                %v493 = vld [vmem:[%s303 + $0x5e0] sm:%s296]
                %494 = vst [vmem:[%s304 + $0x178] sm:%s296] %v493
                %v495 = vld [vmem:[%s303 + $0x5f0] sm:%s296]
                %496 = vst [vmem:[%s304 + $0x17c] sm:%s296] %v495
                %v497 = vld [vmem:[%s303 + $0x600] sm:%s296]
                %498 = vst [vmem:[%s304 + $0x180] sm:%s296] %v497
                %v499 = vld [vmem:[%s303 + $0x610] sm:%s296]
                %500 = vst [vmem:[%s304 + $0x184] sm:%s296] %v499
                %v501 = vld [vmem:[%s303 + $0x620] sm:%s296]
                %502 = vst [vmem:[%s304 + $0x188] sm:%s296] %v501
                %v503 = vld [vmem:[%s303 + $0x630] sm:%s296]
                %504 = vst [vmem:[%s304 + $0x18c] sm:%s296] %v503
                %v505 = vld [vmem:[%s303 + $0x640] sm:%s296]
                %506 = vst [vmem:[%s304 + $0x190] sm:%s296] %v505
                %v507 = vld [vmem:[%s303 + $0x650] sm:%s296]
                %508 = vst [vmem:[%s304 + $0x194] sm:%s296] %v507
                %v509 = vld [vmem:[%s303 + $0x660] sm:%s296]
                %510 = vst [vmem:[%s304 + $0x198] sm:%s296] %v509
                %v511 = vld [vmem:[%s303 + $0x670] sm:%s296]
                %512 = vst [vmem:[%s304 + $0x19c] sm:%s296] %v511
                %v513 = vld [vmem:[%s303 + $0x680] sm:%s296]
                %514 = vst [vmem:[%s304 + $0x1a0] sm:%s296] %v513
                %v515 = vld [vmem:[%s303 + $0x690] sm:%s296]
                %516 = vst [vmem:[%s304 + $0x1a4] sm:%s296] %v515
                %v517 = vld [vmem:[%s303 + $0x6a0] sm:%s296]
                %518 = vst [vmem:[%s304 + $0x1a8] sm:%s296] %v517
                %v519 = vld [vmem:[%s303 + $0x6b0] sm:%s296]
                %520 = vst [vmem:[%s304 + $0x1ac] sm:%s296] %v519
                %v521 = vld [vmem:[%s303 + $0x6c0] sm:%s296]
                %522 = vst [vmem:[%s304 + $0x1b0] sm:%s296] %v521
                %v523 = vld [vmem:[%s303 + $0x6d0] sm:%s296]
                %524 = vst [vmem:[%s304 + $0x1b4] sm:%s296] %v523
                %v525 = vld [vmem:[%s303 + $0x6e0] sm:%s296]
                %526 = vst [vmem:[%s304 + $0x1b8] sm:%s296] %v525
                %v527 = vld [vmem:[%s303 + $0x6f0] sm:%s296]
                %528 = vst [vmem:[%s304 + $0x1bc] sm:%s296] %v527
                %v529 = vld [vmem:[%s303 + $0x700] sm:%s296]
                %530 = vst [vmem:[%s304 + $0x1c0] sm:%s296] %v529
                %v531 = vld [vmem:[%s303 + $0x710] sm:%s296]
                %532 = vst [vmem:[%s304 + $0x1c4] sm:%s296] %v531
                %v533 = vld [vmem:[%s303 + $0x720] sm:%s296]
                %534 = vst [vmem:[%s304 + $0x1c8] sm:%s296] %v533
                %v535 = vld [vmem:[%s303 + $0x730] sm:%s296]
                %536 = vst [vmem:[%s304 + $0x1cc] sm:%s296] %v535
                %v537 = vld [vmem:[%s303 + $0x740] sm:%s296]
                %538 = vst [vmem:[%s304 + $0x1d0] sm:%s296] %v537
                %v539 = vld [vmem:[%s303 + $0x750] sm:%s296]
                %540 = vst [vmem:[%s304 + $0x1d4] sm:%s296] %v539
                %v541 = vld [vmem:[%s303 + $0x760] sm:%s296]
                %542 = vst [vmem:[%s304 + $0x1d8] sm:%s296] %v541
                %v543 = vld [vmem:[%s303 + $0x770] sm:%s296]
                %544 = vst [vmem:[%s304 + $0x1dc] sm:%s296] %v543
                %v545 = vld [vmem:[%s303 + $0x780] sm:%s296]
                %546 = vst [vmem:[%s304 + $0x1e0] sm:%s296] %v545
                %v547 = vld [vmem:[%s303 + $0x790] sm:%s296]
                %548 = vst [vmem:[%s304 + $0x1e4] sm:%s296] %v547
                %v549 = vld [vmem:[%s303 + $0x7a0] sm:%s296]
                %550 = vst [vmem:[%s304 + $0x1e8] sm:%s296] %v549
                %v551 = vld [vmem:[%s303 + $0x7b0] sm:%s296]
                %552 = vst [vmem:[%s304 + $0x1ec] sm:%s296] %v551
                %v553 = vld [vmem:[%s303 + $0x7c0] sm:%s296]
                %554 = vst [vmem:[%s304 + $0x1f0] sm:%s296] %v553
                %v555 = vld [vmem:[%s303 + $0x7d0] sm:%s296]
                %556 = vst [vmem:[%s304 + $0x1f4] sm:%s296] %v555
                %v557 = vld [vmem:[%s303 + $0x7e0] sm:%s296]
                %558 = vst [vmem:[%s304 + $0x1f8] sm:%s296] %v557
                %v559 = vld [vmem:[%s303 + $0x7f0] sm:%s296]
                %560 = vst [vmem:[%s304 + $0x1fc] sm:%s296] %v559
                %v561 = vld [vmem:[%s303 + $0x800] sm:%s296]
                %562 = vst [vmem:[%s304 + $0x200] sm:%s296] %v561
                %v563 = vld [vmem:[%s303 + $0x810] sm:%s296]
                %564 = vst [vmem:[%s304 + $0x204] sm:%s296] %v563
                %v565 = vld [vmem:[%s303 + $0x820] sm:%s296]
                %566 = vst [vmem:[%s304 + $0x208] sm:%s296] %v565
                %v567 = vld [vmem:[%s303 + $0x830] sm:%s296]
                %568 = vst [vmem:[%s304 + $0x20c] sm:%s296] %v567
                %v569 = vld [vmem:[%s303 + $0x840] sm:%s296]
                %570 = vst [vmem:[%s304 + $0x210] sm:%s296] %v569
                %v571 = vld [vmem:[%s303 + $0x850] sm:%s296]
                %572 = vst [vmem:[%s304 + $0x214] sm:%s296] %v571
                %v573 = vld [vmem:[%s303 + $0x860] sm:%s296]
                %574 = vst [vmem:[%s304 + $0x218] sm:%s296] %v573
                %v575 = vld [vmem:[%s303 + $0x870] sm:%s296]
                %576 = vst [vmem:[%s304 + $0x21c] sm:%s296] %v575
                %v577 = vld [vmem:[%s303 + $0x880] sm:%s296]
                %578 = vst [vmem:[%s304 + $0x220] sm:%s296] %v577
                %v579 = vld [vmem:[%s303 + $0x890] sm:%s296]
                %580 = vst [vmem:[%s304 + $0x224] sm:%s296] %v579
                %v581 = vld [vmem:[%s303 + $0x8a0] sm:%s296]
                %582 = vst [vmem:[%s304 + $0x228] sm:%s296] %v581
                %v583 = vld [vmem:[%s303 + $0x8b0] sm:%s296]
                %584 = vst [vmem:[%s304 + $0x22c] sm:%s296] %v583
                %v585 = vld [vmem:[%s303 + $0x8c0] sm:%s296]
                %586 = vst [vmem:[%s304 + $0x230] sm:%s296] %v585
                %v587 = vld [vmem:[%s303 + $0x8d0] sm:%s296]
                %588 = vst [vmem:[%s304 + $0x234] sm:%s296] %v587
                %v589 = vld [vmem:[%s303 + $0x8e0] sm:%s296]
                %590 = vst [vmem:[%s304 + $0x238] sm:%s296] %v589
                %v591 = vld [vmem:[%s303 + $0x8f0] sm:%s296]
                %592 = vst [vmem:[%s304 + $0x23c] sm:%s296] %v591
                %v593 = vld [vmem:[%s303 + $0x900] sm:%s296]
                %594 = vst [vmem:[%s304 + $0x240] sm:%s296] %v593
                %v595 = vld [vmem:[%s303 + $0x910] sm:%s296]
                %596 = vst [vmem:[%s304 + $0x244] sm:%s296] %v595
                %v597 = vld [vmem:[%s303 + $0x920] sm:%s296]
                %598 = vst [vmem:[%s304 + $0x248] sm:%s296] %v597
                %v599 = vld [vmem:[%s303 + $0x930] sm:%s296]
                %600 = vst [vmem:[%s304 + $0x24c] sm:%s296] %v599
                %v601 = vld [vmem:[%s303 + $0x940] sm:%s296]
                %602 = vst [vmem:[%s304 + $0x250] sm:%s296] %v601
                %v603 = vld [vmem:[%s303 + $0x950] sm:%s296]
                %604 = vst [vmem:[%s304 + $0x254] sm:%s296] %v603
                %v605 = vld [vmem:[%s303 + $0x960] sm:%s296]
                %606 = vst [vmem:[%s304 + $0x258] sm:%s296] %v605
                %v607 = vld [vmem:[%s303 + $0x970] sm:%s296]
                %608 = vst [vmem:[%s304 + $0x25c] sm:%s296] %v607
                %v609 = vld [vmem:[%s303 + $0x980] sm:%s296]
                %610 = vst [vmem:[%s304 + $0x260] sm:%s296] %v609
                %v611 = vld [vmem:[%s303 + $0x990] sm:%s296]
                %612 = vst [vmem:[%s304 + $0x264] sm:%s296] %v611
                %v613 = vld [vmem:[%s303 + $0x9a0] sm:%s296]
                %614 = vst [vmem:[%s304 + $0x268] sm:%s296] %v613
                %v615 = vld [vmem:[%s303 + $0x9b0] sm:%s296]
                %616 = vst [vmem:[%s304 + $0x26c] sm:%s296] %v615
                %v617 = vld [vmem:[%s303 + $0x9c0] sm:%s296]
                %618 = vst [vmem:[%s304 + $0x270] sm:%s296] %v617
                %v619 = vld [vmem:[%s303 + $0x9d0] sm:%s296]
                %620 = vst [vmem:[%s304 + $0x274] sm:%s296] %v619
                %v621 = vld [vmem:[%s303 + $0x9e0] sm:%s296]
                %622 = vst [vmem:[%s304 + $0x278] sm:%s296] %v621
                %v623 = vld [vmem:[%s303 + $0x9f0] sm:%s296]
                %624 = vst [vmem:[%s304 + $0x27c] sm:%s296] %v623
                %v625 = vld [vmem:[%s303 + $0xa00] sm:%s296]
                %626 = vst [vmem:[%s304 + $0x280] sm:%s296] %v625
                %v627 = vld [vmem:[%s303 + $0xa10] sm:%s296]
                %628 = vst [vmem:[%s304 + $0x284] sm:%s296] %v627
                %v629 = vld [vmem:[%s303 + $0xa20] sm:%s296]
                %630 = vst [vmem:[%s304 + $0x288] sm:%s296] %v629
                %v631 = vld [vmem:[%s303 + $0xa30] sm:%s296]
                %632 = vst [vmem:[%s304 + $0x28c] sm:%s296] %v631
                %v633 = vld [vmem:[%s303 + $0xa40] sm:%s296]
                %634 = vst [vmem:[%s304 + $0x290] sm:%s296] %v633
                %v635 = vld [vmem:[%s303 + $0xa50] sm:%s296]
                %636 = vst [vmem:[%s304 + $0x294] sm:%s296] %v635
                %v637 = vld [vmem:[%s303 + $0xa60] sm:%s296]
                %638 = vst [vmem:[%s304 + $0x298] sm:%s296] %v637
                %v639 = vld [vmem:[%s303 + $0xa70] sm:%s296]
                %640 = vst [vmem:[%s304 + $0x29c] sm:%s296] %v639
                %v641 = vld [vmem:[%s303 + $0xa80] sm:%s296]
                %642 = vst [vmem:[%s304 + $0x2a0] sm:%s296] %v641
                %v643 = vld [vmem:[%s303 + $0xa90] sm:%s296]
                %644 = vst [vmem:[%s304 + $0x2a4] sm:%s296] %v643
                %v645 = vld [vmem:[%s303 + $0xaa0] sm:%s296]
                %646 = vst [vmem:[%s304 + $0x2a8] sm:%s296] %v645
                %v647 = vld [vmem:[%s303 + $0xab0] sm:%s296]
                %648 = vst [vmem:[%s304 + $0x2ac] sm:%s296] %v647
                %v649 = vld [vmem:[%s303 + $0xac0] sm:%s296]
                %650 = vst [vmem:[%s304 + $0x2b0] sm:%s296] %v649
                %v651 = vld [vmem:[%s303 + $0xad0] sm:%s296]
                %652 = vst [vmem:[%s304 + $0x2b4] sm:%s296] %v651
                %v653 = vld [vmem:[%s303 + $0xae0] sm:%s296]
                %654 = vst [vmem:[%s304 + $0x2b8] sm:%s296] %v653
                %v655 = vld [vmem:[%s303 + $0xaf0] sm:%s296]
                %656 = vst [vmem:[%s304 + $0x2bc] sm:%s296] %v655
                %v657 = vld [vmem:[%s303 + $0xb00] sm:%s296]
                %658 = vst [vmem:[%s304 + $0x2c0] sm:%s296] %v657
                %v659 = vld [vmem:[%s303 + $0xb10] sm:%s296]
                %660 = vst [vmem:[%s304 + $0x2c4] sm:%s296] %v659
                %v661 = vld [vmem:[%s303 + $0xb20] sm:%s296]
                %662 = vst [vmem:[%s304 + $0x2c8] sm:%s296] %v661
                %v663 = vld [vmem:[%s303 + $0xb30] sm:%s296]
                %664 = vst [vmem:[%s304 + $0x2cc] sm:%s296] %v663
                %v665 = vld [vmem:[%s303 + $0xb40] sm:%s296]
                %666 = vst [vmem:[%s304 + $0x2d0] sm:%s296] %v665
                %v667 = vld [vmem:[%s303 + $0xb50] sm:%s296]
                %668 = vst [vmem:[%s304 + $0x2d4] sm:%s296] %v667
                %v669 = vld [vmem:[%s303 + $0xb60] sm:%s296]
                %670 = vst [vmem:[%s304 + $0x2d8] sm:%s296] %v669
                %v671 = vld [vmem:[%s303 + $0xb70] sm:%s296]
                %672 = vst [vmem:[%s304 + $0x2dc] sm:%s296] %v671
                %v673 = vld [vmem:[%s303 + $0xb80] sm:%s296]
                %674 = vst [vmem:[%s304 + $0x2e0] sm:%s296] %v673
                %v675 = vld [vmem:[%s303 + $0xb90] sm:%s296]
                %676 = vst [vmem:[%s304 + $0x2e4] sm:%s296] %v675
                %v677 = vld [vmem:[%s303 + $0xba0] sm:%s296]
                %678 = vst [vmem:[%s304 + $0x2e8] sm:%s296] %v677
                %v679 = vld [vmem:[%s303 + $0xbb0] sm:%s296]
                %680 = vst [vmem:[%s304 + $0x2ec] sm:%s296] %v679
                %v681 = vld [vmem:[%s303 + $0xbc0] sm:%s296]
                %682 = vst [vmem:[%s304 + $0x2f0] sm:%s296] %v681
                %v683 = vld [vmem:[%s303 + $0xbd0] sm:%s296]
                %684 = vst [vmem:[%s304 + $0x2f4] sm:%s296] %v683
                %v685 = vld [vmem:[%s303 + $0xbe0] sm:%s296]
                %686 = vst [vmem:[%s304 + $0x2f8] sm:%s296] %v685
                %v687 = vld [vmem:[%s303 + $0xbf0] sm:%s296]
                %688 = vst [vmem:[%s304 + $0x2fc] sm:%s296] %v687
                %v689 = vld [vmem:[%s303 + $0xc00] sm:%s296]
                %690 = vst [vmem:[%s304 + $0x300] sm:%s296] %v689
                %v691 = vld [vmem:[%s303 + $0xc10] sm:%s296]
                %692 = vst [vmem:[%s304 + $0x304] sm:%s296] %v691
                %v693 = vld [vmem:[%s303 + $0xc20] sm:%s296]
                %694 = vst [vmem:[%s304 + $0x308] sm:%s296] %v693
                %v695 = vld [vmem:[%s303 + $0xc30] sm:%s296]
                %696 = vst [vmem:[%s304 + $0x30c] sm:%s296] %v695
                %v697 = vld [vmem:[%s303 + $0xc40] sm:%s296]
                %698 = vst [vmem:[%s304 + $0x310] sm:%s296] %v697
                %v699 = vld [vmem:[%s303 + $0xc50] sm:%s296]
                %700 = vst [vmem:[%s304 + $0x314] sm:%s296] %v699
                %v701 = vld [vmem:[%s303 + $0xc60] sm:%s296]
                %702 = vst [vmem:[%s304 + $0x318] sm:%s296] %v701
                %v703 = vld [vmem:[%s303 + $0xc70] sm:%s296]
                %704 = vst [vmem:[%s304 + $0x31c] sm:%s296] %v703
                %v705 = vld [vmem:[%s303 + $0xc80] sm:%s296]
                %706 = vst [vmem:[%s304 + $0x320] sm:%s296] %v705
                %v707 = vld [vmem:[%s303 + $0xc90] sm:%s296]
                %708 = vst [vmem:[%s304 + $0x324] sm:%s296] %v707
                %v709 = vld [vmem:[%s303 + $0xca0] sm:%s296]
                %710 = vst [vmem:[%s304 + $0x328] sm:%s296] %v709
                %v711 = vld [vmem:[%s303 + $0xcb0] sm:%s296]
                %712 = vst [vmem:[%s304 + $0x32c] sm:%s296] %v711
                %v713 = vld [vmem:[%s303 + $0xcc0] sm:%s296]
                %714 = vst [vmem:[%s304 + $0x330] sm:%s296] %v713
                %v715 = vld [vmem:[%s303 + $0xcd0] sm:%s296]
                %716 = vst [vmem:[%s304 + $0x334] sm:%s296] %v715
                %v717 = vld [vmem:[%s303 + $0xce0] sm:%s296]
                %718 = vst [vmem:[%s304 + $0x338] sm:%s296] %v717
                %v719 = vld [vmem:[%s303 + $0xcf0] sm:%s296]
                %720 = vst [vmem:[%s304 + $0x33c] sm:%s296] %v719
                %v721 = vld [vmem:[%s303 + $0xd00] sm:%s296]
                %722 = vst [vmem:[%s304 + $0x340] sm:%s296] %v721
                %v723 = vld [vmem:[%s303 + $0xd10] sm:%s296]
                %724 = vst [vmem:[%s304 + $0x344] sm:%s296] %v723
                %v725 = vld [vmem:[%s303 + $0xd20] sm:%s296]
                %726 = vst [vmem:[%s304 + $0x348] sm:%s296] %v725
                %v727 = vld [vmem:[%s303 + $0xd30] sm:%s296]
                %728 = vst [vmem:[%s304 + $0x34c] sm:%s296] %v727
                %v729 = vld [vmem:[%s303 + $0xd40] sm:%s296]
                %730 = vst [vmem:[%s304 + $0x350] sm:%s296] %v729
                %v731 = vld [vmem:[%s303 + $0xd50] sm:%s296]
                %732 = vst [vmem:[%s304 + $0x354] sm:%s296] %v731
                %v733 = vld [vmem:[%s303 + $0xd60] sm:%s296]
                %734 = vst [vmem:[%s304 + $0x358] sm:%s296] %v733
                %v735 = vld [vmem:[%s303 + $0xd70] sm:%s296]
                %736 = vst [vmem:[%s304 + $0x35c] sm:%s296] %v735
                %v737 = vld [vmem:[%s303 + $0xd80] sm:%s296]
                %738 = vst [vmem:[%s304 + $0x360] sm:%s296] %v737
                %v739 = vld [vmem:[%s303 + $0xd90] sm:%s296]
                %740 = vst [vmem:[%s304 + $0x364] sm:%s296] %v739
                %v741 = vld [vmem:[%s303 + $0xda0] sm:%s296]
                %742 = vst [vmem:[%s304 + $0x368] sm:%s296] %v741
                %v743 = vld [vmem:[%s303 + $0xdb0] sm:%s296]
                %744 = vst [vmem:[%s304 + $0x36c] sm:%s296] %v743
                %v745 = vld [vmem:[%s303 + $0xdc0] sm:%s296]
                %746 = vst [vmem:[%s304 + $0x370] sm:%s296] %v745
                %v747 = vld [vmem:[%s303 + $0xdd0] sm:%s296]
                %748 = vst [vmem:[%s304 + $0x374] sm:%s296] %v747
                %v749 = vld [vmem:[%s303 + $0xde0] sm:%s296]
                %750 = vst [vmem:[%s304 + $0x378] sm:%s296] %v749
                %v751 = vld [vmem:[%s303 + $0xdf0] sm:%s296]
                %752 = vst [vmem:[%s304 + $0x37c] sm:%s296] %v751
                %v753 = vld [vmem:[%s303 + $0xe00] sm:%s296]
                %754 = vst [vmem:[%s304 + $0x380] sm:%s296] %v753
                %v755 = vld [vmem:[%s303 + $0xe10] sm:%s296]
                %756 = vst [vmem:[%s304 + $0x384] sm:%s296] %v755
                %v757 = vld [vmem:[%s303 + $0xe20] sm:%s296]
                %758 = vst [vmem:[%s304 + $0x388] sm:%s296] %v757
                %v759 = vld [vmem:[%s303 + $0xe30] sm:%s296]
                %760 = vst [vmem:[%s304 + $0x38c] sm:%s296] %v759
                %v761 = vld [vmem:[%s303 + $0xe40] sm:%s296]
                %762 = vst [vmem:[%s304 + $0x390] sm:%s296] %v761
                %v763 = vld [vmem:[%s303 + $0xe50] sm:%s296]
                %764 = vst [vmem:[%s304 + $0x394] sm:%s296] %v763
                %v765 = vld [vmem:[%s303 + $0xe60] sm:%s296]
                %766 = vst [vmem:[%s304 + $0x398] sm:%s296] %v765
                %v767 = vld [vmem:[%s303 + $0xe70] sm:%s296]
                %768 = vst [vmem:[%s304 + $0x39c] sm:%s296] %v767
                %v769 = vld [vmem:[%s303 + $0xe80] sm:%s296]
                %770 = vst [vmem:[%s304 + $0x3a0] sm:%s296] %v769
                %v771 = vld [vmem:[%s303 + $0xe90] sm:%s296]
                %772 = vst [vmem:[%s304 + $0x3a4] sm:%s296] %v771
                %v773 = vld [vmem:[%s303 + $0xea0] sm:%s296]
                %774 = vst [vmem:[%s304 + $0x3a8] sm:%s296] %v773
                %v775 = vld [vmem:[%s303 + $0xeb0] sm:%s296]
                %776 = vst [vmem:[%s304 + $0x3ac] sm:%s296] %v775
                %v777 = vld [vmem:[%s303 + $0xec0] sm:%s296]
                %778 = vst [vmem:[%s304 + $0x3b0] sm:%s296] %v777
                %v779 = vld [vmem:[%s303 + $0xed0] sm:%s296]
                %780 = vst [vmem:[%s304 + $0x3b4] sm:%s296] %v779
                %v781 = vld [vmem:[%s303 + $0xee0] sm:%s296]
                %782 = vst [vmem:[%s304 + $0x3b8] sm:%s296] %v781
                %v783 = vld [vmem:[%s303 + $0xef0] sm:%s296]
                %784 = vst [vmem:[%s304 + $0x3bc] sm:%s296] %v783
                %v785 = vld [vmem:[%s303 + $0xf00] sm:%s296]
                %786 = vst [vmem:[%s304 + $0x3c0] sm:%s296] %v785
                %v787 = vld [vmem:[%s303 + $0xf10] sm:%s296]
                %788 = vst [vmem:[%s304 + $0x3c4] sm:%s296] %v787
                %v789 = vld [vmem:[%s303 + $0xf20] sm:%s296]
                %790 = vst [vmem:[%s304 + $0x3c8] sm:%s296] %v789
                %v791 = vld [vmem:[%s303 + $0xf30] sm:%s296]
                %792 = vst [vmem:[%s304 + $0x3cc] sm:%s296] %v791
                %v793 = vld [vmem:[%s303 + $0xf40] sm:%s296]
                %794 = vst [vmem:[%s304 + $0x3d0] sm:%s296] %v793
                %v795 = vld [vmem:[%s303 + $0xf50] sm:%s296]
                %796 = vst [vmem:[%s304 + $0x3d4] sm:%s296] %v795
                %v797 = vld [vmem:[%s303 + $0xf60] sm:%s296]
                %798 = vst [vmem:[%s304 + $0x3d8] sm:%s296] %v797
                %v799 = vld [vmem:[%s303 + $0xf70] sm:%s296]
                %800 = vst [vmem:[%s304 + $0x3dc] sm:%s296] %v799
                %v801 = vld [vmem:[%s303 + $0xf80] sm:%s296]
                %802 = vst [vmem:[%s304 + $0x3e0] sm:%s296] %v801
                %v803 = vld [vmem:[%s303 + $0xf90] sm:%s296]
                %804 = vst [vmem:[%s304 + $0x3e4] sm:%s296] %v803
                %v805 = vld [vmem:[%s303 + $0xfa0] sm:%s296]
                %806 = vst [vmem:[%s304 + $0x3e8] sm:%s296] %v805
                %v807 = vld [vmem:[%s303 + $0xfb0] sm:%s296]
                %808 = vst [vmem:[%s304 + $0x3ec] sm:%s296] %v807
                %v809 = vld [vmem:[%s303 + $0xfc0] sm:%s296]
                %810 = vst [vmem:[%s304 + $0x3f0] sm:%s296] %v809
                %v811 = vld [vmem:[%s303 + $0xfd0] sm:%s296]
                %812 = vst [vmem:[%s304 + $0x3f4] sm:%s296] %v811
                %v813 = vld [vmem:[%s303 + $0xfe0] sm:%s296]
                %814 = vst [vmem:[%s304 + $0x3f8] sm:%s296] %v813
                %v815 = vld [vmem:[%s303 + $0xff0] sm:%s296]
                %816 = vst [vmem:[%s304 + $0x3fc] sm:%s296] %v815
                %v817 = vld [vmem:[%s303 + $0x1000] sm:%s296]
                %818 = vst [vmem:[%s304 + $0x400] sm:%s296] %v817
                %v819 = vld [vmem:[%s303 + $0x1010] sm:%s296]
                %820 = vst [vmem:[%s304 + $0x404] sm:%s296] %v819
                %v821 = vld [vmem:[%s303 + $0x1020] sm:%s296]
                %822 = vst [vmem:[%s304 + $0x408] sm:%s296] %v821
                %v823 = vld [vmem:[%s303 + $0x1030] sm:%s296]
                %824 = vst [vmem:[%s304 + $0x40c] sm:%s296] %v823
                %v825 = vld [vmem:[%s303 + $0x1040] sm:%s296]
                %826 = vst [vmem:[%s304 + $0x410] sm:%s296] %v825
                %v827 = vld [vmem:[%s303 + $0x1050] sm:%s296]
                %828 = vst [vmem:[%s304 + $0x414] sm:%s296] %v827
                %v829 = vld [vmem:[%s303 + $0x1060] sm:%s296]
                %830 = vst [vmem:[%s304 + $0x418] sm:%s296] %v829
                %v831 = vld [vmem:[%s303 + $0x1070] sm:%s296]
                %832 = vst [vmem:[%s304 + $0x41c] sm:%s296] %v831
                %v833 = vld [vmem:[%s303 + $0x1080] sm:%s296]
                %834 = vst [vmem:[%s304 + $0x420] sm:%s296] %v833
                %v835 = vld [vmem:[%s303 + $0x1090] sm:%s296]
                %836 = vst [vmem:[%s304 + $0x424] sm:%s296] %v835
                %v837 = vld [vmem:[%s303 + $0x10a0] sm:%s296]
                %838 = vst [vmem:[%s304 + $0x428] sm:%s296] %v837
                %v839 = vld [vmem:[%s303 + $0x10b0] sm:%s296]
                %840 = vst [vmem:[%s304 + $0x42c] sm:%s296] %v839
                %v841 = vld [vmem:[%s303 + $0x10c0] sm:%s296]
                %842 = vst [vmem:[%s304 + $0x430] sm:%s296] %v841
                %v843 = vld [vmem:[%s303 + $0x10d0] sm:%s296]
                %844 = vst [vmem:[%s304 + $0x434] sm:%s296] %v843
                %v845 = vld [vmem:[%s303 + $0x10e0] sm:%s296]
                %846 = vst [vmem:[%s304 + $0x438] sm:%s296] %v845
                %v847 = vld [vmem:[%s303 + $0x10f0] sm:%s296]
                %848 = vst [vmem:[%s304 + $0x43c] sm:%s296] %v847
                %v849 = vld [vmem:[%s303 + $0x1100] sm:%s296]
                %850 = vst [vmem:[%s304 + $0x440] sm:%s296] %v849
                %v851 = vld [vmem:[%s303 + $0x1110] sm:%s296]
                %852 = vst [vmem:[%s304 + $0x444] sm:%s296] %v851
                %v853 = vld [vmem:[%s303 + $0x1120] sm:%s296]
                %854 = vst [vmem:[%s304 + $0x448] sm:%s296] %v853
                %v855 = vld [vmem:[%s303 + $0x1130] sm:%s296]
                %856 = vst [vmem:[%s304 + $0x44c] sm:%s296] %v855
                %v857 = vld [vmem:[%s303 + $0x1140] sm:%s296]
                %858 = vst [vmem:[%s304 + $0x450] sm:%s296] %v857
                %v859 = vld [vmem:[%s303 + $0x1150] sm:%s296]
                %860 = vst [vmem:[%s304 + $0x454] sm:%s296] %v859
                %v861 = vld [vmem:[%s303 + $0x1160] sm:%s296]
                %862 = vst [vmem:[%s304 + $0x458] sm:%s296] %v861
                %v863 = vld [vmem:[%s303 + $0x1170] sm:%s296]
                %864 = vst [vmem:[%s304 + $0x45c] sm:%s296] %v863
                %v865 = vld [vmem:[%s303 + $0x1180] sm:%s296]
                %866 = vst [vmem:[%s304 + $0x460] sm:%s296] %v865
                %v867 = vld [vmem:[%s303 + $0x1190] sm:%s296]
                %868 = vst [vmem:[%s304 + $0x464] sm:%s296] %v867
                %v869 = vld [vmem:[%s303 + $0x11a0] sm:%s296]
                %870 = vst [vmem:[%s304 + $0x468] sm:%s296] %v869
                %v871 = vld [vmem:[%s303 + $0x11b0] sm:%s296]
                %872 = vst [vmem:[%s304 + $0x46c] sm:%s296] %v871
                %v873 = vld [vmem:[%s303 + $0x11c0] sm:%s296]
                %874 = vst [vmem:[%s304 + $0x470] sm:%s296] %v873
                %v875 = vld [vmem:[%s303 + $0x11d0] sm:%s296]
                %876 = vst [vmem:[%s304 + $0x474] sm:%s296] %v875
                %v877 = vld [vmem:[%s303 + $0x11e0] sm:%s296]
                %878 = vst [vmem:[%s304 + $0x478] sm:%s296] %v877
                %v879 = vld [vmem:[%s303 + $0x11f0] sm:%s296]
                %880 = vst [vmem:[%s304 + $0x47c] sm:%s296] %v879
                %v881 = vld [vmem:[%s303 + $0x1200] sm:%s296]
                %882 = vst [vmem:[%s304 + $0x480] sm:%s296] %v881
                %v883 = vld [vmem:[%s303 + $0x1210] sm:%s296]
                %884 = vst [vmem:[%s304 + $0x484] sm:%s296] %v883
                %v885 = vld [vmem:[%s303 + $0x1220] sm:%s296]
                %886 = vst [vmem:[%s304 + $0x488] sm:%s296] %v885
                %v887 = vld [vmem:[%s303 + $0x1230] sm:%s296]
                %888 = vst [vmem:[%s304 + $0x48c] sm:%s296] %v887
                %v889 = vld [vmem:[%s303 + $0x1240] sm:%s296]
                %890 = vst [vmem:[%s304 + $0x490] sm:%s296] %v889
                %v891 = vld [vmem:[%s303 + $0x1250] sm:%s296]
                %892 = vst [vmem:[%s304 + $0x494] sm:%s296] %v891
                %v893 = vld [vmem:[%s303 + $0x1260] sm:%s296]
                %894 = vst [vmem:[%s304 + $0x498] sm:%s296] %v893
                %v895 = vld [vmem:[%s303 + $0x1270] sm:%s296]
                %896 = vst [vmem:[%s304 + $0x49c] sm:%s296] %v895
                %v897 = vld [vmem:[%s303 + $0x1280] sm:%s296]
                %898 = vst [vmem:[%s304 + $0x4a0] sm:%s296] %v897
                %v899 = vld [vmem:[%s303 + $0x1290] sm:%s296]
                %900 = vst [vmem:[%s304 + $0x4a4] sm:%s296] %v899
                %v901 = vld [vmem:[%s303 + $0x12a0] sm:%s296]
                %902 = vst [vmem:[%s304 + $0x4a8] sm:%s296] %v901
                %v903 = vld [vmem:[%s303 + $0x12b0] sm:%s296]
                %904 = vst [vmem:[%s304 + $0x4ac] sm:%s296] %v903
                %v905 = vld [vmem:[%s303 + $0x12c0] sm:%s296]
                %906 = vst [vmem:[%s304 + $0x4b0] sm:%s296] %v905
                %v907 = vld [vmem:[%s303 + $0x12d0] sm:%s296]
                %908 = vst [vmem:[%s304 + $0x4b4] sm:%s296] %v907
                %v909 = vld [vmem:[%s303 + $0x12e0] sm:%s296]
                %910 = vst [vmem:[%s304 + $0x4b8] sm:%s296] %v909
                %v911 = vld [vmem:[%s303 + $0x12f0] sm:%s296]
                %912 = vst [vmem:[%s304 + $0x4bc] sm:%s296] %v911
                %v913 = vld [vmem:[%s303 + $0x1300] sm:%s296]
                %914 = vst [vmem:[%s304 + $0x4c0] sm:%s296] %v913
                %v915 = vld [vmem:[%s303 + $0x1310] sm:%s296]
                %916 = vst [vmem:[%s304 + $0x4c4] sm:%s296] %v915
                %v917 = vld [vmem:[%s303 + $0x1320] sm:%s296]
                %918 = vst [vmem:[%s304 + $0x4c8] sm:%s296] %v917
                %v919 = vld [vmem:[%s303 + $0x1330] sm:%s296]
                %920 = vst [vmem:[%s304 + $0x4cc] sm:%s296] %v919
                %v921 = vld [vmem:[%s303 + $0x1340] sm:%s296]
                %922 = vst [vmem:[%s304 + $0x4d0] sm:%s296] %v921
                %v923 = vld [vmem:[%s303 + $0x1350] sm:%s296]
                %924 = vst [vmem:[%s304 + $0x4d4] sm:%s296] %v923
                %v925 = vld [vmem:[%s303 + $0x1360] sm:%s296]
                %926 = vst [vmem:[%s304 + $0x4d8] sm:%s296] %v925
                %v927 = vld [vmem:[%s303 + $0x1370] sm:%s296]
                %928 = vst [vmem:[%s304 + $0x4dc] sm:%s296] %v927
                %v929 = vld [vmem:[%s303 + $0x1380] sm:%s296]
                %930 = vst [vmem:[%s304 + $0x4e0] sm:%s296] %v929
                %v931 = vld [vmem:[%s303 + $0x1390] sm:%s296]
                %932 = vst [vmem:[%s304 + $0x4e4] sm:%s296] %v931
                %v933 = vld [vmem:[%s303 + $0x13a0] sm:%s296]
                %934 = vst [vmem:[%s304 + $0x4e8] sm:%s296] %v933
                %v935 = vld [vmem:[%s303 + $0x13b0] sm:%s296]
                %936 = vst [vmem:[%s304 + $0x4ec] sm:%s296] %v935
                %v937 = vld [vmem:[%s303 + $0x13c0] sm:%s296]
                %938 = vst [vmem:[%s304 + $0x4f0] sm:%s296] %v937
                %v939 = vld [vmem:[%s303 + $0x13d0] sm:%s296]
                %940 = vst [vmem:[%s304 + $0x4f4] sm:%s296] %v939
                %v941 = vld [vmem:[%s303 + $0x13e0] sm:%s296]
                %942 = vst [vmem:[%s304 + $0x4f8] sm:%s296] %v941
                %v943 = vld [vmem:[%s303 + $0x13f0] sm:%s296]
                %944 = vst [vmem:[%s304 + $0x4fc] sm:%s296] %v943
                %v945 = vld [vmem:[%s303 + $0x1400] sm:%s296]
                %946 = vst [vmem:[%s304 + $0x500] sm:%s296] %v945
                %v947 = vld [vmem:[%s303 + $0x1410] sm:%s296]
                %948 = vst [vmem:[%s304 + $0x504] sm:%s296] %v947
                %v949 = vld [vmem:[%s303 + $0x1420] sm:%s296]
                %950 = vst [vmem:[%s304 + $0x508] sm:%s296] %v949
                %v951 = vld [vmem:[%s303 + $0x1430] sm:%s296]
                %952 = vst [vmem:[%s304 + $0x50c] sm:%s296] %v951
                %v953 = vld [vmem:[%s303 + $0x1440] sm:%s296]
                %954 = vst [vmem:[%s304 + $0x510] sm:%s296] %v953
                %v955 = vld [vmem:[%s303 + $0x1450] sm:%s296]
                %956 = vst [vmem:[%s304 + $0x514] sm:%s296] %v955
                %v957 = vld [vmem:[%s303 + $0x1460] sm:%s296]
                %958 = vst [vmem:[%s304 + $0x518] sm:%s296] %v957
                %v959 = vld [vmem:[%s303 + $0x1470] sm:%s296]
                %960 = vst [vmem:[%s304 + $0x51c] sm:%s296] %v959
                %v961 = vld [vmem:[%s303 + $0x1480] sm:%s296]
                %962 = vst [vmem:[%s304 + $0x520] sm:%s296] %v961
                %v963 = vld [vmem:[%s303 + $0x1490] sm:%s296]
                %964 = vst [vmem:[%s304 + $0x524] sm:%s296] %v963
                %v965 = vld [vmem:[%s303 + $0x14a0] sm:%s296]
                %966 = vst [vmem:[%s304 + $0x528] sm:%s296] %v965
                %v967 = vld [vmem:[%s303 + $0x14b0] sm:%s296]
                %968 = vst [vmem:[%s304 + $0x52c] sm:%s296] %v967
                %v969 = vld [vmem:[%s303 + $0x14c0] sm:%s296]
                %970 = vst [vmem:[%s304 + $0x530] sm:%s296] %v969
                %v971 = vld [vmem:[%s303 + $0x14d0] sm:%s296]
                %972 = vst [vmem:[%s304 + $0x534] sm:%s296] %v971
                %v973 = vld [vmem:[%s303 + $0x14e0] sm:%s296]
                %974 = vst [vmem:[%s304 + $0x538] sm:%s296] %v973
                %v975 = vld [vmem:[%s303 + $0x14f0] sm:%s296]
                %976 = vst [vmem:[%s304 + $0x53c] sm:%s296] %v975
                %v977 = vld [vmem:[%s303 + $0x1500] sm:%s296]
                %978 = vst [vmem:[%s304 + $0x540] sm:%s296] %v977
                %v979 = vld [vmem:[%s303 + $0x1510] sm:%s296]
                %980 = vst [vmem:[%s304 + $0x544] sm:%s296] %v979
                %v981 = vld [vmem:[%s303 + $0x1520] sm:%s296]
                %982 = vst [vmem:[%s304 + $0x548] sm:%s296] %v981
                %v983 = vld [vmem:[%s303 + $0x1530] sm:%s296]
                %984 = vst [vmem:[%s304 + $0x54c] sm:%s296] %v983
                %v985 = vld [vmem:[%s303 + $0x1540] sm:%s296]
                %986 = vst [vmem:[%s304 + $0x550] sm:%s296] %v985
                %v987 = vld [vmem:[%s303 + $0x1550] sm:%s296]
                %988 = vst [vmem:[%s304 + $0x554] sm:%s296] %v987
                %v989 = vld [vmem:[%s303 + $0x1560] sm:%s296]
                %990 = vst [vmem:[%s304 + $0x558] sm:%s296] %v989
                %v991 = vld [vmem:[%s303 + $0x1570] sm:%s296]
                %992 = vst [vmem:[%s304 + $0x55c] sm:%s296] %v991
                %v993 = vld [vmem:[%s303 + $0x1580] sm:%s296]
                %994 = vst [vmem:[%s304 + $0x560] sm:%s296] %v993
                %v995 = vld [vmem:[%s303 + $0x1590] sm:%s296]
                %996 = vst [vmem:[%s304 + $0x564] sm:%s296] %v995
                %v997 = vld [vmem:[%s303 + $0x15a0] sm:%s296]
                %998 = vst [vmem:[%s304 + $0x568] sm:%s296] %v997
                %v999 = vld [vmem:[%s303 + $0x15b0] sm:%s296]
                %1000 = vst [vmem:[%s304 + $0x56c] sm:%s296] %v999
                %v1001 = vld [vmem:[%s303 + $0x15c0] sm:%s296]
                %1002 = vst [vmem:[%s304 + $0x570] sm:%s296] %v1001
                %v1003 = vld [vmem:[%s303 + $0x15d0] sm:%s296]
                %1004 = vst [vmem:[%s304 + $0x574] sm:%s296] %v1003
                %v1005 = vld [vmem:[%s303 + $0x15e0] sm:%s296]
                %1006 = vst [vmem:[%s304 + $0x578] sm:%s296] %v1005
                %v1007 = vld [vmem:[%s303 + $0x15f0] sm:%s296]
                %1008 = vst [vmem:[%s304 + $0x57c] sm:%s296] %v1007
                %v1009 = vld [vmem:[%s303 + $0x1600] sm:%s296]
                %1010 = vst [vmem:[%s304 + $0x580] sm:%s296] %v1009
                %v1011 = vld [vmem:[%s303 + $0x1610] sm:%s296]
                %1012 = vst [vmem:[%s304 + $0x584] sm:%s296] %v1011
                %v1013 = vld [vmem:[%s303 + $0x1620] sm:%s296]
                %1014 = vst [vmem:[%s304 + $0x588] sm:%s296] %v1013
                %v1015 = vld [vmem:[%s303 + $0x1630] sm:%s296]
                %1016 = vst [vmem:[%s304 + $0x58c] sm:%s296] %v1015
                %v1017 = vld [vmem:[%s303 + $0x1640] sm:%s296]
                %1018 = vst [vmem:[%s304 + $0x590] sm:%s296] %v1017
                %v1019 = vld [vmem:[%s303 + $0x1650] sm:%s296]
                %1020 = vst [vmem:[%s304 + $0x594] sm:%s296] %v1019
                %v1021 = vld [vmem:[%s303 + $0x1660] sm:%s296]
                %1022 = vst [vmem:[%s304 + $0x598] sm:%s296] %v1021
                %v1023 = vld [vmem:[%s303 + $0x1670] sm:%s296]
                %1024 = vst [vmem:[%s304 + $0x59c] sm:%s296] %v1023
                %v1025 = vld [vmem:[%s303 + $0x1680] sm:%s296]
                %1026 = vst [vmem:[%s304 + $0x5a0] sm:%s296] %v1025
                %v1027 = vld [vmem:[%s303 + $0x1690] sm:%s296]
                %1028 = vst [vmem:[%s304 + $0x5a4] sm:%s296] %v1027
                %v1029 = vld [vmem:[%s303 + $0x16a0] sm:%s296]
                %1030 = vst [vmem:[%s304 + $0x5a8] sm:%s296] %v1029
                %v1031 = vld [vmem:[%s303 + $0x16b0] sm:%s296]
                %1032 = vst [vmem:[%s304 + $0x5ac] sm:%s296] %v1031
                %v1033 = vld [vmem:[%s303 + $0x16c0] sm:%s296]
                %1034 = vst [vmem:[%s304 + $0x5b0] sm:%s296] %v1033
                %v1035 = vld [vmem:[%s303 + $0x16d0] sm:%s296]
                %1036 = vst [vmem:[%s304 + $0x5b4] sm:%s296] %v1035
                %v1037 = vld [vmem:[%s303 + $0x16e0] sm:%s296]
                %1038 = vst [vmem:[%s304 + $0x5b8] sm:%s296] %v1037
                %v1039 = vld [vmem:[%s303 + $0x16f0] sm:%s296]
                %1040 = vst [vmem:[%s304 + $0x5bc] sm:%s296] %v1039
                %v1041 = vld [vmem:[%s303 + $0x1700] sm:%s296]
                %1042 = vst [vmem:[%s304 + $0x5c0] sm:%s296] %v1041
                %v1043 = vld [vmem:[%s303 + $0x1710] sm:%s296]
                %1044 = vst [vmem:[%s304 + $0x5c4] sm:%s296] %v1043
                %v1045 = vld [vmem:[%s303 + $0x1720] sm:%s296]
                %1046 = vst [vmem:[%s304 + $0x5c8] sm:%s296] %v1045
                %v1047 = vld [vmem:[%s303 + $0x1730] sm:%s296]
                %1048 = vst [vmem:[%s304 + $0x5cc] sm:%s296] %v1047
                %v1049 = vld [vmem:[%s303 + $0x1740] sm:%s296]
                %1050 = vst [vmem:[%s304 + $0x5d0] sm:%s296] %v1049
                %v1051 = vld [vmem:[%s303 + $0x1750] sm:%s296]
                %1052 = vst [vmem:[%s304 + $0x5d4] sm:%s296] %v1051
                %v1053 = vld [vmem:[%s303 + $0x1760] sm:%s296]
                %1054 = vst [vmem:[%s304 + $0x5d8] sm:%s296] %v1053
                %v1055 = vld [vmem:[%s303 + $0x1770] sm:%s296]
                %1056 = vst [vmem:[%s304 + $0x5dc] sm:%s296] %v1055
                %v1057 = vld [vmem:[%s303 + $0x1780] sm:%s296]
                %1058 = vst [vmem:[%s304 + $0x5e0] sm:%s296] %v1057
                %v1059 = vld [vmem:[%s303 + $0x1790] sm:%s296]
                %1060 = vst [vmem:[%s304 + $0x5e4] sm:%s296] %v1059
                %v1061 = vld [vmem:[%s303 + $0x17a0] sm:%s296]
                %1062 = vst [vmem:[%s304 + $0x5e8] sm:%s296] %v1061
                %v1063 = vld [vmem:[%s303 + $0x17b0] sm:%s296]
                %1064 = vst [vmem:[%s304 + $0x5ec] sm:%s296] %v1063
                %v1065 = vld [vmem:[%s303 + $0x17c0] sm:%s296]
                %1066 = vst [vmem:[%s304 + $0x5f0] sm:%s296] %v1065
                %v1067 = vld [vmem:[%s303 + $0x17d0] sm:%s296]
                %1068 = vst [vmem:[%s304 + $0x5f4] sm:%s296] %v1067
                %v1069 = vld [vmem:[%s303 + $0x17e0] sm:%s296]
                %1070 = vst [vmem:[%s304 + $0x5f8] sm:%s296] %v1069
                %v1071 = vld [vmem:[%s303 + $0x17f0] sm:%s296]
                %1072 = vst [vmem:[%s304 + $0x5fc] sm:%s296] %v1071
                %v1073 = vld [vmem:[%s303 + $0x1800] sm:%s296]
                %1074 = vst [vmem:[%s304 + $0x600] sm:%s296] %v1073
                %v1075 = vld [vmem:[%s303 + $0x1810] sm:%s296]
                %1076 = vst [vmem:[%s304 + $0x604] sm:%s296] %v1075
                %v1077 = vld [vmem:[%s303 + $0x1820] sm:%s296]
                %1078 = vst [vmem:[%s304 + $0x608] sm:%s296] %v1077
                %v1079 = vld [vmem:[%s303 + $0x1830] sm:%s296]
                %1080 = vst [vmem:[%s304 + $0x60c] sm:%s296] %v1079
                %v1081 = vld [vmem:[%s303 + $0x1840] sm:%s296]
                %1082 = vst [vmem:[%s304 + $0x610] sm:%s296] %v1081
                %v1083 = vld [vmem:[%s303 + $0x1850] sm:%s296]
                %1084 = vst [vmem:[%s304 + $0x614] sm:%s296] %v1083
                %v1085 = vld [vmem:[%s303 + $0x1860] sm:%s296]
                %1086 = vst [vmem:[%s304 + $0x618] sm:%s296] %v1085
                %v1087 = vld [vmem:[%s303 + $0x1870] sm:%s296]
                %1088 = vst [vmem:[%s304 + $0x61c] sm:%s296] %v1087
              $region57: #{nature_tqn_forward.7} parent=51 // loop_footer
                %s302 = sadd.s32 1, %s298
              $region58: #{nature_tqn_forward.7} parent=51 // loop_footer_branch
                %297 = sbr.rel target = $region54
              $region59: #{nature_tqn_forward.7} parent=51 // loop_exit
                _
            $region52: #{nature_tqn_forward.7} parent=43 // pred_fallthru
              _
          $region44: #{nature_tqn_forward.7} parent=39 // pred_fallthru
            _
          %3487 = vnop
        $region40: #{nature_tqn_forward.7} parent=35 // pred_fallthru
          _
        // Predicated region
        $region89: #{nature_tqn_forward.7} parent=35 // pred_check
          %p3488 = pneg %p104
        $region90: #{nature_tqn_forward.7} parent=35 // pred_check_branch
          %3490 = sbr.rel (%p3488) target = $region92
        $region91: #{nature_tqn_forward.7} parent=35 // pred_region
          %s3491 = sand.u32 %s94, 1
          %s3492 = sand.u32 %s94, 1
          %s3493 = smul.addr %s3492, 8
          %s3494 = scalar_lea.vmem [#allocation3], %s3493
          %s3495 = smul.addr %s16, 4
          %s3496 = scalar_lea.vmem %s3, %s3495
          // Predicated region
          $region93: #{nature_tqn_forward.7} parent=91 // pred_check
            _
          $region94: #{nature_tqn_forward.7} parent=91 // pred_check_branch
            %3498 = sbr.rel (0) target = $region96
          $region95: #{nature_tqn_forward.7} parent=91 // pred_region
            // Predicated region
            $region97: #{nature_tqn_forward.7} parent=95 // pred_check
              _
            $region98: #{nature_tqn_forward.7} parent=95 // pred_check_branch
              %3500 = sbr.rel target = $region100
            $region99: #{nature_tqn_forward.7} parent=95 // pred_region
              // Predicated region
              $region112: #{nature_tqn_forward.7} parent=99 // pred_check
                _
              $region113: #{nature_tqn_forward.7} parent=99 // pred_check_branch
                %3518 = sbr.rel (0) target = $region115
              $region114: #{nature_tqn_forward.7} parent=99 // pred_region
                loop: start=0, step=1, limit=1
                $region116: #{nature_tqn_forward.7} parent=114 // loop_pre_header
                  _
                $region117: #{nature_tqn_forward.7} parent=114 // loop_header
                  %s3520 = sphi 0, %s3524
                  %p3521 = scmp.ge.s32.totalorder %s3520, 1
                  %s3525 = sphi %s3496, %s3496
                  %s3526 = sphi %s3494, %s3494
                $region118: #{nature_tqn_forward.7} parent=114 // loop_header_branch
                  %3523 = sbr.rel (%p3521) target = $region122
                $region119: #{nature_tqn_forward.7} parent=114 // loop_body
                  _
                $region120: #{nature_tqn_forward.7} parent=114 // loop_footer
                  %s3524 = sadd.s32 1, %s3520
                $region121: #{nature_tqn_forward.7} parent=114 // loop_footer_branch
                  %3519 = sbr.rel target = $region117
                $region122: #{nature_tqn_forward.7} parent=114 // loop_exit
                  _
                %s3528 = ssub.s32 16, 1
                loop: start=0, step=1, limit=1
                $region123: #{nature_tqn_forward.7} parent=114 // loop_pre_header
                  _
                $region124: #{nature_tqn_forward.7} parent=114 // loop_header
                  %s3530 = sphi 0, %s3534
                  %p3531 = scmp.ge.s32.totalorder %s3530, 1
                  %s3535 = sphi %s3496, %s3496
                  %s3536 = sphi %s3494, %s3494
                $region125: #{nature_tqn_forward.7} parent=114 // loop_header_branch
                  %3533 = sbr.rel (%p3531) target = $region129
                $region126: #{nature_tqn_forward.7} parent=114 // loop_body
                  %v3537 = vld [vmem:[%s3535] sm:%s3528]
                  %3538 = vst [vmem:[%s3536] sm:%s3528] %v3537
                  %v3539 = vld [vmem:[%s3535 + $0x10] sm:%s3528]
                  %3540 = vst [vmem:[%s3536 + $0x4] sm:%s3528] %v3539
                $region127: #{nature_tqn_forward.7} parent=114 // loop_footer
                  %s3534 = sadd.s32 1, %s3530
                $region128: #{nature_tqn_forward.7} parent=114 // loop_footer_branch
                  %3529 = sbr.rel target = $region124
                $region129: #{nature_tqn_forward.7} parent=114 // loop_exit
                  _
              $region115: #{nature_tqn_forward.7} parent=99 // pred_fallthru
                _
            $region100: #{nature_tqn_forward.7} parent=95 // pred_fallthru
              _
            // Predicated region
            $region101: #{nature_tqn_forward.7} parent=95 // pred_check
              _
            $region102: #{nature_tqn_forward.7} parent=95 // pred_check_branch
              %3502 = sbr.rel (0) target = $region104
            $region103: #{nature_tqn_forward.7} parent=95 // pred_region
              %s3504 = ssub.s32 16, 1
              loop: start=0, step=1, limit=1
              $region105: #{nature_tqn_forward.7} parent=103 // loop_pre_header
                _
              $region106: #{nature_tqn_forward.7} parent=103 // loop_header
                %s3506 = sphi 0, %s3510
                %p3507 = scmp.ge.s32.totalorder %s3506, 1
                %s3511 = sphi %s3496, %s3496
                %s3512 = sphi %s3494, %s3494
              $region107: #{nature_tqn_forward.7} parent=103 // loop_header_branch
                %3509 = sbr.rel (%p3507) target = $region111
              $region108: #{nature_tqn_forward.7} parent=103 // loop_body
                %v3513 = vld [vmem:[%s3511] sm:%s3504]
                %3514 = vst [vmem:[%s3512] sm:%s3504] %v3513
                %v3515 = vld [vmem:[%s3511 + $0x10] sm:%s3504]
                %3516 = vst [vmem:[%s3512 + $0x4] sm:%s3504] %v3515
              $region109: #{nature_tqn_forward.7} parent=103 // loop_footer
                %s3510 = sadd.s32 1, %s3506
              $region110: #{nature_tqn_forward.7} parent=103 // loop_footer_branch
                %3505 = sbr.rel target = $region106
              $region111: #{nature_tqn_forward.7} parent=103 // loop_exit
                _
            $region104: #{nature_tqn_forward.7} parent=95 // pred_fallthru
              _
          $region96: #{nature_tqn_forward.7} parent=91 // pred_fallthru
            _
          %3541 = vnop
        $region92: #{nature_tqn_forward.7} parent=35 // pred_fallthru
          _
        // Predicated region
        $region130: #{nature_tqn_forward.7} parent=35 // pred_check
          %p3542 = pneg %p130
        $region131: #{nature_tqn_forward.7} parent=35 // pred_check_branch
          %3544 = sbr.rel (%p3542) target = $region133
        $region132: #{nature_tqn_forward.7} parent=35 // pred_region
          %p3545 = scmp.lt.s32.totalorder %s16, 3
          %s3546 = scalar_select %p3545, %s16, 3
          %s3547 = scalar_lea.vmem %s4, %s3546
        $region133: #{nature_tqn_forward.7} parent=35 // pred_fallthru
          _
        // Predicated region
        $region134: #{nature_tqn_forward.7} parent=35 // pred_check
          %p3548 = pneg %p198
        $region135: #{nature_tqn_forward.7} parent=35 // pred_check_branch
          %3550 = sbr.rel (%p3548) target = $region137
        $region136: #{nature_tqn_forward.7} parent=35 // pred_region
          %s3551 = smul.u32 16, %s16
          %p3552 = scmp.lt.s32.totalorder %s3551, 63
          %s3553 = scalar_select %p3552, %s3551, 63
          %s3554 = smul.addr %s3553, 4
          %s3555 = scalar_lea.vmem %s7, %s3554
          %s3556 = smul.u32 16, %s16
        $region137: #{nature_tqn_forward.7} parent=35 // pred_fallthru
          _
      $region36: #{nature_tqn_forward.7} parent=5 // pred_fallthru
        _
      %p3557 = scmp.le.s32.totalorder 1, %s16
      %p3558 = scmp.lt.s32.totalorder %s16, 5
      %p3559 = pnand %p3557, %p3558
      %p3560 = pneg %p3559
      // Predicated region
      $region138: #{nature_tqn_forward.7} parent=5 // pred_check
        _
      $region139: #{nature_tqn_forward.7} parent=5 // pred_check_branch
        %3562 = sbr.rel (%p3559) target = $region141
      $region140: #{nature_tqn_forward.7} parent=5 // pred_region
        %s3563 = ssub.s32 %s16, 1
        %s3564 = sand.u32 %s71, 1
        %s3565 = sand.u32 %s71, 1
        %s3566 = smul.addr %s3565, 1568
        %s3567 = scalar_lea.vmem [#allocation2], %s3566
        // Predicated region
        $region142: #{nature_tqn_forward.7} parent=140 // pred_check
          %p3568 = pneg %p84
        $region143: #{nature_tqn_forward.7} parent=140 // pred_check_branch
          %3570 = sbr.rel (%p3568) target = $region145
        $region144: #{nature_tqn_forward.7} parent=140 // pred_region
          _
        $region145: #{nature_tqn_forward.7} parent=140 // pred_fallthru
          _
        %s3571 = sand.u32 %s97, 1
        %s3572 = sand.u32 %s97, 1
        %s3573 = smul.addr %s3572, 8
        %s3574 = scalar_lea.vmem [#allocation3], %s3573
        // Predicated region
        $region146: #{nature_tqn_forward.7} parent=140 // pred_check
          %p3575 = pneg %p110
        $region147: #{nature_tqn_forward.7} parent=140 // pred_check_branch
          %3577 = sbr.rel (%p3575) target = $region149
        $region148: #{nature_tqn_forward.7} parent=140 // pred_region
          _
        $region149: #{nature_tqn_forward.7} parent=140 // pred_fallthru
          _
        %p3578 = pneg %p37
        %p3579 = pneg %p34
        %p3580 = pneg %p58
        %p3581 = pneg %p55
        %s3582 = sand.u32 %s71, 1
        %s3583 = sand.u32 %s71, 1
        %s3584 = smul.addr %s3583, 1568
        %s3585 = scalar_lea.vmem [#allocation2], %s3584
        %p3586 = pneg %p84
        %p3587 = pneg %p81
        %s3588 = sand.u32 %s97, 1
        %s3589 = sand.u32 %s97, 1
        %s3590 = smul.addr %s3589, 8
        %s3591 = scalar_lea.vmem [#allocation3], %s3590
        %p3592 = pneg %p110
        %p3593 = pneg %p107
        %p3594 = scmp.lt.s32.totalorder %s21, 3
        %s3595 = scalar_select %p3594, %s21, 3
        %s3596 = scalar_lea.vmem %s4, %s3595
        %p3597 = pneg %p136
        %p3598 = pneg %p133
        %p3599 = pneg %p157
        %p3600 = pneg %p154
        %p3601 = pneg %p178
        %p3602 = pneg %p175
        %s3603 = smul.u32 16, %s21
        %p3604 = scmp.lt.s32.totalorder %s3603, 63
        %s3605 = scalar_select %p3604, %s3603, 63
        %s3606 = smul.addr %s3605, 4
        %s3607 = scalar_lea.vmem %s7, %s3606
        %p3608 = pneg %p204
        %p3609 = pneg %p201
        %p3610 = pneg %p225
        %p3611 = pneg %p222
        %p3612 = pneg %p246
        %p3613 = pneg %p243
        %p3614 = scmp.lt.s32.totalorder %s21, 3
        %s3615 = scalar_select %p3614, %s21, 3
        %s3616 = scalar_lea.vmem %s4, %s3615
        %s3617 = smul.u32 16, %s21
        %p3618 = scmp.lt.s32.totalorder %s3617, 63
        %s3619 = scalar_select %p3618, %s3617, 63
        %s3620 = smul.addr %s3619, 4
        %s3621 = scalar_lea.vmem %s7, %s3620
        %s3622 = smul.u32 16, %s21
        %v3624 = vld [vmem:[%s1] sm:$0x3]
        %v3625 = vld [vmem:[%s5] sm:$0x1]
        %3627 = vset.pattern.permute.xlu0 0
        %3628 = vperm.xlu0 %3627, %v3624
        %v3629 = vpop.permute.xlu0 %3628
        %v3632 = vperm.slane %v3625, 0
        %v3634 = vmul.f32 %v3629, %v3632
        %v3635 = vld [vmem:[%s6] sm:$0x1]
        %v3637 = vperm.slane %v3635, 0
        %v3639 = vadd.f32 %v3634, %v3637
        %v3640 = vmax.f32 %v3639, 0.0
        %v3641 = vld [vmem:[%s0] sm:$0xff]
        %v3642 = vld [vmem:[%s0 + $0x8] sm:$0xff]
        %v3643 = vld [vmem:[%s0 + $0x10] sm:$0xff]
        %v3644 = vld [vmem:[%s0 + $0x18] sm:$0xff]
        %v3645 = vld [vmem:[%s0 + $0x20] sm:$0xff]
        %v3646 = vld [vmem:[%s0 + $0x28] sm:$0xff]
        %v3647 = vld [vmem:[%s0 + $0x30] sm:$0x3]
        %3655 = vst [vmem:[#allocation1] ss:$4 sm:$0xff] %v3641
        %s3656 = scalar_lea.vmem [#allocation1], 32
        %3657 = vst [vmem:[%s3656] ss:$4 sm:$0xff] %v3642
        %v3658 = vld.sshfl [vmem:[#allocation1] sm:$0xff pattern:$0x73625140]
        %v3659 = vld.sshfl [vmem:[#allocation1 + $0x8] sm:$0xff pattern:$0x73625140]
        %v3660 = vld.sshfl [vmem:[#allocation1 + $0x10] sm:$0xff pattern:$0x73625140]
        %v3661 = vld.sshfl [vmem:[#allocation1 + $0x18] sm:$0xff pattern:$0x73625140]
        %v3662 = vld.sshfl [vmem:[#allocation1 + $0x20] sm:$0xff pattern:$0x73625140]
        %v3663 = vld.sshfl [vmem:[#allocation1 + $0x28] sm:$0xff pattern:$0x73625140]
        %v3664 = vld.sshfl [vmem:[#allocation1 + $0x30] sm:$0xff pattern:$0x73625140]
        %v3665 = vld.sshfl [vmem:[#allocation1 + $0x38] sm:$0xff pattern:$0x73625140]
        %3666 = vst [vmem:[#allocation1] ss:$4 sm:$0xff] %v3643
        %3667 = vst [vmem:[%s3656] ss:$4 sm:$0xff] %v3644
        %v3668 = vld.sshfl [vmem:[#allocation1] sm:$0xff pattern:$0x73625140]
        %v3669 = vld.sshfl [vmem:[#allocation1 + $0x8] sm:$0xff pattern:$0x73625140]
        %v3670 = vld.sshfl [vmem:[#allocation1 + $0x10] sm:$0xff pattern:$0x73625140]
        %v3671 = vld.sshfl [vmem:[#allocation1 + $0x18] sm:$0xff pattern:$0x73625140]
        %v3672 = vld.sshfl [vmem:[#allocation1 + $0x20] sm:$0xff pattern:$0x73625140]
        %v3673 = vld.sshfl [vmem:[#allocation1 + $0x28] sm:$0xff pattern:$0x73625140]
        %v3674 = vld.sshfl [vmem:[#allocation1 + $0x30] sm:$0xff pattern:$0x73625140]
        %v3675 = vld.sshfl [vmem:[#allocation1 + $0x38] sm:$0xff pattern:$0x73625140]
        %3676 = vst [vmem:[#allocation1] ss:$4 sm:$0xff] %v3645
        %3677 = vst [vmem:[%s3656] ss:$4 sm:$0xff] %v3646
        %v3678 = vld.sshfl [vmem:[#allocation1] sm:$0xff pattern:$0x73625140]
        %v3679 = vld.sshfl [vmem:[#allocation1 + $0x8] sm:$0xff pattern:$0x73625140]
        %v3680 = vld.sshfl [vmem:[#allocation1 + $0x10] sm:$0xff pattern:$0x73625140]
        %v3681 = vld.sshfl [vmem:[#allocation1 + $0x18] sm:$0xff pattern:$0x73625140]
        %v3682 = vld.sshfl [vmem:[#allocation1 + $0x20] sm:$0xff pattern:$0x73625140]
        %v3683 = vld.sshfl [vmem:[#allocation1 + $0x28] sm:$0xff pattern:$0x73625140]
        %v3684 = vld.sshfl [vmem:[#allocation1 + $0x30] sm:$0xff pattern:$0x73625140]
        %v3685 = vld.sshfl [vmem:[#allocation1 + $0x38] sm:$0xff pattern:$0x73625140]
        %3686 = vst [vmem:[#allocation1] ss:$4 sm:$0xff] %v3647
        %v3687 = vld.sshfl [vmem:[#allocation1] sm:$0xff pattern:$0x73625140]
        %v3713 = vpack.c.bf16 %v3658, %v3658
        %v3714 = vpack.c.bf16 %v3659, %v3659
        %v3715 = vpack.c.bf16 %v3660, %v3660
        %v3716 = vpack.c.bf16 %v3661, %v3661
        %v3717 = vpack.c.bf16 %v3662, %v3662
        %v3718 = vpack.c.bf16 %v3663, %v3663
        %v3719 = vpack.c.bf16 %v3664, %v3664
        %v3720 = vpack.c.bf16 %v3665, %v3665
        %v3721 = vpack.c.bf16 %v3668, %v3668
        %v3722 = vpack.c.bf16 %v3669, %v3669
        %v3723 = vpack.c.bf16 %v3670, %v3670
        %v3724 = vpack.c.bf16 %v3671, %v3671
        %v3725 = vpack.c.bf16 %v3672, %v3672
        %v3726 = vpack.c.bf16 %v3673, %v3673
        %v3727 = vpack.c.bf16 %v3674, %v3674
        %v3728 = vpack.c.bf16 %v3675, %v3675
        %v3729 = vpack.c.bf16 %v3678, %v3678
        %v3730 = vpack.c.bf16 %v3679, %v3679
        %v3731 = vpack.c.bf16 %v3680, %v3680
        %v3732 = vpack.c.bf16 %v3681, %v3681
        %v3733 = vpack.c.bf16 %v3682, %v3682
        %v3734 = vpack.c.bf16 %v3683, %v3683
        %v3735 = vpack.c.bf16 %v3684, %v3684
        %v3736 = vpack.c.bf16 %v3685, %v3685
        %v3737 = vpack.c.bf16 %v3687, %v3687
        %v3738 = vld [vmem:[%s3567] sm:$0xf]
        %v3739 = vld [vmem:[%s3567 + $0x4] sm:$0xf]
        %v3740 = vld [vmem:[%s3567 + $0x8] sm:$0xf]
        %v3741 = vld [vmem:[%s3567 + $0xc] sm:$0xf]
        %v3742 = vld [vmem:[%s3567 + $0x10] sm:$0xf]
        %v3743 = vld [vmem:[%s3567 + $0x14] sm:$0xf]
        %v3744 = vld [vmem:[%s3567 + $0x18] sm:$0xf]
        %v3745 = vld [vmem:[%s3567 + $0x1c] sm:$0xf]
        %v3746 = vld [vmem:[%s3567 + $0x20] sm:$0xf]
        %v3747 = vld [vmem:[%s3567 + $0x24] sm:$0xf]
        %v3748 = vld [vmem:[%s3567 + $0x28] sm:$0xf]
        %v3749 = vld [vmem:[%s3567 + $0x2c] sm:$0xf]
        %v3750 = vld [vmem:[%s3567 + $0x30] sm:$0xf]
        %v3751 = vld [vmem:[%s3567 + $0x34] sm:$0xf]
        %v3752 = vld [vmem:[%s3567 + $0x38] sm:$0xf]
        %v3753 = vld [vmem:[%s3567 + $0x3c] sm:$0xf]
        %v3754 = vld [vmem:[%s3567 + $0x40] sm:$0xf]
        %v3755 = vld [vmem:[%s3567 + $0x44] sm:$0xf]
        %v3756 = vld [vmem:[%s3567 + $0x48] sm:$0xf]
        %v3757 = vld [vmem:[%s3567 + $0x4c] sm:$0xf]
        %v3758 = vld [vmem:[%s3567 + $0x50] sm:$0xf]
        %v3759 = vld [vmem:[%s3567 + $0x54] sm:$0xf]
        %v3760 = vld [vmem:[%s3567 + $0x58] sm:$0xf]
        %v3761 = vld [vmem:[%s3567 + $0x5c] sm:$0xf]
        %v3762 = vld [vmem:[%s3567 + $0x60] sm:$0xf]
        %v3763 = vld [vmem:[%s3567 + $0x64] sm:$0xf]
        %v3764 = vld [vmem:[%s3567 + $0x68] sm:$0xf]
        %v3765 = vld [vmem:[%s3567 + $0x6c] sm:$0xf]
        %v3766 = vld [vmem:[%s3567 + $0x70] sm:$0xf]
        %v3767 = vld [vmem:[%s3567 + $0x74] sm:$0xf]
        %v3768 = vld [vmem:[%s3567 + $0x78] sm:$0xf]
        %v3769 = vld [vmem:[%s3567 + $0x7c] sm:$0xf]
        %v3770 = vld [vmem:[%s3567 + $0x80] sm:$0xf]
        %v3771 = vld [vmem:[%s3567 + $0x84] sm:$0xf]
        %v3772 = vld [vmem:[%s3567 + $0x88] sm:$0xf]
        %v3773 = vld [vmem:[%s3567 + $0x8c] sm:$0xf]
        %v3774 = vld [vmem:[%s3567 + $0x90] sm:$0xf]
        %v3775 = vld [vmem:[%s3567 + $0x94] sm:$0xf]
        %v3776 = vld [vmem:[%s3567 + $0x98] sm:$0xf]
        %v3777 = vld [vmem:[%s3567 + $0x9c] sm:$0xf]
        %v3778 = vld [vmem:[%s3567 + $0xa0] sm:$0xf]
        %v3779 = vld [vmem:[%s3567 + $0xa4] sm:$0xf]
        %v3780 = vld [vmem:[%s3567 + $0xa8] sm:$0xf]
        %v3781 = vld [vmem:[%s3567 + $0xac] sm:$0xf]
        %v3782 = vld [vmem:[%s3567 + $0xb0] sm:$0xf]
        %v3783 = vld [vmem:[%s3567 + $0xb4] sm:$0xf]
        %v3784 = vld [vmem:[%s3567 + $0xb8] sm:$0xf]
        %v3785 = vld [vmem:[%s3567 + $0xbc] sm:$0xf]
        %v3786 = vld [vmem:[%s3567 + $0xc0] sm:$0xf]
        %v3787 = vld [vmem:[%s3567 + $0xc4] sm:$0xf]
        %v3788 = vld [vmem:[%s3567 + $0xc8] sm:$0xf]
        %v3789 = vld [vmem:[%s3567 + $0xcc] sm:$0xf]
        %v3790 = vld [vmem:[%s3567 + $0xd0] sm:$0xf]
        %v3791 = vld [vmem:[%s3567 + $0xd4] sm:$0xf]
        %v3792 = vld [vmem:[%s3567 + $0xd8] sm:$0xf]
        %v3793 = vld [vmem:[%s3567 + $0xdc] sm:$0xf]
        %v3794 = vld [vmem:[%s3567 + $0xe0] sm:$0xf]
        %v3795 = vld [vmem:[%s3567 + $0xe4] sm:$0xf]
        %v3796 = vld [vmem:[%s3567 + $0xe8] sm:$0xf]
        %v3797 = vld [vmem:[%s3567 + $0xec] sm:$0xf]
        %v3798 = vld [vmem:[%s3567 + $0xf0] sm:$0xf]
        %v3799 = vld [vmem:[%s3567 + $0xf4] sm:$0xf]
        %v3800 = vld [vmem:[%s3567 + $0xf8] sm:$0xf]
        %v3801 = vld [vmem:[%s3567 + $0xfc] sm:$0xf]
        %v3802 = vld [vmem:[%s3567 + $0x100] sm:$0xf]
        %v3803 = vld [vmem:[%s3567 + $0x104] sm:$0xf]
        %v3804 = vld [vmem:[%s3567 + $0x108] sm:$0xf]
        %v3805 = vld [vmem:[%s3567 + $0x10c] sm:$0xf]
        %v3806 = vld [vmem:[%s3567 + $0x110] sm:$0xf]
        %v3807 = vld [vmem:[%s3567 + $0x114] sm:$0xf]
        %v3808 = vld [vmem:[%s3567 + $0x118] sm:$0xf]
        %v3809 = vld [vmem:[%s3567 + $0x11c] sm:$0xf]
        %v3810 = vld [vmem:[%s3567 + $0x120] sm:$0xf]
        %v3811 = vld [vmem:[%s3567 + $0x124] sm:$0xf]
        %v3812 = vld [vmem:[%s3567 + $0x128] sm:$0xf]
        %v3813 = vld [vmem:[%s3567 + $0x12c] sm:$0xf]
        %v3814 = vld [vmem:[%s3567 + $0x130] sm:$0xf]
        %v3815 = vld [vmem:[%s3567 + $0x134] sm:$0xf]
        %v3816 = vld [vmem:[%s3567 + $0x138] sm:$0xf]
        %v3817 = vld [vmem:[%s3567 + $0x13c] sm:$0xf]
        %v3818 = vld [vmem:[%s3567 + $0x140] sm:$0xf]
        %v3819 = vld [vmem:[%s3567 + $0x144] sm:$0xf]
        %v3820 = vld [vmem:[%s3567 + $0x148] sm:$0xf]
        %v3821 = vld [vmem:[%s3567 + $0x14c] sm:$0xf]
        %v3822 = vld [vmem:[%s3567 + $0x150] sm:$0xf]
        %v3823 = vld [vmem:[%s3567 + $0x154] sm:$0xf]
        %v3824 = vld [vmem:[%s3567 + $0x158] sm:$0xf]
        %v3825 = vld [vmem:[%s3567 + $0x15c] sm:$0xf]
        %v3826 = vld [vmem:[%s3567 + $0x160] sm:$0xf]
        %v3827 = vld [vmem:[%s3567 + $0x164] sm:$0xf]
        %v3828 = vld [vmem:[%s3567 + $0x168] sm:$0xf]
        %v3829 = vld [vmem:[%s3567 + $0x16c] sm:$0xf]
        %v3830 = vld [vmem:[%s3567 + $0x170] sm:$0xf]
        %v3831 = vld [vmem:[%s3567 + $0x174] sm:$0xf]
        %v3832 = vld [vmem:[%s3567 + $0x178] sm:$0xf]
        %v3833 = vld [vmem:[%s3567 + $0x17c] sm:$0xf]
        %v3834 = vld [vmem:[%s3567 + $0x180] sm:$0xf]
        %v3835 = vld [vmem:[%s3567 + $0x184] sm:$0xf]
        %v3836 = vld [vmem:[%s3567 + $0x188] sm:$0xf]
        %v3837 = vld [vmem:[%s3567 + $0x18c] sm:$0xf]
        %v3838 = vld [vmem:[%s3567 + $0x190] sm:$0xf]
        %v3839 = vld [vmem:[%s3567 + $0x194] sm:$0xf]
        %v3840 = vld [vmem:[%s3567 + $0x198] sm:$0xf]
        %v3841 = vld [vmem:[%s3567 + $0x19c] sm:$0xf]
        %v3842 = vld [vmem:[%s3567 + $0x1a0] sm:$0xf]
        %v3843 = vld [vmem:[%s3567 + $0x1a4] sm:$0xf]
        %v3844 = vld [vmem:[%s3567 + $0x1a8] sm:$0xf]
        %v3845 = vld [vmem:[%s3567 + $0x1ac] sm:$0xf]
        %v3846 = vld [vmem:[%s3567 + $0x1b0] sm:$0xf]
        %v3847 = vld [vmem:[%s3567 + $0x1b4] sm:$0xf]
        %v3848 = vld [vmem:[%s3567 + $0x1b8] sm:$0xf]
        %v3849 = vld [vmem:[%s3567 + $0x1bc] sm:$0xf]
        %v3850 = vld [vmem:[%s3567 + $0x1c0] sm:$0xf]
        %v3851 = vld [vmem:[%s3567 + $0x1c4] sm:$0xf]
        %v3852 = vld [vmem:[%s3567 + $0x1c8] sm:$0xf]
        %v3853 = vld [vmem:[%s3567 + $0x1cc] sm:$0xf]
        %v3854 = vld [vmem:[%s3567 + $0x1d0] sm:$0xf]
        %v3855 = vld [vmem:[%s3567 + $0x1d4] sm:$0xf]
        %v3856 = vld [vmem:[%s3567 + $0x1d8] sm:$0xf]
        %v3857 = vld [vmem:[%s3567 + $0x1dc] sm:$0xf]
        %v3858 = vld [vmem:[%s3567 + $0x1e0] sm:$0xf]
        %v3859 = vld [vmem:[%s3567 + $0x1e4] sm:$0xf]
        %v3860 = vld [vmem:[%s3567 + $0x1e8] sm:$0xf]
        %v3861 = vld [vmem:[%s3567 + $0x1ec] sm:$0xf]
        %v3862 = vld [vmem:[%s3567 + $0x1f0] sm:$0xf]
        %v3863 = vld [vmem:[%s3567 + $0x1f4] sm:$0xf]
        %v3864 = vld [vmem:[%s3567 + $0x1f8] sm:$0xf]
        %v3865 = vld [vmem:[%s3567 + $0x1fc] sm:$0xf]
        %v3866 = vld [vmem:[%s3567 + $0x200] sm:$0xf]
        %v3867 = vld [vmem:[%s3567 + $0x204] sm:$0xf]
        %v3868 = vld [vmem:[%s3567 + $0x208] sm:$0xf]
        %v3869 = vld [vmem:[%s3567 + $0x20c] sm:$0xf]
        %v3870 = vld [vmem:[%s3567 + $0x210] sm:$0xf]
        %v3871 = vld [vmem:[%s3567 + $0x214] sm:$0xf]
        %v3872 = vld [vmem:[%s3567 + $0x218] sm:$0xf]
        %v3873 = vld [vmem:[%s3567 + $0x21c] sm:$0xf]
        %v3874 = vld [vmem:[%s3567 + $0x220] sm:$0xf]
        %v3875 = vld [vmem:[%s3567 + $0x224] sm:$0xf]
        %v3876 = vld [vmem:[%s3567 + $0x228] sm:$0xf]
        %v3877 = vld [vmem:[%s3567 + $0x22c] sm:$0xf]
        %v3878 = vld [vmem:[%s3567 + $0x230] sm:$0xf]
        %v3879 = vld [vmem:[%s3567 + $0x234] sm:$0xf]
        %v3880 = vld [vmem:[%s3567 + $0x238] sm:$0xf]
        %v3881 = vld [vmem:[%s3567 + $0x23c] sm:$0xf]
        %v3882 = vld [vmem:[%s3567 + $0x240] sm:$0xf]
        %v3883 = vld [vmem:[%s3567 + $0x244] sm:$0xf]
        %v3884 = vld [vmem:[%s3567 + $0x248] sm:$0xf]
        %v3885 = vld [vmem:[%s3567 + $0x24c] sm:$0xf]
        %v3886 = vld [vmem:[%s3567 + $0x250] sm:$0xf]
        %v3887 = vld [vmem:[%s3567 + $0x254] sm:$0xf]
        %v3888 = vld [vmem:[%s3567 + $0x258] sm:$0xf]
        %v3889 = vld [vmem:[%s3567 + $0x25c] sm:$0xf]
        %v3890 = vld [vmem:[%s3567 + $0x260] sm:$0xf]
        %v3891 = vld [vmem:[%s3567 + $0x264] sm:$0xf]
        %v3892 = vld [vmem:[%s3567 + $0x268] sm:$0xf]
        %v3893 = vld [vmem:[%s3567 + $0x26c] sm:$0xf]
        %v3894 = vld [vmem:[%s3567 + $0x270] sm:$0xf]
        %v3895 = vld [vmem:[%s3567 + $0x274] sm:$0xf]
        %v3896 = vld [vmem:[%s3567 + $0x278] sm:$0xf]
        %v3897 = vld [vmem:[%s3567 + $0x27c] sm:$0xf]
        %v3898 = vld [vmem:[%s3567 + $0x280] sm:$0xf]
        %v3899 = vld [vmem:[%s3567 + $0x284] sm:$0xf]
        %v3900 = vld [vmem:[%s3567 + $0x288] sm:$0xf]
        %v3901 = vld [vmem:[%s3567 + $0x28c] sm:$0xf]
        %v3902 = vld [vmem:[%s3567 + $0x290] sm:$0xf]
        %v3903 = vld [vmem:[%s3567 + $0x294] sm:$0xf]
        %v3904 = vld [vmem:[%s3567 + $0x298] sm:$0xf]
        %v3905 = vld [vmem:[%s3567 + $0x29c] sm:$0xf]
        %v3906 = vld [vmem:[%s3567 + $0x2a0] sm:$0xf]
        %v3907 = vld [vmem:[%s3567 + $0x2a4] sm:$0xf]
        %v3908 = vld [vmem:[%s3567 + $0x2a8] sm:$0xf]
        %v3909 = vld [vmem:[%s3567 + $0x2ac] sm:$0xf]
        %v3910 = vld [vmem:[%s3567 + $0x2b0] sm:$0xf]
        %v3911 = vld [vmem:[%s3567 + $0x2b4] sm:$0xf]
        %v3912 = vld [vmem:[%s3567 + $0x2b8] sm:$0xf]
        %v3913 = vld [vmem:[%s3567 + $0x2bc] sm:$0xf]
        %v3914 = vld [vmem:[%s3567 + $0x2c0] sm:$0xf]
        %v3915 = vld [vmem:[%s3567 + $0x2c4] sm:$0xf]
        %v3916 = vld [vmem:[%s3567 + $0x2c8] sm:$0xf]
        %v3917 = vld [vmem:[%s3567 + $0x2cc] sm:$0xf]
        %v3918 = vld [vmem:[%s3567 + $0x2d0] sm:$0xf]
        %v3919 = vld [vmem:[%s3567 + $0x2d4] sm:$0xf]
        %v3920 = vld [vmem:[%s3567 + $0x2d8] sm:$0xf]
        %v3921 = vld [vmem:[%s3567 + $0x2dc] sm:$0xf]
        %v3922 = vld [vmem:[%s3567 + $0x2e0] sm:$0xf]
        %v3923 = vld [vmem:[%s3567 + $0x2e4] sm:$0xf]
        %v3924 = vld [vmem:[%s3567 + $0x2e8] sm:$0xf]
        %v3925 = vld [vmem:[%s3567 + $0x2ec] sm:$0xf]
        %v3926 = vld [vmem:[%s3567 + $0x2f0] sm:$0xf]
        %v3927 = vld [vmem:[%s3567 + $0x2f4] sm:$0xf]
        %v3928 = vld [vmem:[%s3567 + $0x2f8] sm:$0xf]
        %v3929 = vld [vmem:[%s3567 + $0x2fc] sm:$0xf]
        %v3930 = vld [vmem:[%s3567 + $0x300] sm:$0xf]
        %v3931 = vld [vmem:[%s3567 + $0x304] sm:$0xf]
        %v3932 = vld [vmem:[%s3567 + $0x308] sm:$0xf]
        %v3933 = vld [vmem:[%s3567 + $0x30c] sm:$0xf]
        %v3934 = vld [vmem:[%s3567 + $0x310] sm:$0xf]
        %v3935 = vld [vmem:[%s3567 + $0x314] sm:$0xf]
        %v3936 = vld [vmem:[%s3567 + $0x318] sm:$0xf]
        %v3937 = vld [vmem:[%s3567 + $0x31c] sm:$0xf]
        %v3938 = vld [vmem:[%s3567 + $0x320] sm:$0xf]
        %v3939 = vld [vmem:[%s3567 + $0x324] sm:$0xf]
        %v3940 = vld [vmem:[%s3567 + $0x328] sm:$0xf]
        %v3941 = vld [vmem:[%s3567 + $0x32c] sm:$0xf]
        %v3942 = vld [vmem:[%s3567 + $0x330] sm:$0xf]
        %v3943 = vld [vmem:[%s3567 + $0x334] sm:$0xf]
        %v3944 = vld [vmem:[%s3567 + $0x338] sm:$0xf]
        %v3945 = vld [vmem:[%s3567 + $0x33c] sm:$0xf]
        %v3946 = vld [vmem:[%s3567 + $0x340] sm:$0xf]
        %v3947 = vld [vmem:[%s3567 + $0x344] sm:$0xf]
        %v3948 = vld [vmem:[%s3567 + $0x348] sm:$0xf]
        %v3949 = vld [vmem:[%s3567 + $0x34c] sm:$0xf]
        %v3950 = vld [vmem:[%s3567 + $0x350] sm:$0xf]
        %v3951 = vld [vmem:[%s3567 + $0x354] sm:$0xf]
        %v3952 = vld [vmem:[%s3567 + $0x358] sm:$0xf]
        %v3953 = vld [vmem:[%s3567 + $0x35c] sm:$0xf]
        %v3954 = vld [vmem:[%s3567 + $0x360] sm:$0xf]
        %v3955 = vld [vmem:[%s3567 + $0x364] sm:$0xf]
        %v3956 = vld [vmem:[%s3567 + $0x368] sm:$0xf]
        %v3957 = vld [vmem:[%s3567 + $0x36c] sm:$0xf]
        %v3958 = vld [vmem:[%s3567 + $0x370] sm:$0xf]
        %v3959 = vld [vmem:[%s3567 + $0x374] sm:$0xf]
        %v3960 = vld [vmem:[%s3567 + $0x378] sm:$0xf]
        %v3961 = vld [vmem:[%s3567 + $0x37c] sm:$0xf]
        %v3962 = vld [vmem:[%s3567 + $0x380] sm:$0xf]
        %v3963 = vld [vmem:[%s3567 + $0x384] sm:$0xf]
        %v3964 = vld [vmem:[%s3567 + $0x388] sm:$0xf]
        %v3965 = vld [vmem:[%s3567 + $0x38c] sm:$0xf]
        %v3966 = vld [vmem:[%s3567 + $0x390] sm:$0xf]
        %v3967 = vld [vmem:[%s3567 + $0x394] sm:$0xf]
        %v3968 = vld [vmem:[%s3567 + $0x398] sm:$0xf]
        %v3969 = vld [vmem:[%s3567 + $0x39c] sm:$0xf]
        %v3970 = vld [vmem:[%s3567 + $0x3a0] sm:$0xf]
        %v3971 = vld [vmem:[%s3567 + $0x3a4] sm:$0xf]
        %v3972 = vld [vmem:[%s3567 + $0x3a8] sm:$0xf]
        %v3973 = vld [vmem:[%s3567 + $0x3ac] sm:$0xf]
        %v3974 = vld [vmem:[%s3567 + $0x3b0] sm:$0xf]
        %v3975 = vld [vmem:[%s3567 + $0x3b4] sm:$0xf]
        %v3976 = vld [vmem:[%s3567 + $0x3b8] sm:$0xf]
        %v3977 = vld [vmem:[%s3567 + $0x3bc] sm:$0xf]
        %v3978 = vld [vmem:[%s3567 + $0x3c0] sm:$0xf]
        %v3979 = vld [vmem:[%s3567 + $0x3c4] sm:$0xf]
        %v3980 = vld [vmem:[%s3567 + $0x3c8] sm:$0xf]
        %v3981 = vld [vmem:[%s3567 + $0x3cc] sm:$0xf]
        %v3982 = vld [vmem:[%s3567 + $0x3d0] sm:$0xf]
        %v3983 = vld [vmem:[%s3567 + $0x3d4] sm:$0xf]
        %v3984 = vld [vmem:[%s3567 + $0x3d8] sm:$0xf]
        %v3985 = vld [vmem:[%s3567 + $0x3dc] sm:$0xf]
        %v3986 = vld [vmem:[%s3567 + $0x3e0] sm:$0xf]
        %v3987 = vld [vmem:[%s3567 + $0x3e4] sm:$0xf]
        %v3988 = vld [vmem:[%s3567 + $0x3e8] sm:$0xf]
        %v3989 = vld [vmem:[%s3567 + $0x3ec] sm:$0xf]
        %v3990 = vld [vmem:[%s3567 + $0x3f0] sm:$0xf]
        %v3991 = vld [vmem:[%s3567 + $0x3f4] sm:$0xf]
        %v3992 = vld [vmem:[%s3567 + $0x3f8] sm:$0xf]
        %v3993 = vld [vmem:[%s3567 + $0x3fc] sm:$0xf]
        %v3994 = vld [vmem:[%s3567 + $0x400] sm:$0xf]
        %v3995 = vld [vmem:[%s3567 + $0x404] sm:$0xf]
        %v3996 = vld [vmem:[%s3567 + $0x408] sm:$0xf]
        %v3997 = vld [vmem:[%s3567 + $0x40c] sm:$0xf]
        %v3998 = vld [vmem:[%s3567 + $0x410] sm:$0xf]
        %v3999 = vld [vmem:[%s3567 + $0x414] sm:$0xf]
        %v4000 = vld [vmem:[%s3567 + $0x418] sm:$0xf]
        %v4001 = vld [vmem:[%s3567 + $0x41c] sm:$0xf]
        %v4002 = vld [vmem:[%s3567 + $0x420] sm:$0xf]
        %v4003 = vld [vmem:[%s3567 + $0x424] sm:$0xf]
        %v4004 = vld [vmem:[%s3567 + $0x428] sm:$0xf]
        %v4005 = vld [vmem:[%s3567 + $0x42c] sm:$0xf]
        %v4006 = vld [vmem:[%s3567 + $0x430] sm:$0xf]
        %v4007 = vld [vmem:[%s3567 + $0x434] sm:$0xf]
        %v4008 = vld [vmem:[%s3567 + $0x438] sm:$0xf]
        %v4009 = vld [vmem:[%s3567 + $0x43c] sm:$0xf]
        %v4010 = vld [vmem:[%s3567 + $0x440] sm:$0xf]
        %v4011 = vld [vmem:[%s3567 + $0x444] sm:$0xf]
        %v4012 = vld [vmem:[%s3567 + $0x448] sm:$0xf]
        %v4013 = vld [vmem:[%s3567 + $0x44c] sm:$0xf]
        %v4014 = vld [vmem:[%s3567 + $0x450] sm:$0xf]
        %v4015 = vld [vmem:[%s3567 + $0x454] sm:$0xf]
        %v4016 = vld [vmem:[%s3567 + $0x458] sm:$0xf]
        %v4017 = vld [vmem:[%s3567 + $0x45c] sm:$0xf]
        %v4018 = vld [vmem:[%s3567 + $0x460] sm:$0xf]
        %v4019 = vld [vmem:[%s3567 + $0x464] sm:$0xf]
        %v4020 = vld [vmem:[%s3567 + $0x468] sm:$0xf]
        %v4021 = vld [vmem:[%s3567 + $0x46c] sm:$0xf]
        %v4022 = vld [vmem:[%s3567 + $0x470] sm:$0xf]
        %v4023 = vld [vmem:[%s3567 + $0x474] sm:$0xf]
        %v4024 = vld [vmem:[%s3567 + $0x478] sm:$0xf]
        %v4025 = vld [vmem:[%s3567 + $0x47c] sm:$0xf]
        %v4026 = vld [vmem:[%s3567 + $0x480] sm:$0xf]
        %v4027 = vld [vmem:[%s3567 + $0x484] sm:$0xf]
        %v4028 = vld [vmem:[%s3567 + $0x488] sm:$0xf]
        %v4029 = vld [vmem:[%s3567 + $0x48c] sm:$0xf]
        %v4030 = vld [vmem:[%s3567 + $0x490] sm:$0xf]
        %v4031 = vld [vmem:[%s3567 + $0x494] sm:$0xf]
        %v4032 = vld [vmem:[%s3567 + $0x498] sm:$0xf]
        %v4033 = vld [vmem:[%s3567 + $0x49c] sm:$0xf]
        %v4034 = vld [vmem:[%s3567 + $0x4a0] sm:$0xf]
        %v4035 = vld [vmem:[%s3567 + $0x4a4] sm:$0xf]
        %v4036 = vld [vmem:[%s3567 + $0x4a8] sm:$0xf]
        %v4037 = vld [vmem:[%s3567 + $0x4ac] sm:$0xf]
        %v4038 = vld [vmem:[%s3567 + $0x4b0] sm:$0xf]
        %v4039 = vld [vmem:[%s3567 + $0x4b4] sm:$0xf]
        %v4040 = vld [vmem:[%s3567 + $0x4b8] sm:$0xf]
        %v4041 = vld [vmem:[%s3567 + $0x4bc] sm:$0xf]
        %v4042 = vld [vmem:[%s3567 + $0x4c0] sm:$0xf]
        %v4043 = vld [vmem:[%s3567 + $0x4c4] sm:$0xf]
        %v4044 = vld [vmem:[%s3567 + $0x4c8] sm:$0xf]
        %v4045 = vld [vmem:[%s3567 + $0x4cc] sm:$0xf]
        %v4046 = vld [vmem:[%s3567 + $0x4d0] sm:$0xf]
        %v4047 = vld [vmem:[%s3567 + $0x4d4] sm:$0xf]
        %v4048 = vld [vmem:[%s3567 + $0x4d8] sm:$0xf]
        %v4049 = vld [vmem:[%s3567 + $0x4dc] sm:$0xf]
        %v4050 = vld [vmem:[%s3567 + $0x4e0] sm:$0xf]
        %v4051 = vld [vmem:[%s3567 + $0x4e4] sm:$0xf]
        %v4052 = vld [vmem:[%s3567 + $0x4e8] sm:$0xf]
        %v4053 = vld [vmem:[%s3567 + $0x4ec] sm:$0xf]
        %v4054 = vld [vmem:[%s3567 + $0x4f0] sm:$0xf]
        %v4055 = vld [vmem:[%s3567 + $0x4f4] sm:$0xf]
        %v4056 = vld [vmem:[%s3567 + $0x4f8] sm:$0xf]
        %v4057 = vld [vmem:[%s3567 + $0x4fc] sm:$0xf]
        %v4058 = vld [vmem:[%s3567 + $0x500] sm:$0xf]
        %v4059 = vld [vmem:[%s3567 + $0x504] sm:$0xf]
        %v4060 = vld [vmem:[%s3567 + $0x508] sm:$0xf]
        %v4061 = vld [vmem:[%s3567 + $0x50c] sm:$0xf]
        %v4062 = vld [vmem:[%s3567 + $0x510] sm:$0xf]
        %v4063 = vld [vmem:[%s3567 + $0x514] sm:$0xf]
        %v4064 = vld [vmem:[%s3567 + $0x518] sm:$0xf]
        %v4065 = vld [vmem:[%s3567 + $0x51c] sm:$0xf]
        %v4066 = vld [vmem:[%s3567 + $0x520] sm:$0xf]
        %v4067 = vld [vmem:[%s3567 + $0x524] sm:$0xf]
        %v4068 = vld [vmem:[%s3567 + $0x528] sm:$0xf]
        %v4069 = vld [vmem:[%s3567 + $0x52c] sm:$0xf]
        %v4070 = vld [vmem:[%s3567 + $0x530] sm:$0xf]
        %v4071 = vld [vmem:[%s3567 + $0x534] sm:$0xf]
        %v4072 = vld [vmem:[%s3567 + $0x538] sm:$0xf]
        %v4073 = vld [vmem:[%s3567 + $0x53c] sm:$0xf]
        %v4074 = vld [vmem:[%s3567 + $0x540] sm:$0xf]
        %v4075 = vld [vmem:[%s3567 + $0x544] sm:$0xf]
        %v4076 = vld [vmem:[%s3567 + $0x548] sm:$0xf]
        %v4077 = vld [vmem:[%s3567 + $0x54c] sm:$0xf]
        %v4078 = vld [vmem:[%s3567 + $0x550] sm:$0xf]
        %v4079 = vld [vmem:[%s3567 + $0x554] sm:$0xf]
        %v4080 = vld [vmem:[%s3567 + $0x558] sm:$0xf]
        %v4081 = vld [vmem:[%s3567 + $0x55c] sm:$0xf]
        %v4082 = vld [vmem:[%s3567 + $0x560] sm:$0xf]
        %v4083 = vld [vmem:[%s3567 + $0x564] sm:$0xf]
        %v4084 = vld [vmem:[%s3567 + $0x568] sm:$0xf]
        %v4085 = vld [vmem:[%s3567 + $0x56c] sm:$0xf]
        %v4086 = vld [vmem:[%s3567 + $0x570] sm:$0xf]
        %v4087 = vld [vmem:[%s3567 + $0x574] sm:$0xf]
        %v4088 = vld [vmem:[%s3567 + $0x578] sm:$0xf]
        %v4089 = vld [vmem:[%s3567 + $0x57c] sm:$0xf]
        %v4090 = vld [vmem:[%s3567 + $0x580] sm:$0xf]
        %v4091 = vld [vmem:[%s3567 + $0x584] sm:$0xf]
        %v4092 = vld [vmem:[%s3567 + $0x588] sm:$0xf]
        %v4093 = vld [vmem:[%s3567 + $0x58c] sm:$0xf]
        %v4094 = vld [vmem:[%s3567 + $0x590] sm:$0xf]
        %v4095 = vld [vmem:[%s3567 + $0x594] sm:$0xf]
        %v4096 = vld [vmem:[%s3567 + $0x598] sm:$0xf]
        %v4097 = vld [vmem:[%s3567 + $0x59c] sm:$0xf]
        %v4098 = vld [vmem:[%s3567 + $0x5a0] sm:$0xf]
        %v4099 = vld [vmem:[%s3567 + $0x5a4] sm:$0xf]
        %v4100 = vld [vmem:[%s3567 + $0x5a8] sm:$0xf]
        %v4101 = vld [vmem:[%s3567 + $0x5ac] sm:$0xf]
        %v4102 = vld [vmem:[%s3567 + $0x5b0] sm:$0xf]
        %v4103 = vld [vmem:[%s3567 + $0x5b4] sm:$0xf]
        %v4104 = vld [vmem:[%s3567 + $0x5b8] sm:$0xf]
        %v4105 = vld [vmem:[%s3567 + $0x5bc] sm:$0xf]
        %v4106 = vld [vmem:[%s3567 + $0x5c0] sm:$0xf]
        %v4107 = vld [vmem:[%s3567 + $0x5c4] sm:$0xf]
        %v4108 = vld [vmem:[%s3567 + $0x5c8] sm:$0xf]
        %v4109 = vld [vmem:[%s3567 + $0x5cc] sm:$0xf]
        %v4110 = vld [vmem:[%s3567 + $0x5d0] sm:$0xf]
        %v4111 = vld [vmem:[%s3567 + $0x5d4] sm:$0xf]
        %v4112 = vld [vmem:[%s3567 + $0x5d8] sm:$0xf]
        %v4113 = vld [vmem:[%s3567 + $0x5dc] sm:$0xf]
        %v4114 = vld [vmem:[%s3567 + $0x5e0] sm:$0xf]
        %v4115 = vld [vmem:[%s3567 + $0x5e4] sm:$0xf]
        %v4116 = vld [vmem:[%s3567 + $0x5e8] sm:$0xf]
        %v4117 = vld [vmem:[%s3567 + $0x5ec] sm:$0xf]
        %v4118 = vld [vmem:[%s3567 + $0x5f0] sm:$0xf]
        %v4119 = vld [vmem:[%s3567 + $0x5f4] sm:$0xf]
        %v4120 = vld [vmem:[%s3567 + $0x5f8] sm:$0xf]
        %v4121 = vld [vmem:[%s3567 + $0x5fc] sm:$0xf]
        %v4122 = vld [vmem:[%s3567 + $0x600] sm:$0xf]
        %v4123 = vld [vmem:[%s3567 + $0x604] sm:$0xf]
        %v4124 = vld [vmem:[%s3567 + $0x608] sm:$0xf]
        %v4125 = vld [vmem:[%s3567 + $0x60c] sm:$0xf]
        %v4126 = vld [vmem:[%s3567 + $0x610] sm:$0xf]
        %v4127 = vld [vmem:[%s3567 + $0x614] sm:$0xf]
        %v4128 = vld [vmem:[%s3567 + $0x618] sm:$0xf]
        %v4129 = vld [vmem:[%s3567 + $0x61c] sm:$0xf]
        %v4130 = vpack.c.bf16 %v3640, %v3640
        %v4131 = vld [vmem:[%s3574] sm:$0xf]
        %v4132 = vld [vmem:[%s3574 + $0x4] sm:$0x1]
        %v4135 = vunpack.c.l.b16 %v4131
        %v4136 = vunpack.c.l.b16 %v4132
        %v4137 = vpack.c.b16 %v4136, %v4135
        %vm4138 = vcmask 80896
        %v4140 = vsel %vm4138, %v4130, 0
        %vm4142 = vcmask 1044480
        %v4144 = vsel %vm4142, %v4137, 0
        %4146 = vmatpush.bf16.msra.mxu0 0
        %4147 = vmatpush.bf16.msra.mxu0 0
        %4148 = vmatpush.bf16.msra.mxu0 0
        %4149 = vmatpush.bf16.msra.mxu0 0
        %4150 = vmatpush.bf16.msra.mxu0 0
        %4151 = vmatpush.bf16.msra.mxu0 0
        %4152 = vmatpush.bf16.msra.mxu0 0
        %4153 = vmatpush.bf16.msra.mxu0 %v4144
        %4154 = vmatmul.bf16.gmra.mxu0 %v4140
        %v4155 = vpop.f32.mrf.mxu0
        %v4156 = vadd.f32 0.0, %v4155
        %v4157 = vpop.f32.mrf.mxu0
        %4158 = vdwg.mxu0
        %v4551 = vunpack.c.l.b16 %v3738
        %v4552 = vunpack.c.l.b16 %v3739
        %v4553 = vunpack.c.l.b16 %v3740
        %v4554 = vunpack.c.l.b16 %v3741
        %v4555 = vunpack.c.l.b16 %v3742
        %v4556 = vunpack.c.l.b16 %v3743
        %v4557 = vunpack.c.l.b16 %v3744
        %v4558 = vunpack.c.l.b16 %v3745
        %v4559 = vunpack.c.l.b16 %v3746
        %v4560 = vunpack.c.l.b16 %v3747
        %v4561 = vunpack.c.l.b16 %v3748
        %v4562 = vunpack.c.l.b16 %v3749
        %v4563 = vunpack.c.l.b16 %v3750
        %v4564 = vunpack.c.l.b16 %v3751
        %v4565 = vunpack.c.l.b16 %v3752
        %v4566 = vunpack.c.l.b16 %v3753
        %v4567 = vunpack.c.l.b16 %v3754
        %v4568 = vunpack.c.l.b16 %v3755
        %v4569 = vunpack.c.l.b16 %v3756
        %v4570 = vunpack.c.l.b16 %v3757
        %v4571 = vunpack.c.l.b16 %v3758
        %v4572 = vunpack.c.l.b16 %v3759
        %v4573 = vunpack.c.l.b16 %v3760
        %v4574 = vunpack.c.l.b16 %v3761
        %v4575 = vunpack.c.l.b16 %v3762
        %v4576 = vunpack.c.l.b16 %v3763
        %v4577 = vunpack.c.l.b16 %v3764
        %v4578 = vunpack.c.l.b16 %v3765
        %v4579 = vunpack.c.l.b16 %v3766
        %v4580 = vunpack.c.l.b16 %v3767
        %v4581 = vunpack.c.l.b16 %v3768
        %v4582 = vunpack.c.l.b16 %v3769
        %v4583 = vunpack.c.l.b16 %v3770
        %v4584 = vunpack.c.l.b16 %v3771
        %v4585 = vunpack.c.l.b16 %v3772
        %v4586 = vunpack.c.l.b16 %v3773
        %v4587 = vunpack.c.l.b16 %v3774
        %v4588 = vunpack.c.l.b16 %v3775
        %v4589 = vunpack.c.l.b16 %v3776
        %v4590 = vunpack.c.l.b16 %v3777
        %v4591 = vunpack.c.l.b16 %v3778
        %v4592 = vunpack.c.l.b16 %v3779
        %v4593 = vunpack.c.l.b16 %v3780
        %v4594 = vunpack.c.l.b16 %v3781
        %v4595 = vunpack.c.l.b16 %v3782
        %v4596 = vunpack.c.l.b16 %v3783
        %v4597 = vunpack.c.l.b16 %v3784
        %v4598 = vunpack.c.l.b16 %v3785
        %v4599 = vunpack.c.l.b16 %v3786
        %v4600 = vunpack.c.l.b16 %v3787
        %v4601 = vunpack.c.l.b16 %v3788
        %v4602 = vunpack.c.l.b16 %v3789
        %v4603 = vunpack.c.l.b16 %v3790
        %v4604 = vunpack.c.l.b16 %v3791
        %v4605 = vunpack.c.l.b16 %v3792
        %v4606 = vunpack.c.l.b16 %v3793
        %v4607 = vunpack.c.l.b16 %v3794
        %v4608 = vunpack.c.l.b16 %v3795
        %v4609 = vunpack.c.l.b16 %v3796
        %v4610 = vunpack.c.l.b16 %v3797
        %v4611 = vunpack.c.l.b16 %v3798
        %v4612 = vunpack.c.l.b16 %v3799
        %v4613 = vunpack.c.l.b16 %v3800
        %v4614 = vunpack.c.l.b16 %v3801
        %v4615 = vunpack.c.l.b16 %v3802
        %v4616 = vunpack.c.l.b16 %v3803
        %v4617 = vunpack.c.l.b16 %v3804
        %v4618 = vunpack.c.l.b16 %v3805
        %v4619 = vunpack.c.l.b16 %v3806
        %v4620 = vunpack.c.l.b16 %v3807
        %v4621 = vunpack.c.l.b16 %v3808
        %v4622 = vunpack.c.l.b16 %v3809
        %v4623 = vunpack.c.l.b16 %v3810
        %v4624 = vunpack.c.l.b16 %v3811
        %v4625 = vunpack.c.l.b16 %v3812
        %v4626 = vunpack.c.l.b16 %v3813
        %v4627 = vunpack.c.l.b16 %v3814
        %v4628 = vunpack.c.l.b16 %v3815
        %v4629 = vunpack.c.l.b16 %v3816
        %v4630 = vunpack.c.l.b16 %v3817
        %v4631 = vunpack.c.l.b16 %v3818
        %v4632 = vunpack.c.l.b16 %v3819
        %v4633 = vunpack.c.l.b16 %v3820
        %v4634 = vunpack.c.l.b16 %v3821
        %v4635 = vunpack.c.l.b16 %v3822
        %v4636 = vunpack.c.l.b16 %v3823
        %v4637 = vunpack.c.l.b16 %v3824
        %v4638 = vunpack.c.l.b16 %v3825
        %v4639 = vunpack.c.l.b16 %v3826
        %v4640 = vunpack.c.l.b16 %v3827
        %v4641 = vunpack.c.l.b16 %v3828
        %v4642 = vunpack.c.l.b16 %v3829
        %v4643 = vunpack.c.l.b16 %v3830
        %v4644 = vunpack.c.l.b16 %v3831
        %v4645 = vunpack.c.l.b16 %v3832
        %v4646 = vunpack.c.l.b16 %v3833
        %v4647 = vunpack.c.l.b16 %v3834
        %v4648 = vunpack.c.l.b16 %v3835
        %v4649 = vunpack.c.l.b16 %v3836
        %v4650 = vunpack.c.l.b16 %v3837
        %v4651 = vunpack.c.l.b16 %v3838
        %v4652 = vunpack.c.l.b16 %v3839
        %v4653 = vunpack.c.l.b16 %v3840
        %v4654 = vunpack.c.l.b16 %v3841
        %v4655 = vunpack.c.l.b16 %v3842
        %v4656 = vunpack.c.l.b16 %v3843
        %v4657 = vunpack.c.l.b16 %v3844
        %v4658 = vunpack.c.l.b16 %v3845
        %v4659 = vunpack.c.l.b16 %v3846
        %v4660 = vunpack.c.l.b16 %v3847
        %v4661 = vunpack.c.l.b16 %v3848
        %v4662 = vunpack.c.l.b16 %v3849
        %v4663 = vunpack.c.l.b16 %v3850
        %v4664 = vunpack.c.l.b16 %v3851
        %v4665 = vunpack.c.l.b16 %v3852
        %v4666 = vunpack.c.l.b16 %v3853
        %v4667 = vunpack.c.l.b16 %v3854
        %v4668 = vunpack.c.l.b16 %v3855
        %v4669 = vunpack.c.l.b16 %v3856
        %v4670 = vunpack.c.l.b16 %v3857
        %v4671 = vunpack.c.l.b16 %v3858
        %v4672 = vunpack.c.l.b16 %v3859
        %v4673 = vunpack.c.l.b16 %v3860
        %v4674 = vunpack.c.l.b16 %v3861
        %v4675 = vunpack.c.l.b16 %v3862
        %v4676 = vunpack.c.l.b16 %v3863
        %v4677 = vunpack.c.l.b16 %v3864
        %v4678 = vunpack.c.l.b16 %v3865
        %v4679 = vunpack.c.l.b16 %v3866
        %v4680 = vunpack.c.l.b16 %v3867
        %v4681 = vunpack.c.l.b16 %v3868
        %v4682 = vunpack.c.l.b16 %v3869
        %v4683 = vunpack.c.l.b16 %v3870
        %v4684 = vunpack.c.l.b16 %v3871
        %v4685 = vunpack.c.l.b16 %v3872
        %v4686 = vunpack.c.l.b16 %v3873
        %v4687 = vunpack.c.l.b16 %v3874
        %v4688 = vunpack.c.l.b16 %v3875
        %v4689 = vunpack.c.l.b16 %v3876
        %v4690 = vunpack.c.l.b16 %v3877
        %v4691 = vunpack.c.l.b16 %v3878
        %v4692 = vunpack.c.l.b16 %v3879
        %v4693 = vunpack.c.l.b16 %v3880
        %v4694 = vunpack.c.l.b16 %v3881
        %v4695 = vunpack.c.l.b16 %v3882
        %v4696 = vunpack.c.l.b16 %v3883
        %v4697 = vunpack.c.l.b16 %v3884
        %v4698 = vunpack.c.l.b16 %v3885
        %v4699 = vunpack.c.l.b16 %v3886
        %v4700 = vunpack.c.l.b16 %v3887
        %v4701 = vunpack.c.l.b16 %v3888
        %v4702 = vunpack.c.l.b16 %v3889
        %v4703 = vunpack.c.l.b16 %v3890
        %v4704 = vunpack.c.l.b16 %v3891
        %v4705 = vunpack.c.l.b16 %v3892
        %v4706 = vunpack.c.l.b16 %v3893
        %v4707 = vunpack.c.l.b16 %v3894
        %v4708 = vunpack.c.l.b16 %v3895
        %v4709 = vunpack.c.l.b16 %v3896
        %v4710 = vunpack.c.l.b16 %v3897
        %v4711 = vunpack.c.l.b16 %v3898
        %v4712 = vunpack.c.l.b16 %v3899
        %v4713 = vunpack.c.l.b16 %v3900
        %v4714 = vunpack.c.l.b16 %v3901
        %v4715 = vunpack.c.l.b16 %v3902
        %v4716 = vunpack.c.l.b16 %v3903
        %v4717 = vunpack.c.l.b16 %v3904
        %v4718 = vunpack.c.l.b16 %v3905
        %v4719 = vunpack.c.l.b16 %v3906
        %v4720 = vunpack.c.l.b16 %v3907
        %v4721 = vunpack.c.l.b16 %v3908
        %v4722 = vunpack.c.l.b16 %v3909
        %v4723 = vunpack.c.l.b16 %v3910
        %v4724 = vunpack.c.l.b16 %v3911
        %v4725 = vunpack.c.l.b16 %v3912
        %v4726 = vunpack.c.l.b16 %v3913
        %v4727 = vunpack.c.l.b16 %v3914
        %v4728 = vunpack.c.l.b16 %v3915
        %v4729 = vunpack.c.l.b16 %v3916
        %v4730 = vunpack.c.l.b16 %v3917
        %v4731 = vunpack.c.l.b16 %v3918
        %v4732 = vunpack.c.l.b16 %v3919
        %v4733 = vunpack.c.l.b16 %v3920
        %v4734 = vunpack.c.l.b16 %v3921
        %v4735 = vunpack.c.l.b16 %v3922
        %v4736 = vunpack.c.l.b16 %v3923
        %v4737 = vunpack.c.l.b16 %v3924
        %v4738 = vunpack.c.l.b16 %v3925
        %v4739 = vunpack.c.l.b16 %v3926
        %v4740 = vunpack.c.l.b16 %v3927
        %v4741 = vunpack.c.l.b16 %v3928
        %v4742 = vunpack.c.l.b16 %v3929
        %v4743 = vunpack.c.l.b16 %v3930
        %v4744 = vunpack.c.l.b16 %v3931
        %v4745 = vunpack.c.l.b16 %v3932
        %v4746 = vunpack.c.l.b16 %v3933
        %v4747 = vunpack.c.l.b16 %v3934
        %v4748 = vunpack.c.l.b16 %v3935
        %v4749 = vunpack.c.l.b16 %v3936
        %v4750 = vunpack.c.l.b16 %v3937
        %v4751 = vunpack.c.l.b16 %v3938
        %v4752 = vunpack.c.l.b16 %v3939
        %v4753 = vunpack.c.l.b16 %v3940
        %v4754 = vunpack.c.l.b16 %v3941
        %v4755 = vunpack.c.l.b16 %v3942
        %v4756 = vunpack.c.l.b16 %v3943
        %v4757 = vunpack.c.l.b16 %v3944
        %v4758 = vunpack.c.l.b16 %v3945
        %v4759 = vunpack.c.l.b16 %v3946
        %v4760 = vunpack.c.l.b16 %v3947
        %v4761 = vunpack.c.l.b16 %v3948
        %v4762 = vunpack.c.l.b16 %v3949
        %v4763 = vunpack.c.l.b16 %v3950
        %v4764 = vunpack.c.l.b16 %v3951
        %v4765 = vunpack.c.l.b16 %v3952
        %v4766 = vunpack.c.l.b16 %v3953
        %v4767 = vunpack.c.l.b16 %v3954
        %v4768 = vunpack.c.l.b16 %v3955
        %v4769 = vunpack.c.l.b16 %v3956
        %v4770 = vunpack.c.l.b16 %v3957
        %v4771 = vunpack.c.l.b16 %v3958
        %v4772 = vunpack.c.l.b16 %v3959
        %v4773 = vunpack.c.l.b16 %v3960
        %v4774 = vunpack.c.l.b16 %v3961
        %v4775 = vunpack.c.l.b16 %v3962
        %v4776 = vunpack.c.l.b16 %v3963
        %v4777 = vunpack.c.l.b16 %v3964
        %v4778 = vunpack.c.l.b16 %v3965
        %v4779 = vunpack.c.l.b16 %v3966
        %v4780 = vunpack.c.l.b16 %v3967
        %v4781 = vunpack.c.l.b16 %v3968
        %v4782 = vunpack.c.l.b16 %v3969
        %v4783 = vunpack.c.l.b16 %v3970
        %v4784 = vunpack.c.l.b16 %v3971
        %v4785 = vunpack.c.l.b16 %v3972
        %v4786 = vunpack.c.l.b16 %v3973
        %v4787 = vunpack.c.l.b16 %v3974
        %v4788 = vunpack.c.l.b16 %v3975
        %v4789 = vunpack.c.l.b16 %v3976
        %v4790 = vunpack.c.l.b16 %v3977
        %v4791 = vunpack.c.l.b16 %v3978
        %v4792 = vunpack.c.l.b16 %v3979
        %v4793 = vunpack.c.l.b16 %v3980
        %v4794 = vunpack.c.l.b16 %v3981
        %v4795 = vunpack.c.l.b16 %v3982
        %v4796 = vunpack.c.l.b16 %v3983
        %v4797 = vunpack.c.l.b16 %v3984
        %v4798 = vunpack.c.l.b16 %v3985
        %v4799 = vunpack.c.l.b16 %v3986
        %v4800 = vunpack.c.l.b16 %v3987
        %v4801 = vunpack.c.l.b16 %v3988
        %v4802 = vunpack.c.l.b16 %v3989
        %v4803 = vunpack.c.l.b16 %v3990
        %v4804 = vunpack.c.l.b16 %v3991
        %v4805 = vunpack.c.l.b16 %v3992
        %v4806 = vunpack.c.l.b16 %v3993
        %v4807 = vunpack.c.l.b16 %v3994
        %v4808 = vunpack.c.l.b16 %v3995
        %v4809 = vunpack.c.l.b16 %v3996
        %v4810 = vunpack.c.l.b16 %v3997
        %v4811 = vunpack.c.l.b16 %v3998
        %v4812 = vunpack.c.l.b16 %v3999
        %v4813 = vunpack.c.l.b16 %v4000
        %v4814 = vunpack.c.l.b16 %v4001
        %v4815 = vunpack.c.l.b16 %v4002
        %v4816 = vunpack.c.l.b16 %v4003
        %v4817 = vunpack.c.l.b16 %v4004
        %v4818 = vunpack.c.l.b16 %v4005
        %v4819 = vunpack.c.l.b16 %v4006
        %v4820 = vunpack.c.l.b16 %v4007
        %v4821 = vunpack.c.l.b16 %v4008
        %v4822 = vunpack.c.l.b16 %v4009
        %v4823 = vunpack.c.l.b16 %v4010
        %v4824 = vunpack.c.l.b16 %v4011
        %v4825 = vunpack.c.l.b16 %v4012
        %v4826 = vunpack.c.l.b16 %v4013
        %v4827 = vunpack.c.l.b16 %v4014
        %v4828 = vunpack.c.l.b16 %v4015
        %v4829 = vunpack.c.l.b16 %v4016
        %v4830 = vunpack.c.l.b16 %v4017
        %v4831 = vunpack.c.l.b16 %v4018
        %v4832 = vunpack.c.l.b16 %v4019
        %v4833 = vunpack.c.l.b16 %v4020
        %v4834 = vunpack.c.l.b16 %v4021
        %v4835 = vunpack.c.l.b16 %v4022
        %v4836 = vunpack.c.l.b16 %v4023
        %v4837 = vunpack.c.l.b16 %v4024
        %v4838 = vunpack.c.l.b16 %v4025
        %v4839 = vunpack.c.l.b16 %v4026
        %v4840 = vunpack.c.l.b16 %v4027
        %v4841 = vunpack.c.l.b16 %v4028
        %v4842 = vunpack.c.l.b16 %v4029
        %v4843 = vunpack.c.l.b16 %v4030
        %v4844 = vunpack.c.l.b16 %v4031
        %v4845 = vunpack.c.l.b16 %v4032
        %v4846 = vunpack.c.l.b16 %v4033
        %v4847 = vunpack.c.l.b16 %v4034
        %v4848 = vunpack.c.l.b16 %v4035
        %v4849 = vunpack.c.l.b16 %v4036
        %v4850 = vunpack.c.l.b16 %v4037
        %v4851 = vunpack.c.l.b16 %v4038
        %v4852 = vunpack.c.l.b16 %v4039
        %v4853 = vunpack.c.l.b16 %v4040
        %v4854 = vunpack.c.l.b16 %v4041
        %v4855 = vunpack.c.l.b16 %v4042
        %v4856 = vunpack.c.l.b16 %v4043
        %v4857 = vunpack.c.l.b16 %v4044
        %v4858 = vunpack.c.l.b16 %v4045
        %v4859 = vunpack.c.l.b16 %v4046
        %v4860 = vunpack.c.l.b16 %v4047
        %v4861 = vunpack.c.l.b16 %v4048
        %v4862 = vunpack.c.l.b16 %v4049
        %v4863 = vunpack.c.l.b16 %v4050
        %v4864 = vunpack.c.l.b16 %v4051
        %v4865 = vunpack.c.l.b16 %v4052
        %v4866 = vunpack.c.l.b16 %v4053
        %v4867 = vunpack.c.l.b16 %v4054
        %v4868 = vunpack.c.l.b16 %v4055
        %v4869 = vunpack.c.l.b16 %v4056
        %v4870 = vunpack.c.l.b16 %v4057
        %v4871 = vunpack.c.l.b16 %v4058
        %v4872 = vunpack.c.l.b16 %v4059
        %v4873 = vunpack.c.l.b16 %v4060
        %v4874 = vunpack.c.l.b16 %v4061
        %v4875 = vunpack.c.l.b16 %v4062
        %v4876 = vunpack.c.l.b16 %v4063
        %v4877 = vunpack.c.l.b16 %v4064
        %v4878 = vunpack.c.l.b16 %v4065
        %v4879 = vunpack.c.l.b16 %v4066
        %v4880 = vunpack.c.l.b16 %v4067
        %v4881 = vunpack.c.l.b16 %v4068
        %v4882 = vunpack.c.l.b16 %v4069
        %v4883 = vunpack.c.l.b16 %v4070
        %v4884 = vunpack.c.l.b16 %v4071
        %v4885 = vunpack.c.l.b16 %v4072
        %v4886 = vunpack.c.l.b16 %v4073
        %v4887 = vunpack.c.l.b16 %v4074
        %v4888 = vunpack.c.l.b16 %v4075
        %v4889 = vunpack.c.l.b16 %v4076
        %v4890 = vunpack.c.l.b16 %v4077
        %v4891 = vunpack.c.l.b16 %v4078
        %v4892 = vunpack.c.l.b16 %v4079
        %v4893 = vunpack.c.l.b16 %v4080
        %v4894 = vunpack.c.l.b16 %v4081
        %v4895 = vunpack.c.l.b16 %v4082
        %v4896 = vunpack.c.l.b16 %v4083
        %v4897 = vunpack.c.l.b16 %v4084
        %v4898 = vunpack.c.l.b16 %v4085
        %v4899 = vunpack.c.l.b16 %v4086
        %v4900 = vunpack.c.l.b16 %v4087
        %v4901 = vunpack.c.l.b16 %v4088
        %v4902 = vunpack.c.l.b16 %v4089
        %v4903 = vunpack.c.l.b16 %v4090
        %v4904 = vunpack.c.l.b16 %v4091
        %v4905 = vunpack.c.l.b16 %v4092
        %v4906 = vunpack.c.l.b16 %v4093
        %v4907 = vunpack.c.l.b16 %v4094
        %v4908 = vunpack.c.l.b16 %v4095
        %v4909 = vunpack.c.l.b16 %v4096
        %v4910 = vunpack.c.l.b16 %v4097
        %v4911 = vunpack.c.l.b16 %v4098
        %v4912 = vunpack.c.l.b16 %v4099
        %v4913 = vunpack.c.l.b16 %v4100
        %v4914 = vunpack.c.l.b16 %v4101
        %v4915 = vunpack.c.l.b16 %v4102
        %v4916 = vunpack.c.l.b16 %v4103
        %v4917 = vunpack.c.l.b16 %v4104
        %v4918 = vunpack.c.l.b16 %v4105
        %v4919 = vunpack.c.l.b16 %v4106
        %v4920 = vunpack.c.l.b16 %v4107
        %v4921 = vunpack.c.l.b16 %v4108
        %v4922 = vunpack.c.l.b16 %v4109
        %v4923 = vunpack.c.l.b16 %v4110
        %v4924 = vunpack.c.l.b16 %v4111
        %v4925 = vunpack.c.l.b16 %v4112
        %v4926 = vunpack.c.l.b16 %v4113
        %v4927 = vunpack.c.l.b16 %v4114
        %v4928 = vunpack.c.l.b16 %v4115
        %v4929 = vunpack.c.l.b16 %v4116
        %v4930 = vunpack.c.l.b16 %v4117
        %v4931 = vunpack.c.l.b16 %v4118
        %v4932 = vunpack.c.l.b16 %v4119
        %v4933 = vunpack.c.l.b16 %v4120
        %v4934 = vunpack.c.l.b16 %v4121
        %v4935 = vunpack.c.l.b16 %v4122
        %v4936 = vunpack.c.l.b16 %v4123
        %v4937 = vunpack.c.l.b16 %v4124
        %v4938 = vunpack.c.l.b16 %v4125
        %v4939 = vunpack.c.l.b16 %v4126
        %v4940 = vunpack.c.l.b16 %v4127
        %v4941 = vunpack.c.l.b16 %v4128
        %v4942 = vunpack.c.l.b16 %v4129
        %v4943 = vpack.c.b16 %v4552, %v4551
        %v4944 = vpack.c.b16 %v4554, %v4553
        %v4945 = vpack.c.b16 %v4556, %v4555
        %v4946 = vpack.c.b16 %v4558, %v4557
        %v4947 = vpack.c.b16 %v4560, %v4559
        %v4948 = vpack.c.b16 %v4562, %v4561
        %v4949 = vpack.c.b16 %v4564, %v4563
        %v4950 = vpack.c.b16 %v4566, %v4565
        %v4951 = vpack.c.b16 %v4568, %v4567
        %v4952 = vpack.c.b16 %v4570, %v4569
        %v4953 = vpack.c.b16 %v4572, %v4571
        %v4954 = vpack.c.b16 %v4574, %v4573
        %v4955 = vpack.c.b16 %v4576, %v4575
        %v4956 = vpack.c.b16 %v4578, %v4577
        %v4957 = vpack.c.b16 %v4580, %v4579
        %v4958 = vpack.c.b16 %v4582, %v4581
        %v4959 = vpack.c.b16 %v4584, %v4583
        %v4960 = vpack.c.b16 %v4586, %v4585
        %v4961 = vpack.c.b16 %v4588, %v4587
        %v4962 = vpack.c.b16 %v4590, %v4589
        %v4963 = vpack.c.b16 %v4592, %v4591
        %v4964 = vpack.c.b16 %v4594, %v4593
        %v4965 = vpack.c.b16 %v4596, %v4595
        %v4966 = vpack.c.b16 %v4598, %v4597
        %v4967 = vpack.c.b16 %v4600, %v4599
        %v4968 = vpack.c.b16 %v4602, %v4601
        %v4969 = vpack.c.b16 %v4604, %v4603
        %v4970 = vpack.c.b16 %v4606, %v4605
        %v4971 = vpack.c.b16 %v4608, %v4607
        %v4972 = vpack.c.b16 %v4610, %v4609
        %v4973 = vpack.c.b16 %v4612, %v4611
        %v4974 = vpack.c.b16 %v4614, %v4613
        %v4975 = vpack.c.b16 %v4616, %v4615
        %v4976 = vpack.c.b16 %v4618, %v4617
        %v4977 = vpack.c.b16 %v4620, %v4619
        %v4978 = vpack.c.b16 %v4622, %v4621
        %v4979 = vpack.c.b16 %v4624, %v4623
        %v4980 = vpack.c.b16 %v4626, %v4625
        %v4981 = vpack.c.b16 %v4628, %v4627
        %v4982 = vpack.c.b16 %v4630, %v4629
        %v4983 = vpack.c.b16 %v4632, %v4631
        %v4984 = vpack.c.b16 %v4634, %v4633
        %v4985 = vpack.c.b16 %v4636, %v4635
        %v4986 = vpack.c.b16 %v4638, %v4637
        %v4987 = vpack.c.b16 %v4640, %v4639
        %v4988 = vpack.c.b16 %v4642, %v4641
        %v4989 = vpack.c.b16 %v4644, %v4643
        %v4990 = vpack.c.b16 %v4646, %v4645
        %v4991 = vpack.c.b16 %v4648, %v4647
        %v4992 = vpack.c.b16 %v4650, %v4649
        %v4993 = vpack.c.b16 %v4652, %v4651
        %v4994 = vpack.c.b16 %v4654, %v4653
        %v4995 = vpack.c.b16 %v4656, %v4655
        %v4996 = vpack.c.b16 %v4658, %v4657
        %v4997 = vpack.c.b16 %v4660, %v4659
        %v4998 = vpack.c.b16 %v4662, %v4661
        %v4999 = vpack.c.b16 %v4664, %v4663
        %v5000 = vpack.c.b16 %v4666, %v4665
        %v5001 = vpack.c.b16 %v4668, %v4667
        %v5002 = vpack.c.b16 %v4670, %v4669
        %v5003 = vpack.c.b16 %v4672, %v4671
        %v5004 = vpack.c.b16 %v4674, %v4673
        %v5005 = vpack.c.b16 %v4676, %v4675
        %v5006 = vpack.c.b16 %v4678, %v4677
        %v5007 = vpack.c.b16 %v4680, %v4679
        %v5008 = vpack.c.b16 %v4682, %v4681
        %v5009 = vpack.c.b16 %v4684, %v4683
        %v5010 = vpack.c.b16 %v4686, %v4685
        %v5011 = vpack.c.b16 %v4688, %v4687
        %v5012 = vpack.c.b16 %v4690, %v4689
        %v5013 = vpack.c.b16 %v4692, %v4691
        %v5014 = vpack.c.b16 %v4694, %v4693
        %v5015 = vpack.c.b16 %v4696, %v4695
        %v5016 = vpack.c.b16 %v4698, %v4697
        %v5017 = vpack.c.b16 %v4700, %v4699
        %v5018 = vpack.c.b16 %v4702, %v4701
        %v5019 = vpack.c.b16 %v4704, %v4703
        %v5020 = vpack.c.b16 %v4706, %v4705
        %v5021 = vpack.c.b16 %v4708, %v4707
        %v5022 = vpack.c.b16 %v4710, %v4709
        %v5023 = vpack.c.b16 %v4712, %v4711
        %v5024 = vpack.c.b16 %v4714, %v4713
        %v5025 = vpack.c.b16 %v4716, %v4715
        %v5026 = vpack.c.b16 %v4718, %v4717
        %v5027 = vpack.c.b16 %v4720, %v4719
        %v5028 = vpack.c.b16 %v4722, %v4721
        %v5029 = vpack.c.b16 %v4724, %v4723
        %v5030 = vpack.c.b16 %v4726, %v4725
        %v5031 = vpack.c.b16 %v4728, %v4727
        %v5032 = vpack.c.b16 %v4730, %v4729
        %v5033 = vpack.c.b16 %v4732, %v4731
        %v5034 = vpack.c.b16 %v4734, %v4733
        %v5035 = vpack.c.b16 %v4736, %v4735
        %v5036 = vpack.c.b16 %v4738, %v4737
        %v5037 = vpack.c.b16 %v4740, %v4739
        %v5038 = vpack.c.b16 %v4742, %v4741
        %v5039 = vpack.c.b16 %v4744, %v4743
        %v5040 = vpack.c.b16 %v4746, %v4745
        %v5041 = vpack.c.b16 %v4748, %v4747
        %v5042 = vpack.c.b16 %v4750, %v4749
        %v5043 = vpack.c.b16 %v4752, %v4751
        %v5044 = vpack.c.b16 %v4754, %v4753
        %v5045 = vpack.c.b16 %v4756, %v4755
        %v5046 = vpack.c.b16 %v4758, %v4757
        %v5047 = vpack.c.b16 %v4760, %v4759
        %v5048 = vpack.c.b16 %v4762, %v4761
        %v5049 = vpack.c.b16 %v4764, %v4763
        %v5050 = vpack.c.b16 %v4766, %v4765
        %v5051 = vpack.c.b16 %v4768, %v4767
        %v5052 = vpack.c.b16 %v4770, %v4769
        %v5053 = vpack.c.b16 %v4772, %v4771
        %v5054 = vpack.c.b16 %v4774, %v4773
        %v5055 = vpack.c.b16 %v4776, %v4775
        %v5056 = vpack.c.b16 %v4778, %v4777
        %v5057 = vpack.c.b16 %v4780, %v4779
        %v5058 = vpack.c.b16 %v4782, %v4781
        %v5059 = vpack.c.b16 %v4784, %v4783
        %v5060 = vpack.c.b16 %v4786, %v4785
        %v5061 = vpack.c.b16 %v4788, %v4787
        %v5062 = vpack.c.b16 %v4790, %v4789
        %v5063 = vpack.c.b16 %v4792, %v4791
        %v5064 = vpack.c.b16 %v4794, %v4793
        %v5065 = vpack.c.b16 %v4796, %v4795
        %v5066 = vpack.c.b16 %v4798, %v4797
        %v5067 = vpack.c.b16 %v4800, %v4799
        %v5068 = vpack.c.b16 %v4802, %v4801
        %v5069 = vpack.c.b16 %v4804, %v4803
        %v5070 = vpack.c.b16 %v4806, %v4805
        %v5071 = vpack.c.b16 %v4808, %v4807
        %v5072 = vpack.c.b16 %v4810, %v4809
        %v5073 = vpack.c.b16 %v4812, %v4811
        %v5074 = vpack.c.b16 %v4814, %v4813
        %v5075 = vpack.c.b16 %v4816, %v4815
        %v5076 = vpack.c.b16 %v4818, %v4817
        %v5077 = vpack.c.b16 %v4820, %v4819
        %v5078 = vpack.c.b16 %v4822, %v4821
        %v5079 = vpack.c.b16 %v4824, %v4823
        %v5080 = vpack.c.b16 %v4826, %v4825
        %v5081 = vpack.c.b16 %v4828, %v4827
        %v5082 = vpack.c.b16 %v4830, %v4829
        %v5083 = vpack.c.b16 %v4832, %v4831
        %v5084 = vpack.c.b16 %v4834, %v4833
        %v5085 = vpack.c.b16 %v4836, %v4835
        %v5086 = vpack.c.b16 %v4838, %v4837
        %v5087 = vpack.c.b16 %v4840, %v4839
        %v5088 = vpack.c.b16 %v4842, %v4841
        %v5089 = vpack.c.b16 %v4844, %v4843
        %v5090 = vpack.c.b16 %v4846, %v4845
        %v5091 = vpack.c.b16 %v4848, %v4847
        %v5092 = vpack.c.b16 %v4850, %v4849
        %v5093 = vpack.c.b16 %v4852, %v4851
        %v5094 = vpack.c.b16 %v4854, %v4853
        %v5095 = vpack.c.b16 %v4856, %v4855
        %v5096 = vpack.c.b16 %v4858, %v4857
        %v5097 = vpack.c.b16 %v4860, %v4859
        %v5098 = vpack.c.b16 %v4862, %v4861
        %v5099 = vpack.c.b16 %v4864, %v4863
        %v5100 = vpack.c.b16 %v4866, %v4865
        %v5101 = vpack.c.b16 %v4868, %v4867
        %v5102 = vpack.c.b16 %v4870, %v4869
        %v5103 = vpack.c.b16 %v4872, %v4871
        %v5104 = vpack.c.b16 %v4874, %v4873
        %v5105 = vpack.c.b16 %v4876, %v4875
        %v5106 = vpack.c.b16 %v4878, %v4877
        %v5107 = vpack.c.b16 %v4880, %v4879
        %v5108 = vpack.c.b16 %v4882, %v4881
        %v5109 = vpack.c.b16 %v4884, %v4883
        %v5110 = vpack.c.b16 %v4886, %v4885
        %v5111 = vpack.c.b16 %v4888, %v4887
        %v5112 = vpack.c.b16 %v4890, %v4889
        %v5113 = vpack.c.b16 %v4892, %v4891
        %v5114 = vpack.c.b16 %v4894, %v4893
        %v5115 = vpack.c.b16 %v4896, %v4895
        %v5116 = vpack.c.b16 %v4898, %v4897
        %v5117 = vpack.c.b16 %v4900, %v4899
        %v5118 = vpack.c.b16 %v4902, %v4901
        %v5119 = vpack.c.b16 %v4904, %v4903
        %v5120 = vpack.c.b16 %v4906, %v4905
        %v5121 = vpack.c.b16 %v4908, %v4907
        %v5122 = vpack.c.b16 %v4910, %v4909
        %v5123 = vpack.c.b16 %v4912, %v4911
        %v5124 = vpack.c.b16 %v4914, %v4913
        %v5125 = vpack.c.b16 %v4916, %v4915
        %v5126 = vpack.c.b16 %v4918, %v4917
        %v5127 = vpack.c.b16 %v4920, %v4919
        %v5128 = vpack.c.b16 %v4922, %v4921
        %v5129 = vpack.c.b16 %v4924, %v4923
        %v5130 = vpack.c.b16 %v4926, %v4925
        %v5131 = vpack.c.b16 %v4928, %v4927
        %v5132 = vpack.c.b16 %v4930, %v4929
        %v5133 = vpack.c.b16 %v4932, %v4931
        %v5134 = vpack.c.b16 %v4934, %v4933
        %v5135 = vpack.c.b16 %v4936, %v4935
        %v5136 = vpack.c.b16 %v4938, %v4937
        %v5137 = vpack.c.b16 %v4940, %v4939
        %v5138 = vpack.c.b16 %v4942, %v4941
        %vm5335 = vcmask 523264
        %v5337 = vsel %vm5335, %v3737, 0
        %5339 = vmatpush.bf16.msra.mxu0 %v4950
        %5340 = vmatpush.bf16.msra.mxu0 %v4949
        %5341 = vmatpush.bf16.msra.mxu0 %v4948
        %5342 = vmatpush.bf16.msra.mxu0 %v4947
        %5343 = vmatpush.bf16.msra.mxu0 %v4946
        %5344 = vmatpush.bf16.msra.mxu0 %v4945
        %5345 = vmatpush.bf16.msra.mxu0 %v4944
        %5346 = vmatpush.bf16.msra.mxu0 %v4943
        %5347 = vmatmul.bf16.gmra.mxu0 %v3713
        %v5348 = vpop.f32.mrf.mxu0
        %v5349 = vadd.f32 %v4156, %v5348
        %v5350 = vpop.f32.mrf.mxu0
        %5351 = vdwg.mxu0
        %5352 = vmatpush.bf16.msra.mxu0 %v4958
        %5353 = vmatpush.bf16.msra.mxu0 %v4957
        %5354 = vmatpush.bf16.msra.mxu0 %v4956
        %5355 = vmatpush.bf16.msra.mxu0 %v4955
        %5356 = vmatpush.bf16.msra.mxu0 %v4954
        %5357 = vmatpush.bf16.msra.mxu0 %v4953
        %5358 = vmatpush.bf16.msra.mxu0 %v4952
        %5359 = vmatpush.bf16.msra.mxu0 %v4951
        %5360 = vmatmul.bf16.gmra.mxu0 %v3714
        %v5361 = vpop.f32.mrf.mxu0
        %v5362 = vadd.f32 %v5349, %v5361
        %v5363 = vpop.f32.mrf.mxu0
        %5364 = vdwg.mxu0
        %5365 = vmatpush.bf16.msra.mxu0 %v4966
        %5366 = vmatpush.bf16.msra.mxu0 %v4965
        %5367 = vmatpush.bf16.msra.mxu0 %v4964
        %5368 = vmatpush.bf16.msra.mxu0 %v4963
        %5369 = vmatpush.bf16.msra.mxu0 %v4962
        %5370 = vmatpush.bf16.msra.mxu0 %v4961
        %5371 = vmatpush.bf16.msra.mxu0 %v4960
        %5372 = vmatpush.bf16.msra.mxu0 %v4959
        %5373 = vmatmul.bf16.gmra.mxu0 %v3715
        %v5374 = vpop.f32.mrf.mxu0
        %v5375 = vadd.f32 %v5362, %v5374
        %v5376 = vpop.f32.mrf.mxu0
        %5377 = vdwg.mxu0
        %5378 = vmatpush.bf16.msra.mxu0 %v4974
        %5379 = vmatpush.bf16.msra.mxu0 %v4973
        %5380 = vmatpush.bf16.msra.mxu0 %v4972
        %5381 = vmatpush.bf16.msra.mxu0 %v4971
        %5382 = vmatpush.bf16.msra.mxu0 %v4970
        %5383 = vmatpush.bf16.msra.mxu0 %v4969
        %5384 = vmatpush.bf16.msra.mxu0 %v4968
        %5385 = vmatpush.bf16.msra.mxu0 %v4967
        %5386 = vmatmul.bf16.gmra.mxu0 %v3716
        %v5387 = vpop.f32.mrf.mxu0
        %v5388 = vadd.f32 %v5375, %v5387
        %v5389 = vpop.f32.mrf.mxu0
        %5390 = vdwg.mxu0
        %5391 = vmatpush.bf16.msra.mxu0 %v4982
        %5392 = vmatpush.bf16.msra.mxu0 %v4981
        %5393 = vmatpush.bf16.msra.mxu0 %v4980
        %5394 = vmatpush.bf16.msra.mxu0 %v4979
        %5395 = vmatpush.bf16.msra.mxu0 %v4978
        %5396 = vmatpush.bf16.msra.mxu0 %v4977
        %5397 = vmatpush.bf16.msra.mxu0 %v4976
        %5398 = vmatpush.bf16.msra.mxu0 %v4975
        %5399 = vmatmul.bf16.gmra.mxu0 %v3717
        %v5400 = vpop.f32.mrf.mxu0
        %v5401 = vadd.f32 %v5388, %v5400
        %v5402 = vpop.f32.mrf.mxu0
        %5403 = vdwg.mxu0
        %5404 = vmatpush.bf16.msra.mxu0 %v4990
        %5405 = vmatpush.bf16.msra.mxu0 %v4989
        %5406 = vmatpush.bf16.msra.mxu0 %v4988
        %5407 = vmatpush.bf16.msra.mxu0 %v4987
        %5408 = vmatpush.bf16.msra.mxu0 %v4986
        %5409 = vmatpush.bf16.msra.mxu0 %v4985
        %5410 = vmatpush.bf16.msra.mxu0 %v4984
        %5411 = vmatpush.bf16.msra.mxu0 %v4983
        %5412 = vmatmul.bf16.gmra.mxu0 %v3718
        %v5413 = vpop.f32.mrf.mxu0
        %v5414 = vadd.f32 %v5401, %v5413
        %v5415 = vpop.f32.mrf.mxu0
        %5416 = vdwg.mxu0
        %5417 = vmatpush.bf16.msra.mxu0 %v4998
        %5418 = vmatpush.bf16.msra.mxu0 %v4997
        %5419 = vmatpush.bf16.msra.mxu0 %v4996
        %5420 = vmatpush.bf16.msra.mxu0 %v4995
        %5421 = vmatpush.bf16.msra.mxu0 %v4994
        %5422 = vmatpush.bf16.msra.mxu0 %v4993
        %5423 = vmatpush.bf16.msra.mxu0 %v4992
        %5424 = vmatpush.bf16.msra.mxu0 %v4991
        %5425 = vmatmul.bf16.gmra.mxu0 %v3719
        %v5426 = vpop.f32.mrf.mxu0
        %v5427 = vadd.f32 %v5414, %v5426
        %v5428 = vpop.f32.mrf.mxu0
        %5429 = vdwg.mxu0
        %5430 = vmatpush.bf16.msra.mxu0 %v5006
        %5431 = vmatpush.bf16.msra.mxu0 %v5005
        %5432 = vmatpush.bf16.msra.mxu0 %v5004
        %5433 = vmatpush.bf16.msra.mxu0 %v5003
        %5434 = vmatpush.bf16.msra.mxu0 %v5002
        %5435 = vmatpush.bf16.msra.mxu0 %v5001
        %5436 = vmatpush.bf16.msra.mxu0 %v5000
        %5437 = vmatpush.bf16.msra.mxu0 %v4999
        %5438 = vmatmul.bf16.gmra.mxu0 %v3720
        %v5439 = vpop.f32.mrf.mxu0
        %v5440 = vadd.f32 %v5427, %v5439
        %v5441 = vpop.f32.mrf.mxu0
        %5442 = vdwg.mxu0
        %5443 = vmatpush.bf16.msra.mxu0 %v5014
        %5444 = vmatpush.bf16.msra.mxu0 %v5013
        %5445 = vmatpush.bf16.msra.mxu0 %v5012
        %5446 = vmatpush.bf16.msra.mxu0 %v5011
        %5447 = vmatpush.bf16.msra.mxu0 %v5010
        %5448 = vmatpush.bf16.msra.mxu0 %v5009
        %5449 = vmatpush.bf16.msra.mxu0 %v5008
        %5450 = vmatpush.bf16.msra.mxu0 %v5007
        %5451 = vmatmul.bf16.gmra.mxu0 %v3721
        %v5452 = vpop.f32.mrf.mxu0
        %v5453 = vadd.f32 %v5440, %v5452
        %v5454 = vpop.f32.mrf.mxu0
        %5455 = vdwg.mxu0
        %5456 = vmatpush.bf16.msra.mxu0 %v5022
        %5457 = vmatpush.bf16.msra.mxu0 %v5021
        %5458 = vmatpush.bf16.msra.mxu0 %v5020
        %5459 = vmatpush.bf16.msra.mxu0 %v5019
        %5460 = vmatpush.bf16.msra.mxu0 %v5018
        %5461 = vmatpush.bf16.msra.mxu0 %v5017
        %5462 = vmatpush.bf16.msra.mxu0 %v5016
        %5463 = vmatpush.bf16.msra.mxu0 %v5015
        %5464 = vmatmul.bf16.gmra.mxu0 %v3722
        %v5465 = vpop.f32.mrf.mxu0
        %v5466 = vadd.f32 %v5453, %v5465
        %v5467 = vpop.f32.mrf.mxu0
        %5468 = vdwg.mxu0
        %5469 = vmatpush.bf16.msra.mxu0 %v5030
        %5470 = vmatpush.bf16.msra.mxu0 %v5029
        %5471 = vmatpush.bf16.msra.mxu0 %v5028
        %5472 = vmatpush.bf16.msra.mxu0 %v5027
        %5473 = vmatpush.bf16.msra.mxu0 %v5026
        %5474 = vmatpush.bf16.msra.mxu0 %v5025
        %5475 = vmatpush.bf16.msra.mxu0 %v5024
        %5476 = vmatpush.bf16.msra.mxu0 %v5023
        %5477 = vmatmul.bf16.gmra.mxu0 %v3723
        %v5478 = vpop.f32.mrf.mxu0
        %v5479 = vadd.f32 %v5466, %v5478
        %v5480 = vpop.f32.mrf.mxu0
        %5481 = vdwg.mxu0
        %5482 = vmatpush.bf16.msra.mxu0 %v5038
        %5483 = vmatpush.bf16.msra.mxu0 %v5037
        %5484 = vmatpush.bf16.msra.mxu0 %v5036
        %5485 = vmatpush.bf16.msra.mxu0 %v5035
        %5486 = vmatpush.bf16.msra.mxu0 %v5034
        %5487 = vmatpush.bf16.msra.mxu0 %v5033
        %5488 = vmatpush.bf16.msra.mxu0 %v5032
        %5489 = vmatpush.bf16.msra.mxu0 %v5031
        %5490 = vmatmul.bf16.gmra.mxu0 %v3724
        %v5491 = vpop.f32.mrf.mxu0
        %v5492 = vadd.f32 %v5479, %v5491
        %v5493 = vpop.f32.mrf.mxu0
        %5494 = vdwg.mxu0
        %5495 = vmatpush.bf16.msra.mxu0 %v5046
        %5496 = vmatpush.bf16.msra.mxu0 %v5045
        %5497 = vmatpush.bf16.msra.mxu0 %v5044
        %5498 = vmatpush.bf16.msra.mxu0 %v5043
        %5499 = vmatpush.bf16.msra.mxu0 %v5042
        %5500 = vmatpush.bf16.msra.mxu0 %v5041
        %5501 = vmatpush.bf16.msra.mxu0 %v5040
        %5502 = vmatpush.bf16.msra.mxu0 %v5039
        %5503 = vmatmul.bf16.gmra.mxu0 %v3725
        %v5504 = vpop.f32.mrf.mxu0
        %v5505 = vadd.f32 %v5492, %v5504
        %v5506 = vpop.f32.mrf.mxu0
        %5507 = vdwg.mxu0
        %5508 = vmatpush.bf16.msra.mxu0 %v5054
        %5509 = vmatpush.bf16.msra.mxu0 %v5053
        %5510 = vmatpush.bf16.msra.mxu0 %v5052
        %5511 = vmatpush.bf16.msra.mxu0 %v5051
        %5512 = vmatpush.bf16.msra.mxu0 %v5050
        %5513 = vmatpush.bf16.msra.mxu0 %v5049
        %5514 = vmatpush.bf16.msra.mxu0 %v5048
        %5515 = vmatpush.bf16.msra.mxu0 %v5047
        %5516 = vmatmul.bf16.gmra.mxu0 %v3726
        %v5517 = vpop.f32.mrf.mxu0
        %v5518 = vadd.f32 %v5505, %v5517
        %v5519 = vpop.f32.mrf.mxu0
        %5520 = vdwg.mxu0
        %5521 = vmatpush.bf16.msra.mxu0 %v5062
        %5522 = vmatpush.bf16.msra.mxu0 %v5061
        %5523 = vmatpush.bf16.msra.mxu0 %v5060
        %5524 = vmatpush.bf16.msra.mxu0 %v5059
        %5525 = vmatpush.bf16.msra.mxu0 %v5058
        %5526 = vmatpush.bf16.msra.mxu0 %v5057
        %5527 = vmatpush.bf16.msra.mxu0 %v5056
        %5528 = vmatpush.bf16.msra.mxu0 %v5055
        %5529 = vmatmul.bf16.gmra.mxu0 %v3727
        %v5530 = vpop.f32.mrf.mxu0
        %v5531 = vadd.f32 %v5518, %v5530
        %v5532 = vpop.f32.mrf.mxu0
        %5533 = vdwg.mxu0
        %5534 = vmatpush.bf16.msra.mxu0 %v5070
        %5535 = vmatpush.bf16.msra.mxu0 %v5069
        %5536 = vmatpush.bf16.msra.mxu0 %v5068
        %5537 = vmatpush.bf16.msra.mxu0 %v5067
        %5538 = vmatpush.bf16.msra.mxu0 %v5066
        %5539 = vmatpush.bf16.msra.mxu0 %v5065
        %5540 = vmatpush.bf16.msra.mxu0 %v5064
        %5541 = vmatpush.bf16.msra.mxu0 %v5063
        %5542 = vmatmul.bf16.gmra.mxu0 %v3728
        %v5543 = vpop.f32.mrf.mxu0
        %v5544 = vadd.f32 %v5531, %v5543
        %v5545 = vpop.f32.mrf.mxu0
        %5546 = vdwg.mxu0
        %5547 = vmatpush.bf16.msra.mxu0 %v5078
        %5548 = vmatpush.bf16.msra.mxu0 %v5077
        %5549 = vmatpush.bf16.msra.mxu0 %v5076
        %5550 = vmatpush.bf16.msra.mxu0 %v5075
        %5551 = vmatpush.bf16.msra.mxu0 %v5074
        %5552 = vmatpush.bf16.msra.mxu0 %v5073
        %5553 = vmatpush.bf16.msra.mxu0 %v5072
        %5554 = vmatpush.bf16.msra.mxu0 %v5071
        %5555 = vmatmul.bf16.gmra.mxu0 %v3729
        %v5556 = vpop.f32.mrf.mxu0
        %v5557 = vadd.f32 %v5544, %v5556
        %v5558 = vpop.f32.mrf.mxu0
        %5559 = vdwg.mxu0
        %5560 = vmatpush.bf16.msra.mxu0 %v5086
        %5561 = vmatpush.bf16.msra.mxu0 %v5085
        %5562 = vmatpush.bf16.msra.mxu0 %v5084
        %5563 = vmatpush.bf16.msra.mxu0 %v5083
        %5564 = vmatpush.bf16.msra.mxu0 %v5082
        %5565 = vmatpush.bf16.msra.mxu0 %v5081
        %5566 = vmatpush.bf16.msra.mxu0 %v5080
        %5567 = vmatpush.bf16.msra.mxu0 %v5079
        %5568 = vmatmul.bf16.gmra.mxu0 %v3730
        %v5569 = vpop.f32.mrf.mxu0
        %v5570 = vadd.f32 %v5557, %v5569
        %v5571 = vpop.f32.mrf.mxu0
        %5572 = vdwg.mxu0
        %5573 = vmatpush.bf16.msra.mxu0 %v5094
        %5574 = vmatpush.bf16.msra.mxu0 %v5093
        %5575 = vmatpush.bf16.msra.mxu0 %v5092
        %5576 = vmatpush.bf16.msra.mxu0 %v5091
        %5577 = vmatpush.bf16.msra.mxu0 %v5090
        %5578 = vmatpush.bf16.msra.mxu0 %v5089
        %5579 = vmatpush.bf16.msra.mxu0 %v5088
        %5580 = vmatpush.bf16.msra.mxu0 %v5087
        %5581 = vmatmul.bf16.gmra.mxu0 %v3731
        %v5582 = vpop.f32.mrf.mxu0
        %v5583 = vadd.f32 %v5570, %v5582
        %v5584 = vpop.f32.mrf.mxu0
        %5585 = vdwg.mxu0
        %5586 = vmatpush.bf16.msra.mxu0 %v5102
        %5587 = vmatpush.bf16.msra.mxu0 %v5101
        %5588 = vmatpush.bf16.msra.mxu0 %v5100
        %5589 = vmatpush.bf16.msra.mxu0 %v5099
        %5590 = vmatpush.bf16.msra.mxu0 %v5098
        %5591 = vmatpush.bf16.msra.mxu0 %v5097
        %5592 = vmatpush.bf16.msra.mxu0 %v5096
        %5593 = vmatpush.bf16.msra.mxu0 %v5095
        %5594 = vmatmul.bf16.gmra.mxu0 %v3732
        %v5595 = vpop.f32.mrf.mxu0
        %v5596 = vadd.f32 %v5583, %v5595
        %v5597 = vpop.f32.mrf.mxu0
        %5598 = vdwg.mxu0
        %5599 = vmatpush.bf16.msra.mxu0 %v5110
        %5600 = vmatpush.bf16.msra.mxu0 %v5109
        %5601 = vmatpush.bf16.msra.mxu0 %v5108
        %5602 = vmatpush.bf16.msra.mxu0 %v5107
        %5603 = vmatpush.bf16.msra.mxu0 %v5106
        %5604 = vmatpush.bf16.msra.mxu0 %v5105
        %5605 = vmatpush.bf16.msra.mxu0 %v5104
        %5606 = vmatpush.bf16.msra.mxu0 %v5103
        %5607 = vmatmul.bf16.gmra.mxu0 %v3733
        %v5608 = vpop.f32.mrf.mxu0
        %v5609 = vadd.f32 %v5596, %v5608
        %v5610 = vpop.f32.mrf.mxu0
        %5611 = vdwg.mxu0
        %5612 = vmatpush.bf16.msra.mxu0 %v5118
        %5613 = vmatpush.bf16.msra.mxu0 %v5117
        %5614 = vmatpush.bf16.msra.mxu0 %v5116
        %5615 = vmatpush.bf16.msra.mxu0 %v5115
        %5616 = vmatpush.bf16.msra.mxu0 %v5114
        %5617 = vmatpush.bf16.msra.mxu0 %v5113
        %5618 = vmatpush.bf16.msra.mxu0 %v5112
        %5619 = vmatpush.bf16.msra.mxu0 %v5111
        %5620 = vmatmul.bf16.gmra.mxu0 %v3734
        %v5621 = vpop.f32.mrf.mxu0
        %v5622 = vadd.f32 %v5609, %v5621
        %v5623 = vpop.f32.mrf.mxu0
        %5624 = vdwg.mxu0
        %5625 = vmatpush.bf16.msra.mxu0 %v5126
        %5626 = vmatpush.bf16.msra.mxu0 %v5125
        %5627 = vmatpush.bf16.msra.mxu0 %v5124
        %5628 = vmatpush.bf16.msra.mxu0 %v5123
        %5629 = vmatpush.bf16.msra.mxu0 %v5122
        %5630 = vmatpush.bf16.msra.mxu0 %v5121
        %5631 = vmatpush.bf16.msra.mxu0 %v5120
        %5632 = vmatpush.bf16.msra.mxu0 %v5119
        %5633 = vmatmul.bf16.gmra.mxu0 %v3735
        %v5634 = vpop.f32.mrf.mxu0
        %v5635 = vadd.f32 %v5622, %v5634
        %v5636 = vpop.f32.mrf.mxu0
        %5637 = vdwg.mxu0
        %5638 = vmatpush.bf16.msra.mxu0 %v5134
        %5639 = vmatpush.bf16.msra.mxu0 %v5133
        %5640 = vmatpush.bf16.msra.mxu0 %v5132
        %5641 = vmatpush.bf16.msra.mxu0 %v5131
        %5642 = vmatpush.bf16.msra.mxu0 %v5130
        %5643 = vmatpush.bf16.msra.mxu0 %v5129
        %5644 = vmatpush.bf16.msra.mxu0 %v5128
        %5645 = vmatpush.bf16.msra.mxu0 %v5127
        %5646 = vmatmul.bf16.gmra.mxu0 %v3736
        %v5647 = vpop.f32.mrf.mxu0
        %v5648 = vadd.f32 %v5635, %v5647
        %v5649 = vpop.f32.mrf.mxu0
        %5650 = vdwg.mxu0
        %5651 = vmatpush.bf16.msra.mxu0 0
        %5652 = vmatpush.bf16.msra.mxu0 0
        %5653 = vmatpush.bf16.msra.mxu0 0
        %5654 = vmatpush.bf16.msra.mxu0 0
        %5655 = vmatpush.bf16.msra.mxu0 %v5138
        %5656 = vmatpush.bf16.msra.mxu0 %v5137
        %5657 = vmatpush.bf16.msra.mxu0 %v5136
        %5658 = vmatpush.bf16.msra.mxu0 %v5135
        %5659 = vmatmul.bf16.gmra.mxu0 %v5337
        %v5660 = vpop.f32.mrf.mxu0
        %v5661 = vadd.f32 %v5648, %v5660
        %v5662 = vpop.f32.mrf.mxu0
        %5663 = vdwg.mxu0
        %v5664 = vld [vmem:[%s3616] sm:$0x1]
        %v5666 = vperm.slane %v5664, 0
        %v5668 = vadd.f32 %v5661, %v5666
        %v5669 = vmax.f32 %v5668, 0.0
        %v5670 = vpack.c.bf16 %v5669, %v5669
        %v5671 = vld [vmem:[%s3621] sm:$0xf]
        %v5672 = vld [vmem:[%s3621 + $0x4] sm:$0xf]
        %v5673 = vld [vmem:[%s3621 + $0x8] sm:$0xf]
        %v5674 = vld [vmem:[%s3621 + $0xc] sm:$0xf]
        %v5675 = vld [vmem:[%s3621 + $0x10] sm:$0xf]
        %v5676 = vld [vmem:[%s3621 + $0x14] sm:$0xf]
        %v5677 = vld [vmem:[%s3621 + $0x18] sm:$0xf]
        %v5678 = vld [vmem:[%s3621 + $0x1c] sm:$0xf]
        %v5679 = vld [vmem:[%s3621 + $0x20] sm:$0xf]
        %v5680 = vld [vmem:[%s3621 + $0x24] sm:$0xf]
        %v5681 = vld [vmem:[%s3621 + $0x28] sm:$0xf]
        %v5682 = vld [vmem:[%s3621 + $0x2c] sm:$0xf]
        %v5683 = vld [vmem:[%s3621 + $0x30] sm:$0xf]
        %v5684 = vld [vmem:[%s3621 + $0x34] sm:$0xf]
        %v5685 = vld [vmem:[%s3621 + $0x38] sm:$0xf]
        %v5686 = vld [vmem:[%s3621 + $0x3c] sm:$0xf]
        %v5703 = vunpack.c.l.b16 %v5671
        %v5704 = vunpack.c.l.b16 %v5672
        %v5705 = vunpack.c.l.b16 %v5673
        %v5706 = vunpack.c.l.b16 %v5674
        %v5707 = vunpack.c.l.b16 %v5675
        %v5708 = vunpack.c.l.b16 %v5676
        %v5709 = vunpack.c.l.b16 %v5677
        %v5710 = vunpack.c.l.b16 %v5678
        %v5711 = vunpack.c.l.b16 %v5679
        %v5712 = vunpack.c.l.b16 %v5680
        %v5713 = vunpack.c.l.b16 %v5681
        %v5714 = vunpack.c.l.b16 %v5682
        %v5715 = vunpack.c.l.b16 %v5683
        %v5716 = vunpack.c.l.b16 %v5684
        %v5717 = vunpack.c.l.b16 %v5685
        %v5718 = vunpack.c.l.b16 %v5686
        %v5719 = vpack.c.b16 %v5704, %v5703
        %v5720 = vpack.c.b16 %v5706, %v5705
        %v5721 = vpack.c.b16 %v5708, %v5707
        %v5722 = vpack.c.b16 %v5710, %v5709
        %v5723 = vpack.c.b16 %v5712, %v5711
        %v5724 = vpack.c.b16 %v5714, %v5713
        %v5725 = vpack.c.b16 %v5716, %v5715
        %v5726 = vpack.c.b16 %v5718, %v5717
        %5735 = vmatpush.bf16.msra.mxu0 %v5726
        %5736 = vmatpush.bf16.msra.mxu0 %v5725
        %5737 = vmatpush.bf16.msra.mxu0 %v5724
        %5738 = vmatpush.bf16.msra.mxu0 %v5723
        %5739 = vmatpush.bf16.msra.mxu0 %v5722
        %5740 = vmatpush.bf16.msra.mxu0 %v5721
        %5741 = vmatpush.bf16.msra.mxu0 %v5720
        %5742 = vmatpush.bf16.msra.mxu0 %v5719
        %5743 = vmatmul.bf16.gmra.mxu0 %v5670
        %v5744 = vpop.f32.mrf.mxu0
        %v5745 = vadd.f32 0.0, %v5744
        %v5746 = vpop.f32.mrf.mxu0
        %5747 = vdwg.mxu0
        %p5748 = scmp.eq.s32.totalorder %s21, 0
        // Predicated region
        $region150: #{nature_tqn_forward.7} parent=140 // pred_check
          %p5749 = pneg %p5748
        $region151: #{nature_tqn_forward.7} parent=140 // pred_check_branch
          %5751 = sbr.rel (%p5749) target = $region153
        $region152: #{nature_tqn_forward.7} parent=140 // pred_region
          %v5752 = vld [vmem:[%s8] sm:$0x1]
          %v5754 = vperm.slane %v5752, 0
          %v5756 = vadd.f32 %v5754, %v5745
          %vm5757 = vcmask 74752
          %5758 = vst.msk [vmem:[#allocation4] sm:$0x3] %vm5757, %v5756
        $region153: #{nature_tqn_forward.7} parent=140 // pred_fallthru
          _
        %p5759 = scmp.gt.s32.totalorder %s21, 0
        // Predicated region
        $region154: #{nature_tqn_forward.7} parent=140 // pred_check
          %p5760 = pneg %p5759
        $region155: #{nature_tqn_forward.7} parent=140 // pred_check_branch
          %5762 = sbr.rel (%p5760) target = $region157
        $region156: #{nature_tqn_forward.7} parent=140 // pred_region
          %v5763 = vld [vmem:[#allocation4] sm:$0x3]
          %v5764 = vadd.f32 %v5763, %v5745
          %vm5765 = vcmask 74752
          %5766 = vst.msk [vmem:[#allocation4] sm:$0x3] %vm5765, %v5764
        $region157: #{nature_tqn_forward.7} parent=140 // pred_fallthru
          _
        // Predicated region
        $region158: #{nature_tqn_forward.7} parent=140 // pred_check
          %p5767 = pneg %p243
        $region159: #{nature_tqn_forward.7} parent=140 // pred_check_branch
          %5769 = sbr.rel (%p5767) target = $region161
        $region160: #{nature_tqn_forward.7} parent=140 // pred_region
          %5771 = vsyncadd [#allocation5], 0
          %s5773 = sshll.u32 [#allocation4], 4
          %s5774 = int_to_ptr.vmem [resolvable:$true] %s5773
          %s5775 = sshll.u32 %s9, 4
          %s5776 = int_to_ptr.hbm [resolvable:$true] %s5775
          %5778 = dma.vmem_to_hbm [thread:$0]  %s5774, 32, %s5776, [#allocation5]
        $region161: #{nature_tqn_forward.7} parent=140 // pred_fallthru
          _
        // Predicated region
        $region162: #{nature_tqn_forward.7} parent=140 // pred_check
          %p5779 = pneg %p243
        $region163: #{nature_tqn_forward.7} parent=140 // pred_check_branch
          %5781 = sbr.rel (%p5779) target = $region165
        $region164: #{nature_tqn_forward.7} parent=140 // pred_region
          %5783 = dma.done [#allocation5], 32
        $region165: #{nature_tqn_forward.7} parent=140 // pred_fallthru
          _
      $region141: #{nature_tqn_forward.7} parent=5 // pred_fallthru
        _
      %p5784 = scmp.le.s32.totalorder 2, %s16
      // Predicated region
      $region166: #{nature_tqn_forward.7} parent=5 // pred_check
        %p5785 = pneg %p5784
      $region167: #{nature_tqn_forward.7} parent=5 // pred_check_branch
        %5787 = sbr.rel (%p5785) target = $region169
      $region168: #{nature_tqn_forward.7} parent=5 // pred_region
        %s5788 = ssub.s32 %s16, 2
      $region169: #{nature_tqn_forward.7} parent=5 // pred_fallthru
        _
    $region6: #{nature_tqn_forward.7} parent=1 // loop_footer
      %s20 = sadd.s32 1, %s16
    $region7: #{nature_tqn_forward.7} parent=1 // loop_footer_branch
      %15 = sbr.rel target = $region3
    $region8: #{nature_tqn_forward.7} parent=1 // loop_exit
      _
    %5789 = vsyncpa [#allocation5], 1
    %s5790 = scalar_lea.sflag [#allocation5], 1
    %5791 = vsyncpa %s5790, 1

</llo_original>
